<compile_context>
chip_gen: v7x
topology: tpu7x:2x2x1
jax: 0.10.0
libtpu: 0.0.40
codegen_flags: <defaults>
</compile_context>

<pallas_src>
import functools

import jax
import jax.numpy as jnp
from jax.experimental import pallas as pl
from jax.experimental.pallas import tpu as pltpu

_TM_CAP = 1024   # max rows per matmul tile (>=512 per HBM-roofline guidance)
_LANE = 128


def _round_up(x, m):
    return (x + m - 1) // m * m


def _pick_tm(m, cap=_TM_CAP):
    """Largest row tile <= cap that divides m (m is a multiple of 8 here)."""
    if m <= cap:
        return m
    for tm in range(cap, 7, -8):
        if m % tm == 0:
            return tm
    return m


# ----------------------------------------------------------------------------
# Pallas kernels
# ----------------------------------------------------------------------------
def _convt_bn_relu_kernel(a_ref, b_ref, gamma_ref, beta_ref, o_ref,
                          y_acc, sum_ref, *, num_tiles, tm, m_rows, co):
    """Fused matmul + batch-stat accumulation + BatchNorm(train) + ReLU."""
    i = pl.program_id(0)

    # MXU: bf16 x bf16 -> f32
    y = jnp.dot(a_ref[...], b_ref[...], preferred_element_type=jnp.float32)

    row = pl.multiple_of(i * tm, tm)
    y_acc[pl.ds(row, tm), :] = y            # layer activation stays in VMEM

    @pl.when(i == 0)
    def _():
        sum_ref[...] = jnp.zeros_like(sum_ref)

    sum_ref[...] += jnp.sum(y, axis=0, keepdims=True)

    @pl.when(i == num_tiles - 1)
    def _():
        inv_m = 1.0 / m_rows
        mean = sum_ref[...] * inv_m                              # (1, Cp)

        # Two-pass, deviation-based variance (robust vs E[y^2] - E[y]^2).
        var = jnp.zeros_like(mean)
        for t in range(num_tiles):                               # static, small
            d = y_acc[pl.ds(t * tm, tm), :] - mean
            var = var + jnp.sum(d * d, axis=0, keepdims=True)
        var = var * inv_m

        scale = gamma_ref[...] * jax.lax.rsqrt(var + 1e-5)       # EUP rsqrt
        shift = beta_ref[...] - mean * scale

        # BN affine + ReLU, single channel-unpadded store per tile.
        for t in range(num_tiles):
            yt = y_acc[pl.ds(t * tm, tm), :]
            o_ref[pl.ds(t * tm, tm), :] = (
                jnp.maximum(yt * scale + shift, 0.0)[:, :co].astype(o_ref.dtype))


def _convt_tanh_kernel(a_ref, b_ref, o_ref, *, co):
    """Fused matmul + tanh epilogue (last layer, no stats dependency)."""
    y = jnp.dot(a_ref[...], b_ref[...], preferred_element_type=jnp.float32)
    o_ref[...] = jnp.tanh(y[:, :co])


# ----------------------------------------------------------------------------
# pallas_call wrappers
# ----------------------------------------------------------------------------
def _fused_convt_bn_relu(a, b, gamma2d, beta2d, *, m, co, cp, tm):
    kd = a.shape[1]
    num_tiles = m // tm
    kernel = functools.partial(_convt_bn_relu_kernel,
                               num_tiles=num_tiles, tm=tm, m_rows=m, co=co)
    return pl.pallas_call(
        kernel,
        out_shape=jax.ShapeDtypeStruct((m, co), jnp.bfloat16),
        grid=(num_tiles,),
        in_specs=[
            pl.BlockSpec((tm, kd), lambda i: (i, 0)),   # patch row tile
            pl.BlockSpec((kd, cp), lambda i: (0, 0)),   # weight panel (resident)
            pl.BlockSpec((1, cp), lambda i: (0, 0)),    # gamma
            pl.BlockSpec((1, cp), lambda i: (0, 0)),    # beta
        ],
        out_specs=pl.BlockSpec((m, co), lambda i: (0, 0)),  # written once at end
        scratch_shapes=[
            pltpu.VMEM((m, cp), jnp.float32),   # full layer activation (<= 4 MiB)
            pltpu.VMEM((1, cp), jnp.float32),   # running per-channel sum
        ],
        # Accumulation across the M axis -> must stay "arbitrary" (sequential).
        compiler_params=pltpu.CompilerParams(dimension_semantics=("arbitrary",)),
    )(a, b, gamma2d, beta2d)


def _fused_convt_tanh(a, b, *, m, co, cp, tm):
    kd = a.shape[1]
    num_tiles = m // tm
    kernel = functools.partial(_convt_tanh_kernel, co=co)
    return pl.pallas_call(
        kernel,
        out_shape=jax.ShapeDtypeStruct((m, co), jnp.float32),
        grid=(num_tiles,),
        in_specs=[
            pl.BlockSpec((tm, kd), lambda i: (i, 0)),
            pl.BlockSpec((kd, cp), lambda i: (0, 0)),
        ],
        out_specs=pl.BlockSpec((tm, co), lambda i: (i, 0)),
        # Independent tiles -> "parallel" (lets v7x use both TensorCores).
        compiler_params=pltpu.CompilerParams(dimension_semantics=("parallel",)),
    )(a, b)


# ----------------------------------------------------------------------------
# ConvTranspose2d lowering (glue in plain JAX: dilation + pad + patch extract)
# ----------------------------------------------------------------------------
def _im2col_transposed(x_nhwc, k, stride, padding):
    """Dilate-by-stride, pad by (k-1-padding), extract kxk patches."""
    n, h, w, c = x_nhwc.shape
    if stride > 1:
        hd, wd = (h - 1) * stride + 1, (w - 1) * stride + 1
        xd = jnp.zeros((n, hd, wd, c), x_nhwc.dtype)
        xd = xd.at[:, ::stride, ::stride, :].set(x_nhwc)
    else:
        xd, hd, wd = x_nhwc, h, w
    pad = k - 1 - padding
    xp = jnp.pad(xd, ((0, 0), (pad, pad), (pad, pad), (0, 0)))
    oh = hd + 2 * pad - k + 1
    ow = wd + 2 * pad - k + 1
    patches = []
    for kh in range(k):
        for kw in range(k):
            patches.append(xp[:, kh:kh + oh, kw:kw + ow, :])
    p = jnp.stack(patches, axis=3)               # (N, OH, OW, K*K, Cin)
    p = p.reshape(n * oh * ow, k * k * c)        # (M, Kd)
    return p, (n, oh, ow)


def _weight_matrix(w):
    """PyTorch ConvTranspose weight (Cin, Cout, K, K) -> (K*K*Cin, Cout)."""
    ci, co, k, _ = w.shape
    w_flip = w[:, :, ::-1, ::-1]                         # spatial flip
    return jnp.transpose(w_flip, (2, 3, 0, 1)).reshape(k * k * ci, co)


def _conv_t_layer(x_nhwc, w, stride, padding, gamma, beta, last):
    ci, co, k, _ = w.shape
    x_bf16 = x_nhwc.astype(jnp.bfloat16)
    patches, (n, oh, ow) = _im2col_transposed(x_bf16, k, stride, padding)
    wm = _weight_matrix(w)                                  # (Kd, co) f32

    m, kd = patches.shape
    kp = _round_up(kd, _LANE)     # only layer 0 actually pads (1600 -> 1664)
    cp = _round_up(co, _LANE)     # Cout padded to 128 for the MXU panel only

    a = patches if kp == kd else jnp.pad(patches, ((0, 0), (0, kp - kd)))
    b = jnp.pad(wm, ((0, kp - kd), (0, cp - co))).astype(jnp.bfloat16)

    tm = _pick_tm(m)

    if not last:
        gp = jnp.pad(gamma, (0, cp - co)).reshape(1, cp)
        bp = jnp.pad(beta, (0, cp - co)).reshape(1, cp)
        out = _fused_convt_bn_relu(a, b, gp, bp, m=m, co=co, cp=cp, tm=tm)
    else:
        out = _fused_convt_tanh(a, b, m=m, co=co, cp=cp, tm=tm)

    return out.reshape(n, oh, ow, co)


# ----------------------------------------------------------------------------
# GNet forward
# ----------------------------------------------------------------------------
_LAYER_CFG = [(1, 0), (2, 1), (2, 1), (2, 1), (2, 1)]   # (stride, padding)
_CHANNELS = [100, 64, 32, 16, 8, 3]


def gnet_forward(x_nchw, params):
    x = jnp.transpose(x_nchw, (0, 2, 3, 1))  # -> NHWC
    for li, (stride, padding) in enumerate(_LAYER_CFG):
        last = li == len(_LAYER_CFG) - 1
        x = _conv_t_layer(
            x,
            params[f"w{li}"],
            stride,
            padding,
            None if last else params[f"gamma{li}"],
            None if last else params[f"beta{li}"],
            last,
        )
    return jnp.transpose(x, (0, 3, 1, 2))    # -> NCHW, f32


# ----------------------------------------------------------------------------
# Pure-JAX f32 reference (same math, no Pallas) for a sanity check
# ----------------------------------------------------------------------------
def _ref_forward(x_nchw, params):
    x = jnp.transpose(x_nchw, (0, 2, 3, 1))
    for li, (stride, padding) in enumerate(_LAYER_CFG):
        last = li == len(_LAYER_CFG) - 1
        w = params[f"w{li}"]
        ci, co, k, _ = w.shape
        patches, (n, oh, ow) = _im2col_transposed(x, k, stride, padding)
        y = jnp.matmul(patches, _weight_matrix(w),
                       precision=jax.lax.Precision.HIGHEST)
        if not last:
            mean = jnp.mean(y, axis=0)
            var = jnp.var(y, axis=0)
            y = (y - mean) * jax.lax.rsqrt(var + 1e-5)
            y = y * params[f"gamma{li}"] + params[f"beta{li}"]
            y = jnp.maximum(y, 0.0)
        else:
            y = jnp.tanh(y)
        x = y.reshape(n, oh, ow, co)
    return jnp.transpose(x, (0, 3, 1, 2))


# ----------------------------------------------------------------------------
# Main
# ----------------------------------------------------------------------------
def _make_params(key):
    params = {}
    for li in range(5):
        key, kw, kg, kb = jax.random.split(key, 4)
        ci, co = _CHANNELS[li], _CHANNELS[li + 1]
        params[f"w{li}"] = 0.02 * jax.random.normal(kw, (ci, co, 4, 4), jnp.float32)
        if li < 4:
            params[f"gamma{li}"] = 1.0 + 0.05 * jax.random.normal(kg, (co,), jnp.float32)
            params[f"beta{li}"] = 0.05 * jax.random.normal(kb, (co,), jnp.float32)
    return params, key


if __name__ == "__main__":
    key = jax.random.PRNGKey(0)
    params, key = _make_params(key)
    key, kx = jax.random.split(key)
    # DCGAN latent input: (N, 100, 1, 1)
    x = jax.random.normal(kx, (2, 100, 1, 1), jnp.float32)

    fwd = jax.jit(gnet_forward)
    out = jax.block_until_ready(fwd(x, params))

    assert out.shape == (2, 3, 64, 64), out.shape
    assert bool(jnp.all(jnp.isfinite(out)))
    ref = jax.block_until_ready(jax.jit(_ref_forward)(x, params))
    assert bool(jnp.allclose(out, ref, atol=0.1)), float(jnp.max(jnp.abs(out - ref)))

    print("KERNEL_OK")
</pallas_src>

<mosaic_0001>
module attributes {stable_mosaic.version = 11 : i64} {
  func.func @_convt_bn_relu_kernel(%arg0: i32, %arg1: memref<32x1664xbf16, #tpu.memory_space<vmem>>, %arg2: memref<1664x128xbf16, #tpu.memory_space<vmem>>, %arg3: memref<1x128xf32, #tpu.memory_space<vmem>>, %arg4: memref<1x128xf32, #tpu.memory_space<vmem>>, %arg5: memref<32x64xbf16, #tpu.memory_space<vmem>>, %arg6: memref<32x128xf32, #tpu.memory_space<vmem>>, %arg7: memref<1x128xf32, #tpu.memory_space<vmem>>) attributes {dimension_semantics = [#tpu.dimension_semantics<arbitrary>], iteration_bounds = array<i64: 1>, scalar_prefetch = 0 : i64, scratch_operands = 2 : i64, tpu.core_type = #tpu.core_type<tc>, window_params = [{transform_indices = @transform_0, window_bounds = array<i64: 32, 1664>}, {pipeline_mode = #tpu.pipeline_mode<synchronous>, transform_indices = @transform_1, window_bounds = array<i64: 1664, 128>}, {pipeline_mode = #tpu.pipeline_mode<synchronous>, transform_indices = @transform_2, window_bounds = array<i64: 1, 128>}, {pipeline_mode = #tpu.pipeline_mode<synchronous>, transform_indices = @transform_3, window_bounds = array<i64: 1, 128>}, {pipeline_mode = #tpu.pipeline_mode<synchronous>, transform_indices = @transform_4, window_bounds = array<i64: 32, 64>}]} {
    %c0 = arith.constant 0 : index
    %c0_0 = arith.constant 0 : index
    %0 = vector.load %arg1[%c0, %c0_0] : memref<32x1664xbf16, #tpu.memory_space<vmem>>, vector<32x1664xbf16>
    %c0_1 = arith.constant 0 : index
    %c0_2 = arith.constant 0 : index
    %1 = vector.load %arg2[%c0_1, %c0_2] : memref<1664x128xbf16, #tpu.memory_space<vmem>>, vector<1664x128xbf16>
    %cst = arith.constant dense<0.000000e+00> : vector<32x128xf32>
    %2 = tpu.matmul %0, %1, %cst {dimension_numbers = #tpu.dot_dimension_numbers<[1], [0], [0], [1], [0, 0, 1, 1], [], []>} : vector<32x1664xbf16>, vector<1664x128xbf16>, vector<32x128xf32> -> vector<32x128xf32>
    %c32_i32 = arith.constant 32 : i32
    %3 = arith.muli %arg0, %c32_i32 : i32
    %4 = tpu.assume_multiple %3, 32 : i32
    %5 = arith.index_cast %4 : i32 to index
    %c0_3 = arith.constant 0 : index
    %6 = vector.load %arg6[%5, %c0_3] : memref<32x128xf32, #tpu.memory_space<vmem>>, vector<32x128xf32>
    tpu.vector_store %arg6[%5, %c0_3], %2 {strides = array<i32>} : memref<32x128xf32, #tpu.memory_space<vmem>>, vector<32x128xf32>,
    %c0_i32 = arith.constant 0 : i32
    %7 = arith.cmpi eq, %arg0, %c0_i32 : i32
    %8 = arith.extui %7 : i1 to i32
    %c0_i32_4 = arith.constant 0 : i32
    %9 = arith.cmpi ne, %8, %c0_i32_4 : i32
    scf.if %9 {
      %cst_12 = arith.constant 0.000000e+00 : f32
      %18 = vector.broadcast %cst_12 : f32 to vector<1x128xf32>
      %c0_13 = arith.constant 0 : index
      %c0_14 = arith.constant 0 : index
      %19 = vector.load %arg7[%c0_13, %c0_14] : memref<1x128xf32, #tpu.memory_space<vmem>>, vector<1x128xf32>
      tpu.vector_store %arg7[%c0_13, %c0_14], %18 {strides = array<i32>} : memref<1x128xf32, #tpu.memory_space<vmem>>, vector<1x128xf32>,
    } else {
    }
    %c0_5 = arith.constant 0 : index
    %c0_6 = arith.constant 0 : index
    %10 = vector.load %arg7[%c0_5, %c0_6] : memref<1x128xf32, #tpu.memory_space<vmem>>, vector<1x128xf32>
    %cst_7 = arith.constant dense<0.000000e+00> : vector<128xf32>
    %11 = vector.multi_reduction <add>, %2, %cst_7 [0] : vector<32x128xf32> to vector<128xf32>
    %12 = vector.shape_cast %11 : vector<128xf32> to vector<1x128xf32>
    %13 = arith.addf %10, %12 : vector<1x128xf32>
    %c0_8 = arith.constant 0 : index
    %c0_9 = arith.constant 0 : index
    %14 = vector.load %arg7[%c0_8, %c0_9] : memref<1x128xf32, #tpu.memory_space<vmem>>, vector<1x128xf32>
    tpu.vector_store %arg7[%c0_8, %c0_9], %13 {strides = array<i32>} : memref<1x128xf32, #tpu.memory_space<vmem>>, vector<1x128xf32>,
    %c0_i32_10 = arith.constant 0 : i32
    %15 = arith.cmpi eq, %arg0, %c0_i32_10 : i32
    %16 = arith.extui %15 : i1 to i32
    %c0_i32_11 = arith.constant 0 : i32
    %17 = arith.cmpi ne, %16, %c0_i32_11 : i32
    scf.if %17 {
      %c0_12 = arith.constant 0 : index
      %c0_13 = arith.constant 0 : index
      %18 = vector.load %arg7[%c0_12, %c0_13] : memref<1x128xf32, #tpu.memory_space<vmem>>, vector<1x128xf32>
      %cst_14 = arith.constant 3.125000e-02 : f32
      %19 = vector.broadcast %cst_14 : f32 to vector<1x128xf32>
      %20 = arith.mulf %18, %19 : vector<1x128xf32>
      %cst_15 = arith.constant 0.000000e+00 : f32
      %21 = vector.broadcast %cst_15 : f32 to vector<1x128xf32>
      %c0_16 = arith.constant 0 : index
      %c0_17 = arith.constant 0 : index
      %22 = vector.load %arg6[%c0_16, %c0_17] : memref<32x128xf32, #tpu.memory_space<vmem>>, vector<32x128xf32>
      %23 = vector.broadcast %20 : vector<1x128xf32> to vector<32x128xf32>
      %24 = arith.subf %22, %23 : vector<32x128xf32>
      %25 = arith.mulf %24, %24 : vector<32x128xf32>
      %cst_18 = arith.constant dense<0.000000e+00> : vector<128xf32>
      %26 = vector.multi_reduction <add>, %25, %cst_18 [0] : vector<32x128xf32> to vector<128xf32>
      %27 = vector.shape_cast %26 : vector<128xf32> to vector<1x128xf32>
      %28 = arith.addf %21, %27 : vector<1x128xf32>
      %cst_19 = arith.constant 3.125000e-02 : f32
      %29 = vector.broadcast %cst_19 : f32 to vector<1x128xf32>
      %30 = arith.mulf %28, %29 : vector<1x128xf32>
      %c0_20 = arith.constant 0 : index
      %c0_21 = arith.constant 0 : index
      %31 = vector.load %arg3[%c0_20, %c0_21] : memref<1x128xf32, #tpu.memory_space<vmem>>, vector<1x128xf32>
      %cst_22 = arith.constant 9.99999974E-6 : f32
      %32 = vector.broadcast %cst_22 : f32 to vector<1x128xf32>
      %33 = arith.addf %30, %32 : vector<1x128xf32>
      %34 = math.rsqrt %33 : vector<1x128xf32>
      %35 = arith.mulf %31, %34 : vector<1x128xf32>
      %c0_23 = arith.constant 0 : index
      %c0_24 = arith.constant 0 : index
      %36 = vector.load %arg4[%c0_23, %c0_24] : memref<1x128xf32, #tpu.memory_space<vmem>>, vector<1x128xf32>
      %37 = arith.mulf %20, %35 : vector<1x128xf32>
      %38 = arith.subf %36, %37 : vector<1x128xf32>
      %c0_25 = arith.constant 0 : index
      %c0_26 = arith.constant 0 : index
      %39 = vector.load %arg6[%c0_25, %c0_26] : memref<32x128xf32, #tpu.memory_space<vmem>>, vector<32x128xf32>
      %40 = vector.broadcast %35 : vector<1x128xf32> to vector<32x128xf32>
      %41 = arith.mulf %39, %40 : vector<32x128xf32>
      %42 = vector.broadcast %38 : vector<1x128xf32> to vector<32x128xf32>
      %43 = arith.addf %41, %42 : vector<32x128xf32>
      %cst_27 = arith.constant 0.000000e+00 : f32
      %44 = vector.broadcast %cst_27 : f32 to vector<32x128xf32>
      %45 = arith.maximumf %43, %44 : vector<32x128xf32>
      %46 = vector.extract_strided_slice %45 {offsets = [0, 0], sizes = [32, 64], strides = [1, 1]} : vector<32x128xf32> to vector<32x64xf32>
      %47 = arith.truncf %46 : vector<32x64xf32> to vector<32x64xbf16>
      %c0_28 = arith.constant 0 : index
      %c0_29 = arith.constant 0 : index
      %48 = vector.load %arg5[%c0_28, %c0_29] : memref<32x64xbf16, #tpu.memory_space<vmem>>, vector<32x64xbf16>
      tpu.vector_store %arg5[%c0_28, %c0_29], %47 {strides = array<i32>} : memref<32x64xbf16, #tpu.memory_space<vmem>>, vector<32x64xbf16>,
    } else {
    }
    return
  }
  func.func @transform_0(%arg0: i32) -> (i32, i32) {
    %c0_i32 = arith.constant 0 : i32
    %c0_i32_0 = arith.constant 0 : i32
    return %arg0, %c0_i32 : i32, i32
  }
  func.func @transform_1(%arg0: i32) -> (i32, i32) {
    %c0_i32 = arith.constant 0 : i32
    %c0_i32_0 = arith.constant 0 : i32
    %c0_i32_1 = arith.constant 0 : i32
    return %c0_i32, %c0_i32_0 : i32, i32
  }
  func.func @transform_2(%arg0: i32) -> (i32, i32) {
    %c0_i32 = arith.constant 0 : i32
    %c0_i32_0 = arith.constant 0 : i32
    %c0_i32_1 = arith.constant 0 : i32
    return %c0_i32, %c0_i32_0 : i32, i32
  }
  func.func @transform_3(%arg0: i32) -> (i32, i32) {
    %c0_i32 = arith.constant 0 : i32
    %c0_i32_0 = arith.constant 0 : i32
    %c0_i32_1 = arith.constant 0 : i32
    return %c0_i32, %c0_i32_0 : i32, i32
  }
  func.func @transform_4(%arg0: i32) -> (i32, i32) {
    %c0_i32 = arith.constant 0 : i32
    %c0_i32_0 = arith.constant 0 : i32
    %c0_i32_1 = arith.constant 0 : i32
    return %c0_i32, %c0_i32_0 : i32, i32
  }
}

module attributes {stable_mosaic.version = 11 : i64} {
  func.func @_convt_bn_relu_kernel(%arg0: i32, %arg1: memref<128x1024xbf16, #tpu.memory_space<vmem>>, %arg2: memref<1024x128xbf16, #tpu.memory_space<vmem>>, %arg3: memref<1x128xf32, #tpu.memory_space<vmem>>, %arg4: memref<1x128xf32, #tpu.memory_space<vmem>>, %arg5: memref<128x32xbf16, #tpu.memory_space<vmem>>, %arg6: memref<128x128xf32, #tpu.memory_space<vmem>>, %arg7: memref<1x128xf32, #tpu.memory_space<vmem>>) attributes {dimension_semantics = [#tpu.dimension_semantics<arbitrary>], iteration_bounds = array<i64: 1>, scalar_prefetch = 0 : i64, scratch_operands = 2 : i64, tpu.core_type = #tpu.core_type<tc>, window_params = [{transform_indices = @transform_0, window_bounds = array<i64: 128, 1024>}, {pipeline_mode = #tpu.pipeline_mode<synchronous>, transform_indices = @transform_1, window_bounds = array<i64: 1024, 128>}, {pipeline_mode = #tpu.pipeline_mode<synchronous>, transform_indices = @transform_2, window_bounds = array<i64: 1, 128>}, {pipeline_mode = #tpu.pipeline_mode<synchronous>, transform_indices = @transform_3, window_bounds = array<i64: 1, 128>}, {pipeline_mode = #tpu.pipeline_mode<synchronous>, transform_indices = @transform_4, window_bounds = array<i64: 128, 32>}]} {
    %c0 = arith.constant 0 : index
    %c0_0 = arith.constant 0 : index
    %0 = vector.load %arg1[%c0, %c0_0] : memref<128x1024xbf16, #tpu.memory_space<vmem>>, vector<128x1024xbf16>
    %c0_1 = arith.constant 0 : index
    %c0_2 = arith.constant 0 : index
    %1 = vector.load %arg2[%c0_1, %c0_2] : memref<1024x128xbf16, #tpu.memory_space<vmem>>, vector<1024x128xbf16>
    %cst = arith.constant dense<0.000000e+00> : vector<128x128xf32>
    %2 = tpu.matmul %0, %1, %cst {dimension_numbers = #tpu.dot_dimension_numbers<[1], [0], [0], [1], [0, 0, 1, 1], [], []>} : vector<128x1024xbf16>, vector<1024x128xbf16>, vector<128x128xf32> -> vector<128x128xf32>
    %c128_i32 = arith.constant 128 : i32
    %3 = arith.muli %arg0, %c128_i32 : i32
    %4 = tpu.assume_multiple %3, 128 : i32
    %5 = arith.index_cast %4 : i32 to index
    %c0_3 = arith.constant 0 : index
    %6 = vector.load %arg6[%5, %c0_3] : memref<128x128xf32, #tpu.memory_space<vmem>>, vector<128x128xf32>
    tpu.vector_store %arg6[%5, %c0_3], %2 {strides = array<i32>} : memref<128x128xf32, #tpu.memory_space<vmem>>, vector<128x128xf32>,
    %c0_i32 = arith.constant 0 : i32
    %7 = arith.cmpi eq, %arg0, %c0_i32 : i32
    %8 = arith.extui %7 : i1 to i32
    %c0_i32_4 = arith.constant 0 : i32
    %9 = arith.cmpi ne, %8, %c0_i32_4 : i32
    scf.if %9 {
      %cst_12 = arith.constant 0.000000e+00 : f32
      %18 = vector.broadcast %cst_12 : f32 to vector<1x128xf32>
      %c0_13 = arith.constant 0 : index
      %c0_14 = arith.constant 0 : index
      %19 = vector.load %arg7[%c0_13, %c0_14] : memref<1x128xf32, #tpu.memory_space<vmem>>, vector<1x128xf32>
      tpu.vector_store %arg7[%c0_13, %c0_14], %18 {strides = array<i32>} : memref<1x128xf32, #tpu.memory_space<vmem>>, vector<1x128xf32>,
    } else {
    }
    %c0_5 = arith.constant 0 : index
    %c0_6 = arith.constant 0 : index
    %10 = vector.load %arg7[%c0_5, %c0_6] : memref<1x128xf32, #tpu.memory_space<vmem>>, vector<1x128xf32>
    %cst_7 = arith.constant dense<0.000000e+00> : vector<128xf32>
    %11 = vector.multi_reduction <add>, %2, %cst_7 [0] : vector<128x128xf32> to vector<128xf32>
    %12 = vector.shape_cast %11 : vector<128xf32> to vector<1x128xf32>
    %13 = arith.addf %10, %12 : vector<1x128xf32>
    %c0_8 = arith.constant 0 : index
    %c0_9 = arith.constant 0 : index
    %14 = vector.load %arg7[%c0_8, %c0_9] : memref<1x128xf32, #tpu.memory_space<vmem>>, vector<1x128xf32>
    tpu.vector_store %arg7[%c0_8, %c0_9], %13 {strides = array<i32>} : memref<1x128xf32, #tpu.memory_space<vmem>>, vector<1x128xf32>,
    %c0_i32_10 = arith.constant 0 : i32
    %15 = arith.cmpi eq, %arg0, %c0_i32_10 : i32
    %16 = arith.extui %15 : i1 to i32
    %c0_i32_11 = arith.constant 0 : i32
    %17 = arith.cmpi ne, %16, %c0_i32_11 : i32
    scf.if %17 {
      %c0_12 = arith.constant 0 : index
      %c0_13 = arith.constant 0 : index
      %18 = vector.load %arg7[%c0_12, %c0_13] : memref<1x128xf32, #tpu.memory_space<vmem>>, vector<1x128xf32>
      %cst_14 = arith.constant 7.812500e-03 : f32
      %19 = vector.broadcast %cst_14 : f32 to vector<1x128xf32>
      %20 = arith.mulf %18, %19 : vector<1x128xf32>
      %cst_15 = arith.constant 0.000000e+00 : f32
      %21 = vector.broadcast %cst_15 : f32 to vector<1x128xf32>
      %c0_16 = arith.constant 0 : index
      %c0_17 = arith.constant 0 : index
      %22 = vector.load %arg6[%c0_16, %c0_17] : memref<128x128xf32, #tpu.memory_space<vmem>>, vector<128x128xf32>
      %23 = vector.broadcast %20 : vector<1x128xf32> to vector<128x128xf32>
      %24 = arith.subf %22, %23 : vector<128x128xf32>
      %25 = arith.mulf %24, %24 : vector<128x128xf32>
      %cst_18 = arith.constant dense<0.000000e+00> : vector<128xf32>
      %26 = vector.multi_reduction <add>, %25, %cst_18 [0] : vector<128x128xf32> to vector<128xf32>
      %27 = vector.shape_cast %26 : vector<128xf32> to vector<1x128xf32>
      %28 = arith.addf %21, %27 : vector<1x128xf32>
      %cst_19 = arith.constant 7.812500e-03 : f32
      %29 = vector.broadcast %cst_19 : f32 to vector<1x128xf32>
      %30 = arith.mulf %28, %29 : vector<1x128xf32>
      %c0_20 = arith.constant 0 : index
      %c0_21 = arith.constant 0 : index
      %31 = vector.load %arg3[%c0_20, %c0_21] : memref<1x128xf32, #tpu.memory_space<vmem>>, vector<1x128xf32>
      %cst_22 = arith.constant 9.99999974E-6 : f32
      %32 = vector.broadcast %cst_22 : f32 to vector<1x128xf32>
      %33 = arith.addf %30, %32 : vector<1x128xf32>
      %34 = math.rsqrt %33 : vector<1x128xf32>
      %35 = arith.mulf %31, %34 : vector<1x128xf32>
      %c0_23 = arith.constant 0 : index
      %c0_24 = arith.constant 0 : index
      %36 = vector.load %arg4[%c0_23, %c0_24] : memref<1x128xf32, #tpu.memory_space<vmem>>, vector<1x128xf32>
      %37 = arith.mulf %20, %35 : vector<1x128xf32>
      %38 = arith.subf %36, %37 : vector<1x128xf32>
      %c0_25 = arith.constant 0 : index
      %c0_26 = arith.constant 0 : index
      %39 = vector.load %arg6[%c0_25, %c0_26] : memref<128x128xf32, #tpu.memory_space<vmem>>, vector<128x128xf32>
      %40 = vector.broadcast %35 : vector<1x128xf32> to vector<128x128xf32>
      %41 = arith.mulf %39, %40 : vector<128x128xf32>
      %42 = vector.broadcast %38 : vector<1x128xf32> to vector<128x128xf32>
      %43 = arith.addf %41, %42 : vector<128x128xf32>
      %cst_27 = arith.constant 0.000000e+00 : f32
      %44 = vector.broadcast %cst_27 : f32 to vector<128x128xf32>
      %45 = arith.maximumf %43, %44 : vector<128x128xf32>
      %46 = vector.extract_strided_slice %45 {offsets = [0, 0], sizes = [128, 32], strides = [1, 1]} : vector<128x128xf32> to vector<128x32xf32>
      %47 = arith.truncf %46 : vector<128x32xf32> to vector<128x32xbf16>
      %c0_28 = arith.constant 0 : index
      %c0_29 = arith.constant 0 : index
      %48 = vector.load %arg5[%c0_28, %c0_29] : memref<128x32xbf16, #tpu.memory_space<vmem>>, vector<128x32xbf16>
      tpu.vector_store %arg5[%c0_28, %c0_29], %47 {strides = array<i32>} : memref<128x32xbf16, #tpu.memory_space<vmem>>, vector<128x32xbf16>,
    } else {
    }
    return
  }
  func.func @transform_0(%arg0: i32) -> (i32, i32) {
    %c0_i32 = arith.constant 0 : i32
    %c0_i32_0 = arith.constant 0 : i32
    return %arg0, %c0_i32 : i32, i32
  }
  func.func @transform_1(%arg0: i32) -> (i32, i32) {
    %c0_i32 = arith.constant 0 : i32
    %c0_i32_0 = arith.constant 0 : i32
    %c0_i32_1 = arith.constant 0 : i32
    return %c0_i32, %c0_i32_0 : i32, i32
  }
  func.func @transform_2(%arg0: i32) -> (i32, i32) {
    %c0_i32 = arith.constant 0 : i32
    %c0_i32_0 = arith.constant 0 : i32
    %c0_i32_1 = arith.constant 0 : i32
    return %c0_i32, %c0_i32_0 : i32, i32
  }
  func.func @transform_3(%arg0: i32) -> (i32, i32) {
    %c0_i32 = arith.constant 0 : i32
    %c0_i32_0 = arith.constant 0 : i32
    %c0_i32_1 = arith.constant 0 : i32
    return %c0_i32, %c0_i32_0 : i32, i32
  }
  func.func @transform_4(%arg0: i32) -> (i32, i32) {
    %c0_i32 = arith.constant 0 : i32
    %c0_i32_0 = arith.constant 0 : i32
    %c0_i32_1 = arith.constant 0 : i32
    return %c0_i32, %c0_i32_0 : i32, i32
  }
}

module attributes {stable_mosaic.version = 11 : i64} {
  func.func @_convt_bn_relu_kernel(%arg0: i32, %arg1: memref<512x512xbf16, #tpu.memory_space<vmem>>, %arg2: memref<512x128xbf16, #tpu.memory_space<vmem>>, %arg3: memref<1x128xf32, #tpu.memory_space<vmem>>, %arg4: memref<1x128xf32, #tpu.memory_space<vmem>>, %arg5: memref<512x16xbf16, #tpu.memory_space<vmem>>, %arg6: memref<512x128xf32, #tpu.memory_space<vmem>>, %arg7: memref<1x128xf32, #tpu.memory_space<vmem>>) attributes {dimension_semantics = [#tpu.dimension_semantics<arbitrary>], iteration_bounds = array<i64: 1>, scalar_prefetch = 0 : i64, scratch_operands = 2 : i64, tpu.core_type = #tpu.core_type<tc>, window_params = [{transform_indices = @transform_0, window_bounds = array<i64: 512, 512>}, {pipeline_mode = #tpu.pipeline_mode<synchronous>, transform_indices = @transform_1, window_bounds = array<i64: 512, 128>}, {pipeline_mode = #tpu.pipeline_mode<synchronous>, transform_indices = @transform_2, window_bounds = array<i64: 1, 128>}, {pipeline_mode = #tpu.pipeline_mode<synchronous>, transform_indices = @transform_3, window_bounds = array<i64: 1, 128>}, {pipeline_mode = #tpu.pipeline_mode<synchronous>, transform_indices = @transform_4, window_bounds = array<i64: 512, 16>}]} {
    %c0 = arith.constant 0 : index
    %c0_0 = arith.constant 0 : index
    %0 = vector.load %arg1[%c0, %c0_0] : memref<512x512xbf16, #tpu.memory_space<vmem>>, vector<512x512xbf16>
    %c0_1 = arith.constant 0 : index
    %c0_2 = arith.constant 0 : index
    %1 = vector.load %arg2[%c0_1, %c0_2] : memref<512x128xbf16, #tpu.memory_space<vmem>>, vector<512x128xbf16>
    %cst = arith.constant dense<0.000000e+00> : vector<512x128xf32>
    %2 = tpu.matmul %0, %1, %cst {dimension_numbers = #tpu.dot_dimension_numbers<[1], [0], [0], [1], [0, 0, 1, 1], [], []>} : vector<512x512xbf16>, vector<512x128xbf16>, vector<512x128xf32> -> vector<512x128xf32>
    %c512_i32 = arith.constant 512 : i32
    %3 = arith.muli %arg0, %c512_i32 : i32
    %4 = tpu.assume_multiple %3, 512 : i32
    %5 = arith.index_cast %4 : i32 to index
    %c0_3 = arith.constant 0 : index
    %6 = vector.load %arg6[%5, %c0_3] : memref<512x128xf32, #tpu.memory_space<vmem>>, vector<512x128xf32>
    tpu.vector_store %arg6[%5, %c0_3], %2 {strides = array<i32>} : memref<512x128xf32, #tpu.memory_space<vmem>>, vector<512x128xf32>,
    %c0_i32 = arith.constant 0 : i32
    %7 = arith.cmpi eq, %arg0, %c0_i32 : i32
    %8 = arith.extui %7 : i1 to i32
    %c0_i32_4 = arith.constant 0 : i32
    %9 = arith.cmpi ne, %8, %c0_i32_4 : i32
    scf.if %9 {
      %cst_12 = arith.constant 0.000000e+00 : f32
      %18 = vector.broadcast %cst_12 : f32 to vector<1x128xf32>
      %c0_13 = arith.constant 0 : index
      %c0_14 = arith.constant 0 : index
      %19 = vector.load %arg7[%c0_13, %c0_14] : memref<1x128xf32, #tpu.memory_space<vmem>>, vector<1x128xf32>
      tpu.vector_store %arg7[%c0_13, %c0_14], %18 {strides = array<i32>} : memref<1x128xf32, #tpu.memory_space<vmem>>, vector<1x128xf32>,
    } else {
    }
    %c0_5 = arith.constant 0 : index
    %c0_6 = arith.constant 0 : index
    %10 = vector.load %arg7[%c0_5, %c0_6] : memref<1x128xf32, #tpu.memory_space<vmem>>, vector<1x128xf32>
    %cst_7 = arith.constant dense<0.000000e+00> : vector<128xf32>
    %11 = vector.multi_reduction <add>, %2, %cst_7 [0] : vector<512x128xf32> to vector<128xf32>
    %12 = vector.shape_cast %11 : vector<128xf32> to vector<1x128xf32>
    %13 = arith.addf %10, %12 : vector<1x128xf32>
    %c0_8 = arith.constant 0 : index
    %c0_9 = arith.constant 0 : index
    %14 = vector.load %arg7[%c0_8, %c0_9] : memref<1x128xf32, #tpu.memory_space<vmem>>, vector<1x128xf32>
    tpu.vector_store %arg7[%c0_8, %c0_9], %13 {strides = array<i32>} : memref<1x128xf32, #tpu.memory_space<vmem>>, vector<1x128xf32>,
    %c0_i32_10 = arith.constant 0 : i32
    %15 = arith.cmpi eq, %arg0, %c0_i32_10 : i32
    %16 = arith.extui %15 : i1 to i32
    %c0_i32_11 = arith.constant 0 : i32
    %17 = arith.cmpi ne, %16, %c0_i32_11 : i32
    scf.if %17 {
      %c0_12 = arith.constant 0 : index
      %c0_13 = arith.constant 0 : index
      %18 = vector.load %arg7[%c0_12, %c0_13] : memref<1x128xf32, #tpu.memory_space<vmem>>, vector<1x128xf32>
      %cst_14 = arith.constant 0.001953125 : f32
      %19 = vector.broadcast %cst_14 : f32 to vector<1x128xf32>
      %20 = arith.mulf %18, %19 : vector<1x128xf32>
      %cst_15 = arith.constant 0.000000e+00 : f32
      %21 = vector.broadcast %cst_15 : f32 to vector<1x128xf32>
      %c0_16 = arith.constant 0 : index
      %c0_17 = arith.constant 0 : index
      %22 = vector.load %arg6[%c0_16, %c0_17] : memref<512x128xf32, #tpu.memory_space<vmem>>, vector<512x128xf32>
      %23 = vector.broadcast %20 : vector<1x128xf32> to vector<512x128xf32>
      %24 = arith.subf %22, %23 : vector<512x128xf32>
      %25 = arith.mulf %24, %24 : vector<512x128xf32>
      %cst_18 = arith.constant dense<0.000000e+00> : vector<128xf32>
      %26 = vector.multi_reduction <add>, %25, %cst_18 [0] : vector<512x128xf32> to vector<128xf32>
      %27 = vector.shape_cast %26 : vector<128xf32> to vector<1x128xf32>
      %28 = arith.addf %21, %27 : vector<1x128xf32>
      %cst_19 = arith.constant 0.001953125 : f32
      %29 = vector.broadcast %cst_19 : f32 to vector<1x128xf32>
      %30 = arith.mulf %28, %29 : vector<1x128xf32>
      %c0_20 = arith.constant 0 : index
      %c0_21 = arith.constant 0 : index
      %31 = vector.load %arg3[%c0_20, %c0_21] : memref<1x128xf32, #tpu.memory_space<vmem>>, vector<1x128xf32>
      %cst_22 = arith.constant 9.99999974E-6 : f32
      %32 = vector.broadcast %cst_22 : f32 to vector<1x128xf32>
      %33 = arith.addf %30, %32 : vector<1x128xf32>
      %34 = math.rsqrt %33 : vector<1x128xf32>
      %35 = arith.mulf %31, %34 : vector<1x128xf32>
      %c0_23 = arith.constant 0 : index
      %c0_24 = arith.constant 0 : index
      %36 = vector.load %arg4[%c0_23, %c0_24] : memref<1x128xf32, #tpu.memory_space<vmem>>, vector<1x128xf32>
      %37 = arith.mulf %20, %35 : vector<1x128xf32>
      %38 = arith.subf %36, %37 : vector<1x128xf32>
      %c0_25 = arith.constant 0 : index
      %c0_26 = arith.constant 0 : index
      %39 = vector.load %arg6[%c0_25, %c0_26] : memref<512x128xf32, #tpu.memory_space<vmem>>, vector<512x128xf32>
      %40 = vector.broadcast %35 : vector<1x128xf32> to vector<512x128xf32>
      %41 = arith.mulf %39, %40 : vector<512x128xf32>
      %42 = vector.broadcast %38 : vector<1x128xf32> to vector<512x128xf32>
      %43 = arith.addf %41, %42 : vector<512x128xf32>
      %cst_27 = arith.constant 0.000000e+00 : f32
      %44 = vector.broadcast %cst_27 : f32 to vector<512x128xf32>
      %45 = arith.maximumf %43, %44 : vector<512x128xf32>
      %46 = vector.extract_strided_slice %45 {offsets = [0, 0], sizes = [512, 16], strides = [1, 1]} : vector<512x128xf32> to vector<512x16xf32>
      %47 = arith.truncf %46 : vector<512x16xf32> to vector<512x16xbf16>
      %c0_28 = arith.constant 0 : index
      %c0_29 = arith.constant 0 : index
      %48 = vector.load %arg5[%c0_28, %c0_29] : memref<512x16xbf16, #tpu.memory_space<vmem>>, vector<512x16xbf16>
      tpu.vector_store %arg5[%c0_28, %c0_29], %47 {strides = array<i32>} : memref<512x16xbf16, #tpu.memory_space<vmem>>, vector<512x16xbf16>,
    } else {
    }
    return
  }
  func.func @transform_0(%arg0: i32) -> (i32, i32) {
    %c0_i32 = arith.constant 0 : i32
    %c0_i32_0 = arith.constant 0 : i32
    return %arg0, %c0_i32 : i32, i32
  }
  func.func @transform_1(%arg0: i32) -> (i32, i32) {
    %c0_i32 = arith.constant 0 : i32
    %c0_i32_0 = arith.constant 0 : i32
    %c0_i32_1 = arith.constant 0 : i32
    return %c0_i32, %c0_i32_0 : i32, i32
  }
  func.func @transform_2(%arg0: i32) -> (i32, i32) {
    %c0_i32 = arith.constant 0 : i32
    %c0_i32_0 = arith.constant 0 : i32
    %c0_i32_1 = arith.constant 0 : i32
    return %c0_i32, %c0_i32_0 : i32, i32
  }
  func.func @transform_3(%arg0: i32) -> (i32, i32) {
    %c0_i32 = arith.constant 0 : i32
    %c0_i32_0 = arith.constant 0 : i32
    %c0_i32_1 = arith.constant 0 : i32
    return %c0_i32, %c0_i32_0 : i32, i32
  }
  func.func @transform_4(%arg0: i32) -> (i32, i32) {
    %c0_i32 = arith.constant 0 : i32
    %c0_i32_0 = arith.constant 0 : i32
    %c0_i32_1 = arith.constant 0 : i32
    return %c0_i32, %c0_i32_0 : i32, i32
  }
}

module attributes {stable_mosaic.version = 11 : i64} {
  func.func @_convt_bn_relu_kernel(%arg0: i32, %arg1: memref<1024x256xbf16, #tpu.memory_space<vmem>>, %arg2: memref<256x128xbf16, #tpu.memory_space<vmem>>, %arg3: memref<1x128xf32, #tpu.memory_space<vmem>>, %arg4: memref<1x128xf32, #tpu.memory_space<vmem>>, %arg5: memref<2048x8xbf16, #tpu.memory_space<vmem>>, %arg6: memref<2048x128xf32, #tpu.memory_space<vmem>>, %arg7: memref<1x128xf32, #tpu.memory_space<vmem>>) attributes {dimension_semantics = [#tpu.dimension_semantics<arbitrary>], iteration_bounds = array<i64: 2>, scalar_prefetch = 0 : i64, scratch_operands = 2 : i64, tpu.core_type = #tpu.core_type<tc>, window_params = [{transform_indices = @transform_0, window_bounds = array<i64: 1024, 256>}, {pipeline_mode = #tpu.pipeline_mode<synchronous>, transform_indices = @transform_1, window_bounds = array<i64: 256, 128>}, {pipeline_mode = #tpu.pipeline_mode<synchronous>, transform_indices = @transform_2, window_bounds = array<i64: 1, 128>}, {pipeline_mode = #tpu.pipeline_mode<synchronous>, transform_indices = @transform_3, window_bounds = array<i64: 1, 128>}, {pipeline_mode = #tpu.pipeline_mode<synchronous>, transform_indices = @transform_4, window_bounds = array<i64: 2048, 8>}]} {
    %c0 = arith.constant 0 : index
    %c0_0 = arith.constant 0 : index
    %0 = vector.load %arg1[%c0, %c0_0] : memref<1024x256xbf16, #tpu.memory_space<vmem>>, vector<1024x256xbf16>
    %c0_1 = arith.constant 0 : index
    %c0_2 = arith.constant 0 : index
    %1 = vector.load %arg2[%c0_1, %c0_2] : memref<256x128xbf16, #tpu.memory_space<vmem>>, vector<256x128xbf16>
    %cst = arith.constant dense<0.000000e+00> : vector<1024x128xf32>
    %2 = tpu.matmul %0, %1, %cst {dimension_numbers = #tpu.dot_dimension_numbers<[1], [0], [0], [1], [0, 0, 1, 1], [], []>} : vector<1024x256xbf16>, vector<256x128xbf16>, vector<1024x128xf32> -> vector<1024x128xf32>
    %c1024_i32 = arith.constant 1024 : i32
    %3 = arith.muli %arg0, %c1024_i32 : i32
    %4 = tpu.assume_multiple %3, 1024 : i32
    %5 = arith.index_cast %4 : i32 to index
    %c0_3 = arith.constant 0 : index
    %6 = vector.load %arg6[%5, %c0_3] : memref<2048x128xf32, #tpu.memory_space<vmem>>, vector<1024x128xf32>
    tpu.vector_store %arg6[%5, %c0_3], %2 {strides = array<i32>} : memref<2048x128xf32, #tpu.memory_space<vmem>>, vector<1024x128xf32>,
    %c0_i32 = arith.constant 0 : i32
    %7 = arith.cmpi eq, %arg0, %c0_i32 : i32
    %8 = arith.extui %7 : i1 to i32
    %c0_i32_4 = arith.constant 0 : i32
    %9 = arith.cmpi ne, %8, %c0_i32_4 : i32
    scf.if %9 {
      %cst_11 = arith.constant 0.000000e+00 : f32
      %18 = vector.broadcast %cst_11 : f32 to vector<1x128xf32>
      %c0_12 = arith.constant 0 : index
      %c0_13 = arith.constant 0 : index
      %19 = vector.load %arg7[%c0_12, %c0_13] : memref<1x128xf32, #tpu.memory_space<vmem>>, vector<1x128xf32>
      tpu.vector_store %arg7[%c0_12, %c0_13], %18 {strides = array<i32>} : memref<1x128xf32, #tpu.memory_space<vmem>>, vector<1x128xf32>,
    } else {
    }
    %c0_5 = arith.constant 0 : index
    %c0_6 = arith.constant 0 : index
    %10 = vector.load %arg7[%c0_5, %c0_6] : memref<1x128xf32, #tpu.memory_space<vmem>>, vector<1x128xf32>
    %cst_7 = arith.constant dense<0.000000e+00> : vector<128xf32>
    %11 = vector.multi_reduction <add>, %2, %cst_7 [0] : vector<1024x128xf32> to vector<128xf32>
    %12 = vector.shape_cast %11 : vector<128xf32> to vector<1x128xf32>
    %13 = arith.addf %10, %12 : vector<1x128xf32>
    %c0_8 = arith.constant 0 : index
    %c0_9 = arith.constant 0 : index
    %14 = vector.load %arg7[%c0_8, %c0_9] : memref<1x128xf32, #tpu.memory_space<vmem>>, vector<1x128xf32>
    tpu.vector_store %arg7[%c0_8, %c0_9], %13 {strides = array<i32>} : memref<1x128xf32, #tpu.memory_space<vmem>>, vector<1x128xf32>,
    %c1_i32 = arith.constant 1 : i32
    %15 = arith.cmpi eq, %arg0, %c1_i32 : i32
    %16 = arith.extui %15 : i1 to i32
    %c0_i32_10 = arith.constant 0 : i32
    %17 = arith.cmpi ne, %16, %c0_i32_10 : i32
    scf.if %17 {
      %c0_11 = arith.constant 0 : index
      %c0_12 = arith.constant 0 : index
      %18 = vector.load %arg7[%c0_11, %c0_12] : memref<1x128xf32, #tpu.memory_space<vmem>>, vector<1x128xf32>
      %cst_13 = arith.constant 4.8828125E-4 : f32
      %19 = vector.broadcast %cst_13 : f32 to vector<1x128xf32>
      %20 = arith.mulf %18, %19 : vector<1x128xf32>
      %cst_14 = arith.constant 0.000000e+00 : f32
      %21 = vector.broadcast %cst_14 : f32 to vector<1x128xf32>
      %c0_15 = arith.constant 0 : index
      %c0_16 = arith.constant 0 : index
      %22 = vector.load %arg6[%c0_15, %c0_16] : memref<2048x128xf32, #tpu.memory_space<vmem>>, vector<1024x128xf32>
      %23 = vector.broadcast %20 : vector<1x128xf32> to vector<1024x128xf32>
      %24 = arith.subf %22, %23 : vector<1024x128xf32>
      %25 = arith.mulf %24, %24 : vector<1024x128xf32>
      %cst_17 = arith.constant dense<0.000000e+00> : vector<128xf32>
      %26 = vector.multi_reduction <add>, %25, %cst_17 [0] : vector<1024x128xf32> to vector<128xf32>
      %27 = vector.shape_cast %26 : vector<128xf32> to vector<1x128xf32>
      %28 = arith.addf %21, %27 : vector<1x128xf32>
      %c1024 = arith.constant 1024 : index
      %c0_18 = arith.constant 0 : index
      %29 = vector.load %arg6[%c1024, %c0_18] : memref<2048x128xf32, #tpu.memory_space<vmem>>, vector<1024x128xf32>
      %30 = vector.broadcast %20 : vector<1x128xf32> to vector<1024x128xf32>
      %31 = arith.subf %29, %30 : vector<1024x128xf32>
      %32 = arith.mulf %31, %31 : vector<1024x128xf32>
      %cst_19 = arith.constant dense<0.000000e+00> : vector<128xf32>
      %33 = vector.multi_reduction <add>, %32, %cst_19 [0] : vector<1024x128xf32> to vector<128xf32>
      %34 = vector.shape_cast %33 : vector<128xf32> to vector<1x128xf32>
      %35 = arith.addf %28, %34 : vector<1x128xf32>
      %cst_20 = arith.constant 4.8828125E-4 : f32
      %36 = vector.broadcast %cst_20 : f32 to vector<1x128xf32>
      %37 = arith.mulf %35, %36 : vector<1x128xf32>
      %c0_21 = arith.constant 0 : index
      %c0_22 = arith.constant 0 : index
      %38 = vector.load %arg3[%c0_21, %c0_22] : memref<1x128xf32, #tpu.memory_space<vmem>>, vector<1x128xf32>
      %cst_23 = arith.constant 9.99999974E-6 : f32
      %39 = vector.broadcast %cst_23 : f32 to vector<1x128xf32>
      %40 = arith.addf %37, %39 : vector<1x128xf32>
      %41 = math.rsqrt %40 : vector<1x128xf32>
      %42 = arith.mulf %38, %41 : vector<1x128xf32>
      %c0_24 = arith.constant 0 : index
      %c0_25 = arith.constant 0 : index
      %43 = vector.load %arg4[%c0_24, %c0_25] : memref<1x128xf32, #tpu.memory_space<vmem>>, vector<1x128xf32>
      %44 = arith.mulf %20, %42 : vector<1x128xf32>
      %45 = arith.subf %43, %44 : vector<1x128xf32>
      %c0_26 = arith.constant 0 : index
      %c0_27 = arith.constant 0 : index
      %46 = vector.load %arg6[%c0_26, %c0_27] : memref<2048x128xf32, #tpu.memory_space<vmem>>, vector<1024x128xf32>
      %47 = vector.broadcast %42 : vector<1x128xf32> to vector<1024x128xf32>
      %48 = arith.mulf %46, %47 : vector<1024x128xf32>
      %49 = vector.broadcast %45 : vector<1x128xf32> to vector<1024x128xf32>
      %50 = arith.addf %48, %49 : vector<1024x128xf32>
      %cst_28 = arith.constant 0.000000e+00 : f32
      %51 = vector.broadcast %cst_28 : f32 to vector<1024x128xf32>
      %52 = arith.maximumf %50, %51 : vector<1024x128xf32>
      %53 = vector.extract_strided_slice %52 {offsets = [0, 0], sizes = [1024, 8], strides = [1, 1]} : vector<1024x128xf32> to vector<1024x8xf32>
      %54 = arith.truncf %53 : vector<1024x8xf32> to vector<1024x8xbf16>
      %c0_29 = arith.constant 0 : index
      %c0_30 = arith.constant 0 : index
      %55 = vector.load %arg5[%c0_29, %c0_30] : memref<2048x8xbf16, #tpu.memory_space<vmem>>, vector<1024x8xbf16>
      tpu.vector_store %arg5[%c0_29, %c0_30], %54 {strides = array<i32>} : memref<2048x8xbf16, #tpu.memory_space<vmem>>, vector<1024x8xbf16>,
      %c1024_31 = arith.constant 1024 : index
      %c0_32 = arith.constant 0 : index
      %56 = vector.load %arg6[%c1024_31, %c0_32] : memref<2048x128xf32, #tpu.memory_space<vmem>>, vector<1024x128xf32>
      %57 = vector.broadcast %42 : vector<1x128xf32> to vector<1024x128xf32>
      %58 = arith.mulf %56, %57 : vector<1024x128xf32>
      %59 = vector.broadcast %45 : vector<1x128xf32> to vector<1024x128xf32>
      %60 = arith.addf %58, %59 : vector<1024x128xf32>
      %cst_33 = arith.constant 0.000000e+00 : f32
      %61 = vector.broadcast %cst_33 : f32 to vector<1024x128xf32>
      %62 = arith.maximumf %60, %61 : vector<1024x128xf32>
      %63 = vector.extract_strided_slice %62 {offsets = [0, 0], sizes = [1024, 8], strides = [1, 1]} : vector<1024x128xf32> to vector<1024x8xf32>
      %64 = arith.truncf %63 : vector<1024x8xf32> to vector<1024x8xbf16>
      %c1024_34 = arith.constant 1024 : index
      %c0_35 = arith.constant 0 : index
      %65 = vector.load %arg5[%c1024_34, %c0_35] : memref<2048x8xbf16, #tpu.memory_space<vmem>>, vector<1024x8xbf16>
      tpu.vector_store %arg5[%c1024_34, %c0_35], %64 {strides = array<i32>} : memref<2048x8xbf16, #tpu.memory_space<vmem>>, vector<1024x8xbf16>,
    } else {
    }
    return
  }
  func.func @transform_0(%arg0: i32) -> (i32, i32) {
    %c0_i32 = arith.constant 0 : i32
    %c0_i32_0 = arith.constant 0 : i32
    return %arg0, %c0_i32 : i32, i32
  }
  func.func @transform_1(%arg0: i32) -> (i32, i32) {
    %c0_i32 = arith.constant 0 : i32
    %c0_i32_0 = arith.constant 0 : i32
    %c0_i32_1 = arith.constant 0 : i32
    return %c0_i32, %c0_i32_0 : i32, i32
  }
  func.func @transform_2(%arg0: i32) -> (i32, i32) {
    %c0_i32 = arith.constant 0 : i32
    %c0_i32_0 = arith.constant 0 : i32
    %c0_i32_1 = arith.constant 0 : i32
    return %c0_i32, %c0_i32_0 : i32, i32
  }
  func.func @transform_3(%arg0: i32) -> (i32, i32) {
    %c0_i32 = arith.constant 0 : i32
    %c0_i32_0 = arith.constant 0 : i32
    %c0_i32_1 = arith.constant 0 : i32
    return %c0_i32, %c0_i32_0 : i32, i32
  }
  func.func @transform_4(%arg0: i32) -> (i32, i32) {
    %c0_i32 = arith.constant 0 : i32
    %c0_i32_0 = arith.constant 0 : i32
    %c0_i32_1 = arith.constant 0 : i32
    return %c0_i32, %c0_i32_0 : i32, i32
  }
}

module attributes {stable_mosaic.version = 11 : i64} {
  func.func @_convt_tanh_kernel(%arg0: i32, %arg1: memref<1024x128xbf16, #tpu.memory_space<vmem>>, %arg2: memref<128x128xbf16, #tpu.memory_space<vmem>>, %arg3: memref<1024x3xf32, #tpu.memory_space<vmem>>) attributes {dimension_semantics = [#tpu.dimension_semantics<parallel>], iteration_bounds = array<i64: 8>, scalar_prefetch = 0 : i64, scratch_operands = 0 : i64, tpu.core_type = #tpu.core_type<tc>, window_params = [{transform_indices = @transform_0, window_bounds = array<i64: 1024, 128>}, {pipeline_mode = #tpu.pipeline_mode<synchronous>, transform_indices = @transform_1, window_bounds = array<i64: 128, 128>}, {transform_indices = @transform_2, window_bounds = array<i64: 1024, 3>}]} {
    %c0 = arith.constant 0 : index
    %c0_0 = arith.constant 0 : index
    %0 = vector.load %arg1[%c0, %c0_0] : memref<1024x128xbf16, #tpu.memory_space<vmem>>, vector<1024x128xbf16>
    %c0_1 = arith.constant 0 : index
    %c0_2 = arith.constant 0 : index
    %1 = vector.load %arg2[%c0_1, %c0_2] : memref<128x128xbf16, #tpu.memory_space<vmem>>, vector<128x128xbf16>
    %cst = arith.constant dense<0.000000e+00> : vector<1024x128xf32>
    %2 = tpu.matmul %0, %1, %cst {dimension_numbers = #tpu.dot_dimension_numbers<[1], [0], [0], [1], [0, 0, 1, 1], [], []>} : vector<1024x128xbf16>, vector<128x128xbf16>, vector<1024x128xf32> -> vector<1024x128xf32>
    %3 = vector.extract_strided_slice %2 {offsets = [0, 0], sizes = [1024, 3], strides = [1, 1]} : vector<1024x128xf32> to vector<1024x3xf32>
    %4 = math.tanh %3 : vector<1024x3xf32>
    %c0_3 = arith.constant 0 : index
    %c0_4 = arith.constant 0 : index
    %5 = vector.load %arg3[%c0_3, %c0_4] : memref<1024x3xf32, #tpu.memory_space<vmem>>, vector<1024x3xf32>
    tpu.vector_store %arg3[%c0_3, %c0_4], %4 {strides = array<i32>} : memref<1024x3xf32, #tpu.memory_space<vmem>>, vector<1024x3xf32>,
    return
  }
  func.func @transform_0(%arg0: i32) -> (i32, i32) {
    %c0_i32 = arith.constant 0 : i32
    %c0_i32_0 = arith.constant 0 : i32
    return %arg0, %c0_i32 : i32, i32
  }
  func.func @transform_1(%arg0: i32) -> (i32, i32) {
    %c0_i32 = arith.constant 0 : i32
    %c0_i32_0 = arith.constant 0 : i32
    %c0_i32_1 = arith.constant 0 : i32
    return %c0_i32, %c0_i32_0 : i32, i32
  }
  func.func @transform_2(%arg0: i32) -> (i32, i32) {
    %c0_i32 = arith.constant 0 : i32
    %c0_i32_0 = arith.constant 0 : i32
    return %arg0, %c0_i32 : i32, i32
  }
}

</mosaic_0001>

<llo_original>
// kernel: gnet_forward.5
$region0: #{gnet_forward.5}
  #allocation0 [shape = 'u32[]', space=smem, size = 0x4, offset = 0x4, fixed_abs, tag = 'smem constant byte address 0x4 - core index']
  #allocation1 [shape = 'u32[144,128]{1,0:T(1,128)}', space=vmem, size = 0x12000, scoped, tag = 'internal scratch']
  #allocation2 [shape = 'f32[32,128]{1,0:T(8,128)}', space=vmem, size = 0x4000, scoped, tag = 'scratch operand']
  #allocation3 [shape = 'f32[1,128]{1,0:T(1,128)}', space=vmem, size = 0x200, scoped, tag = 'scratch operand']
  %s0 = inlined_call_operand.vmem [shape: bf16[32,1664], index: 0, kind: input, shape index: {}]
  %s1 = inlined_call_operand.vmem [shape: bf16[1664,128], index: 1, kind: input, shape index: {}]
  %s2 = inlined_call_operand.vmem [shape: f32[1,128], index: 2, kind: input, shape index: {}]
  %s3 = inlined_call_operand.vmem [shape: f32[1,128], index: 3, kind: input, shape index: {}]
  %s4 = inlined_call_operand.vmem [shape: bf16[32,64], index: 4, kind: output, shape index: {}]
  %s5 = sld [smem:[#allocation0]]
  $region34: #{gnet_forward.5} parent=0
    _
  %s7 = ssub.s32 1, %s5
  %s8 = scalar_select 0, %s7, %s5
  // Predicated region
  $region2: #{gnet_forward.5} parent=0 // pred_check
    _
  $region3: #{gnet_forward.5} parent=0 // pred_check_branch
    %10 = sbr.rel (0) target = $region5
  $region4: #{gnet_forward.5} parent=0 // pred_region
    _
  $region5: #{gnet_forward.5} parent=0 // pred_fallthru
    _
  // Predicated region
  $region6: #{gnet_forward.5} parent=0 // pred_check
    _
  $region7: #{gnet_forward.5} parent=0 // pred_check_branch
    %12 = sbr.rel (0) target = $region9
  $region8: #{gnet_forward.5} parent=0 // pred_region
    _
  $region9: #{gnet_forward.5} parent=0 // pred_fallthru
    _
  // Predicated region
  $region10: #{gnet_forward.5} parent=0 // pred_check
    _
  $region11: #{gnet_forward.5} parent=0 // pred_check_branch
    %14 = sbr.rel (0) target = $region13
  $region12: #{gnet_forward.5} parent=0 // pred_region
    _
  $region13: #{gnet_forward.5} parent=0 // pred_fallthru
    _
  // Predicated region
  $region14: #{gnet_forward.5} parent=0 // pred_check
    _
  $region15: #{gnet_forward.5} parent=0 // pred_check_branch
    %16 = sbr.rel (0) target = $region17
  $region16: #{gnet_forward.5} parent=0 // pred_region
    _
  $region17: #{gnet_forward.5} parent=0 // pred_fallthru
    _
  %v18 = vld [vmem:[%s0] sm:$0xff]
  %v19 = vld [vmem:[%s0 + $0x8] sm:$0xff]
  %v20 = vld [vmem:[%s0 + $0x10] sm:$0xff]
  %v21 = vld [vmem:[%s0 + $0x18] sm:$0xff]
  %v22 = vld [vmem:[%s0 + $0x20] sm:$0xff]
  %v23 = vld [vmem:[%s0 + $0x28] sm:$0xff]
  %v24 = vld [vmem:[%s0 + $0x30] sm:$0xf]
  %v25 = vld [vmem:[%s0 + $0x34] sm:$0xff]
  %v26 = vld [vmem:[%s0 + $0x3c] sm:$0xff]
  %v27 = vld [vmem:[%s0 + $0x44] sm:$0xff]
  %v28 = vld [vmem:[%s0 + $0x4c] sm:$0xff]
  %v29 = vld [vmem:[%s0 + $0x54] sm:$0xff]
  %v30 = vld [vmem:[%s0 + $0x5c] sm:$0xff]
  %v31 = vld [vmem:[%s0 + $0x64] sm:$0xf]
  %v32 = vld [vmem:[%s0 + $0x68] sm:$0xff]
  %v33 = vld [vmem:[%s0 + $0x70] sm:$0xff]
  %v34 = vld [vmem:[%s0 + $0x78] sm:$0xff]
  %v35 = vld [vmem:[%s0 + $0x80] sm:$0xff]
  %v36 = vld [vmem:[%s0 + $0x88] sm:$0xff]
  %v37 = vld [vmem:[%s0 + $0x90] sm:$0xff]
  %v38 = vld [vmem:[%s0 + $0x98] sm:$0xf]
  %v39 = vld [vmem:[%s0 + $0x9c] sm:$0xff]
  %v40 = vld [vmem:[%s0 + $0xa4] sm:$0xff]
  %v41 = vld [vmem:[%s0 + $0xac] sm:$0xff]
  %v42 = vld [vmem:[%s0 + $0xb4] sm:$0xff]
  %v43 = vld [vmem:[%s0 + $0xbc] sm:$0xff]
  %v44 = vld [vmem:[%s0 + $0xc4] sm:$0xff]
  %v45 = vld [vmem:[%s0 + $0xcc] sm:$0xf]
  %v46 = vld [vmem:[%s1] sm:$0xf]
  %v47 = vld [vmem:[%s1 + $0x4] sm:$0xf]
  %v48 = vld [vmem:[%s1 + $0x8] sm:$0xf]
  %v49 = vld [vmem:[%s1 + $0xc] sm:$0xf]
  %v50 = vld [vmem:[%s1 + $0x10] sm:$0xf]
  %v51 = vld [vmem:[%s1 + $0x14] sm:$0xf]
  %v52 = vld [vmem:[%s1 + $0x18] sm:$0xf]
  %v53 = vld [vmem:[%s1 + $0x1c] sm:$0xf]
  %v54 = vld [vmem:[%s1 + $0x20] sm:$0xf]
  %v55 = vld [vmem:[%s1 + $0x24] sm:$0xf]
  %v56 = vld [vmem:[%s1 + $0x28] sm:$0xf]
  %v57 = vld [vmem:[%s1 + $0x2c] sm:$0xf]
  %v58 = vld [vmem:[%s1 + $0x30] sm:$0xf]
  %v59 = vld [vmem:[%s1 + $0x34] sm:$0xf]
  %v60 = vld [vmem:[%s1 + $0x38] sm:$0xf]
  %v61 = vld [vmem:[%s1 + $0x3c] sm:$0xf]
  %v62 = vld [vmem:[%s1 + $0x40] sm:$0xf]
  %v63 = vld [vmem:[%s1 + $0x44] sm:$0xf]
  %v64 = vld [vmem:[%s1 + $0x48] sm:$0xf]
  %v65 = vld [vmem:[%s1 + $0x4c] sm:$0xf]
  %v66 = vld [vmem:[%s1 + $0x50] sm:$0xf]
  %v67 = vld [vmem:[%s1 + $0x54] sm:$0xf]
  %v68 = vld [vmem:[%s1 + $0x58] sm:$0xf]
  %v69 = vld [vmem:[%s1 + $0x5c] sm:$0xf]
  %v70 = vld [vmem:[%s1 + $0x60] sm:$0xf]
  %v71 = vld [vmem:[%s1 + $0x64] sm:$0xf]
  %v72 = vld [vmem:[%s1 + $0x68] sm:$0xf]
  %v73 = vld [vmem:[%s1 + $0x6c] sm:$0xf]
  %v74 = vld [vmem:[%s1 + $0x70] sm:$0xf]
  %v75 = vld [vmem:[%s1 + $0x74] sm:$0xf]
  %v76 = vld [vmem:[%s1 + $0x78] sm:$0xf]
  %v77 = vld [vmem:[%s1 + $0x7c] sm:$0xf]
  %v78 = vld [vmem:[%s1 + $0x80] sm:$0xf]
  %v79 = vld [vmem:[%s1 + $0x84] sm:$0xf]
  %v80 = vld [vmem:[%s1 + $0x88] sm:$0xf]
  %v81 = vld [vmem:[%s1 + $0x8c] sm:$0xf]
  %v82 = vld [vmem:[%s1 + $0x90] sm:$0xf]
  %v83 = vld [vmem:[%s1 + $0x94] sm:$0xf]
  %v84 = vld [vmem:[%s1 + $0x98] sm:$0xf]
  %v85 = vld [vmem:[%s1 + $0x9c] sm:$0xf]
  %v86 = vld [vmem:[%s1 + $0xa0] sm:$0xf]
  %v87 = vld [vmem:[%s1 + $0xa4] sm:$0xf]
  %v88 = vld [vmem:[%s1 + $0xa8] sm:$0xf]
  %v89 = vld [vmem:[%s1 + $0xac] sm:$0xf]
  %v90 = vld [vmem:[%s1 + $0xb0] sm:$0xf]
  %v91 = vld [vmem:[%s1 + $0xb4] sm:$0xf]
  %v92 = vld [vmem:[%s1 + $0xb8] sm:$0xf]
  %v93 = vld [vmem:[%s1 + $0xbc] sm:$0xf]
  %v94 = vld [vmem:[%s1 + $0xc0] sm:$0xf]
  %v95 = vld [vmem:[%s1 + $0xc4] sm:$0xf]
  %v96 = vld [vmem:[%s1 + $0xc8] sm:$0xf]
  %v97 = vld [vmem:[%s1 + $0xcc] sm:$0xf]
  %v98 = vld [vmem:[%s1 + $0xd0] sm:$0xf]
  %v99 = vld [vmem:[%s1 + $0xd4] sm:$0xf]
  %v100 = vld [vmem:[%s1 + $0xd8] sm:$0xf]
  %v101 = vld [vmem:[%s1 + $0xdc] sm:$0xf]
  %v102 = vld [vmem:[%s1 + $0xe0] sm:$0xf]
  %v103 = vld [vmem:[%s1 + $0xe4] sm:$0xf]
  %v104 = vld [vmem:[%s1 + $0xe8] sm:$0xf]
  %v105 = vld [vmem:[%s1 + $0xec] sm:$0xf]
  %v106 = vld [vmem:[%s1 + $0xf0] sm:$0xf]
  %v107 = vld [vmem:[%s1 + $0xf4] sm:$0xf]
  %v108 = vld [vmem:[%s1 + $0xf8] sm:$0xf]
  %v109 = vld [vmem:[%s1 + $0xfc] sm:$0xf]
  %v110 = vld [vmem:[%s1 + $0x100] sm:$0xf]
  %v111 = vld [vmem:[%s1 + $0x104] sm:$0xf]
  %v112 = vld [vmem:[%s1 + $0x108] sm:$0xf]
  %v113 = vld [vmem:[%s1 + $0x10c] sm:$0xf]
  %v114 = vld [vmem:[%s1 + $0x110] sm:$0xf]
  %v115 = vld [vmem:[%s1 + $0x114] sm:$0xf]
  %v116 = vld [vmem:[%s1 + $0x118] sm:$0xf]
  %v117 = vld [vmem:[%s1 + $0x11c] sm:$0xf]
  %v118 = vld [vmem:[%s1 + $0x120] sm:$0xf]
  %v119 = vld [vmem:[%s1 + $0x124] sm:$0xf]
  %v120 = vld [vmem:[%s1 + $0x128] sm:$0xf]
  %v121 = vld [vmem:[%s1 + $0x12c] sm:$0xf]
  %v122 = vld [vmem:[%s1 + $0x130] sm:$0xf]
  %v123 = vld [vmem:[%s1 + $0x134] sm:$0xf]
  %v124 = vld [vmem:[%s1 + $0x138] sm:$0xf]
  %v125 = vld [vmem:[%s1 + $0x13c] sm:$0xf]
  %v126 = vld [vmem:[%s1 + $0x140] sm:$0xf]
  %v127 = vld [vmem:[%s1 + $0x144] sm:$0xf]
  %v128 = vld [vmem:[%s1 + $0x148] sm:$0xf]
  %v129 = vld [vmem:[%s1 + $0x14c] sm:$0xf]
  %v130 = vld [vmem:[%s1 + $0x150] sm:$0xf]
  %v131 = vld [vmem:[%s1 + $0x154] sm:$0xf]
  %v132 = vld [vmem:[%s1 + $0x158] sm:$0xf]
  %v133 = vld [vmem:[%s1 + $0x15c] sm:$0xf]
  %v134 = vld [vmem:[%s1 + $0x160] sm:$0xf]
  %v135 = vld [vmem:[%s1 + $0x164] sm:$0xf]
  %v136 = vld [vmem:[%s1 + $0x168] sm:$0xf]
  %v137 = vld [vmem:[%s1 + $0x16c] sm:$0xf]
  %v138 = vld [vmem:[%s1 + $0x170] sm:$0xf]
  %v139 = vld [vmem:[%s1 + $0x174] sm:$0xf]
  %v140 = vld [vmem:[%s1 + $0x178] sm:$0xf]
  %v141 = vld [vmem:[%s1 + $0x17c] sm:$0xf]
  %v142 = vld [vmem:[%s1 + $0x180] sm:$0xf]
  %v143 = vld [vmem:[%s1 + $0x184] sm:$0xf]
  %v144 = vld [vmem:[%s1 + $0x188] sm:$0xf]
  %v145 = vld [vmem:[%s1 + $0x18c] sm:$0xf]
  %v146 = vld [vmem:[%s1 + $0x190] sm:$0xf]
  %v147 = vld [vmem:[%s1 + $0x194] sm:$0xf]
  %v148 = vld [vmem:[%s1 + $0x198] sm:$0xf]
  %v149 = vld [vmem:[%s1 + $0x19c] sm:$0xf]
  %v150 = vld [vmem:[%s1 + $0x1a0] sm:$0xf]
  %v151 = vld [vmem:[%s1 + $0x1a4] sm:$0xf]
  %v152 = vld [vmem:[%s1 + $0x1a8] sm:$0xf]
  %v153 = vld [vmem:[%s1 + $0x1ac] sm:$0xf]
  %v154 = vld [vmem:[%s1 + $0x1b0] sm:$0xf]
  %v155 = vld [vmem:[%s1 + $0x1b4] sm:$0xf]
  %v156 = vld [vmem:[%s1 + $0x1b8] sm:$0xf]
  %v157 = vld [vmem:[%s1 + $0x1bc] sm:$0xf]
  %v158 = vld [vmem:[%s1 + $0x1c0] sm:$0xf]
  %v159 = vld [vmem:[%s1 + $0x1c4] sm:$0xf]
  %v160 = vld [vmem:[%s1 + $0x1c8] sm:$0xf]
  %v161 = vld [vmem:[%s1 + $0x1cc] sm:$0xf]
  %v162 = vld [vmem:[%s1 + $0x1d0] sm:$0xf]
  %v163 = vld [vmem:[%s1 + $0x1d4] sm:$0xf]
  %v164 = vld [vmem:[%s1 + $0x1d8] sm:$0xf]
  %v165 = vld [vmem:[%s1 + $0x1dc] sm:$0xf]
  %v166 = vld [vmem:[%s1 + $0x1e0] sm:$0xf]
  %v167 = vld [vmem:[%s1 + $0x1e4] sm:$0xf]
  %v168 = vld [vmem:[%s1 + $0x1e8] sm:$0xf]
  %v169 = vld [vmem:[%s1 + $0x1ec] sm:$0xf]
  %v170 = vld [vmem:[%s1 + $0x1f0] sm:$0xf]
  %v171 = vld [vmem:[%s1 + $0x1f4] sm:$0xf]
  %v172 = vld [vmem:[%s1 + $0x1f8] sm:$0xf]
  %v173 = vld [vmem:[%s1 + $0x1fc] sm:$0xf]
  %v174 = vld [vmem:[%s1 + $0x200] sm:$0xf]
  %v175 = vld [vmem:[%s1 + $0x204] sm:$0xf]
  %v176 = vld [vmem:[%s1 + $0x208] sm:$0xf]
  %v177 = vld [vmem:[%s1 + $0x20c] sm:$0xf]
  %v178 = vld [vmem:[%s1 + $0x210] sm:$0xf]
  %v179 = vld [vmem:[%s1 + $0x214] sm:$0xf]
  %v180 = vld [vmem:[%s1 + $0x218] sm:$0xf]
  %v181 = vld [vmem:[%s1 + $0x21c] sm:$0xf]
  %v182 = vld [vmem:[%s1 + $0x220] sm:$0xf]
  %v183 = vld [vmem:[%s1 + $0x224] sm:$0xf]
  %v184 = vld [vmem:[%s1 + $0x228] sm:$0xf]
  %v185 = vld [vmem:[%s1 + $0x22c] sm:$0xf]
  %v186 = vld [vmem:[%s1 + $0x230] sm:$0xf]
  %v187 = vld [vmem:[%s1 + $0x234] sm:$0xf]
  %v188 = vld [vmem:[%s1 + $0x238] sm:$0xf]
  %v189 = vld [vmem:[%s1 + $0x23c] sm:$0xf]
  %v190 = vld [vmem:[%s1 + $0x240] sm:$0xf]
  %v191 = vld [vmem:[%s1 + $0x244] sm:$0xf]
  %v192 = vld [vmem:[%s1 + $0x248] sm:$0xf]
  %v193 = vld [vmem:[%s1 + $0x24c] sm:$0xf]
  %v194 = vld [vmem:[%s1 + $0x250] sm:$0xf]
  %v195 = vld [vmem:[%s1 + $0x254] sm:$0xf]
  %v196 = vld [vmem:[%s1 + $0x258] sm:$0xf]
  %v197 = vld [vmem:[%s1 + $0x25c] sm:$0xf]
  %v198 = vld [vmem:[%s1 + $0x260] sm:$0xf]
  %v199 = vld [vmem:[%s1 + $0x264] sm:$0xf]
  %v200 = vld [vmem:[%s1 + $0x268] sm:$0xf]
  %v201 = vld [vmem:[%s1 + $0x26c] sm:$0xf]
  %v202 = vld [vmem:[%s1 + $0x270] sm:$0xf]
  %v203 = vld [vmem:[%s1 + $0x274] sm:$0xf]
  %v204 = vld [vmem:[%s1 + $0x278] sm:$0xf]
  %v205 = vld [vmem:[%s1 + $0x27c] sm:$0xf]
  %v206 = vld [vmem:[%s1 + $0x280] sm:$0xf]
  %v207 = vld [vmem:[%s1 + $0x284] sm:$0xf]
  %v208 = vld [vmem:[%s1 + $0x288] sm:$0xf]
  %v209 = vld [vmem:[%s1 + $0x28c] sm:$0xf]
  %v210 = vld [vmem:[%s1 + $0x290] sm:$0xf]
  %v211 = vld [vmem:[%s1 + $0x294] sm:$0xf]
  %v212 = vld [vmem:[%s1 + $0x298] sm:$0xf]
  %v213 = vld [vmem:[%s1 + $0x29c] sm:$0xf]
  %v214 = vld [vmem:[%s1 + $0x2a0] sm:$0xf]
  %v215 = vld [vmem:[%s1 + $0x2a4] sm:$0xf]
  %v216 = vld [vmem:[%s1 + $0x2a8] sm:$0xf]
  %v217 = vld [vmem:[%s1 + $0x2ac] sm:$0xf]
  %v218 = vld [vmem:[%s1 + $0x2b0] sm:$0xf]
  %v219 = vld [vmem:[%s1 + $0x2b4] sm:$0xf]
  %v220 = vld [vmem:[%s1 + $0x2b8] sm:$0xf]
  %v221 = vld [vmem:[%s1 + $0x2bc] sm:$0xf]
  %v222 = vld [vmem:[%s1 + $0x2c0] sm:$0xf]
  %v223 = vld [vmem:[%s1 + $0x2c4] sm:$0xf]
  %v224 = vld [vmem:[%s1 + $0x2c8] sm:$0xf]
  %v225 = vld [vmem:[%s1 + $0x2cc] sm:$0xf]
  %v226 = vld [vmem:[%s1 + $0x2d0] sm:$0xf]
  %v227 = vld [vmem:[%s1 + $0x2d4] sm:$0xf]
  %v228 = vld [vmem:[%s1 + $0x2d8] sm:$0xf]
  %v229 = vld [vmem:[%s1 + $0x2dc] sm:$0xf]
  %v230 = vld [vmem:[%s1 + $0x2e0] sm:$0xf]
  %v231 = vld [vmem:[%s1 + $0x2e4] sm:$0xf]
  %v232 = vld [vmem:[%s1 + $0x2e8] sm:$0xf]
  %v233 = vld [vmem:[%s1 + $0x2ec] sm:$0xf]
  %v234 = vld [vmem:[%s1 + $0x2f0] sm:$0xf]
  %v235 = vld [vmem:[%s1 + $0x2f4] sm:$0xf]
  %v236 = vld [vmem:[%s1 + $0x2f8] sm:$0xf]
  %v237 = vld [vmem:[%s1 + $0x2fc] sm:$0xf]
  %v238 = vld [vmem:[%s1 + $0x300] sm:$0xf]
  %v239 = vld [vmem:[%s1 + $0x304] sm:$0xf]
  %v240 = vld [vmem:[%s1 + $0x308] sm:$0xf]
  %v241 = vld [vmem:[%s1 + $0x30c] sm:$0xf]
  %v242 = vld [vmem:[%s1 + $0x310] sm:$0xf]
  %v243 = vld [vmem:[%s1 + $0x314] sm:$0xf]
  %v244 = vld [vmem:[%s1 + $0x318] sm:$0xf]
  %v245 = vld [vmem:[%s1 + $0x31c] sm:$0xf]
  %v246 = vld [vmem:[%s1 + $0x320] sm:$0xf]
  %v247 = vld [vmem:[%s1 + $0x324] sm:$0xf]
  %v248 = vld [vmem:[%s1 + $0x328] sm:$0xf]
  %v249 = vld [vmem:[%s1 + $0x32c] sm:$0xf]
  %v250 = vld [vmem:[%s1 + $0x330] sm:$0xf]
  %v251 = vld [vmem:[%s1 + $0x334] sm:$0xf]
  %v252 = vld [vmem:[%s1 + $0x338] sm:$0xf]
  %v253 = vld [vmem:[%s1 + $0x33c] sm:$0xf]
  %v282 = vunpack.c.l.b16 %v18
  %v283 = vunpack.c.h.b16 %v18
  %v284 = vunpack.c.l.b16 %v19
  %v285 = vunpack.c.h.b16 %v19
  %v286 = vunpack.c.l.b16 %v20
  %v287 = vunpack.c.h.b16 %v20
  %v288 = vunpack.c.l.b16 %v21
  %v289 = vunpack.c.h.b16 %v21
  %v290 = vunpack.c.l.b16 %v22
  %v291 = vunpack.c.h.b16 %v22
  %v292 = vunpack.c.l.b16 %v23
  %v293 = vunpack.c.h.b16 %v23
  %v294 = vunpack.c.l.b16 %v24
  %v295 = vunpack.c.l.b16 %v25
  %v296 = vunpack.c.h.b16 %v25
  %v297 = vunpack.c.l.b16 %v26
  %v298 = vunpack.c.h.b16 %v26
  %v299 = vunpack.c.l.b16 %v27
  %v300 = vunpack.c.h.b16 %v27
  %v301 = vunpack.c.l.b16 %v28
  %v302 = vunpack.c.h.b16 %v28
  %v303 = vunpack.c.l.b16 %v29
  %v304 = vunpack.c.h.b16 %v29
  %v305 = vunpack.c.l.b16 %v30
  %v306 = vunpack.c.h.b16 %v30
  %v307 = vunpack.c.l.b16 %v31
  %v308 = vunpack.c.l.b16 %v32
  %v309 = vunpack.c.h.b16 %v32
  %v310 = vunpack.c.l.b16 %v33
  %v311 = vunpack.c.h.b16 %v33
  %v312 = vunpack.c.l.b16 %v34
  %v313 = vunpack.c.h.b16 %v34
  %v314 = vunpack.c.l.b16 %v35
  %v315 = vunpack.c.h.b16 %v35
  %v316 = vunpack.c.l.b16 %v36
  %v317 = vunpack.c.h.b16 %v36
  %v318 = vunpack.c.l.b16 %v37
  %v319 = vunpack.c.h.b16 %v37
  %v320 = vunpack.c.l.b16 %v38
  %v321 = vunpack.c.l.b16 %v39
  %v322 = vunpack.c.h.b16 %v39
  %v323 = vunpack.c.l.b16 %v40
  %v324 = vunpack.c.h.b16 %v40
  %v325 = vunpack.c.l.b16 %v41
  %v326 = vunpack.c.h.b16 %v41
  %v327 = vunpack.c.l.b16 %v42
  %v328 = vunpack.c.h.b16 %v42
  %v329 = vunpack.c.l.b16 %v43
  %v330 = vunpack.c.h.b16 %v43
  %v331 = vunpack.c.l.b16 %v44
  %v332 = vunpack.c.h.b16 %v44
  %v333 = vunpack.c.l.b16 %v45
  %v334 = vpack.c.b16 %v295, %v282
  %v335 = vpack.c.b16 %v296, %v283
  %v336 = vpack.c.b16 %v297, %v284
  %v337 = vpack.c.b16 %v298, %v285
  %v338 = vpack.c.b16 %v299, %v286
  %v339 = vpack.c.b16 %v300, %v287
  %v340 = vpack.c.b16 %v301, %v288
  %v341 = vpack.c.b16 %v302, %v289
  %v342 = vpack.c.b16 %v303, %v290
  %v343 = vpack.c.b16 %v304, %v291
  %v344 = vpack.c.b16 %v305, %v292
  %v345 = vpack.c.b16 %v306, %v293
  %v346 = vpack.c.b16 %v307, %v294
  %v347 = vpack.c.b16 %v321, %v308
  %v348 = vpack.c.b16 %v322, %v309
  %v349 = vpack.c.b16 %v323, %v310
  %v350 = vpack.c.b16 %v324, %v311
  %v351 = vpack.c.b16 %v325, %v312
  %v352 = vpack.c.b16 %v326, %v313
  %v353 = vpack.c.b16 %v327, %v314
  %v354 = vpack.c.b16 %v328, %v315
  %v355 = vpack.c.b16 %v329, %v316
  %v356 = vpack.c.b16 %v330, %v317
  %v357 = vpack.c.b16 %v331, %v318
  %v358 = vpack.c.b16 %v332, %v319
  %v359 = vpack.c.b16 %v333, %v320
  %v594 = vunpack.c.l.b16 %v46
  %v595 = vunpack.c.l.b16 %v47
  %v596 = vunpack.c.l.b16 %v48
  %v597 = vunpack.c.l.b16 %v49
  %v598 = vunpack.c.l.b16 %v50
  %v599 = vunpack.c.l.b16 %v51
  %v600 = vunpack.c.l.b16 %v52
  %v601 = vunpack.c.l.b16 %v53
  %v602 = vunpack.c.l.b16 %v54
  %v603 = vunpack.c.l.b16 %v55
  %v604 = vunpack.c.l.b16 %v56
  %v605 = vunpack.c.l.b16 %v57
  %v606 = vunpack.c.l.b16 %v58
  %v607 = vunpack.c.l.b16 %v59
  %v608 = vunpack.c.l.b16 %v60
  %v609 = vunpack.c.l.b16 %v61
  %v610 = vunpack.c.l.b16 %v62
  %v611 = vunpack.c.l.b16 %v63
  %v612 = vunpack.c.l.b16 %v64
  %v613 = vunpack.c.l.b16 %v65
  %v614 = vunpack.c.l.b16 %v66
  %v615 = vunpack.c.l.b16 %v67
  %v616 = vunpack.c.l.b16 %v68
  %v617 = vunpack.c.l.b16 %v69
  %v618 = vunpack.c.l.b16 %v70
  %v619 = vunpack.c.l.b16 %v71
  %v620 = vunpack.c.l.b16 %v72
  %v621 = vunpack.c.l.b16 %v73
  %v622 = vunpack.c.l.b16 %v74
  %v623 = vunpack.c.l.b16 %v75
  %v624 = vunpack.c.l.b16 %v76
  %v625 = vunpack.c.l.b16 %v77
  %v626 = vunpack.c.l.b16 %v78
  %v627 = vunpack.c.l.b16 %v79
  %v628 = vunpack.c.l.b16 %v80
  %v629 = vunpack.c.l.b16 %v81
  %v630 = vunpack.c.l.b16 %v82
  %v631 = vunpack.c.l.b16 %v83
  %v632 = vunpack.c.l.b16 %v84
  %v633 = vunpack.c.l.b16 %v85
  %v634 = vunpack.c.l.b16 %v86
  %v635 = vunpack.c.l.b16 %v87
  %v636 = vunpack.c.l.b16 %v88
  %v637 = vunpack.c.l.b16 %v89
  %v638 = vunpack.c.l.b16 %v90
  %v639 = vunpack.c.l.b16 %v91
  %v640 = vunpack.c.l.b16 %v92
  %v641 = vunpack.c.l.b16 %v93
  %v642 = vunpack.c.l.b16 %v94
  %v643 = vunpack.c.l.b16 %v95
  %v644 = vunpack.c.l.b16 %v96
  %v645 = vunpack.c.l.b16 %v97
  %v646 = vunpack.c.l.b16 %v98
  %v647 = vunpack.c.l.b16 %v99
  %v648 = vunpack.c.l.b16 %v100
  %v649 = vunpack.c.l.b16 %v101
  %v650 = vunpack.c.l.b16 %v102
  %v651 = vunpack.c.l.b16 %v103
  %v652 = vunpack.c.l.b16 %v104
  %v653 = vunpack.c.l.b16 %v105
  %v654 = vunpack.c.l.b16 %v106
  %v655 = vunpack.c.l.b16 %v107
  %v656 = vunpack.c.l.b16 %v108
  %v657 = vunpack.c.l.b16 %v109
  %v658 = vunpack.c.l.b16 %v110
  %v659 = vunpack.c.l.b16 %v111
  %v660 = vunpack.c.l.b16 %v112
  %v661 = vunpack.c.l.b16 %v113
  %v662 = vunpack.c.l.b16 %v114
  %v663 = vunpack.c.l.b16 %v115
  %v664 = vunpack.c.l.b16 %v116
  %v665 = vunpack.c.l.b16 %v117
  %v666 = vunpack.c.l.b16 %v118
  %v667 = vunpack.c.l.b16 %v119
  %v668 = vunpack.c.l.b16 %v120
  %v669 = vunpack.c.l.b16 %v121
  %v670 = vunpack.c.l.b16 %v122
  %v671 = vunpack.c.l.b16 %v123
  %v672 = vunpack.c.l.b16 %v124
  %v673 = vunpack.c.l.b16 %v125
  %v674 = vunpack.c.l.b16 %v126
  %v675 = vunpack.c.l.b16 %v127
  %v676 = vunpack.c.l.b16 %v128
  %v677 = vunpack.c.l.b16 %v129
  %v678 = vunpack.c.l.b16 %v130
  %v679 = vunpack.c.l.b16 %v131
  %v680 = vunpack.c.l.b16 %v132
  %v681 = vunpack.c.l.b16 %v133
  %v682 = vunpack.c.l.b16 %v134
  %v683 = vunpack.c.l.b16 %v135
  %v684 = vunpack.c.l.b16 %v136
  %v685 = vunpack.c.l.b16 %v137
  %v686 = vunpack.c.l.b16 %v138
  %v687 = vunpack.c.l.b16 %v139
  %v688 = vunpack.c.l.b16 %v140
  %v689 = vunpack.c.l.b16 %v141
  %v690 = vunpack.c.l.b16 %v142
  %v691 = vunpack.c.l.b16 %v143
  %v692 = vunpack.c.l.b16 %v144
  %v693 = vunpack.c.l.b16 %v145
  %v694 = vunpack.c.l.b16 %v146
  %v695 = vunpack.c.l.b16 %v147
  %v696 = vunpack.c.l.b16 %v148
  %v697 = vunpack.c.l.b16 %v149
  %v698 = vunpack.c.l.b16 %v150
  %v699 = vunpack.c.l.b16 %v151
  %v700 = vunpack.c.l.b16 %v152
  %v701 = vunpack.c.l.b16 %v153
  %v702 = vunpack.c.l.b16 %v154
  %v703 = vunpack.c.l.b16 %v155
  %v704 = vunpack.c.l.b16 %v156
  %v705 = vunpack.c.l.b16 %v157
  %v706 = vunpack.c.l.b16 %v158
  %v707 = vunpack.c.l.b16 %v159
  %v708 = vunpack.c.l.b16 %v160
  %v709 = vunpack.c.l.b16 %v161
  %v710 = vunpack.c.l.b16 %v162
  %v711 = vunpack.c.l.b16 %v163
  %v712 = vunpack.c.l.b16 %v164
  %v713 = vunpack.c.l.b16 %v165
  %v714 = vunpack.c.l.b16 %v166
  %v715 = vunpack.c.l.b16 %v167
  %v716 = vunpack.c.l.b16 %v168
  %v717 = vunpack.c.l.b16 %v169
  %v718 = vunpack.c.l.b16 %v170
  %v719 = vunpack.c.l.b16 %v171
  %v720 = vunpack.c.l.b16 %v172
  %v721 = vunpack.c.l.b16 %v173
  %v722 = vunpack.c.l.b16 %v174
  %v723 = vunpack.c.l.b16 %v175
  %v724 = vunpack.c.l.b16 %v176
  %v725 = vunpack.c.l.b16 %v177
  %v726 = vunpack.c.l.b16 %v178
  %v727 = vunpack.c.l.b16 %v179
  %v728 = vunpack.c.l.b16 %v180
  %v729 = vunpack.c.l.b16 %v181
  %v730 = vunpack.c.l.b16 %v182
  %v731 = vunpack.c.l.b16 %v183
  %v732 = vunpack.c.l.b16 %v184
  %v733 = vunpack.c.l.b16 %v185
  %v734 = vunpack.c.l.b16 %v186
  %v735 = vunpack.c.l.b16 %v187
  %v736 = vunpack.c.l.b16 %v188
  %v737 = vunpack.c.l.b16 %v189
  %v738 = vunpack.c.l.b16 %v190
  %v739 = vunpack.c.l.b16 %v191
  %v740 = vunpack.c.l.b16 %v192
  %v741 = vunpack.c.l.b16 %v193
  %v742 = vunpack.c.l.b16 %v194
  %v743 = vunpack.c.l.b16 %v195
  %v744 = vunpack.c.l.b16 %v196
  %v745 = vunpack.c.l.b16 %v197
  %v746 = vunpack.c.l.b16 %v198
  %v747 = vunpack.c.l.b16 %v199
  %v748 = vunpack.c.l.b16 %v200
  %v749 = vunpack.c.l.b16 %v201
  %v750 = vunpack.c.l.b16 %v202
  %v751 = vunpack.c.l.b16 %v203
  %v752 = vunpack.c.l.b16 %v204
  %v753 = vunpack.c.l.b16 %v205
  %v754 = vunpack.c.l.b16 %v206
  %v755 = vunpack.c.l.b16 %v207
  %v756 = vunpack.c.l.b16 %v208
  %v757 = vunpack.c.l.b16 %v209
  %v758 = vunpack.c.l.b16 %v210
  %v759 = vunpack.c.l.b16 %v211
  %v760 = vunpack.c.l.b16 %v212
  %v761 = vunpack.c.l.b16 %v213
  %v762 = vunpack.c.l.b16 %v214
  %v763 = vunpack.c.l.b16 %v215
  %v764 = vunpack.c.l.b16 %v216
  %v765 = vunpack.c.l.b16 %v217
  %v766 = vunpack.c.l.b16 %v218
  %v767 = vunpack.c.l.b16 %v219
  %v768 = vunpack.c.l.b16 %v220
  %v769 = vunpack.c.l.b16 %v221
  %v770 = vunpack.c.l.b16 %v222
  %v771 = vunpack.c.l.b16 %v223
  %v772 = vunpack.c.l.b16 %v224
  %v773 = vunpack.c.l.b16 %v225
  %v774 = vunpack.c.l.b16 %v226
  %v775 = vunpack.c.l.b16 %v227
  %v776 = vunpack.c.l.b16 %v228
  %v777 = vunpack.c.l.b16 %v229
  %v778 = vunpack.c.l.b16 %v230
  %v779 = vunpack.c.l.b16 %v231
  %v780 = vunpack.c.l.b16 %v232
  %v781 = vunpack.c.l.b16 %v233
  %v782 = vunpack.c.l.b16 %v234
  %v783 = vunpack.c.l.b16 %v235
  %v784 = vunpack.c.l.b16 %v236
  %v785 = vunpack.c.l.b16 %v237
  %v786 = vunpack.c.l.b16 %v238
  %v787 = vunpack.c.l.b16 %v239
  %v788 = vunpack.c.l.b16 %v240
  %v789 = vunpack.c.l.b16 %v241
  %v790 = vunpack.c.l.b16 %v242
  %v791 = vunpack.c.l.b16 %v243
  %v792 = vunpack.c.l.b16 %v244
  %v793 = vunpack.c.l.b16 %v245
  %v794 = vunpack.c.l.b16 %v246
  %v795 = vunpack.c.l.b16 %v247
  %v796 = vunpack.c.l.b16 %v248
  %v797 = vunpack.c.l.b16 %v249
  %v798 = vunpack.c.l.b16 %v250
  %v799 = vunpack.c.l.b16 %v251
  %v800 = vunpack.c.l.b16 %v252
  %v801 = vunpack.c.l.b16 %v253
  %v802 = vpack.c.b16 %v595, %v594
  %v803 = vpack.c.b16 %v597, %v596
  %v804 = vpack.c.b16 %v599, %v598
  %v805 = vpack.c.b16 %v601, %v600
  %v806 = vpack.c.b16 %v603, %v602
  %v807 = vpack.c.b16 %v605, %v604
  %v808 = vpack.c.b16 %v607, %v606
  %v809 = vpack.c.b16 %v609, %v608
  %v810 = vpack.c.b16 %v611, %v610
  %v811 = vpack.c.b16 %v613, %v612
  %v812 = vpack.c.b16 %v615, %v614
  %v813 = vpack.c.b16 %v617, %v616
  %v814 = vpack.c.b16 %v619, %v618
  %v815 = vpack.c.b16 %v621, %v620
  %v816 = vpack.c.b16 %v623, %v622
  %v817 = vpack.c.b16 %v625, %v624
  %v818 = vpack.c.b16 %v627, %v626
  %v819 = vpack.c.b16 %v629, %v628
  %v820 = vpack.c.b16 %v631, %v630
  %v821 = vpack.c.b16 %v633, %v632
  %v822 = vpack.c.b16 %v635, %v634
  %v823 = vpack.c.b16 %v637, %v636
  %v824 = vpack.c.b16 %v639, %v638
  %v825 = vpack.c.b16 %v641, %v640
  %v826 = vpack.c.b16 %v643, %v642
  %v827 = vpack.c.b16 %v645, %v644
  %v828 = vpack.c.b16 %v647, %v646
  %v829 = vpack.c.b16 %v649, %v648
  %v830 = vpack.c.b16 %v651, %v650
  %v831 = vpack.c.b16 %v653, %v652
  %v832 = vpack.c.b16 %v655, %v654
  %v833 = vpack.c.b16 %v657, %v656
  %v834 = vpack.c.b16 %v659, %v658
  %v835 = vpack.c.b16 %v661, %v660
  %v836 = vpack.c.b16 %v663, %v662
  %v837 = vpack.c.b16 %v665, %v664
  %v838 = vpack.c.b16 %v667, %v666
  %v839 = vpack.c.b16 %v669, %v668
  %v840 = vpack.c.b16 %v671, %v670
  %v841 = vpack.c.b16 %v673, %v672
  %v842 = vpack.c.b16 %v675, %v674
  %v843 = vpack.c.b16 %v677, %v676
  %v844 = vpack.c.b16 %v679, %v678
  %v845 = vpack.c.b16 %v681, %v680
  %v846 = vpack.c.b16 %v683, %v682
  %v847 = vpack.c.b16 %v685, %v684
  %v848 = vpack.c.b16 %v687, %v686
  %v849 = vpack.c.b16 %v689, %v688
  %v850 = vpack.c.b16 %v691, %v690
  %v851 = vpack.c.b16 %v693, %v692
  %v852 = vpack.c.b16 %v695, %v694
  %v853 = vpack.c.b16 %v697, %v696
  %v854 = vpack.c.b16 %v699, %v698
  %v855 = vpack.c.b16 %v701, %v700
  %v856 = vpack.c.b16 %v703, %v702
  %v857 = vpack.c.b16 %v705, %v704
  %v858 = vpack.c.b16 %v707, %v706
  %v859 = vpack.c.b16 %v709, %v708
  %v860 = vpack.c.b16 %v711, %v710
  %v861 = vpack.c.b16 %v713, %v712
  %v862 = vpack.c.b16 %v715, %v714
  %v863 = vpack.c.b16 %v717, %v716
  %v864 = vpack.c.b16 %v719, %v718
  %v865 = vpack.c.b16 %v721, %v720
  %v866 = vpack.c.b16 %v723, %v722
  %v867 = vpack.c.b16 %v725, %v724
  %v868 = vpack.c.b16 %v727, %v726
  %v869 = vpack.c.b16 %v729, %v728
  %v870 = vpack.c.b16 %v731, %v730
  %v871 = vpack.c.b16 %v733, %v732
  %v872 = vpack.c.b16 %v735, %v734
  %v873 = vpack.c.b16 %v737, %v736
  %v874 = vpack.c.b16 %v739, %v738
  %v875 = vpack.c.b16 %v741, %v740
  %v876 = vpack.c.b16 %v743, %v742
  %v877 = vpack.c.b16 %v745, %v744
  %v878 = vpack.c.b16 %v747, %v746
  %v879 = vpack.c.b16 %v749, %v748
  %v880 = vpack.c.b16 %v751, %v750
  %v881 = vpack.c.b16 %v753, %v752
  %v882 = vpack.c.b16 %v755, %v754
  %v883 = vpack.c.b16 %v757, %v756
  %v884 = vpack.c.b16 %v759, %v758
  %v885 = vpack.c.b16 %v761, %v760
  %v886 = vpack.c.b16 %v763, %v762
  %v887 = vpack.c.b16 %v765, %v764
  %v888 = vpack.c.b16 %v767, %v766
  %v889 = vpack.c.b16 %v769, %v768
  %v890 = vpack.c.b16 %v771, %v770
  %v891 = vpack.c.b16 %v773, %v772
  %v892 = vpack.c.b16 %v775, %v774
  %v893 = vpack.c.b16 %v777, %v776
  %v894 = vpack.c.b16 %v779, %v778
  %v895 = vpack.c.b16 %v781, %v780
  %v896 = vpack.c.b16 %v783, %v782
  %v897 = vpack.c.b16 %v785, %v784
  %v898 = vpack.c.b16 %v787, %v786
  %v899 = vpack.c.b16 %v789, %v788
  %v900 = vpack.c.b16 %v791, %v790
  %v901 = vpack.c.b16 %v793, %v792
  %v902 = vpack.c.b16 %v795, %v794
  %v903 = vpack.c.b16 %v797, %v796
  %v904 = vpack.c.b16 %v799, %v798
  %v905 = vpack.c.b16 %v801, %v800
  %1010 = vmatprep.subr.bf16.mxu0 0
  %1011 = vmatpush1.bf16.msra.mxu0 %v802
  %1012 = vmatprep.subr.bf16.mxu0 0
  %1013 = vmatpush1.bf16.msra.mxu0 %v803
  %1014 = vmatprep.subr.bf16.mxu0 0
  %1015 = vmatpush1.bf16.msra.mxu0 %v804
  %1016 = vmatprep.subr.bf16.mxu0 0
  %1017 = vmatpush1.bf16.msra.mxu0 %v805
  %1018 = vmatprep.subr.bf16.mxu0 0
  %1019 = vmatpush1.bf16.msra.mxu0 %v806
  %1020 = vmatprep.subr.bf16.mxu0 0
  %1021 = vmatpush1.bf16.msra.mxu0 %v807
  %1022 = vmatprep.subr.bf16.mxu0 0
  %1023 = vmatpush1.bf16.msra.mxu0 %v808
  %1024 = vmatprep.subr.bf16.mxu0 0
  %1025 = vmatpush1.bf16.msra.mxu0 %v809
  %1026 = vmatprep.subr.bf16.mxu0 0
  %1027 = vmatpush1.bf16.msra.mxu0 %v810
  %1028 = vmatprep.subr.bf16.mxu0 0
  %1029 = vmatpush1.bf16.msra.mxu0 %v811
  %1030 = vmatprep.subr.bf16.mxu0 0
  %1031 = vmatpush1.bf16.msra.mxu0 %v812
  %1032 = vmatprep.subr.bf16.mxu0 0
  %1033 = vmatpush1.bf16.msra.mxu0 %v813
  %1034 = vmatprep.subr.bf16.mxu0 0
  %1035 = vmatpush1.bf16.msra.mxu0 %v814
  %1036 = vmatprep.subr.bf16.mxu0 0
  %1037 = vmatpush1.bf16.msra.mxu0 %v815
  %1038 = vmatprep.subr.bf16.mxu0 0
  %1039 = vmatpush1.bf16.msra.mxu0 %v816
  %1040 = vmatprep.subr.bf16.mxu0 0
  %1041 = vmatpush1.bf16.msra.mxu0 %v817
  %1042 = vmatprep.mubr.bf16.mxu0 %v335
  %1043 = vmatmul.mubr.bf16.gmra.mrb[0].mxu0 %v334
  %v1044 = vpop.f32.mrb[0].mxu0
  %v1045 = vadd.f32 0.0, %v1044
  %v1046 = vpop.f32.mrb[0].mxu0
  %v1047 = vpop.f32.mrb[0].mxu0
  %v1048 = vadd.f32 0.0, %v1047
  %v1049 = vpop.f32.mrb[0].mxu0
  %1050 = vmatprep.mubr.bf16.mxu0 %v348
  %1051 = vmatmul.mubr.bf16.gmra.mrb[0].mxu0 %v347
  %v1052 = vpop.f32.mrb[0].mxu0
  %v1053 = vadd.f32 0.0, %v1052
  %v1054 = vpop.f32.mrb[0].mxu0
  %v1055 = vpop.f32.mrb[0].mxu0
  %v1056 = vadd.f32 0.0, %v1055
  %v1057 = vpop.f32.mrb[0].mxu0
  %1058 = vdwg.mxu0
  %1059 = vmatprep.subr.bf16.mxu0 0
  %1060 = vmatpush1.bf16.msra.mxu0 %v818
  %1061 = vmatprep.subr.bf16.mxu0 0
  %1062 = vmatpush1.bf16.msra.mxu0 %v819
  %1063 = vmatprep.subr.bf16.mxu0 0
  %1064 = vmatpush1.bf16.msra.mxu0 %v820
  %1065 = vmatprep.subr.bf16.mxu0 0
  %1066 = vmatpush1.bf16.msra.mxu0 %v821
  %1067 = vmatprep.subr.bf16.mxu0 0
  %1068 = vmatpush1.bf16.msra.mxu0 %v822
  %1069 = vmatprep.subr.bf16.mxu0 0
  %1070 = vmatpush1.bf16.msra.mxu0 %v823
  %1071 = vmatprep.subr.bf16.mxu0 0
  %1072 = vmatpush1.bf16.msra.mxu0 %v824
  %1073 = vmatprep.subr.bf16.mxu0 0
  %1074 = vmatpush1.bf16.msra.mxu0 %v825
  %1075 = vmatprep.subr.bf16.mxu0 0
  %1076 = vmatpush1.bf16.msra.mxu0 %v826
  %1077 = vmatprep.subr.bf16.mxu0 0
  %1078 = vmatpush1.bf16.msra.mxu0 %v827
  %1079 = vmatprep.subr.bf16.mxu0 0
  %1080 = vmatpush1.bf16.msra.mxu0 %v828
  %1081 = vmatprep.subr.bf16.mxu0 0
  %1082 = vmatpush1.bf16.msra.mxu0 %v829
  %1083 = vmatprep.subr.bf16.mxu0 0
  %1084 = vmatpush1.bf16.msra.mxu0 %v830
  %1085 = vmatprep.subr.bf16.mxu0 0
  %1086 = vmatpush1.bf16.msra.mxu0 %v831
  %1087 = vmatprep.subr.bf16.mxu0 0
  %1088 = vmatpush1.bf16.msra.mxu0 %v832
  %1089 = vmatprep.subr.bf16.mxu0 0
  %1090 = vmatpush1.bf16.msra.mxu0 %v833
  %1091 = vmatprep.mubr.bf16.mxu0 %v337
  %1092 = vmatmul.mubr.bf16.gmra.mrb[0].mxu0 %v336
  %v1093 = vpop.f32.mrb[0].mxu0
  %v1094 = vadd.f32 %v1045, %v1093
  %v1095 = vpop.f32.mrb[0].mxu0
  %v1096 = vpop.f32.mrb[0].mxu0
  %v1097 = vadd.f32 %v1048, %v1096
  %v1098 = vpop.f32.mrb[0].mxu0
  %1099 = vmatprep.mubr.bf16.mxu0 %v350
  %1100 = vmatmul.mubr.bf16.gmra.mrb[0].mxu0 %v349
  %v1101 = vpop.f32.mrb[0].mxu0
  %v1102 = vadd.f32 %v1053, %v1101
  %v1103 = vpop.f32.mrb[0].mxu0
  %v1104 = vpop.f32.mrb[0].mxu0
  %v1105 = vadd.f32 %v1056, %v1104
  %v1106 = vpop.f32.mrb[0].mxu0
  %1107 = vdwg.mxu0
  %1108 = vmatprep.subr.bf16.mxu0 0
  %1109 = vmatpush1.bf16.msra.mxu0 %v834
  %1110 = vmatprep.subr.bf16.mxu0 0
  %1111 = vmatpush1.bf16.msra.mxu0 %v835
  %1112 = vmatprep.subr.bf16.mxu0 0
  %1113 = vmatpush1.bf16.msra.mxu0 %v836
  %1114 = vmatprep.subr.bf16.mxu0 0
  %1115 = vmatpush1.bf16.msra.mxu0 %v837
  %1116 = vmatprep.subr.bf16.mxu0 0
  %1117 = vmatpush1.bf16.msra.mxu0 %v838
  %1118 = vmatprep.subr.bf16.mxu0 0
  %1119 = vmatpush1.bf16.msra.mxu0 %v839
  %1120 = vmatprep.subr.bf16.mxu0 0
  %1121 = vmatpush1.bf16.msra.mxu0 %v840
  %1122 = vmatprep.subr.bf16.mxu0 0
  %1123 = vmatpush1.bf16.msra.mxu0 %v841
  %1124 = vmatprep.subr.bf16.mxu0 0
  %1125 = vmatpush1.bf16.msra.mxu0 %v842
  %1126 = vmatprep.subr.bf16.mxu0 0
  %1127 = vmatpush1.bf16.msra.mxu0 %v843
  %1128 = vmatprep.subr.bf16.mxu0 0
  %1129 = vmatpush1.bf16.msra.mxu0 %v844
  %1130 = vmatprep.subr.bf16.mxu0 0
  %1131 = vmatpush1.bf16.msra.mxu0 %v845
  %1132 = vmatprep.subr.bf16.mxu0 0
  %1133 = vmatpush1.bf16.msra.mxu0 %v846
  %1134 = vmatprep.subr.bf16.mxu0 0
  %1135 = vmatpush1.bf16.msra.mxu0 %v847
  %1136 = vmatprep.subr.bf16.mxu0 0
  %1137 = vmatpush1.bf16.msra.mxu0 %v848
  %1138 = vmatprep.subr.bf16.mxu0 0
  %1139 = vmatpush1.bf16.msra.mxu0 %v849
  %1140 = vmatprep.mubr.bf16.mxu0 %v339
  %1141 = vmatmul.mubr.bf16.gmra.mrb[0].mxu0 %v338
  %v1142 = vpop.f32.mrb[0].mxu0
  %v1143 = vadd.f32 %v1094, %v1142
  %v1144 = vpop.f32.mrb[0].mxu0
  %v1145 = vpop.f32.mrb[0].mxu0
  %v1146 = vadd.f32 %v1097, %v1145
  %v1147 = vpop.f32.mrb[0].mxu0
  %1148 = vmatprep.mubr.bf16.mxu0 %v352
  %1149 = vmatmul.mubr.bf16.gmra.mrb[0].mxu0 %v351
  %v1150 = vpop.f32.mrb[0].mxu0
  %v1151 = vadd.f32 %v1102, %v1150
  %v1152 = vpop.f32.mrb[0].mxu0
  %v1153 = vpop.f32.mrb[0].mxu0
  %v1154 = vadd.f32 %v1105, %v1153
  %v1155 = vpop.f32.mrb[0].mxu0
  %1156 = vdwg.mxu0
  %1157 = vmatprep.subr.bf16.mxu0 0
  %1158 = vmatpush1.bf16.msra.mxu0 %v850
  %1159 = vmatprep.subr.bf16.mxu0 0
  %1160 = vmatpush1.bf16.msra.mxu0 %v851
  %1161 = vmatprep.subr.bf16.mxu0 0
  %1162 = vmatpush1.bf16.msra.mxu0 %v852
  %1163 = vmatprep.subr.bf16.mxu0 0
  %1164 = vmatpush1.bf16.msra.mxu0 %v853
  %1165 = vmatprep.subr.bf16.mxu0 0
  %1166 = vmatpush1.bf16.msra.mxu0 %v854
  %1167 = vmatprep.subr.bf16.mxu0 0
  %1168 = vmatpush1.bf16.msra.mxu0 %v855
  %1169 = vmatprep.subr.bf16.mxu0 0
  %1170 = vmatpush1.bf16.msra.mxu0 %v856
  %1171 = vmatprep.subr.bf16.mxu0 0
  %1172 = vmatpush1.bf16.msra.mxu0 %v857
  %1173 = vmatprep.subr.bf16.mxu0 0
  %1174 = vmatpush1.bf16.msra.mxu0 %v858
  %1175 = vmatprep.subr.bf16.mxu0 0
  %1176 = vmatpush1.bf16.msra.mxu0 %v859
  %1177 = vmatprep.subr.bf16.mxu0 0
  %1178 = vmatpush1.bf16.msra.mxu0 %v860
  %1179 = vmatprep.subr.bf16.mxu0 0
  %1180 = vmatpush1.bf16.msra.mxu0 %v861
  %1181 = vmatprep.subr.bf16.mxu0 0
  %1182 = vmatpush1.bf16.msra.mxu0 %v862
  %1183 = vmatprep.subr.bf16.mxu0 0
  %1184 = vmatpush1.bf16.msra.mxu0 %v863
  %1185 = vmatprep.subr.bf16.mxu0 0
  %1186 = vmatpush1.bf16.msra.mxu0 %v864
  %1187 = vmatprep.subr.bf16.mxu0 0
  %1188 = vmatpush1.bf16.msra.mxu0 %v865
  %1189 = vmatprep.mubr.bf16.mxu0 %v341
  %1190 = vmatmul.mubr.bf16.gmra.mrb[0].mxu0 %v340
  %v1191 = vpop.f32.mrb[0].mxu0
  %v1192 = vadd.f32 %v1143, %v1191
  %v1193 = vpop.f32.mrb[0].mxu0
  %v1194 = vpop.f32.mrb[0].mxu0
  %v1195 = vadd.f32 %v1146, %v1194
  %v1196 = vpop.f32.mrb[0].mxu0
  %1197 = vmatprep.mubr.bf16.mxu0 %v354
  %1198 = vmatmul.mubr.bf16.gmra.mrb[0].mxu0 %v353
  %v1199 = vpop.f32.mrb[0].mxu0
  %v1200 = vadd.f32 %v1151, %v1199
  %v1201 = vpop.f32.mrb[0].mxu0
  %v1202 = vpop.f32.mrb[0].mxu0
  %v1203 = vadd.f32 %v1154, %v1202
  %v1204 = vpop.f32.mrb[0].mxu0
  %1205 = vdwg.mxu0
  %1206 = vmatprep.subr.bf16.mxu0 0
  %1207 = vmatpush1.bf16.msra.mxu0 %v866
  %1208 = vmatprep.subr.bf16.mxu0 0
  %1209 = vmatpush1.bf16.msra.mxu0 %v867
  %1210 = vmatprep.subr.bf16.mxu0 0
  %1211 = vmatpush1.bf16.msra.mxu0 %v868
  %1212 = vmatprep.subr.bf16.mxu0 0
  %1213 = vmatpush1.bf16.msra.mxu0 %v869
  %1214 = vmatprep.subr.bf16.mxu0 0
  %1215 = vmatpush1.bf16.msra.mxu0 %v870
  %1216 = vmatprep.subr.bf16.mxu0 0
  %1217 = vmatpush1.bf16.msra.mxu0 %v871
  %1218 = vmatprep.subr.bf16.mxu0 0
  %1219 = vmatpush1.bf16.msra.mxu0 %v872
  %1220 = vmatprep.subr.bf16.mxu0 0
  %1221 = vmatpush1.bf16.msra.mxu0 %v873
  %1222 = vmatprep.subr.bf16.mxu0 0
  %1223 = vmatpush1.bf16.msra.mxu0 %v874
  %1224 = vmatprep.subr.bf16.mxu0 0
  %1225 = vmatpush1.bf16.msra.mxu0 %v875
  %1226 = vmatprep.subr.bf16.mxu0 0
  %1227 = vmatpush1.bf16.msra.mxu0 %v876
  %1228 = vmatprep.subr.bf16.mxu0 0
  %1229 = vmatpush1.bf16.msra.mxu0 %v877
  %1230 = vmatprep.subr.bf16.mxu0 0
  %1231 = vmatpush1.bf16.msra.mxu0 %v878
  %1232 = vmatprep.subr.bf16.mxu0 0
  %1233 = vmatpush1.bf16.msra.mxu0 %v879
  %1234 = vmatprep.subr.bf16.mxu0 0
  %1235 = vmatpush1.bf16.msra.mxu0 %v880
  %1236 = vmatprep.subr.bf16.mxu0 0
  %1237 = vmatpush1.bf16.msra.mxu0 %v881
  %1238 = vmatprep.mubr.bf16.mxu0 %v343
  %1239 = vmatmul.mubr.bf16.gmra.mrb[0].mxu0 %v342
  %v1240 = vpop.f32.mrb[0].mxu0
  %v1241 = vadd.f32 %v1192, %v1240
  %v1242 = vpop.f32.mrb[0].mxu0
  %v1243 = vpop.f32.mrb[0].mxu0
  %v1244 = vadd.f32 %v1195, %v1243
  %v1245 = vpop.f32.mrb[0].mxu0
  %1246 = vmatprep.mubr.bf16.mxu0 %v356
  %1247 = vmatmul.mubr.bf16.gmra.mrb[0].mxu0 %v355
  %v1248 = vpop.f32.mrb[0].mxu0
  %v1249 = vadd.f32 %v1200, %v1248
  %v1250 = vpop.f32.mrb[0].mxu0
  %v1251 = vpop.f32.mrb[0].mxu0
  %v1252 = vadd.f32 %v1203, %v1251
  %v1253 = vpop.f32.mrb[0].mxu0
  %1254 = vdwg.mxu0
  %1255 = vmatprep.subr.bf16.mxu0 0
  %1256 = vmatpush1.bf16.msra.mxu0 %v882
  %1257 = vmatprep.subr.bf16.mxu0 0
  %1258 = vmatpush1.bf16.msra.mxu0 %v883
  %1259 = vmatprep.subr.bf16.mxu0 0
  %1260 = vmatpush1.bf16.msra.mxu0 %v884
  %1261 = vmatprep.subr.bf16.mxu0 0
  %1262 = vmatpush1.bf16.msra.mxu0 %v885
  %1263 = vmatprep.subr.bf16.mxu0 0
  %1264 = vmatpush1.bf16.msra.mxu0 %v886
  %1265 = vmatprep.subr.bf16.mxu0 0
  %1266 = vmatpush1.bf16.msra.mxu0 %v887
  %1267 = vmatprep.subr.bf16.mxu0 0
  %1268 = vmatpush1.bf16.msra.mxu0 %v888
  %1269 = vmatprep.subr.bf16.mxu0 0
  %1270 = vmatpush1.bf16.msra.mxu0 %v889
  %1271 = vmatprep.subr.bf16.mxu0 0
  %1272 = vmatpush1.bf16.msra.mxu0 %v890
  %1273 = vmatprep.subr.bf16.mxu0 0
  %1274 = vmatpush1.bf16.msra.mxu0 %v891
  %1275 = vmatprep.subr.bf16.mxu0 0
  %1276 = vmatpush1.bf16.msra.mxu0 %v892
  %1277 = vmatprep.subr.bf16.mxu0 0
  %1278 = vmatpush1.bf16.msra.mxu0 %v893
  %1279 = vmatprep.subr.bf16.mxu0 0
  %1280 = vmatpush1.bf16.msra.mxu0 %v894
  %1281 = vmatprep.subr.bf16.mxu0 0
  %1282 = vmatpush1.bf16.msra.mxu0 %v895
  %1283 = vmatprep.subr.bf16.mxu0 0
  %1284 = vmatpush1.bf16.msra.mxu0 %v896
  %1285 = vmatprep.subr.bf16.mxu0 0
  %1286 = vmatpush1.bf16.msra.mxu0 %v897
  %1287 = vmatprep.mubr.bf16.mxu0 %v345
  %1288 = vmatmul.mubr.bf16.gmra.mrb[0].mxu0 %v344
  %v1289 = vpop.f32.mrb[0].mxu0
  %v1290 = vadd.f32 %v1241, %v1289
  %v1291 = vpop.f32.mrb[0].mxu0
  %v1292 = vpop.f32.mrb[0].mxu0
  %v1293 = vadd.f32 %v1244, %v1292
  %v1294 = vpop.f32.mrb[0].mxu0
  %1295 = vmatprep.mubr.bf16.mxu0 %v358
  %1296 = vmatmul.mubr.bf16.gmra.mrb[0].mxu0 %v357
  %v1297 = vpop.f32.mrb[0].mxu0
  %v1298 = vadd.f32 %v1249, %v1297
  %v1299 = vpop.f32.mrb[0].mxu0
  %v1300 = vpop.f32.mrb[0].mxu0
  %v1301 = vadd.f32 %v1252, %v1300
  %v1302 = vpop.f32.mrb[0].mxu0
  %1303 = vdwg.mxu0
  %1304 = vmatprep.subr.bf16.mxu0 0
  %1305 = vmatpush1.bf16.msra.mxu0 %v898
  %1306 = vmatprep.subr.bf16.mxu0 0
  %1307 = vmatpush1.bf16.msra.mxu0 %v899
  %1308 = vmatprep.subr.bf16.mxu0 0
  %1309 = vmatpush1.bf16.msra.mxu0 %v900
  %1310 = vmatprep.subr.bf16.mxu0 0
  %1311 = vmatpush1.bf16.msra.mxu0 %v901
  %1312 = vmatprep.subr.bf16.mxu0 0
  %1313 = vmatpush1.bf16.msra.mxu0 %v902
  %1314 = vmatprep.subr.bf16.mxu0 0
  %1315 = vmatpush1.bf16.msra.mxu0 %v903
  %1316 = vmatprep.subr.bf16.mxu0 0
  %1317 = vmatpush1.bf16.msra.mxu0 %v904
  %1318 = vmatprep.subr.bf16.mxu0 0
  %1319 = vmatpush1.bf16.msra.mxu0 %v905
  %1320 = vmatprep.subr.bf16.mxu0 0
  %1321 = vmatpush1.bf16.msra.mxu0 0
  %1322 = vmatprep.subr.bf16.mxu0 0
  %1323 = vmatpush1.bf16.msra.mxu0 0
  %1324 = vmatprep.subr.bf16.mxu0 0
  %1325 = vmatpush1.bf16.msra.mxu0 0
  %1326 = vmatprep.subr.bf16.mxu0 0
  %1327 = vmatpush1.bf16.msra.mxu0 0
  %1328 = vmatprep.subr.bf16.mxu0 0
  %1329 = vmatpush1.bf16.msra.mxu0 0
  %1330 = vmatprep.subr.bf16.mxu0 0
  %1331 = vmatpush1.bf16.msra.mxu0 0
  %1332 = vmatprep.subr.bf16.mxu0 0
  %1333 = vmatpush1.bf16.msra.mxu0 0
  %1334 = vmatprep.subr.bf16.mxu0 0
  %1335 = vmatpush1.bf16.msra.mxu0 0
  %1336 = vmatprep.mubr.bf16.mxu0 0
  %1337 = vmatmul.mubr.bf16.gmra.mrb[0].mxu0 %v346
  %v1338 = vpop.f32.mrb[0].mxu0
  %v1339 = vadd.f32 %v1290, %v1338
  %v1340 = vpop.f32.mrb[0].mxu0
  %v1341 = vpop.f32.mrb[0].mxu0
  %v1342 = vadd.f32 %v1293, %v1341
  %v1343 = vpop.f32.mrb[0].mxu0
  %1344 = vmatprep.mubr.bf16.mxu0 0
  %1345 = vmatmul.mubr.bf16.gmra.mrb[0].mxu0 %v359
  %v1346 = vpop.f32.mrb[0].mxu0
  %v1347 = vadd.f32 %v1298, %v1346
  %v1348 = vpop.f32.mrb[0].mxu0
  %v1349 = vpop.f32.mrb[0].mxu0
  %v1350 = vadd.f32 %v1301, %v1349
  %v1351 = vpop.f32.mrb[0].mxu0
  %1352 = vdwg.mxu0
  %s1353 = smul.u32 0, 32
  %s1354 = scalar_lea.vmem [#allocation2], %s1353
  %1355 = vst [vmem:[%s1354] sm:$0xff] %v1339
  %1356 = vst [vmem:[%s1354 + $0x8] sm:$0xff] %v1342
  %1357 = vst [vmem:[%s1354 + $0x10] sm:$0xff] %v1347
  %1358 = vst [vmem:[%s1354 + $0x18] sm:$0xff] %v1350
  %p1359 = scmp.eq.s32.totalorder 0, 0
  // Predicated region
  $region18: #{gnet_forward.5} parent=0 // pred_check
    %p1360 = pneg %p1359
  $region19: #{gnet_forward.5} parent=0 // pred_check_branch
    %1362 = sbr.rel (%p1360) target = $region21
  $region20: #{gnet_forward.5} parent=0 // pred_region
    %1363 = vst [vmem:[#allocation3] sm:$0x1] 0.0
  $region21: #{gnet_forward.5} parent=0 // pred_fallthru
    _
  %v1364 = vld [vmem:[#allocation3] sm:$0x1]
  %v1365 = vadd.f32 %v1339, %v1342
  %v1366 = vadd.f32 %v1365, %v1347
  %v1367 = vadd.f32 %v1366, %v1350
  %v1368 = vrot.slane %v1367, 4
  %v1369 = vadd.f32 %v1367, %v1368
  %v1370 = vrot.slane %v1369, 2
  %v1371 = vadd.f32 %v1369, %v1370
  %v1372 = vrot.slane %v1371, 1
  %v1373 = vadd.f32 %v1371, %v1372
  %v1374 = vadd.f32 %v1364, %v1373
  %1375 = vst [vmem:[#allocation3] sm:$0x1] %v1374
  // Predicated region
  $region22: #{gnet_forward.5} parent=0 // pred_check
    %p1376 = pneg %p1359
  $region23: #{gnet_forward.5} parent=0 // pred_check_branch
    %1378 = sbr.rel (%p1376) target = $region25
  $region24: #{gnet_forward.5} parent=0 // pred_region
    %v1379 = vld [vmem:[#allocation3] sm:$0x1]
    %v1380 = vmul.f32 %v1379, 0.03125
    %v1381 = vld [vmem:[#allocation2] sm:$0xff]
    %v1382 = vld [vmem:[#allocation2 + $0x8] sm:$0xff]
    %v1383 = vld [vmem:[#allocation2 + $0x10] sm:$0xff]
    %v1384 = vld [vmem:[#allocation2 + $0x18] sm:$0xff]
    %v1386 = vlaneseq
    %v1387 = vshrl.u32 %v1386, 7
    %v1388 = vsub.s32 0, %v1387
    %v1389 = vrot.slane %v1380, %v1388
    %v1391 = vsub.f32 %v1381, %v1389
    %v1392 = vsub.f32 %v1382, %v1389
    %v1393 = vsub.f32 %v1383, %v1389
    %v1394 = vsub.f32 %v1384, %v1389
    %v1395 = vmul.f32 %v1391, %v1391
    %v1396 = vmul.f32 %v1392, %v1392
    %v1397 = vmul.f32 %v1393, %v1393
    %v1398 = vmul.f32 %v1394, %v1394
    %v1399 = vadd.f32 %v1395, %v1396
    %v1400 = vadd.f32 %v1399, %v1397
    %v1401 = vadd.f32 %v1400, %v1398
    %v1402 = vrot.slane %v1401, 4
    %v1403 = vadd.f32 %v1401, %v1402
    %v1404 = vrot.slane %v1403, 2
    %v1405 = vadd.f32 %v1403, %v1404
    %v1406 = vrot.slane %v1405, 1
    %v1407 = vadd.f32 %v1405, %v1406
    %v1408 = vadd.f32 %v1407, 0.0
    %v1409 = vmul.f32 %v1408, 0.03125
    %v1410 = vld [vmem:[%s2] sm:$0x1]
    %v1411 = vadd.f32 %v1409, 1e-05
    %v1412 = vrsqrt.pop %v1411
    %v1413 = vmul.f32 %v1410, %v1412
    %v1414 = vld [vmem:[%s3] sm:$0x1]
    %v1415 = vmul.f32 %v1380, %v1413
    %v1416 = vsub.f32 %v1414, %v1415
    %v1418 = vlaneseq
    %v1419 = vshrl.u32 %v1418, 7
    %v1420 = vsub.s32 0, %v1419
    %v1421 = vrot.slane %v1413, %v1420
    %v1423 = vmul.f32 %v1381, %v1421
    %v1424 = vmul.f32 %v1382, %v1421
    %v1425 = vmul.f32 %v1383, %v1421
    %v1426 = vmul.f32 %v1384, %v1421
    %v1428 = vlaneseq
    %v1429 = vshrl.u32 %v1428, 7
    %v1430 = vsub.s32 0, %v1429
    %v1431 = vrot.slane %v1416, %v1430
    %v1433 = vadd.f32 %v1423, %v1431
    %v1434 = vadd.f32 %v1424, %v1431
    %v1435 = vadd.f32 %v1425, %v1431
    %v1436 = vadd.f32 %v1426, %v1431
    %v1437 = vmax.f32 %v1433, 0.0
    %v1438 = vmax.f32 %v1434, 0.0
    %v1439 = vmax.f32 %v1435, 0.0
    %v1440 = vmax.f32 %v1436, 0.0
    %v1441 = vpack.c.bf16 %v1438, %v1437
    %v1442 = vpack.c.bf16 %v1440, %v1439
    %v1445 = vunpack.c.l.b16 %v1441
    %v1446 = vunpack.c.h.b16 %v1441
    %v1447 = vunpack.c.l.b16 %v1442
    %v1448 = vunpack.c.h.b16 %v1442
    %v1449 = vpack.c.b16 %v1445, %v1445
    %v1450 = vpack.c.b16 %v1446, %v1446
    %v1451 = vpack.c.b16 %v1447, %v1447
    %v1452 = vpack.c.b16 %v1448, %v1448
    %vm1457 = vcmask 519168
    %1458 = vst.msk [vmem:[%s4] sm:$0xf] %vm1457, %v1449
    %1459 = vst.msk [vmem:[%s4 + $0x4] sm:$0xf] %vm1457, %v1450
    %1460 = vst.msk [vmem:[%s4 + $0x8] sm:$0xf] %vm1457, %v1451
    %1461 = vst.msk [vmem:[%s4 + $0xc] sm:$0xf] %vm1457, %v1452
  $region25: #{gnet_forward.5} parent=0 // pred_fallthru
    _
  // Predicated region
  $region26: #{gnet_forward.5} parent=0 // pred_check
    _
  $region27: #{gnet_forward.5} parent=0 // pred_check_branch
    %1463 = sbr.rel (0) target = $region29
  $region28: #{gnet_forward.5} parent=0 // pred_region
    _
  $region29: #{gnet_forward.5} parent=0 // pred_fallthru
    _
  // Predicated region
  $region30: #{gnet_forward.5} parent=0 // pred_check
    _
  $region31: #{gnet_forward.5} parent=0 // pred_check_branch
    %1465 = sbr.rel (0) target = $region33
  $region32: #{gnet_forward.5} parent=0 // pred_region
    _
  $region33: #{gnet_forward.5} parent=0 // pred_fallthru
    _

// kernel: gnet_forward.6
$region0: #{gnet_forward.6}
  #allocation0 [shape = 'u32[]', space=smem, size = 0x4, offset = 0x4, fixed_abs, tag = 'smem constant byte address 0x4 - core index']
  #allocation1 [shape = 'u32[144,128]{1,0:T(1,128)}', space=vmem, size = 0x12000, scoped, tag = 'internal scratch']
  #allocation2 [shape = 'f32[128,128]{1,0:T(8,128)}', space=vmem, size = 0x10000, scoped, tag = 'scratch operand']
  #allocation3 [shape = 'f32[1,128]{1,0:T(1,128)}', space=vmem, size = 0x200, scoped, tag = 'scratch operand']
  %s0 = inlined_call_operand.vmem [shape: bf16[128,1024], index: 0, kind: input, shape index: {}]
  %s1 = inlined_call_operand.vmem [shape: bf16[1024,128], index: 1, kind: input, shape index: {}]
  %s2 = inlined_call_operand.vmem [shape: f32[1,128], index: 2, kind: input, shape index: {}]
  %s3 = inlined_call_operand.vmem [shape: f32[1,128], index: 3, kind: input, shape index: {}]
  %s4 = inlined_call_operand.vmem [shape: bf16[128,32], index: 4, kind: output, shape index: {}]
  %s5 = sld [smem:[#allocation0]]
  $region34: #{gnet_forward.6} parent=0
    _
  %s7 = ssub.s32 1, %s5
  %s8 = scalar_select 0, %s7, %s5
  // Predicated region
  $region2: #{gnet_forward.6} parent=0 // pred_check
    _
  $region3: #{gnet_forward.6} parent=0 // pred_check_branch
    %10 = sbr.rel (0) target = $region5
  $region4: #{gnet_forward.6} parent=0 // pred_region
    _
  $region5: #{gnet_forward.6} parent=0 // pred_fallthru
    _
  // Predicated region
  $region6: #{gnet_forward.6} parent=0 // pred_check
    _
  $region7: #{gnet_forward.6} parent=0 // pred_check_branch
    %12 = sbr.rel (0) target = $region9
  $region8: #{gnet_forward.6} parent=0 // pred_region
    _
  $region9: #{gnet_forward.6} parent=0 // pred_fallthru
    _
  // Predicated region
  $region10: #{gnet_forward.6} parent=0 // pred_check
    _
  $region11: #{gnet_forward.6} parent=0 // pred_check_branch
    %14 = sbr.rel (0) target = $region13
  $region12: #{gnet_forward.6} parent=0 // pred_region
    _
  $region13: #{gnet_forward.6} parent=0 // pred_fallthru
    _
  // Predicated region
  $region14: #{gnet_forward.6} parent=0 // pred_check
    _
  $region15: #{gnet_forward.6} parent=0 // pred_check_branch
    %16 = sbr.rel (0) target = $region17
  $region16: #{gnet_forward.6} parent=0 // pred_region
    _
  $region17: #{gnet_forward.6} parent=0 // pred_fallthru
    _
  %v18 = vld [vmem:[%s0] sm:$0xff]
  %v19 = vld [vmem:[%s0 + $0x8] sm:$0xff]
  %v20 = vld [vmem:[%s0 + $0x10] sm:$0xff]
  %v21 = vld [vmem:[%s0 + $0x18] sm:$0xff]
  %v22 = vld [vmem:[%s0 + $0x20] sm:$0xff]
  %v23 = vld [vmem:[%s0 + $0x28] sm:$0xff]
  %v24 = vld [vmem:[%s0 + $0x30] sm:$0xff]
  %v25 = vld [vmem:[%s0 + $0x38] sm:$0xff]
  %v26 = vld [vmem:[%s0 + $0x40] sm:$0xff]
  %v27 = vld [vmem:[%s0 + $0x48] sm:$0xff]
  %v28 = vld [vmem:[%s0 + $0x50] sm:$0xff]
  %v29 = vld [vmem:[%s0 + $0x58] sm:$0xff]
  %v30 = vld [vmem:[%s0 + $0x60] sm:$0xff]
  %v31 = vld [vmem:[%s0 + $0x68] sm:$0xff]
  %v32 = vld [vmem:[%s0 + $0x70] sm:$0xff]
  %v33 = vld [vmem:[%s0 + $0x78] sm:$0xff]
  %v34 = vld [vmem:[%s0 + $0x80] sm:$0xff]
  %v35 = vld [vmem:[%s0 + $0x88] sm:$0xff]
  %v36 = vld [vmem:[%s0 + $0x90] sm:$0xff]
  %v37 = vld [vmem:[%s0 + $0x98] sm:$0xff]
  %v38 = vld [vmem:[%s0 + $0xa0] sm:$0xff]
  %v39 = vld [vmem:[%s0 + $0xa8] sm:$0xff]
  %v40 = vld [vmem:[%s0 + $0xb0] sm:$0xff]
  %v41 = vld [vmem:[%s0 + $0xb8] sm:$0xff]
  %v42 = vld [vmem:[%s0 + $0xc0] sm:$0xff]
  %v43 = vld [vmem:[%s0 + $0xc8] sm:$0xff]
  %v44 = vld [vmem:[%s0 + $0xd0] sm:$0xff]
  %v45 = vld [vmem:[%s0 + $0xd8] sm:$0xff]
  %v46 = vld [vmem:[%s0 + $0xe0] sm:$0xff]
  %v47 = vld [vmem:[%s0 + $0xe8] sm:$0xff]
  %v48 = vld [vmem:[%s0 + $0xf0] sm:$0xff]
  %v49 = vld [vmem:[%s0 + $0xf8] sm:$0xff]
  %v50 = vld [vmem:[%s0 + $0x100] sm:$0xff]
  %v51 = vld [vmem:[%s0 + $0x108] sm:$0xff]
  %v52 = vld [vmem:[%s0 + $0x110] sm:$0xff]
  %v53 = vld [vmem:[%s0 + $0x118] sm:$0xff]
  %v54 = vld [vmem:[%s0 + $0x120] sm:$0xff]
  %v55 = vld [vmem:[%s0 + $0x128] sm:$0xff]
  %v56 = vld [vmem:[%s0 + $0x130] sm:$0xff]
  %v57 = vld [vmem:[%s0 + $0x138] sm:$0xff]
  %v58 = vld [vmem:[%s0 + $0x140] sm:$0xff]
  %v59 = vld [vmem:[%s0 + $0x148] sm:$0xff]
  %v60 = vld [vmem:[%s0 + $0x150] sm:$0xff]
  %v61 = vld [vmem:[%s0 + $0x158] sm:$0xff]
  %v62 = vld [vmem:[%s0 + $0x160] sm:$0xff]
  %v63 = vld [vmem:[%s0 + $0x168] sm:$0xff]
  %v64 = vld [vmem:[%s0 + $0x170] sm:$0xff]
  %v65 = vld [vmem:[%s0 + $0x178] sm:$0xff]
  %v66 = vld [vmem:[%s0 + $0x180] sm:$0xff]
  %v67 = vld [vmem:[%s0 + $0x188] sm:$0xff]
  %v68 = vld [vmem:[%s0 + $0x190] sm:$0xff]
  %v69 = vld [vmem:[%s0 + $0x198] sm:$0xff]
  %v70 = vld [vmem:[%s0 + $0x1a0] sm:$0xff]
  %v71 = vld [vmem:[%s0 + $0x1a8] sm:$0xff]
  %v72 = vld [vmem:[%s0 + $0x1b0] sm:$0xff]
  %v73 = vld [vmem:[%s0 + $0x1b8] sm:$0xff]
  %v74 = vld [vmem:[%s0 + $0x1c0] sm:$0xff]
  %v75 = vld [vmem:[%s0 + $0x1c8] sm:$0xff]
  %v76 = vld [vmem:[%s0 + $0x1d0] sm:$0xff]
  %v77 = vld [vmem:[%s0 + $0x1d8] sm:$0xff]
  %v78 = vld [vmem:[%s0 + $0x1e0] sm:$0xff]
  %v79 = vld [vmem:[%s0 + $0x1e8] sm:$0xff]
  %v80 = vld [vmem:[%s0 + $0x1f0] sm:$0xff]
  %v81 = vld [vmem:[%s0 + $0x1f8] sm:$0xff]
  %v82 = vld [vmem:[%s1] sm:$0xf]
  %v83 = vld [vmem:[%s1 + $0x4] sm:$0xf]
  %v84 = vld [vmem:[%s1 + $0x8] sm:$0xf]
  %v85 = vld [vmem:[%s1 + $0xc] sm:$0xf]
  %v86 = vld [vmem:[%s1 + $0x10] sm:$0xf]
  %v87 = vld [vmem:[%s1 + $0x14] sm:$0xf]
  %v88 = vld [vmem:[%s1 + $0x18] sm:$0xf]
  %v89 = vld [vmem:[%s1 + $0x1c] sm:$0xf]
  %v90 = vld [vmem:[%s1 + $0x20] sm:$0xf]
  %v91 = vld [vmem:[%s1 + $0x24] sm:$0xf]
  %v92 = vld [vmem:[%s1 + $0x28] sm:$0xf]
  %v93 = vld [vmem:[%s1 + $0x2c] sm:$0xf]
  %v94 = vld [vmem:[%s1 + $0x30] sm:$0xf]
  %v95 = vld [vmem:[%s1 + $0x34] sm:$0xf]
  %v96 = vld [vmem:[%s1 + $0x38] sm:$0xf]
  %v97 = vld [vmem:[%s1 + $0x3c] sm:$0xf]
  %v98 = vld [vmem:[%s1 + $0x40] sm:$0xf]
  %v99 = vld [vmem:[%s1 + $0x44] sm:$0xf]
  %v100 = vld [vmem:[%s1 + $0x48] sm:$0xf]
  %v101 = vld [vmem:[%s1 + $0x4c] sm:$0xf]
  %v102 = vld [vmem:[%s1 + $0x50] sm:$0xf]
  %v103 = vld [vmem:[%s1 + $0x54] sm:$0xf]
  %v104 = vld [vmem:[%s1 + $0x58] sm:$0xf]
  %v105 = vld [vmem:[%s1 + $0x5c] sm:$0xf]
  %v106 = vld [vmem:[%s1 + $0x60] sm:$0xf]
  %v107 = vld [vmem:[%s1 + $0x64] sm:$0xf]
  %v108 = vld [vmem:[%s1 + $0x68] sm:$0xf]
  %v109 = vld [vmem:[%s1 + $0x6c] sm:$0xf]
  %v110 = vld [vmem:[%s1 + $0x70] sm:$0xf]
  %v111 = vld [vmem:[%s1 + $0x74] sm:$0xf]
  %v112 = vld [vmem:[%s1 + $0x78] sm:$0xf]
  %v113 = vld [vmem:[%s1 + $0x7c] sm:$0xf]
  %v114 = vld [vmem:[%s1 + $0x80] sm:$0xf]
  %v115 = vld [vmem:[%s1 + $0x84] sm:$0xf]
  %v116 = vld [vmem:[%s1 + $0x88] sm:$0xf]
  %v117 = vld [vmem:[%s1 + $0x8c] sm:$0xf]
  %v118 = vld [vmem:[%s1 + $0x90] sm:$0xf]
  %v119 = vld [vmem:[%s1 + $0x94] sm:$0xf]
  %v120 = vld [vmem:[%s1 + $0x98] sm:$0xf]
  %v121 = vld [vmem:[%s1 + $0x9c] sm:$0xf]
  %v122 = vld [vmem:[%s1 + $0xa0] sm:$0xf]
  %v123 = vld [vmem:[%s1 + $0xa4] sm:$0xf]
  %v124 = vld [vmem:[%s1 + $0xa8] sm:$0xf]
  %v125 = vld [vmem:[%s1 + $0xac] sm:$0xf]
  %v126 = vld [vmem:[%s1 + $0xb0] sm:$0xf]
  %v127 = vld [vmem:[%s1 + $0xb4] sm:$0xf]
  %v128 = vld [vmem:[%s1 + $0xb8] sm:$0xf]
  %v129 = vld [vmem:[%s1 + $0xbc] sm:$0xf]
  %v130 = vld [vmem:[%s1 + $0xc0] sm:$0xf]
  %v131 = vld [vmem:[%s1 + $0xc4] sm:$0xf]
  %v132 = vld [vmem:[%s1 + $0xc8] sm:$0xf]
  %v133 = vld [vmem:[%s1 + $0xcc] sm:$0xf]
  %v134 = vld [vmem:[%s1 + $0xd0] sm:$0xf]
  %v135 = vld [vmem:[%s1 + $0xd4] sm:$0xf]
  %v136 = vld [vmem:[%s1 + $0xd8] sm:$0xf]
  %v137 = vld [vmem:[%s1 + $0xdc] sm:$0xf]
  %v138 = vld [vmem:[%s1 + $0xe0] sm:$0xf]
  %v139 = vld [vmem:[%s1 + $0xe4] sm:$0xf]
  %v140 = vld [vmem:[%s1 + $0xe8] sm:$0xf]
  %v141 = vld [vmem:[%s1 + $0xec] sm:$0xf]
  %v142 = vld [vmem:[%s1 + $0xf0] sm:$0xf]
  %v143 = vld [vmem:[%s1 + $0xf4] sm:$0xf]
  %v144 = vld [vmem:[%s1 + $0xf8] sm:$0xf]
  %v145 = vld [vmem:[%s1 + $0xfc] sm:$0xf]
  %v146 = vld [vmem:[%s1 + $0x100] sm:$0xf]
  %v147 = vld [vmem:[%s1 + $0x104] sm:$0xf]
  %v148 = vld [vmem:[%s1 + $0x108] sm:$0xf]
  %v149 = vld [vmem:[%s1 + $0x10c] sm:$0xf]
  %v150 = vld [vmem:[%s1 + $0x110] sm:$0xf]
  %v151 = vld [vmem:[%s1 + $0x114] sm:$0xf]
  %v152 = vld [vmem:[%s1 + $0x118] sm:$0xf]
  %v153 = vld [vmem:[%s1 + $0x11c] sm:$0xf]
  %v154 = vld [vmem:[%s1 + $0x120] sm:$0xf]
  %v155 = vld [vmem:[%s1 + $0x124] sm:$0xf]
  %v156 = vld [vmem:[%s1 + $0x128] sm:$0xf]
  %v157 = vld [vmem:[%s1 + $0x12c] sm:$0xf]
  %v158 = vld [vmem:[%s1 + $0x130] sm:$0xf]
  %v159 = vld [vmem:[%s1 + $0x134] sm:$0xf]
  %v160 = vld [vmem:[%s1 + $0x138] sm:$0xf]
  %v161 = vld [vmem:[%s1 + $0x13c] sm:$0xf]
  %v162 = vld [vmem:[%s1 + $0x140] sm:$0xf]
  %v163 = vld [vmem:[%s1 + $0x144] sm:$0xf]
  %v164 = vld [vmem:[%s1 + $0x148] sm:$0xf]
  %v165 = vld [vmem:[%s1 + $0x14c] sm:$0xf]
  %v166 = vld [vmem:[%s1 + $0x150] sm:$0xf]
  %v167 = vld [vmem:[%s1 + $0x154] sm:$0xf]
  %v168 = vld [vmem:[%s1 + $0x158] sm:$0xf]
  %v169 = vld [vmem:[%s1 + $0x15c] sm:$0xf]
  %v170 = vld [vmem:[%s1 + $0x160] sm:$0xf]
  %v171 = vld [vmem:[%s1 + $0x164] sm:$0xf]
  %v172 = vld [vmem:[%s1 + $0x168] sm:$0xf]
  %v173 = vld [vmem:[%s1 + $0x16c] sm:$0xf]
  %v174 = vld [vmem:[%s1 + $0x170] sm:$0xf]
  %v175 = vld [vmem:[%s1 + $0x174] sm:$0xf]
  %v176 = vld [vmem:[%s1 + $0x178] sm:$0xf]
  %v177 = vld [vmem:[%s1 + $0x17c] sm:$0xf]
  %v178 = vld [vmem:[%s1 + $0x180] sm:$0xf]
  %v179 = vld [vmem:[%s1 + $0x184] sm:$0xf]
  %v180 = vld [vmem:[%s1 + $0x188] sm:$0xf]
  %v181 = vld [vmem:[%s1 + $0x18c] sm:$0xf]
  %v182 = vld [vmem:[%s1 + $0x190] sm:$0xf]
  %v183 = vld [vmem:[%s1 + $0x194] sm:$0xf]
  %v184 = vld [vmem:[%s1 + $0x198] sm:$0xf]
  %v185 = vld [vmem:[%s1 + $0x19c] sm:$0xf]
  %v186 = vld [vmem:[%s1 + $0x1a0] sm:$0xf]
  %v187 = vld [vmem:[%s1 + $0x1a4] sm:$0xf]
  %v188 = vld [vmem:[%s1 + $0x1a8] sm:$0xf]
  %v189 = vld [vmem:[%s1 + $0x1ac] sm:$0xf]
  %v190 = vld [vmem:[%s1 + $0x1b0] sm:$0xf]
  %v191 = vld [vmem:[%s1 + $0x1b4] sm:$0xf]
  %v192 = vld [vmem:[%s1 + $0x1b8] sm:$0xf]
  %v193 = vld [vmem:[%s1 + $0x1bc] sm:$0xf]
  %v194 = vld [vmem:[%s1 + $0x1c0] sm:$0xf]
  %v195 = vld [vmem:[%s1 + $0x1c4] sm:$0xf]
  %v196 = vld [vmem:[%s1 + $0x1c8] sm:$0xf]
  %v197 = vld [vmem:[%s1 + $0x1cc] sm:$0xf]
  %v198 = vld [vmem:[%s1 + $0x1d0] sm:$0xf]
  %v199 = vld [vmem:[%s1 + $0x1d4] sm:$0xf]
  %v200 = vld [vmem:[%s1 + $0x1d8] sm:$0xf]
  %v201 = vld [vmem:[%s1 + $0x1dc] sm:$0xf]
  %v202 = vld [vmem:[%s1 + $0x1e0] sm:$0xf]
  %v203 = vld [vmem:[%s1 + $0x1e4] sm:$0xf]
  %v204 = vld [vmem:[%s1 + $0x1e8] sm:$0xf]
  %v205 = vld [vmem:[%s1 + $0x1ec] sm:$0xf]
  %v206 = vld [vmem:[%s1 + $0x1f0] sm:$0xf]
  %v207 = vld [vmem:[%s1 + $0x1f4] sm:$0xf]
  %v208 = vld [vmem:[%s1 + $0x1f8] sm:$0xf]
  %v209 = vld [vmem:[%s1 + $0x1fc] sm:$0xf]
  %v274 = vunpack.c.l.b16 %v18
  %v275 = vunpack.c.h.b16 %v18
  %v276 = vunpack.c.l.b16 %v19
  %v277 = vunpack.c.h.b16 %v19
  %v278 = vunpack.c.l.b16 %v20
  %v279 = vunpack.c.h.b16 %v20
  %v280 = vunpack.c.l.b16 %v21
  %v281 = vunpack.c.h.b16 %v21
  %v282 = vunpack.c.l.b16 %v22
  %v283 = vunpack.c.h.b16 %v22
  %v284 = vunpack.c.l.b16 %v23
  %v285 = vunpack.c.h.b16 %v23
  %v286 = vunpack.c.l.b16 %v24
  %v287 = vunpack.c.h.b16 %v24
  %v288 = vunpack.c.l.b16 %v25
  %v289 = vunpack.c.h.b16 %v25
  %v290 = vunpack.c.l.b16 %v26
  %v291 = vunpack.c.h.b16 %v26
  %v292 = vunpack.c.l.b16 %v27
  %v293 = vunpack.c.h.b16 %v27
  %v294 = vunpack.c.l.b16 %v28
  %v295 = vunpack.c.h.b16 %v28
  %v296 = vunpack.c.l.b16 %v29
  %v297 = vunpack.c.h.b16 %v29
  %v298 = vunpack.c.l.b16 %v30
  %v299 = vunpack.c.h.b16 %v30
  %v300 = vunpack.c.l.b16 %v31
  %v301 = vunpack.c.h.b16 %v31
  %v302 = vunpack.c.l.b16 %v32
  %v303 = vunpack.c.h.b16 %v32
  %v304 = vunpack.c.l.b16 %v33
  %v305 = vunpack.c.h.b16 %v33
  %v306 = vunpack.c.l.b16 %v34
  %v307 = vunpack.c.h.b16 %v34
  %v308 = vunpack.c.l.b16 %v35
  %v309 = vunpack.c.h.b16 %v35
  %v310 = vunpack.c.l.b16 %v36
  %v311 = vunpack.c.h.b16 %v36
  %v312 = vunpack.c.l.b16 %v37
  %v313 = vunpack.c.h.b16 %v37
  %v314 = vunpack.c.l.b16 %v38
  %v315 = vunpack.c.h.b16 %v38
  %v316 = vunpack.c.l.b16 %v39
  %v317 = vunpack.c.h.b16 %v39
  %v318 = vunpack.c.l.b16 %v40
  %v319 = vunpack.c.h.b16 %v40
  %v320 = vunpack.c.l.b16 %v41
  %v321 = vunpack.c.h.b16 %v41
  %v322 = vunpack.c.l.b16 %v42
  %v323 = vunpack.c.h.b16 %v42
  %v324 = vunpack.c.l.b16 %v43
  %v325 = vunpack.c.h.b16 %v43
  %v326 = vunpack.c.l.b16 %v44
  %v327 = vunpack.c.h.b16 %v44
  %v328 = vunpack.c.l.b16 %v45
  %v329 = vunpack.c.h.b16 %v45
  %v330 = vunpack.c.l.b16 %v46
  %v331 = vunpack.c.h.b16 %v46
  %v332 = vunpack.c.l.b16 %v47
  %v333 = vunpack.c.h.b16 %v47
  %v334 = vunpack.c.l.b16 %v48
  %v335 = vunpack.c.h.b16 %v48
  %v336 = vunpack.c.l.b16 %v49
  %v337 = vunpack.c.h.b16 %v49
  %v338 = vunpack.c.l.b16 %v50
  %v339 = vunpack.c.h.b16 %v50
  %v340 = vunpack.c.l.b16 %v51
  %v341 = vunpack.c.h.b16 %v51
  %v342 = vunpack.c.l.b16 %v52
  %v343 = vunpack.c.h.b16 %v52
  %v344 = vunpack.c.l.b16 %v53
  %v345 = vunpack.c.h.b16 %v53
  %v346 = vunpack.c.l.b16 %v54
  %v347 = vunpack.c.h.b16 %v54
  %v348 = vunpack.c.l.b16 %v55
  %v349 = vunpack.c.h.b16 %v55
  %v350 = vunpack.c.l.b16 %v56
  %v351 = vunpack.c.h.b16 %v56
  %v352 = vunpack.c.l.b16 %v57
  %v353 = vunpack.c.h.b16 %v57
  %v354 = vunpack.c.l.b16 %v58
  %v355 = vunpack.c.h.b16 %v58
  %v356 = vunpack.c.l.b16 %v59
  %v357 = vunpack.c.h.b16 %v59
  %v358 = vunpack.c.l.b16 %v60
  %v359 = vunpack.c.h.b16 %v60
  %v360 = vunpack.c.l.b16 %v61
  %v361 = vunpack.c.h.b16 %v61
  %v362 = vunpack.c.l.b16 %v62
  %v363 = vunpack.c.h.b16 %v62
  %v364 = vunpack.c.l.b16 %v63
  %v365 = vunpack.c.h.b16 %v63
  %v366 = vunpack.c.l.b16 %v64
  %v367 = vunpack.c.h.b16 %v64
  %v368 = vunpack.c.l.b16 %v65
  %v369 = vunpack.c.h.b16 %v65
  %v370 = vunpack.c.l.b16 %v66
  %v371 = vunpack.c.h.b16 %v66
  %v372 = vunpack.c.l.b16 %v67
  %v373 = vunpack.c.h.b16 %v67
  %v374 = vunpack.c.l.b16 %v68
  %v375 = vunpack.c.h.b16 %v68
  %v376 = vunpack.c.l.b16 %v69
  %v377 = vunpack.c.h.b16 %v69
  %v378 = vunpack.c.l.b16 %v70
  %v379 = vunpack.c.h.b16 %v70
  %v380 = vunpack.c.l.b16 %v71
  %v381 = vunpack.c.h.b16 %v71
  %v382 = vunpack.c.l.b16 %v72
  %v383 = vunpack.c.h.b16 %v72
  %v384 = vunpack.c.l.b16 %v73
  %v385 = vunpack.c.h.b16 %v73
  %v386 = vunpack.c.l.b16 %v74
  %v387 = vunpack.c.h.b16 %v74
  %v388 = vunpack.c.l.b16 %v75
  %v389 = vunpack.c.h.b16 %v75
  %v390 = vunpack.c.l.b16 %v76
  %v391 = vunpack.c.h.b16 %v76
  %v392 = vunpack.c.l.b16 %v77
  %v393 = vunpack.c.h.b16 %v77
  %v394 = vunpack.c.l.b16 %v78
  %v395 = vunpack.c.h.b16 %v78
  %v396 = vunpack.c.l.b16 %v79
  %v397 = vunpack.c.h.b16 %v79
  %v398 = vunpack.c.l.b16 %v80
  %v399 = vunpack.c.h.b16 %v80
  %v400 = vunpack.c.l.b16 %v81
  %v401 = vunpack.c.h.b16 %v81
  %v402 = vpack.c.b16 %v282, %v274
  %v403 = vpack.c.b16 %v283, %v275
  %v404 = vpack.c.b16 %v284, %v276
  %v405 = vpack.c.b16 %v285, %v277
  %v406 = vpack.c.b16 %v286, %v278
  %v407 = vpack.c.b16 %v287, %v279
  %v408 = vpack.c.b16 %v288, %v280
  %v409 = vpack.c.b16 %v289, %v281
  %v410 = vpack.c.b16 %v298, %v290
  %v411 = vpack.c.b16 %v299, %v291
  %v412 = vpack.c.b16 %v300, %v292
  %v413 = vpack.c.b16 %v301, %v293
  %v414 = vpack.c.b16 %v302, %v294
  %v415 = vpack.c.b16 %v303, %v295
  %v416 = vpack.c.b16 %v304, %v296
  %v417 = vpack.c.b16 %v305, %v297
  %v418 = vpack.c.b16 %v314, %v306
  %v419 = vpack.c.b16 %v315, %v307
  %v420 = vpack.c.b16 %v316, %v308
  %v421 = vpack.c.b16 %v317, %v309
  %v422 = vpack.c.b16 %v318, %v310
  %v423 = vpack.c.b16 %v319, %v311
  %v424 = vpack.c.b16 %v320, %v312
  %v425 = vpack.c.b16 %v321, %v313
  %v426 = vpack.c.b16 %v330, %v322
  %v427 = vpack.c.b16 %v331, %v323
  %v428 = vpack.c.b16 %v332, %v324
  %v429 = vpack.c.b16 %v333, %v325
  %v430 = vpack.c.b16 %v334, %v326
  %v431 = vpack.c.b16 %v335, %v327
  %v432 = vpack.c.b16 %v336, %v328
  %v433 = vpack.c.b16 %v337, %v329
  %v434 = vpack.c.b16 %v346, %v338
  %v435 = vpack.c.b16 %v347, %v339
  %v436 = vpack.c.b16 %v348, %v340
  %v437 = vpack.c.b16 %v349, %v341
  %v438 = vpack.c.b16 %v350, %v342
  %v439 = vpack.c.b16 %v351, %v343
  %v440 = vpack.c.b16 %v352, %v344
  %v441 = vpack.c.b16 %v353, %v345
  %v442 = vpack.c.b16 %v362, %v354
  %v443 = vpack.c.b16 %v363, %v355
  %v444 = vpack.c.b16 %v364, %v356
  %v445 = vpack.c.b16 %v365, %v357
  %v446 = vpack.c.b16 %v366, %v358
  %v447 = vpack.c.b16 %v367, %v359
  %v448 = vpack.c.b16 %v368, %v360
  %v449 = vpack.c.b16 %v369, %v361
  %v450 = vpack.c.b16 %v378, %v370
  %v451 = vpack.c.b16 %v379, %v371
  %v452 = vpack.c.b16 %v380, %v372
  %v453 = vpack.c.b16 %v381, %v373
  %v454 = vpack.c.b16 %v382, %v374
  %v455 = vpack.c.b16 %v383, %v375
  %v456 = vpack.c.b16 %v384, %v376
  %v457 = vpack.c.b16 %v385, %v377
  %v458 = vpack.c.b16 %v394, %v386
  %v459 = vpack.c.b16 %v395, %v387
  %v460 = vpack.c.b16 %v396, %v388
  %v461 = vpack.c.b16 %v397, %v389
  %v462 = vpack.c.b16 %v398, %v390
  %v463 = vpack.c.b16 %v399, %v391
  %v464 = vpack.c.b16 %v400, %v392
  %v465 = vpack.c.b16 %v401, %v393
  %v658 = vunpack.c.l.b16 %v82
  %v659 = vunpack.c.l.b16 %v83
  %v660 = vunpack.c.l.b16 %v84
  %v661 = vunpack.c.l.b16 %v85
  %v662 = vunpack.c.l.b16 %v86
  %v663 = vunpack.c.l.b16 %v87
  %v664 = vunpack.c.l.b16 %v88
  %v665 = vunpack.c.l.b16 %v89
  %v666 = vunpack.c.l.b16 %v90
  %v667 = vunpack.c.l.b16 %v91
  %v668 = vunpack.c.l.b16 %v92
  %v669 = vunpack.c.l.b16 %v93
  %v670 = vunpack.c.l.b16 %v94
  %v671 = vunpack.c.l.b16 %v95
  %v672 = vunpack.c.l.b16 %v96
  %v673 = vunpack.c.l.b16 %v97
  %v674 = vunpack.c.l.b16 %v98
  %v675 = vunpack.c.l.b16 %v99
  %v676 = vunpack.c.l.b16 %v100
  %v677 = vunpack.c.l.b16 %v101
  %v678 = vunpack.c.l.b16 %v102
  %v679 = vunpack.c.l.b16 %v103
  %v680 = vunpack.c.l.b16 %v104
  %v681 = vunpack.c.l.b16 %v105
  %v682 = vunpack.c.l.b16 %v106
  %v683 = vunpack.c.l.b16 %v107
  %v684 = vunpack.c.l.b16 %v108
  %v685 = vunpack.c.l.b16 %v109
  %v686 = vunpack.c.l.b16 %v110
  %v687 = vunpack.c.l.b16 %v111
  %v688 = vunpack.c.l.b16 %v112
  %v689 = vunpack.c.l.b16 %v113
  %v690 = vunpack.c.l.b16 %v114
  %v691 = vunpack.c.l.b16 %v115
  %v692 = vunpack.c.l.b16 %v116
  %v693 = vunpack.c.l.b16 %v117
  %v694 = vunpack.c.l.b16 %v118
  %v695 = vunpack.c.l.b16 %v119
  %v696 = vunpack.c.l.b16 %v120
  %v697 = vunpack.c.l.b16 %v121
  %v698 = vunpack.c.l.b16 %v122
  %v699 = vunpack.c.l.b16 %v123
  %v700 = vunpack.c.l.b16 %v124
  %v701 = vunpack.c.l.b16 %v125
  %v702 = vunpack.c.l.b16 %v126
  %v703 = vunpack.c.l.b16 %v127
  %v704 = vunpack.c.l.b16 %v128
  %v705 = vunpack.c.l.b16 %v129
  %v706 = vunpack.c.l.b16 %v130
  %v707 = vunpack.c.l.b16 %v131
  %v708 = vunpack.c.l.b16 %v132
  %v709 = vunpack.c.l.b16 %v133
  %v710 = vunpack.c.l.b16 %v134
  %v711 = vunpack.c.l.b16 %v135
  %v712 = vunpack.c.l.b16 %v136
  %v713 = vunpack.c.l.b16 %v137
  %v714 = vunpack.c.l.b16 %v138
  %v715 = vunpack.c.l.b16 %v139
  %v716 = vunpack.c.l.b16 %v140
  %v717 = vunpack.c.l.b16 %v141
  %v718 = vunpack.c.l.b16 %v142
  %v719 = vunpack.c.l.b16 %v143
  %v720 = vunpack.c.l.b16 %v144
  %v721 = vunpack.c.l.b16 %v145
  %v722 = vunpack.c.l.b16 %v146
  %v723 = vunpack.c.l.b16 %v147
  %v724 = vunpack.c.l.b16 %v148
  %v725 = vunpack.c.l.b16 %v149
  %v726 = vunpack.c.l.b16 %v150
  %v727 = vunpack.c.l.b16 %v151
  %v728 = vunpack.c.l.b16 %v152
  %v729 = vunpack.c.l.b16 %v153
  %v730 = vunpack.c.l.b16 %v154
  %v731 = vunpack.c.l.b16 %v155
  %v732 = vunpack.c.l.b16 %v156
  %v733 = vunpack.c.l.b16 %v157
  %v734 = vunpack.c.l.b16 %v158
  %v735 = vunpack.c.l.b16 %v159
  %v736 = vunpack.c.l.b16 %v160
  %v737 = vunpack.c.l.b16 %v161
  %v738 = vunpack.c.l.b16 %v162
  %v739 = vunpack.c.l.b16 %v163
  %v740 = vunpack.c.l.b16 %v164
  %v741 = vunpack.c.l.b16 %v165
  %v742 = vunpack.c.l.b16 %v166
  %v743 = vunpack.c.l.b16 %v167
  %v744 = vunpack.c.l.b16 %v168
  %v745 = vunpack.c.l.b16 %v169
  %v746 = vunpack.c.l.b16 %v170
  %v747 = vunpack.c.l.b16 %v171
  %v748 = vunpack.c.l.b16 %v172
  %v749 = vunpack.c.l.b16 %v173
  %v750 = vunpack.c.l.b16 %v174
  %v751 = vunpack.c.l.b16 %v175
  %v752 = vunpack.c.l.b16 %v176
  %v753 = vunpack.c.l.b16 %v177
  %v754 = vunpack.c.l.b16 %v178
  %v755 = vunpack.c.l.b16 %v179
  %v756 = vunpack.c.l.b16 %v180
  %v757 = vunpack.c.l.b16 %v181
  %v758 = vunpack.c.l.b16 %v182
  %v759 = vunpack.c.l.b16 %v183
  %v760 = vunpack.c.l.b16 %v184
  %v761 = vunpack.c.l.b16 %v185
  %v762 = vunpack.c.l.b16 %v186
  %v763 = vunpack.c.l.b16 %v187
  %v764 = vunpack.c.l.b16 %v188
  %v765 = vunpack.c.l.b16 %v189
  %v766 = vunpack.c.l.b16 %v190
  %v767 = vunpack.c.l.b16 %v191
  %v768 = vunpack.c.l.b16 %v192
  %v769 = vunpack.c.l.b16 %v193
  %v770 = vunpack.c.l.b16 %v194
  %v771 = vunpack.c.l.b16 %v195
  %v772 = vunpack.c.l.b16 %v196
  %v773 = vunpack.c.l.b16 %v197
  %v774 = vunpack.c.l.b16 %v198
  %v775 = vunpack.c.l.b16 %v199
  %v776 = vunpack.c.l.b16 %v200
  %v777 = vunpack.c.l.b16 %v201
  %v778 = vunpack.c.l.b16 %v202
  %v779 = vunpack.c.l.b16 %v203
  %v780 = vunpack.c.l.b16 %v204
  %v781 = vunpack.c.l.b16 %v205
  %v782 = vunpack.c.l.b16 %v206
  %v783 = vunpack.c.l.b16 %v207
  %v784 = vunpack.c.l.b16 %v208
  %v785 = vunpack.c.l.b16 %v209
  %v786 = vpack.c.b16 %v659, %v658
  %v787 = vpack.c.b16 %v661, %v660
  %v788 = vpack.c.b16 %v663, %v662
  %v789 = vpack.c.b16 %v665, %v664
  %v790 = vpack.c.b16 %v667, %v666
  %v791 = vpack.c.b16 %v669, %v668
  %v792 = vpack.c.b16 %v671, %v670
  %v793 = vpack.c.b16 %v673, %v672
  %v794 = vpack.c.b16 %v675, %v674
  %v795 = vpack.c.b16 %v677, %v676
  %v796 = vpack.c.b16 %v679, %v678
  %v797 = vpack.c.b16 %v681, %v680
  %v798 = vpack.c.b16 %v683, %v682
  %v799 = vpack.c.b16 %v685, %v684
  %v800 = vpack.c.b16 %v687, %v686
  %v801 = vpack.c.b16 %v689, %v688
  %v802 = vpack.c.b16 %v691, %v690
  %v803 = vpack.c.b16 %v693, %v692
  %v804 = vpack.c.b16 %v695, %v694
  %v805 = vpack.c.b16 %v697, %v696
  %v806 = vpack.c.b16 %v699, %v698
  %v807 = vpack.c.b16 %v701, %v700
  %v808 = vpack.c.b16 %v703, %v702
  %v809 = vpack.c.b16 %v705, %v704
  %v810 = vpack.c.b16 %v707, %v706
  %v811 = vpack.c.b16 %v709, %v708
  %v812 = vpack.c.b16 %v711, %v710
  %v813 = vpack.c.b16 %v713, %v712
  %v814 = vpack.c.b16 %v715, %v714
  %v815 = vpack.c.b16 %v717, %v716
  %v816 = vpack.c.b16 %v719, %v718
  %v817 = vpack.c.b16 %v721, %v720
  %v818 = vpack.c.b16 %v723, %v722
  %v819 = vpack.c.b16 %v725, %v724
  %v820 = vpack.c.b16 %v727, %v726
  %v821 = vpack.c.b16 %v729, %v728
  %v822 = vpack.c.b16 %v731, %v730
  %v823 = vpack.c.b16 %v733, %v732
  %v824 = vpack.c.b16 %v735, %v734
  %v825 = vpack.c.b16 %v737, %v736
  %v826 = vpack.c.b16 %v739, %v738
  %v827 = vpack.c.b16 %v741, %v740
  %v828 = vpack.c.b16 %v743, %v742
  %v829 = vpack.c.b16 %v745, %v744
  %v830 = vpack.c.b16 %v747, %v746
  %v831 = vpack.c.b16 %v749, %v748
  %v832 = vpack.c.b16 %v751, %v750
  %v833 = vpack.c.b16 %v753, %v752
  %v834 = vpack.c.b16 %v755, %v754
  %v835 = vpack.c.b16 %v757, %v756
  %v836 = vpack.c.b16 %v759, %v758
  %v837 = vpack.c.b16 %v761, %v760
  %v838 = vpack.c.b16 %v763, %v762
  %v839 = vpack.c.b16 %v765, %v764
  %v840 = vpack.c.b16 %v767, %v766
  %v841 = vpack.c.b16 %v769, %v768
  %v842 = vpack.c.b16 %v771, %v770
  %v843 = vpack.c.b16 %v773, %v772
  %v844 = vpack.c.b16 %v775, %v774
  %v845 = vpack.c.b16 %v777, %v776
  %v846 = vpack.c.b16 %v779, %v778
  %v847 = vpack.c.b16 %v781, %v780
  %v848 = vpack.c.b16 %v783, %v782
  %v849 = vpack.c.b16 %v785, %v784
  %914 = vmatprep.subr.bf16.mxu0 0
  %915 = vmatpush1.bf16.msra.mxu0 %v786
  %916 = vmatprep.subr.bf16.mxu0 0
  %917 = vmatpush1.bf16.msra.mxu0 %v787
  %918 = vmatprep.subr.bf16.mxu0 0
  %919 = vmatpush1.bf16.msra.mxu0 %v788
  %920 = vmatprep.subr.bf16.mxu0 0
  %921 = vmatpush1.bf16.msra.mxu0 %v789
  %922 = vmatprep.subr.bf16.mxu0 0
  %923 = vmatpush1.bf16.msra.mxu0 %v790
  %924 = vmatprep.subr.bf16.mxu0 0
  %925 = vmatpush1.bf16.msra.mxu0 %v791
  %926 = vmatprep.subr.bf16.mxu0 0
  %927 = vmatpush1.bf16.msra.mxu0 %v792
  %928 = vmatprep.subr.bf16.mxu0 0
  %929 = vmatpush1.bf16.msra.mxu0 %v793
  %930 = vmatprep.subr.bf16.mxu0 0
  %931 = vmatpush1.bf16.msra.mxu0 %v794
  %932 = vmatprep.subr.bf16.mxu0 0
  %933 = vmatpush1.bf16.msra.mxu0 %v795
  %934 = vmatprep.subr.bf16.mxu0 0
  %935 = vmatpush1.bf16.msra.mxu0 %v796
  %936 = vmatprep.subr.bf16.mxu0 0
  %937 = vmatpush1.bf16.msra.mxu0 %v797
  %938 = vmatprep.subr.bf16.mxu0 0
  %939 = vmatpush1.bf16.msra.mxu0 %v798
  %940 = vmatprep.subr.bf16.mxu0 0
  %941 = vmatpush1.bf16.msra.mxu0 %v799
  %942 = vmatprep.subr.bf16.mxu0 0
  %943 = vmatpush1.bf16.msra.mxu0 %v800
  %944 = vmatprep.subr.bf16.mxu0 0
  %945 = vmatpush1.bf16.msra.mxu0 %v801
  %946 = vmatprep.mubr.bf16.mxu0 %v403
  %947 = vmatmul.mubr.bf16.gmra.mrb[0].mxu0 %v402
  %v948 = vpop.f32.mrb[0].mxu0
  %v949 = vadd.f32 0.0, %v948
  %v950 = vpop.f32.mrb[0].mxu0
  %v951 = vpop.f32.mrb[0].mxu0
  %v952 = vadd.f32 0.0, %v951
  %v953 = vpop.f32.mrb[0].mxu0
  %954 = vmatprep.mubr.bf16.mxu0 %v411
  %955 = vmatmul.mubr.bf16.gmra.mrb[0].mxu0 %v410
  %v956 = vpop.f32.mrb[0].mxu0
  %v957 = vadd.f32 0.0, %v956
  %v958 = vpop.f32.mrb[0].mxu0
  %v959 = vpop.f32.mrb[0].mxu0
  %v960 = vadd.f32 0.0, %v959
  %v961 = vpop.f32.mrb[0].mxu0
  %962 = vmatprep.mubr.bf16.mxu0 %v419
  %963 = vmatmul.mubr.bf16.gmra.mrb[0].mxu0 %v418
  %v964 = vpop.f32.mrb[0].mxu0
  %v965 = vadd.f32 0.0, %v964
  %v966 = vpop.f32.mrb[0].mxu0
  %v967 = vpop.f32.mrb[0].mxu0
  %v968 = vadd.f32 0.0, %v967
  %v969 = vpop.f32.mrb[0].mxu0
  %970 = vmatprep.mubr.bf16.mxu0 %v427
  %971 = vmatmul.mubr.bf16.gmra.mrb[0].mxu0 %v426
  %v972 = vpop.f32.mrb[0].mxu0
  %v973 = vadd.f32 0.0, %v972
  %v974 = vpop.f32.mrb[0].mxu0
  %v975 = vpop.f32.mrb[0].mxu0
  %v976 = vadd.f32 0.0, %v975
  %v977 = vpop.f32.mrb[0].mxu0
  %978 = vmatprep.mubr.bf16.mxu0 %v435
  %979 = vmatmul.mubr.bf16.gmra.mrb[0].mxu0 %v434
  %v980 = vpop.f32.mrb[0].mxu0
  %v981 = vadd.f32 0.0, %v980
  %v982 = vpop.f32.mrb[0].mxu0
  %v983 = vpop.f32.mrb[0].mxu0
  %v984 = vadd.f32 0.0, %v983
  %v985 = vpop.f32.mrb[0].mxu0
  %986 = vmatprep.mubr.bf16.mxu0 %v443
  %987 = vmatmul.mubr.bf16.gmra.mrb[0].mxu0 %v442
  %v988 = vpop.f32.mrb[0].mxu0
  %v989 = vadd.f32 0.0, %v988
  %v990 = vpop.f32.mrb[0].mxu0
  %v991 = vpop.f32.mrb[0].mxu0
  %v992 = vadd.f32 0.0, %v991
  %v993 = vpop.f32.mrb[0].mxu0
  %994 = vmatprep.mubr.bf16.mxu0 %v451
  %995 = vmatmul.mubr.bf16.gmra.mrb[0].mxu0 %v450
  %v996 = vpop.f32.mrb[0].mxu0
  %v997 = vadd.f32 0.0, %v996
  %v998 = vpop.f32.mrb[0].mxu0
  %v999 = vpop.f32.mrb[0].mxu0
  %v1000 = vadd.f32 0.0, %v999
  %v1001 = vpop.f32.mrb[0].mxu0
  %1002 = vmatprep.mubr.bf16.mxu0 %v459
  %1003 = vmatmul.mubr.bf16.gmra.mrb[0].mxu0 %v458
  %v1004 = vpop.f32.mrb[0].mxu0
  %v1005 = vadd.f32 0.0, %v1004
  %v1006 = vpop.f32.mrb[0].mxu0
  %v1007 = vpop.f32.mrb[0].mxu0
  %v1008 = vadd.f32 0.0, %v1007
  %v1009 = vpop.f32.mrb[0].mxu0
  %1010 = vdwg.mxu0
  %1011 = vmatprep.subr.bf16.mxu0 0
  %1012 = vmatpush1.bf16.msra.mxu0 %v802
  %1013 = vmatprep.subr.bf16.mxu0 0
  %1014 = vmatpush1.bf16.msra.mxu0 %v803
  %1015 = vmatprep.subr.bf16.mxu0 0
  %1016 = vmatpush1.bf16.msra.mxu0 %v804
  %1017 = vmatprep.subr.bf16.mxu0 0
  %1018 = vmatpush1.bf16.msra.mxu0 %v805
  %1019 = vmatprep.subr.bf16.mxu0 0
  %1020 = vmatpush1.bf16.msra.mxu0 %v806
  %1021 = vmatprep.subr.bf16.mxu0 0
  %1022 = vmatpush1.bf16.msra.mxu0 %v807
  %1023 = vmatprep.subr.bf16.mxu0 0
  %1024 = vmatpush1.bf16.msra.mxu0 %v808
  %1025 = vmatprep.subr.bf16.mxu0 0
  %1026 = vmatpush1.bf16.msra.mxu0 %v809
  %1027 = vmatprep.subr.bf16.mxu0 0
  %1028 = vmatpush1.bf16.msra.mxu0 %v810
  %1029 = vmatprep.subr.bf16.mxu0 0
  %1030 = vmatpush1.bf16.msra.mxu0 %v811
  %1031 = vmatprep.subr.bf16.mxu0 0
  %1032 = vmatpush1.bf16.msra.mxu0 %v812
  %1033 = vmatprep.subr.bf16.mxu0 0
  %1034 = vmatpush1.bf16.msra.mxu0 %v813
  %1035 = vmatprep.subr.bf16.mxu0 0
  %1036 = vmatpush1.bf16.msra.mxu0 %v814
  %1037 = vmatprep.subr.bf16.mxu0 0
  %1038 = vmatpush1.bf16.msra.mxu0 %v815
  %1039 = vmatprep.subr.bf16.mxu0 0
  %1040 = vmatpush1.bf16.msra.mxu0 %v816
  %1041 = vmatprep.subr.bf16.mxu0 0
  %1042 = vmatpush1.bf16.msra.mxu0 %v817
  %1043 = vmatprep.mubr.bf16.mxu0 %v405
  %1044 = vmatmul.mubr.bf16.gmra.mrb[0].mxu0 %v404
  %v1045 = vpop.f32.mrb[0].mxu0
  %v1046 = vadd.f32 %v949, %v1045
  %v1047 = vpop.f32.mrb[0].mxu0
  %v1048 = vpop.f32.mrb[0].mxu0
  %v1049 = vadd.f32 %v952, %v1048
  %v1050 = vpop.f32.mrb[0].mxu0
  %1051 = vmatprep.mubr.bf16.mxu0 %v413
  %1052 = vmatmul.mubr.bf16.gmra.mrb[0].mxu0 %v412
  %v1053 = vpop.f32.mrb[0].mxu0
  %v1054 = vadd.f32 %v957, %v1053
  %v1055 = vpop.f32.mrb[0].mxu0
  %v1056 = vpop.f32.mrb[0].mxu0
  %v1057 = vadd.f32 %v960, %v1056
  %v1058 = vpop.f32.mrb[0].mxu0
  %1059 = vmatprep.mubr.bf16.mxu0 %v421
  %1060 = vmatmul.mubr.bf16.gmra.mrb[0].mxu0 %v420
  %v1061 = vpop.f32.mrb[0].mxu0
  %v1062 = vadd.f32 %v965, %v1061
  %v1063 = vpop.f32.mrb[0].mxu0
  %v1064 = vpop.f32.mrb[0].mxu0
  %v1065 = vadd.f32 %v968, %v1064
  %v1066 = vpop.f32.mrb[0].mxu0
  %1067 = vmatprep.mubr.bf16.mxu0 %v429
  %1068 = vmatmul.mubr.bf16.gmra.mrb[0].mxu0 %v428
  %v1069 = vpop.f32.mrb[0].mxu0
  %v1070 = vadd.f32 %v973, %v1069
  %v1071 = vpop.f32.mrb[0].mxu0
  %v1072 = vpop.f32.mrb[0].mxu0
  %v1073 = vadd.f32 %v976, %v1072
  %v1074 = vpop.f32.mrb[0].mxu0
  %1075 = vmatprep.mubr.bf16.mxu0 %v437
  %1076 = vmatmul.mubr.bf16.gmra.mrb[0].mxu0 %v436
  %v1077 = vpop.f32.mrb[0].mxu0
  %v1078 = vadd.f32 %v981, %v1077
  %v1079 = vpop.f32.mrb[0].mxu0
  %v1080 = vpop.f32.mrb[0].mxu0
  %v1081 = vadd.f32 %v984, %v1080
  %v1082 = vpop.f32.mrb[0].mxu0
  %1083 = vmatprep.mubr.bf16.mxu0 %v445
  %1084 = vmatmul.mubr.bf16.gmra.mrb[0].mxu0 %v444
  %v1085 = vpop.f32.mrb[0].mxu0
  %v1086 = vadd.f32 %v989, %v1085
  %v1087 = vpop.f32.mrb[0].mxu0
  %v1088 = vpop.f32.mrb[0].mxu0
  %v1089 = vadd.f32 %v992, %v1088
  %v1090 = vpop.f32.mrb[0].mxu0
  %1091 = vmatprep.mubr.bf16.mxu0 %v453
  %1092 = vmatmul.mubr.bf16.gmra.mrb[0].mxu0 %v452
  %v1093 = vpop.f32.mrb[0].mxu0
  %v1094 = vadd.f32 %v997, %v1093
  %v1095 = vpop.f32.mrb[0].mxu0
  %v1096 = vpop.f32.mrb[0].mxu0
  %v1097 = vadd.f32 %v1000, %v1096
  %v1098 = vpop.f32.mrb[0].mxu0
  %1099 = vmatprep.mubr.bf16.mxu0 %v461
  %1100 = vmatmul.mubr.bf16.gmra.mrb[0].mxu0 %v460
  %v1101 = vpop.f32.mrb[0].mxu0
  %v1102 = vadd.f32 %v1005, %v1101
  %v1103 = vpop.f32.mrb[0].mxu0
  %v1104 = vpop.f32.mrb[0].mxu0
  %v1105 = vadd.f32 %v1008, %v1104
  %v1106 = vpop.f32.mrb[0].mxu0
  %1107 = vdwg.mxu0
  %1108 = vmatprep.subr.bf16.mxu0 0
  %1109 = vmatpush1.bf16.msra.mxu0 %v818
  %1110 = vmatprep.subr.bf16.mxu0 0
  %1111 = vmatpush1.bf16.msra.mxu0 %v819
  %1112 = vmatprep.subr.bf16.mxu0 0
  %1113 = vmatpush1.bf16.msra.mxu0 %v820
  %1114 = vmatprep.subr.bf16.mxu0 0
  %1115 = vmatpush1.bf16.msra.mxu0 %v821
  %1116 = vmatprep.subr.bf16.mxu0 0
  %1117 = vmatpush1.bf16.msra.mxu0 %v822
  %1118 = vmatprep.subr.bf16.mxu0 0
  %1119 = vmatpush1.bf16.msra.mxu0 %v823
  %1120 = vmatprep.subr.bf16.mxu0 0
  %1121 = vmatpush1.bf16.msra.mxu0 %v824
  %1122 = vmatprep.subr.bf16.mxu0 0
  %1123 = vmatpush1.bf16.msra.mxu0 %v825
  %1124 = vmatprep.subr.bf16.mxu0 0
  %1125 = vmatpush1.bf16.msra.mxu0 %v826
  %1126 = vmatprep.subr.bf16.mxu0 0
  %1127 = vmatpush1.bf16.msra.mxu0 %v827
  %1128 = vmatprep.subr.bf16.mxu0 0
  %1129 = vmatpush1.bf16.msra.mxu0 %v828
  %1130 = vmatprep.subr.bf16.mxu0 0
  %1131 = vmatpush1.bf16.msra.mxu0 %v829
  %1132 = vmatprep.subr.bf16.mxu0 0
  %1133 = vmatpush1.bf16.msra.mxu0 %v830
  %1134 = vmatprep.subr.bf16.mxu0 0
  %1135 = vmatpush1.bf16.msra.mxu0 %v831
  %1136 = vmatprep.subr.bf16.mxu0 0
  %1137 = vmatpush1.bf16.msra.mxu0 %v832
  %1138 = vmatprep.subr.bf16.mxu0 0
  %1139 = vmatpush1.bf16.msra.mxu0 %v833
  %1140 = vmatprep.mubr.bf16.mxu0 %v407
  %1141 = vmatmul.mubr.bf16.gmra.mrb[0].mxu0 %v406
  %v1142 = vpop.f32.mrb[0].mxu0
  %v1143 = vadd.f32 %v1046, %v1142
  %v1144 = vpop.f32.mrb[0].mxu0
  %v1145 = vpop.f32.mrb[0].mxu0
  %v1146 = vadd.f32 %v1049, %v1145
  %v1147 = vpop.f32.mrb[0].mxu0
  %1148 = vmatprep.mubr.bf16.mxu0 %v415
  %1149 = vmatmul.mubr.bf16.gmra.mrb[0].mxu0 %v414
  %v1150 = vpop.f32.mrb[0].mxu0
  %v1151 = vadd.f32 %v1054, %v1150
  %v1152 = vpop.f32.mrb[0].mxu0
  %v1153 = vpop.f32.mrb[0].mxu0
  %v1154 = vadd.f32 %v1057, %v1153
  %v1155 = vpop.f32.mrb[0].mxu0
  %1156 = vmatprep.mubr.bf16.mxu0 %v423
  %1157 = vmatmul.mubr.bf16.gmra.mrb[0].mxu0 %v422
  %v1158 = vpop.f32.mrb[0].mxu0
  %v1159 = vadd.f32 %v1062, %v1158
  %v1160 = vpop.f32.mrb[0].mxu0
  %v1161 = vpop.f32.mrb[0].mxu0
  %v1162 = vadd.f32 %v1065, %v1161
  %v1163 = vpop.f32.mrb[0].mxu0
  %1164 = vmatprep.mubr.bf16.mxu0 %v431
  %1165 = vmatmul.mubr.bf16.gmra.mrb[0].mxu0 %v430
  %v1166 = vpop.f32.mrb[0].mxu0
  %v1167 = vadd.f32 %v1070, %v1166
  %v1168 = vpop.f32.mrb[0].mxu0
  %v1169 = vpop.f32.mrb[0].mxu0
  %v1170 = vadd.f32 %v1073, %v1169
  %v1171 = vpop.f32.mrb[0].mxu0
  %1172 = vmatprep.mubr.bf16.mxu0 %v439
  %1173 = vmatmul.mubr.bf16.gmra.mrb[0].mxu0 %v438
  %v1174 = vpop.f32.mrb[0].mxu0
  %v1175 = vadd.f32 %v1078, %v1174
  %v1176 = vpop.f32.mrb[0].mxu0
  %v1177 = vpop.f32.mrb[0].mxu0
  %v1178 = vadd.f32 %v1081, %v1177
  %v1179 = vpop.f32.mrb[0].mxu0
  %1180 = vmatprep.mubr.bf16.mxu0 %v447
  %1181 = vmatmul.mubr.bf16.gmra.mrb[0].mxu0 %v446
  %v1182 = vpop.f32.mrb[0].mxu0
  %v1183 = vadd.f32 %v1086, %v1182
  %v1184 = vpop.f32.mrb[0].mxu0
  %v1185 = vpop.f32.mrb[0].mxu0
  %v1186 = vadd.f32 %v1089, %v1185
  %v1187 = vpop.f32.mrb[0].mxu0
  %1188 = vmatprep.mubr.bf16.mxu0 %v455
  %1189 = vmatmul.mubr.bf16.gmra.mrb[0].mxu0 %v454
  %v1190 = vpop.f32.mrb[0].mxu0
  %v1191 = vadd.f32 %v1094, %v1190
  %v1192 = vpop.f32.mrb[0].mxu0
  %v1193 = vpop.f32.mrb[0].mxu0
  %v1194 = vadd.f32 %v1097, %v1193
  %v1195 = vpop.f32.mrb[0].mxu0
  %1196 = vmatprep.mubr.bf16.mxu0 %v463
  %1197 = vmatmul.mubr.bf16.gmra.mrb[0].mxu0 %v462
  %v1198 = vpop.f32.mrb[0].mxu0
  %v1199 = vadd.f32 %v1102, %v1198
  %v1200 = vpop.f32.mrb[0].mxu0
  %v1201 = vpop.f32.mrb[0].mxu0
  %v1202 = vadd.f32 %v1105, %v1201
  %v1203 = vpop.f32.mrb[0].mxu0
  %1204 = vdwg.mxu0
  %1205 = vmatprep.subr.bf16.mxu0 0
  %1206 = vmatpush1.bf16.msra.mxu0 %v834
  %1207 = vmatprep.subr.bf16.mxu0 0
  %1208 = vmatpush1.bf16.msra.mxu0 %v835
  %1209 = vmatprep.subr.bf16.mxu0 0
  %1210 = vmatpush1.bf16.msra.mxu0 %v836
  %1211 = vmatprep.subr.bf16.mxu0 0
  %1212 = vmatpush1.bf16.msra.mxu0 %v837
  %1213 = vmatprep.subr.bf16.mxu0 0
  %1214 = vmatpush1.bf16.msra.mxu0 %v838
  %1215 = vmatprep.subr.bf16.mxu0 0
  %1216 = vmatpush1.bf16.msra.mxu0 %v839
  %1217 = vmatprep.subr.bf16.mxu0 0
  %1218 = vmatpush1.bf16.msra.mxu0 %v840
  %1219 = vmatprep.subr.bf16.mxu0 0
  %1220 = vmatpush1.bf16.msra.mxu0 %v841
  %1221 = vmatprep.subr.bf16.mxu0 0
  %1222 = vmatpush1.bf16.msra.mxu0 %v842
  %1223 = vmatprep.subr.bf16.mxu0 0
  %1224 = vmatpush1.bf16.msra.mxu0 %v843
  %1225 = vmatprep.subr.bf16.mxu0 0
  %1226 = vmatpush1.bf16.msra.mxu0 %v844
  %1227 = vmatprep.subr.bf16.mxu0 0
  %1228 = vmatpush1.bf16.msra.mxu0 %v845
  %1229 = vmatprep.subr.bf16.mxu0 0
  %1230 = vmatpush1.bf16.msra.mxu0 %v846
  %1231 = vmatprep.subr.bf16.mxu0 0
  %1232 = vmatpush1.bf16.msra.mxu0 %v847
  %1233 = vmatprep.subr.bf16.mxu0 0
  %1234 = vmatpush1.bf16.msra.mxu0 %v848
  %1235 = vmatprep.subr.bf16.mxu0 0
  %1236 = vmatpush1.bf16.msra.mxu0 %v849
  %1237 = vmatprep.mubr.bf16.mxu0 %v409
  %1238 = vmatmul.mubr.bf16.gmra.mrb[0].mxu0 %v408
  %v1239 = vpop.f32.mrb[0].mxu0
  %v1240 = vadd.f32 %v1143, %v1239
  %v1241 = vpop.f32.mrb[0].mxu0
  %v1242 = vpop.f32.mrb[0].mxu0
  %v1243 = vadd.f32 %v1146, %v1242
  %v1244 = vpop.f32.mrb[0].mxu0
  %1245 = vmatprep.mubr.bf16.mxu0 %v417
  %1246 = vmatmul.mubr.bf16.gmra.mrb[0].mxu0 %v416
  %v1247 = vpop.f32.mrb[0].mxu0
  %v1248 = vadd.f32 %v1151, %v1247
  %v1249 = vpop.f32.mrb[0].mxu0
  %v1250 = vpop.f32.mrb[0].mxu0
  %v1251 = vadd.f32 %v1154, %v1250
  %v1252 = vpop.f32.mrb[0].mxu0
  %1253 = vmatprep.mubr.bf16.mxu0 %v425
  %1254 = vmatmul.mubr.bf16.gmra.mrb[0].mxu0 %v424
  %v1255 = vpop.f32.mrb[0].mxu0
  %v1256 = vadd.f32 %v1159, %v1255
  %v1257 = vpop.f32.mrb[0].mxu0
  %v1258 = vpop.f32.mrb[0].mxu0
  %v1259 = vadd.f32 %v1162, %v1258
  %v1260 = vpop.f32.mrb[0].mxu0
  %1261 = vmatprep.mubr.bf16.mxu0 %v433
  %1262 = vmatmul.mubr.bf16.gmra.mrb[0].mxu0 %v432
  %v1263 = vpop.f32.mrb[0].mxu0
  %v1264 = vadd.f32 %v1167, %v1263
  %v1265 = vpop.f32.mrb[0].mxu0
  %v1266 = vpop.f32.mrb[0].mxu0
  %v1267 = vadd.f32 %v1170, %v1266
  %v1268 = vpop.f32.mrb[0].mxu0
  %1269 = vmatprep.mubr.bf16.mxu0 %v441
  %1270 = vmatmul.mubr.bf16.gmra.mrb[0].mxu0 %v440
  %v1271 = vpop.f32.mrb[0].mxu0
  %v1272 = vadd.f32 %v1175, %v1271
  %v1273 = vpop.f32.mrb[0].mxu0
  %v1274 = vpop.f32.mrb[0].mxu0
  %v1275 = vadd.f32 %v1178, %v1274
  %v1276 = vpop.f32.mrb[0].mxu0
  %1277 = vmatprep.mubr.bf16.mxu0 %v449
  %1278 = vmatmul.mubr.bf16.gmra.mrb[0].mxu0 %v448
  %v1279 = vpop.f32.mrb[0].mxu0
  %v1280 = vadd.f32 %v1183, %v1279
  %v1281 = vpop.f32.mrb[0].mxu0
  %v1282 = vpop.f32.mrb[0].mxu0
  %v1283 = vadd.f32 %v1186, %v1282
  %v1284 = vpop.f32.mrb[0].mxu0
  %1285 = vmatprep.mubr.bf16.mxu0 %v457
  %1286 = vmatmul.mubr.bf16.gmra.mrb[0].mxu0 %v456
  %v1287 = vpop.f32.mrb[0].mxu0
  %v1288 = vadd.f32 %v1191, %v1287
  %v1289 = vpop.f32.mrb[0].mxu0
  %v1290 = vpop.f32.mrb[0].mxu0
  %v1291 = vadd.f32 %v1194, %v1290
  %v1292 = vpop.f32.mrb[0].mxu0
  %1293 = vmatprep.mubr.bf16.mxu0 %v465
  %1294 = vmatmul.mubr.bf16.gmra.mrb[0].mxu0 %v464
  %v1295 = vpop.f32.mrb[0].mxu0
  %v1296 = vadd.f32 %v1199, %v1295
  %v1297 = vpop.f32.mrb[0].mxu0
  %v1298 = vpop.f32.mrb[0].mxu0
  %v1299 = vadd.f32 %v1202, %v1298
  %v1300 = vpop.f32.mrb[0].mxu0
  %1301 = vdwg.mxu0
  %s1302 = smul.u32 0, 128
  %s1303 = scalar_lea.vmem [#allocation2], %s1302
  %1304 = vst [vmem:[%s1303] sm:$0xff] %v1240
  %1305 = vst [vmem:[%s1303 + $0x8] sm:$0xff] %v1243
  %1306 = vst [vmem:[%s1303 + $0x10] sm:$0xff] %v1248
  %1307 = vst [vmem:[%s1303 + $0x18] sm:$0xff] %v1251
  %1308 = vst [vmem:[%s1303 + $0x20] sm:$0xff] %v1256
  %1309 = vst [vmem:[%s1303 + $0x28] sm:$0xff] %v1259
  %1310 = vst [vmem:[%s1303 + $0x30] sm:$0xff] %v1264
  %1311 = vst [vmem:[%s1303 + $0x38] sm:$0xff] %v1267
  %1312 = vst [vmem:[%s1303 + $0x40] sm:$0xff] %v1272
  %1313 = vst [vmem:[%s1303 + $0x48] sm:$0xff] %v1275
  %1314 = vst [vmem:[%s1303 + $0x50] sm:$0xff] %v1280
  %1315 = vst [vmem:[%s1303 + $0x58] sm:$0xff] %v1283
  %1316 = vst [vmem:[%s1303 + $0x60] sm:$0xff] %v1288
  %1317 = vst [vmem:[%s1303 + $0x68] sm:$0xff] %v1291
  %1318 = vst [vmem:[%s1303 + $0x70] sm:$0xff] %v1296
  %1319 = vst [vmem:[%s1303 + $0x78] sm:$0xff] %v1299
  %p1320 = scmp.eq.s32.totalorder 0, 0
  // Predicated region
  $region18: #{gnet_forward.6} parent=0 // pred_check
    %p1321 = pneg %p1320
  $region19: #{gnet_forward.6} parent=0 // pred_check_branch
    %1323 = sbr.rel (%p1321) target = $region21
  $region20: #{gnet_forward.6} parent=0 // pred_region
    %1324 = vst [vmem:[#allocation3] sm:$0x1] 0.0
  $region21: #{gnet_forward.6} parent=0 // pred_fallthru
    _
  %v1325 = vld [vmem:[#allocation3] sm:$0x1]
  %v1326 = vadd.f32 %v1240, %v1243
  %v1327 = vadd.f32 %v1326, %v1248
  %v1328 = vadd.f32 %v1327, %v1251
  %v1329 = vadd.f32 %v1328, %v1256
  %v1330 = vadd.f32 %v1329, %v1259
  %v1331 = vadd.f32 %v1330, %v1264
  %v1332 = vadd.f32 %v1331, %v1267
  %v1333 = vadd.f32 %v1332, %v1272
  %v1334 = vadd.f32 %v1333, %v1275
  %v1335 = vadd.f32 %v1334, %v1280
  %v1336 = vadd.f32 %v1335, %v1283
  %v1337 = vadd.f32 %v1336, %v1288
  %v1338 = vadd.f32 %v1337, %v1291
  %v1339 = vadd.f32 %v1338, %v1296
  %v1340 = vadd.f32 %v1339, %v1299
  %v1341 = vrot.slane %v1340, 4
  %v1342 = vadd.f32 %v1340, %v1341
  %v1343 = vrot.slane %v1342, 2
  %v1344 = vadd.f32 %v1342, %v1343
  %v1345 = vrot.slane %v1344, 1
  %v1346 = vadd.f32 %v1344, %v1345
  %v1347 = vadd.f32 %v1325, %v1346
  %1348 = vst [vmem:[#allocation3] sm:$0x1] %v1347
  // Predicated region
  $region22: #{gnet_forward.6} parent=0 // pred_check
    %p1349 = pneg %p1320
  $region23: #{gnet_forward.6} parent=0 // pred_check_branch
    %1351 = sbr.rel (%p1349) target = $region25
  $region24: #{gnet_forward.6} parent=0 // pred_region
    %v1352 = vld [vmem:[#allocation3] sm:$0x1]
    %v1353 = vmul.f32 %v1352, 0.0078125
    %v1354 = vld [vmem:[#allocation2] sm:$0xff]
    %v1355 = vld [vmem:[#allocation2 + $0x8] sm:$0xff]
    %v1356 = vld [vmem:[#allocation2 + $0x10] sm:$0xff]
    %v1357 = vld [vmem:[#allocation2 + $0x18] sm:$0xff]
    %v1358 = vld [vmem:[#allocation2 + $0x20] sm:$0xff]
    %v1359 = vld [vmem:[#allocation2 + $0x28] sm:$0xff]
    %v1360 = vld [vmem:[#allocation2 + $0x30] sm:$0xff]
    %v1361 = vld [vmem:[#allocation2 + $0x38] sm:$0xff]
    %v1362 = vld [vmem:[#allocation2 + $0x40] sm:$0xff]
    %v1363 = vld [vmem:[#allocation2 + $0x48] sm:$0xff]
    %v1364 = vld [vmem:[#allocation2 + $0x50] sm:$0xff]
    %v1365 = vld [vmem:[#allocation2 + $0x58] sm:$0xff]
    %v1366 = vld [vmem:[#allocation2 + $0x60] sm:$0xff]
    %v1367 = vld [vmem:[#allocation2 + $0x68] sm:$0xff]
    %v1368 = vld [vmem:[#allocation2 + $0x70] sm:$0xff]
    %v1369 = vld [vmem:[#allocation2 + $0x78] sm:$0xff]
    %v1371 = vlaneseq
    %v1372 = vshrl.u32 %v1371, 7
    %v1373 = vsub.s32 0, %v1372
    %v1374 = vrot.slane %v1353, %v1373
    %v1376 = vsub.f32 %v1354, %v1374
    %v1377 = vsub.f32 %v1355, %v1374
    %v1378 = vsub.f32 %v1356, %v1374
    %v1379 = vsub.f32 %v1357, %v1374
    %v1380 = vsub.f32 %v1358, %v1374
    %v1381 = vsub.f32 %v1359, %v1374
    %v1382 = vsub.f32 %v1360, %v1374
    %v1383 = vsub.f32 %v1361, %v1374
    %v1384 = vsub.f32 %v1362, %v1374
    %v1385 = vsub.f32 %v1363, %v1374
    %v1386 = vsub.f32 %v1364, %v1374
    %v1387 = vsub.f32 %v1365, %v1374
    %v1388 = vsub.f32 %v1366, %v1374
    %v1389 = vsub.f32 %v1367, %v1374
    %v1390 = vsub.f32 %v1368, %v1374
    %v1391 = vsub.f32 %v1369, %v1374
    %v1392 = vmul.f32 %v1376, %v1376
    %v1393 = vmul.f32 %v1377, %v1377
    %v1394 = vmul.f32 %v1378, %v1378
    %v1395 = vmul.f32 %v1379, %v1379
    %v1396 = vmul.f32 %v1380, %v1380
    %v1397 = vmul.f32 %v1381, %v1381
    %v1398 = vmul.f32 %v1382, %v1382
    %v1399 = vmul.f32 %v1383, %v1383
    %v1400 = vmul.f32 %v1384, %v1384
    %v1401 = vmul.f32 %v1385, %v1385
    %v1402 = vmul.f32 %v1386, %v1386
    %v1403 = vmul.f32 %v1387, %v1387
    %v1404 = vmul.f32 %v1388, %v1388
    %v1405 = vmul.f32 %v1389, %v1389
    %v1406 = vmul.f32 %v1390, %v1390
    %v1407 = vmul.f32 %v1391, %v1391
    %v1408 = vadd.f32 %v1392, %v1393
    %v1409 = vadd.f32 %v1408, %v1394
    %v1410 = vadd.f32 %v1409, %v1395
    %v1411 = vadd.f32 %v1410, %v1396
    %v1412 = vadd.f32 %v1411, %v1397
    %v1413 = vadd.f32 %v1412, %v1398
    %v1414 = vadd.f32 %v1413, %v1399
    %v1415 = vadd.f32 %v1414, %v1400
    %v1416 = vadd.f32 %v1415, %v1401
    %v1417 = vadd.f32 %v1416, %v1402
    %v1418 = vadd.f32 %v1417, %v1403
    %v1419 = vadd.f32 %v1418, %v1404
    %v1420 = vadd.f32 %v1419, %v1405
    %v1421 = vadd.f32 %v1420, %v1406
    %v1422 = vadd.f32 %v1421, %v1407
    %v1423 = vrot.slane %v1422, 4
    %v1424 = vadd.f32 %v1422, %v1423
    %v1425 = vrot.slane %v1424, 2
    %v1426 = vadd.f32 %v1424, %v1425
    %v1427 = vrot.slane %v1426, 1
    %v1428 = vadd.f32 %v1426, %v1427
    %v1429 = vadd.f32 %v1428, 0.0
    %v1430 = vmul.f32 %v1429, 0.0078125
    %v1431 = vld [vmem:[%s2] sm:$0x1]
    %v1432 = vadd.f32 %v1430, 1e-05
    %v1433 = vrsqrt.pop %v1432
    %v1434 = vmul.f32 %v1431, %v1433
    %v1435 = vld [vmem:[%s3] sm:$0x1]
    %v1436 = vmul.f32 %v1353, %v1434
    %v1437 = vsub.f32 %v1435, %v1436
    %v1439 = vlaneseq
    %v1440 = vshrl.u32 %v1439, 7
    %v1441 = vsub.s32 0, %v1440
    %v1442 = vrot.slane %v1434, %v1441
    %v1444 = vmul.f32 %v1354, %v1442
    %v1445 = vmul.f32 %v1355, %v1442
    %v1446 = vmul.f32 %v1356, %v1442
    %v1447 = vmul.f32 %v1357, %v1442
    %v1448 = vmul.f32 %v1358, %v1442
    %v1449 = vmul.f32 %v1359, %v1442
    %v1450 = vmul.f32 %v1360, %v1442
    %v1451 = vmul.f32 %v1361, %v1442
    %v1452 = vmul.f32 %v1362, %v1442
    %v1453 = vmul.f32 %v1363, %v1442
    %v1454 = vmul.f32 %v1364, %v1442
    %v1455 = vmul.f32 %v1365, %v1442
    %v1456 = vmul.f32 %v1366, %v1442
    %v1457 = vmul.f32 %v1367, %v1442
    %v1458 = vmul.f32 %v1368, %v1442
    %v1459 = vmul.f32 %v1369, %v1442
    %v1461 = vlaneseq
    %v1462 = vshrl.u32 %v1461, 7
    %v1463 = vsub.s32 0, %v1462
    %v1464 = vrot.slane %v1437, %v1463
    %v1466 = vadd.f32 %v1444, %v1464
    %v1467 = vadd.f32 %v1445, %v1464
    %v1468 = vadd.f32 %v1446, %v1464
    %v1469 = vadd.f32 %v1447, %v1464
    %v1470 = vadd.f32 %v1448, %v1464
    %v1471 = vadd.f32 %v1449, %v1464
    %v1472 = vadd.f32 %v1450, %v1464
    %v1473 = vadd.f32 %v1451, %v1464
    %v1474 = vadd.f32 %v1452, %v1464
    %v1475 = vadd.f32 %v1453, %v1464
    %v1476 = vadd.f32 %v1454, %v1464
    %v1477 = vadd.f32 %v1455, %v1464
    %v1478 = vadd.f32 %v1456, %v1464
    %v1479 = vadd.f32 %v1457, %v1464
    %v1480 = vadd.f32 %v1458, %v1464
    %v1481 = vadd.f32 %v1459, %v1464
    %v1482 = vmax.f32 %v1466, 0.0
    %v1483 = vmax.f32 %v1467, 0.0
    %v1484 = vmax.f32 %v1468, 0.0
    %v1485 = vmax.f32 %v1469, 0.0
    %v1486 = vmax.f32 %v1470, 0.0
    %v1487 = vmax.f32 %v1471, 0.0
    %v1488 = vmax.f32 %v1472, 0.0
    %v1489 = vmax.f32 %v1473, 0.0
    %v1490 = vmax.f32 %v1474, 0.0
    %v1491 = vmax.f32 %v1475, 0.0
    %v1492 = vmax.f32 %v1476, 0.0
    %v1493 = vmax.f32 %v1477, 0.0
    %v1494 = vmax.f32 %v1478, 0.0
    %v1495 = vmax.f32 %v1479, 0.0
    %v1496 = vmax.f32 %v1480, 0.0
    %v1497 = vmax.f32 %v1481, 0.0
    %v1498 = vpack.c.bf16 %v1483, %v1482
    %v1499 = vpack.c.bf16 %v1485, %v1484
    %v1500 = vpack.c.bf16 %v1487, %v1486
    %v1501 = vpack.c.bf16 %v1489, %v1488
    %v1502 = vpack.c.bf16 %v1491, %v1490
    %v1503 = vpack.c.bf16 %v1493, %v1492
    %v1504 = vpack.c.bf16 %v1495, %v1494
    %v1505 = vpack.c.bf16 %v1497, %v1496
    %v1514 = vunpack.c.l.b16 %v1498
    %v1515 = vunpack.c.h.b16 %v1498
    %v1516 = vunpack.c.l.b16 %v1499
    %v1517 = vunpack.c.h.b16 %v1499
    %v1518 = vunpack.c.l.b16 %v1500
    %v1519 = vunpack.c.h.b16 %v1500
    %v1520 = vunpack.c.l.b16 %v1501
    %v1521 = vunpack.c.h.b16 %v1501
    %v1522 = vunpack.c.l.b16 %v1502
    %v1523 = vunpack.c.h.b16 %v1502
    %v1524 = vunpack.c.l.b16 %v1503
    %v1525 = vunpack.c.h.b16 %v1503
    %v1526 = vunpack.c.l.b16 %v1504
    %v1527 = vunpack.c.h.b16 %v1504
    %v1528 = vunpack.c.l.b16 %v1505
    %v1529 = vunpack.c.h.b16 %v1505
    %v1530 = vpack.c.b16 %v1514, %v1514
    %v1531 = vpack.c.b16 %v1515, %v1515
    %v1532 = vpack.c.b16 %v1516, %v1516
    %v1533 = vpack.c.b16 %v1517, %v1517
    %v1534 = vpack.c.b16 %v1518, %v1518
    %v1535 = vpack.c.b16 %v1519, %v1519
    %v1536 = vpack.c.b16 %v1520, %v1520
    %v1537 = vpack.c.b16 %v1521, %v1521
    %v1538 = vpack.c.b16 %v1522, %v1522
    %v1539 = vpack.c.b16 %v1523, %v1523
    %v1540 = vpack.c.b16 %v1524, %v1524
    %v1541 = vpack.c.b16 %v1525, %v1525
    %v1542 = vpack.c.b16 %v1526, %v1526
    %v1543 = vpack.c.b16 %v1527, %v1527
    %v1544 = vpack.c.b16 %v1528, %v1528
    %v1545 = vpack.c.b16 %v1529, %v1529
    %vm1562 = vcmask 257024
    %1563 = vst.msk [vmem:[%s4] sm:$0xf] %vm1562, %v1530
    %1564 = vst.msk [vmem:[%s4 + $0x4] sm:$0xf] %vm1562, %v1531
    %1565 = vst.msk [vmem:[%s4 + $0x8] sm:$0xf] %vm1562, %v1532
    %1566 = vst.msk [vmem:[%s4 + $0xc] sm:$0xf] %vm1562, %v1533
    %1567 = vst.msk [vmem:[%s4 + $0x10] sm:$0xf] %vm1562, %v1534
    %1568 = vst.msk [vmem:[%s4 + $0x14] sm:$0xf] %vm1562, %v1535
    %1569 = vst.msk [vmem:[%s4 + $0x18] sm:$0xf] %vm1562, %v1536
    %1570 = vst.msk [vmem:[%s4 + $0x1c] sm:$0xf] %vm1562, %v1537
    %1571 = vst.msk [vmem:[%s4 + $0x20] sm:$0xf] %vm1562, %v1538
    %1572 = vst.msk [vmem:[%s4 + $0x24] sm:$0xf] %vm1562, %v1539
    %1573 = vst.msk [vmem:[%s4 + $0x28] sm:$0xf] %vm1562, %v1540
    %1574 = vst.msk [vmem:[%s4 + $0x2c] sm:$0xf] %vm1562, %v1541
    %1575 = vst.msk [vmem:[%s4 + $0x30] sm:$0xf] %vm1562, %v1542
    %1576 = vst.msk [vmem:[%s4 + $0x34] sm:$0xf] %vm1562, %v1543
    %1577 = vst.msk [vmem:[%s4 + $0x38] sm:$0xf] %vm1562, %v1544
    %1578 = vst.msk [vmem:[%s4 + $0x3c] sm:$0xf] %vm1562, %v1545
  $region25: #{gnet_forward.6} parent=0 // pred_fallthru
    _
  // Predicated region
  $region26: #{gnet_forward.6} parent=0 // pred_check
    _
  $region27: #{gnet_forward.6} parent=0 // pred_check_branch
    %1580 = sbr.rel (0) target = $region29
  $region28: #{gnet_forward.6} parent=0 // pred_region
    _
  $region29: #{gnet_forward.6} parent=0 // pred_fallthru
    _
  // Predicated region
  $region30: #{gnet_forward.6} parent=0 // pred_check
    _
  $region31: #{gnet_forward.6} parent=0 // pred_check_branch
    %1582 = sbr.rel (0) target = $region33
  $region32: #{gnet_forward.6} parent=0 // pred_region
    _
  $region33: #{gnet_forward.6} parent=0 // pred_fallthru
    _

// kernel: gnet_forward.7
$region0: #{gnet_forward.7}
  #allocation0 [shape = 'u32[]', space=smem, size = 0x4, offset = 0x4, fixed_abs, tag = 'smem constant byte address 0x4 - core index']
  #allocation1 [shape = 'u32[144,128]{1,0:T(1,128)}', space=vmem, size = 0x12000, scoped, tag = 'internal scratch']
  #allocation2 [shape = 'f32[512,128]{1,0:T(8,128)}', space=vmem, size = 0x40000, scoped, tag = 'scratch operand']
  #allocation3 [shape = 'f32[1,128]{1,0:T(1,128)}', space=vmem, size = 0x200, scoped, tag = 'scratch operand']
  %s0 = inlined_call_operand.vmem [shape: bf16[512,512], index: 0, kind: input, shape index: {}]
  %s1 = inlined_call_operand.vmem [shape: bf16[512,128], index: 1, kind: input, shape index: {}]
  %s2 = inlined_call_operand.vmem [shape: f32[1,128], index: 2, kind: input, shape index: {}]
  %s3 = inlined_call_operand.vmem [shape: f32[1,128], index: 3, kind: input, shape index: {}]
  %s4 = inlined_call_operand.vmem [shape: bf16[512,16], index: 4, kind: output, shape index: {}]
  %s5 = sld [smem:[#allocation0]]
  $region34: #{gnet_forward.7} parent=0
    _
  %s7 = ssub.s32 1, %s5
  %s8 = scalar_select 0, %s7, %s5
  // Predicated region
  $region2: #{gnet_forward.7} parent=0 // pred_check
    _
  $region3: #{gnet_forward.7} parent=0 // pred_check_branch
    %10 = sbr.rel (0) target = $region5
  $region4: #{gnet_forward.7} parent=0 // pred_region
    _
  $region5: #{gnet_forward.7} parent=0 // pred_fallthru
    _
  // Predicated region
  $region6: #{gnet_forward.7} parent=0 // pred_check
    _
  $region7: #{gnet_forward.7} parent=0 // pred_check_branch
    %12 = sbr.rel (0) target = $region9
  $region8: #{gnet_forward.7} parent=0 // pred_region
    _
  $region9: #{gnet_forward.7} parent=0 // pred_fallthru
    _
  // Predicated region
  $region10: #{gnet_forward.7} parent=0 // pred_check
    _
  $region11: #{gnet_forward.7} parent=0 // pred_check_branch
    %14 = sbr.rel (0) target = $region13
  $region12: #{gnet_forward.7} parent=0 // pred_region
    _
  $region13: #{gnet_forward.7} parent=0 // pred_fallthru
    _
  // Predicated region
  $region14: #{gnet_forward.7} parent=0 // pred_check
    _
  $region15: #{gnet_forward.7} parent=0 // pred_check_branch
    %16 = sbr.rel (0) target = $region17
  $region16: #{gnet_forward.7} parent=0 // pred_region
    _
  $region17: #{gnet_forward.7} parent=0 // pred_fallthru
    _
  %v18 = vld [vmem:[%s0] sm:$0xff]
  %v19 = vld [vmem:[%s0 + $0x8] sm:$0xff]
  %v20 = vld [vmem:[%s0 + $0x10] sm:$0xff]
  %v21 = vld [vmem:[%s0 + $0x18] sm:$0xff]
  %v22 = vld [vmem:[%s0 + $0x20] sm:$0xff]
  %v23 = vld [vmem:[%s0 + $0x28] sm:$0xff]
  %v24 = vld [vmem:[%s0 + $0x30] sm:$0xff]
  %v25 = vld [vmem:[%s0 + $0x38] sm:$0xff]
  %v26 = vld [vmem:[%s0 + $0x40] sm:$0xff]
  %v27 = vld [vmem:[%s0 + $0x48] sm:$0xff]
  %v28 = vld [vmem:[%s0 + $0x50] sm:$0xff]
  %v29 = vld [vmem:[%s0 + $0x58] sm:$0xff]
  %v30 = vld [vmem:[%s0 + $0x60] sm:$0xff]
  %v31 = vld [vmem:[%s0 + $0x68] sm:$0xff]
  %v32 = vld [vmem:[%s0 + $0x70] sm:$0xff]
  %v33 = vld [vmem:[%s0 + $0x78] sm:$0xff]
  %v34 = vld [vmem:[%s0 + $0x80] sm:$0xff]
  %v35 = vld [vmem:[%s0 + $0x88] sm:$0xff]
  %v36 = vld [vmem:[%s0 + $0x90] sm:$0xff]
  %v37 = vld [vmem:[%s0 + $0x98] sm:$0xff]
  %v38 = vld [vmem:[%s0 + $0xa0] sm:$0xff]
  %v39 = vld [vmem:[%s0 + $0xa8] sm:$0xff]
  %v40 = vld [vmem:[%s0 + $0xb0] sm:$0xff]
  %v41 = vld [vmem:[%s0 + $0xb8] sm:$0xff]
  %v42 = vld [vmem:[%s0 + $0xc0] sm:$0xff]
  %v43 = vld [vmem:[%s0 + $0xc8] sm:$0xff]
  %v44 = vld [vmem:[%s0 + $0xd0] sm:$0xff]
  %v45 = vld [vmem:[%s0 + $0xd8] sm:$0xff]
  %v46 = vld [vmem:[%s0 + $0xe0] sm:$0xff]
  %v47 = vld [vmem:[%s0 + $0xe8] sm:$0xff]
  %v48 = vld [vmem:[%s0 + $0xf0] sm:$0xff]
  %v49 = vld [vmem:[%s0 + $0xf8] sm:$0xff]
  %v50 = vld [vmem:[%s0 + $0x100] sm:$0xff]
  %v51 = vld [vmem:[%s0 + $0x108] sm:$0xff]
  %v52 = vld [vmem:[%s0 + $0x110] sm:$0xff]
  %v53 = vld [vmem:[%s0 + $0x118] sm:$0xff]
  %v54 = vld [vmem:[%s0 + $0x120] sm:$0xff]
  %v55 = vld [vmem:[%s0 + $0x128] sm:$0xff]
  %v56 = vld [vmem:[%s0 + $0x130] sm:$0xff]
  %v57 = vld [vmem:[%s0 + $0x138] sm:$0xff]
  %v58 = vld [vmem:[%s0 + $0x140] sm:$0xff]
  %v59 = vld [vmem:[%s0 + $0x148] sm:$0xff]
  %v60 = vld [vmem:[%s0 + $0x150] sm:$0xff]
  %v61 = vld [vmem:[%s0 + $0x158] sm:$0xff]
  %v62 = vld [vmem:[%s0 + $0x160] sm:$0xff]
  %v63 = vld [vmem:[%s0 + $0x168] sm:$0xff]
  %v64 = vld [vmem:[%s0 + $0x170] sm:$0xff]
  %v65 = vld [vmem:[%s0 + $0x178] sm:$0xff]
  %v66 = vld [vmem:[%s0 + $0x180] sm:$0xff]
  %v67 = vld [vmem:[%s0 + $0x188] sm:$0xff]
  %v68 = vld [vmem:[%s0 + $0x190] sm:$0xff]
  %v69 = vld [vmem:[%s0 + $0x198] sm:$0xff]
  %v70 = vld [vmem:[%s0 + $0x1a0] sm:$0xff]
  %v71 = vld [vmem:[%s0 + $0x1a8] sm:$0xff]
  %v72 = vld [vmem:[%s0 + $0x1b0] sm:$0xff]
  %v73 = vld [vmem:[%s0 + $0x1b8] sm:$0xff]
  %v74 = vld [vmem:[%s0 + $0x1c0] sm:$0xff]
  %v75 = vld [vmem:[%s0 + $0x1c8] sm:$0xff]
  %v76 = vld [vmem:[%s0 + $0x1d0] sm:$0xff]
  %v77 = vld [vmem:[%s0 + $0x1d8] sm:$0xff]
  %v78 = vld [vmem:[%s0 + $0x1e0] sm:$0xff]
  %v79 = vld [vmem:[%s0 + $0x1e8] sm:$0xff]
  %v80 = vld [vmem:[%s0 + $0x1f0] sm:$0xff]
  %v81 = vld [vmem:[%s0 + $0x1f8] sm:$0xff]
  %v82 = vld [vmem:[%s0 + $0x200] sm:$0xff]
  %v83 = vld [vmem:[%s0 + $0x208] sm:$0xff]
  %v84 = vld [vmem:[%s0 + $0x210] sm:$0xff]
  %v85 = vld [vmem:[%s0 + $0x218] sm:$0xff]
  %v86 = vld [vmem:[%s0 + $0x220] sm:$0xff]
  %v87 = vld [vmem:[%s0 + $0x228] sm:$0xff]
  %v88 = vld [vmem:[%s0 + $0x230] sm:$0xff]
  %v89 = vld [vmem:[%s0 + $0x238] sm:$0xff]
  %v90 = vld [vmem:[%s0 + $0x240] sm:$0xff]
  %v91 = vld [vmem:[%s0 + $0x248] sm:$0xff]
  %v92 = vld [vmem:[%s0 + $0x250] sm:$0xff]
  %v93 = vld [vmem:[%s0 + $0x258] sm:$0xff]
  %v94 = vld [vmem:[%s0 + $0x260] sm:$0xff]
  %v95 = vld [vmem:[%s0 + $0x268] sm:$0xff]
  %v96 = vld [vmem:[%s0 + $0x270] sm:$0xff]
  %v97 = vld [vmem:[%s0 + $0x278] sm:$0xff]
  %v98 = vld [vmem:[%s0 + $0x280] sm:$0xff]
  %v99 = vld [vmem:[%s0 + $0x288] sm:$0xff]
  %v100 = vld [vmem:[%s0 + $0x290] sm:$0xff]
  %v101 = vld [vmem:[%s0 + $0x298] sm:$0xff]
  %v102 = vld [vmem:[%s0 + $0x2a0] sm:$0xff]
  %v103 = vld [vmem:[%s0 + $0x2a8] sm:$0xff]
  %v104 = vld [vmem:[%s0 + $0x2b0] sm:$0xff]
  %v105 = vld [vmem:[%s0 + $0x2b8] sm:$0xff]
  %v106 = vld [vmem:[%s0 + $0x2c0] sm:$0xff]
  %v107 = vld [vmem:[%s0 + $0x2c8] sm:$0xff]
  %v108 = vld [vmem:[%s0 + $0x2d0] sm:$0xff]
  %v109 = vld [vmem:[%s0 + $0x2d8] sm:$0xff]
  %v110 = vld [vmem:[%s0 + $0x2e0] sm:$0xff]
  %v111 = vld [vmem:[%s0 + $0x2e8] sm:$0xff]
  %v112 = vld [vmem:[%s0 + $0x2f0] sm:$0xff]
  %v113 = vld [vmem:[%s0 + $0x2f8] sm:$0xff]
  %v114 = vld [vmem:[%s0 + $0x300] sm:$0xff]
  %v115 = vld [vmem:[%s0 + $0x308] sm:$0xff]
  %v116 = vld [vmem:[%s0 + $0x310] sm:$0xff]
  %v117 = vld [vmem:[%s0 + $0x318] sm:$0xff]
  %v118 = vld [vmem:[%s0 + $0x320] sm:$0xff]
  %v119 = vld [vmem:[%s0 + $0x328] sm:$0xff]
  %v120 = vld [vmem:[%s0 + $0x330] sm:$0xff]
  %v121 = vld [vmem:[%s0 + $0x338] sm:$0xff]
  %v122 = vld [vmem:[%s0 + $0x340] sm:$0xff]
  %v123 = vld [vmem:[%s0 + $0x348] sm:$0xff]
  %v124 = vld [vmem:[%s0 + $0x350] sm:$0xff]
  %v125 = vld [vmem:[%s0 + $0x358] sm:$0xff]
  %v126 = vld [vmem:[%s0 + $0x360] sm:$0xff]
  %v127 = vld [vmem:[%s0 + $0x368] sm:$0xff]
  %v128 = vld [vmem:[%s0 + $0x370] sm:$0xff]
  %v129 = vld [vmem:[%s0 + $0x378] sm:$0xff]
  %v130 = vld [vmem:[%s0 + $0x380] sm:$0xff]
  %v131 = vld [vmem:[%s0 + $0x388] sm:$0xff]
  %v132 = vld [vmem:[%s0 + $0x390] sm:$0xff]
  %v133 = vld [vmem:[%s0 + $0x398] sm:$0xff]
  %v134 = vld [vmem:[%s0 + $0x3a0] sm:$0xff]
  %v135 = vld [vmem:[%s0 + $0x3a8] sm:$0xff]
  %v136 = vld [vmem:[%s0 + $0x3b0] sm:$0xff]
  %v137 = vld [vmem:[%s0 + $0x3b8] sm:$0xff]
  %v138 = vld [vmem:[%s0 + $0x3c0] sm:$0xff]
  %v139 = vld [vmem:[%s0 + $0x3c8] sm:$0xff]
  %v140 = vld [vmem:[%s0 + $0x3d0] sm:$0xff]
  %v141 = vld [vmem:[%s0 + $0x3d8] sm:$0xff]
  %v142 = vld [vmem:[%s0 + $0x3e0] sm:$0xff]
  %v143 = vld [vmem:[%s0 + $0x3e8] sm:$0xff]
  %v144 = vld [vmem:[%s0 + $0x3f0] sm:$0xff]
  %v145 = vld [vmem:[%s0 + $0x3f8] sm:$0xff]
  %v146 = vld [vmem:[%s1] sm:$0xf]
  %v147 = vld [vmem:[%s1 + $0x4] sm:$0xf]
  %v148 = vld [vmem:[%s1 + $0x8] sm:$0xf]
  %v149 = vld [vmem:[%s1 + $0xc] sm:$0xf]
  %v150 = vld [vmem:[%s1 + $0x10] sm:$0xf]
  %v151 = vld [vmem:[%s1 + $0x14] sm:$0xf]
  %v152 = vld [vmem:[%s1 + $0x18] sm:$0xf]
  %v153 = vld [vmem:[%s1 + $0x1c] sm:$0xf]
  %v154 = vld [vmem:[%s1 + $0x20] sm:$0xf]
  %v155 = vld [vmem:[%s1 + $0x24] sm:$0xf]
  %v156 = vld [vmem:[%s1 + $0x28] sm:$0xf]
  %v157 = vld [vmem:[%s1 + $0x2c] sm:$0xf]
  %v158 = vld [vmem:[%s1 + $0x30] sm:$0xf]
  %v159 = vld [vmem:[%s1 + $0x34] sm:$0xf]
  %v160 = vld [vmem:[%s1 + $0x38] sm:$0xf]
  %v161 = vld [vmem:[%s1 + $0x3c] sm:$0xf]
  %v162 = vld [vmem:[%s1 + $0x40] sm:$0xf]
  %v163 = vld [vmem:[%s1 + $0x44] sm:$0xf]
  %v164 = vld [vmem:[%s1 + $0x48] sm:$0xf]
  %v165 = vld [vmem:[%s1 + $0x4c] sm:$0xf]
  %v166 = vld [vmem:[%s1 + $0x50] sm:$0xf]
  %v167 = vld [vmem:[%s1 + $0x54] sm:$0xf]
  %v168 = vld [vmem:[%s1 + $0x58] sm:$0xf]
  %v169 = vld [vmem:[%s1 + $0x5c] sm:$0xf]
  %v170 = vld [vmem:[%s1 + $0x60] sm:$0xf]
  %v171 = vld [vmem:[%s1 + $0x64] sm:$0xf]
  %v172 = vld [vmem:[%s1 + $0x68] sm:$0xf]
  %v173 = vld [vmem:[%s1 + $0x6c] sm:$0xf]
  %v174 = vld [vmem:[%s1 + $0x70] sm:$0xf]
  %v175 = vld [vmem:[%s1 + $0x74] sm:$0xf]
  %v176 = vld [vmem:[%s1 + $0x78] sm:$0xf]
  %v177 = vld [vmem:[%s1 + $0x7c] sm:$0xf]
  %v178 = vld [vmem:[%s1 + $0x80] sm:$0xf]
  %v179 = vld [vmem:[%s1 + $0x84] sm:$0xf]
  %v180 = vld [vmem:[%s1 + $0x88] sm:$0xf]
  %v181 = vld [vmem:[%s1 + $0x8c] sm:$0xf]
  %v182 = vld [vmem:[%s1 + $0x90] sm:$0xf]
  %v183 = vld [vmem:[%s1 + $0x94] sm:$0xf]
  %v184 = vld [vmem:[%s1 + $0x98] sm:$0xf]
  %v185 = vld [vmem:[%s1 + $0x9c] sm:$0xf]
  %v186 = vld [vmem:[%s1 + $0xa0] sm:$0xf]
  %v187 = vld [vmem:[%s1 + $0xa4] sm:$0xf]
  %v188 = vld [vmem:[%s1 + $0xa8] sm:$0xf]
  %v189 = vld [vmem:[%s1 + $0xac] sm:$0xf]
  %v190 = vld [vmem:[%s1 + $0xb0] sm:$0xf]
  %v191 = vld [vmem:[%s1 + $0xb4] sm:$0xf]
  %v192 = vld [vmem:[%s1 + $0xb8] sm:$0xf]
  %v193 = vld [vmem:[%s1 + $0xbc] sm:$0xf]
  %v194 = vld [vmem:[%s1 + $0xc0] sm:$0xf]
  %v195 = vld [vmem:[%s1 + $0xc4] sm:$0xf]
  %v196 = vld [vmem:[%s1 + $0xc8] sm:$0xf]
  %v197 = vld [vmem:[%s1 + $0xcc] sm:$0xf]
  %v198 = vld [vmem:[%s1 + $0xd0] sm:$0xf]
  %v199 = vld [vmem:[%s1 + $0xd4] sm:$0xf]
  %v200 = vld [vmem:[%s1 + $0xd8] sm:$0xf]
  %v201 = vld [vmem:[%s1 + $0xdc] sm:$0xf]
  %v202 = vld [vmem:[%s1 + $0xe0] sm:$0xf]
  %v203 = vld [vmem:[%s1 + $0xe4] sm:$0xf]
  %v204 = vld [vmem:[%s1 + $0xe8] sm:$0xf]
  %v205 = vld [vmem:[%s1 + $0xec] sm:$0xf]
  %v206 = vld [vmem:[%s1 + $0xf0] sm:$0xf]
  %v207 = vld [vmem:[%s1 + $0xf4] sm:$0xf]
  %v208 = vld [vmem:[%s1 + $0xf8] sm:$0xf]
  %v209 = vld [vmem:[%s1 + $0xfc] sm:$0xf]
  %v338 = vunpack.c.l.b16 %v18
  %v339 = vunpack.c.h.b16 %v18
  %v340 = vunpack.c.l.b16 %v19
  %v341 = vunpack.c.h.b16 %v19
  %v342 = vunpack.c.l.b16 %v20
  %v343 = vunpack.c.h.b16 %v20
  %v344 = vunpack.c.l.b16 %v21
  %v345 = vunpack.c.h.b16 %v21
  %v346 = vunpack.c.l.b16 %v22
  %v347 = vunpack.c.h.b16 %v22
  %v348 = vunpack.c.l.b16 %v23
  %v349 = vunpack.c.h.b16 %v23
  %v350 = vunpack.c.l.b16 %v24
  %v351 = vunpack.c.h.b16 %v24
  %v352 = vunpack.c.l.b16 %v25
  %v353 = vunpack.c.h.b16 %v25
  %v354 = vunpack.c.l.b16 %v26
  %v355 = vunpack.c.h.b16 %v26
  %v356 = vunpack.c.l.b16 %v27
  %v357 = vunpack.c.h.b16 %v27
  %v358 = vunpack.c.l.b16 %v28
  %v359 = vunpack.c.h.b16 %v28
  %v360 = vunpack.c.l.b16 %v29
  %v361 = vunpack.c.h.b16 %v29
  %v362 = vunpack.c.l.b16 %v30
  %v363 = vunpack.c.h.b16 %v30
  %v364 = vunpack.c.l.b16 %v31
  %v365 = vunpack.c.h.b16 %v31
  %v366 = vunpack.c.l.b16 %v32
  %v367 = vunpack.c.h.b16 %v32
  %v368 = vunpack.c.l.b16 %v33
  %v369 = vunpack.c.h.b16 %v33
  %v370 = vunpack.c.l.b16 %v34
  %v371 = vunpack.c.h.b16 %v34
  %v372 = vunpack.c.l.b16 %v35
  %v373 = vunpack.c.h.b16 %v35
  %v374 = vunpack.c.l.b16 %v36
  %v375 = vunpack.c.h.b16 %v36
  %v376 = vunpack.c.l.b16 %v37
  %v377 = vunpack.c.h.b16 %v37
  %v378 = vunpack.c.l.b16 %v38
  %v379 = vunpack.c.h.b16 %v38
  %v380 = vunpack.c.l.b16 %v39
  %v381 = vunpack.c.h.b16 %v39
  %v382 = vunpack.c.l.b16 %v40
  %v383 = vunpack.c.h.b16 %v40
  %v384 = vunpack.c.l.b16 %v41
  %v385 = vunpack.c.h.b16 %v41
  %v386 = vunpack.c.l.b16 %v42
  %v387 = vunpack.c.h.b16 %v42
  %v388 = vunpack.c.l.b16 %v43
  %v389 = vunpack.c.h.b16 %v43
  %v390 = vunpack.c.l.b16 %v44
  %v391 = vunpack.c.h.b16 %v44
  %v392 = vunpack.c.l.b16 %v45
  %v393 = vunpack.c.h.b16 %v45
  %v394 = vunpack.c.l.b16 %v46
  %v395 = vunpack.c.h.b16 %v46
  %v396 = vunpack.c.l.b16 %v47
  %v397 = vunpack.c.h.b16 %v47
  %v398 = vunpack.c.l.b16 %v48
  %v399 = vunpack.c.h.b16 %v48
  %v400 = vunpack.c.l.b16 %v49
  %v401 = vunpack.c.h.b16 %v49
  %v402 = vunpack.c.l.b16 %v50
  %v403 = vunpack.c.h.b16 %v50
  %v404 = vunpack.c.l.b16 %v51
  %v405 = vunpack.c.h.b16 %v51
  %v406 = vunpack.c.l.b16 %v52
  %v407 = vunpack.c.h.b16 %v52
  %v408 = vunpack.c.l.b16 %v53
  %v409 = vunpack.c.h.b16 %v53
  %v410 = vunpack.c.l.b16 %v54
  %v411 = vunpack.c.h.b16 %v54
  %v412 = vunpack.c.l.b16 %v55
  %v413 = vunpack.c.h.b16 %v55
  %v414 = vunpack.c.l.b16 %v56
  %v415 = vunpack.c.h.b16 %v56
  %v416 = vunpack.c.l.b16 %v57
  %v417 = vunpack.c.h.b16 %v57
  %v418 = vunpack.c.l.b16 %v58
  %v419 = vunpack.c.h.b16 %v58
  %v420 = vunpack.c.l.b16 %v59
  %v421 = vunpack.c.h.b16 %v59
  %v422 = vunpack.c.l.b16 %v60
  %v423 = vunpack.c.h.b16 %v60
  %v424 = vunpack.c.l.b16 %v61
  %v425 = vunpack.c.h.b16 %v61
  %v426 = vunpack.c.l.b16 %v62
  %v427 = vunpack.c.h.b16 %v62
  %v428 = vunpack.c.l.b16 %v63
  %v429 = vunpack.c.h.b16 %v63
  %v430 = vunpack.c.l.b16 %v64
  %v431 = vunpack.c.h.b16 %v64
  %v432 = vunpack.c.l.b16 %v65
  %v433 = vunpack.c.h.b16 %v65
  %v434 = vunpack.c.l.b16 %v66
  %v435 = vunpack.c.h.b16 %v66
  %v436 = vunpack.c.l.b16 %v67
  %v437 = vunpack.c.h.b16 %v67
  %v438 = vunpack.c.l.b16 %v68
  %v439 = vunpack.c.h.b16 %v68
  %v440 = vunpack.c.l.b16 %v69
  %v441 = vunpack.c.h.b16 %v69
  %v442 = vunpack.c.l.b16 %v70
  %v443 = vunpack.c.h.b16 %v70
  %v444 = vunpack.c.l.b16 %v71
  %v445 = vunpack.c.h.b16 %v71
  %v446 = vunpack.c.l.b16 %v72
  %v447 = vunpack.c.h.b16 %v72
  %v448 = vunpack.c.l.b16 %v73
  %v449 = vunpack.c.h.b16 %v73
  %v450 = vunpack.c.l.b16 %v74
  %v451 = vunpack.c.h.b16 %v74
  %v452 = vunpack.c.l.b16 %v75
  %v453 = vunpack.c.h.b16 %v75
  %v454 = vunpack.c.l.b16 %v76
  %v455 = vunpack.c.h.b16 %v76
  %v456 = vunpack.c.l.b16 %v77
  %v457 = vunpack.c.h.b16 %v77
  %v458 = vunpack.c.l.b16 %v78
  %v459 = vunpack.c.h.b16 %v78
  %v460 = vunpack.c.l.b16 %v79
  %v461 = vunpack.c.h.b16 %v79
  %v462 = vunpack.c.l.b16 %v80
  %v463 = vunpack.c.h.b16 %v80
  %v464 = vunpack.c.l.b16 %v81
  %v465 = vunpack.c.h.b16 %v81
  %v466 = vunpack.c.l.b16 %v82
  %v467 = vunpack.c.h.b16 %v82
  %v468 = vunpack.c.l.b16 %v83
  %v469 = vunpack.c.h.b16 %v83
  %v470 = vunpack.c.l.b16 %v84
  %v471 = vunpack.c.h.b16 %v84
  %v472 = vunpack.c.l.b16 %v85
  %v473 = vunpack.c.h.b16 %v85
  %v474 = vunpack.c.l.b16 %v86
  %v475 = vunpack.c.h.b16 %v86
  %v476 = vunpack.c.l.b16 %v87
  %v477 = vunpack.c.h.b16 %v87
  %v478 = vunpack.c.l.b16 %v88
  %v479 = vunpack.c.h.b16 %v88
  %v480 = vunpack.c.l.b16 %v89
  %v481 = vunpack.c.h.b16 %v89
  %v482 = vunpack.c.l.b16 %v90
  %v483 = vunpack.c.h.b16 %v90
  %v484 = vunpack.c.l.b16 %v91
  %v485 = vunpack.c.h.b16 %v91
  %v486 = vunpack.c.l.b16 %v92
  %v487 = vunpack.c.h.b16 %v92
  %v488 = vunpack.c.l.b16 %v93
  %v489 = vunpack.c.h.b16 %v93
  %v490 = vunpack.c.l.b16 %v94
  %v491 = vunpack.c.h.b16 %v94
  %v492 = vunpack.c.l.b16 %v95
  %v493 = vunpack.c.h.b16 %v95
  %v494 = vunpack.c.l.b16 %v96
  %v495 = vunpack.c.h.b16 %v96
  %v496 = vunpack.c.l.b16 %v97
  %v497 = vunpack.c.h.b16 %v97
  %v498 = vunpack.c.l.b16 %v98
  %v499 = vunpack.c.h.b16 %v98
  %v500 = vunpack.c.l.b16 %v99
  %v501 = vunpack.c.h.b16 %v99
  %v502 = vunpack.c.l.b16 %v100
  %v503 = vunpack.c.h.b16 %v100
  %v504 = vunpack.c.l.b16 %v101
  %v505 = vunpack.c.h.b16 %v101
  %v506 = vunpack.c.l.b16 %v102
  %v507 = vunpack.c.h.b16 %v102
  %v508 = vunpack.c.l.b16 %v103
  %v509 = vunpack.c.h.b16 %v103
  %v510 = vunpack.c.l.b16 %v104
  %v511 = vunpack.c.h.b16 %v104
  %v512 = vunpack.c.l.b16 %v105
  %v513 = vunpack.c.h.b16 %v105
  %v514 = vunpack.c.l.b16 %v106
  %v515 = vunpack.c.h.b16 %v106
  %v516 = vunpack.c.l.b16 %v107
  %v517 = vunpack.c.h.b16 %v107
  %v518 = vunpack.c.l.b16 %v108
  %v519 = vunpack.c.h.b16 %v108
  %v520 = vunpack.c.l.b16 %v109
  %v521 = vunpack.c.h.b16 %v109
  %v522 = vunpack.c.l.b16 %v110
  %v523 = vunpack.c.h.b16 %v110
  %v524 = vunpack.c.l.b16 %v111
  %v525 = vunpack.c.h.b16 %v111
  %v526 = vunpack.c.l.b16 %v112
  %v527 = vunpack.c.h.b16 %v112
  %v528 = vunpack.c.l.b16 %v113
  %v529 = vunpack.c.h.b16 %v113
  %v530 = vunpack.c.l.b16 %v114
  %v531 = vunpack.c.h.b16 %v114
  %v532 = vunpack.c.l.b16 %v115
  %v533 = vunpack.c.h.b16 %v115
  %v534 = vunpack.c.l.b16 %v116
  %v535 = vunpack.c.h.b16 %v116
  %v536 = vunpack.c.l.b16 %v117
  %v537 = vunpack.c.h.b16 %v117
  %v538 = vunpack.c.l.b16 %v118
  %v539 = vunpack.c.h.b16 %v118
  %v540 = vunpack.c.l.b16 %v119
  %v541 = vunpack.c.h.b16 %v119
  %v542 = vunpack.c.l.b16 %v120
  %v543 = vunpack.c.h.b16 %v120
  %v544 = vunpack.c.l.b16 %v121
  %v545 = vunpack.c.h.b16 %v121
  %v546 = vunpack.c.l.b16 %v122
  %v547 = vunpack.c.h.b16 %v122
  %v548 = vunpack.c.l.b16 %v123
  %v549 = vunpack.c.h.b16 %v123
  %v550 = vunpack.c.l.b16 %v124
  %v551 = vunpack.c.h.b16 %v124
  %v552 = vunpack.c.l.b16 %v125
  %v553 = vunpack.c.h.b16 %v125
  %v554 = vunpack.c.l.b16 %v126
  %v555 = vunpack.c.h.b16 %v126
  %v556 = vunpack.c.l.b16 %v127
  %v557 = vunpack.c.h.b16 %v127
  %v558 = vunpack.c.l.b16 %v128
  %v559 = vunpack.c.h.b16 %v128
  %v560 = vunpack.c.l.b16 %v129
  %v561 = vunpack.c.h.b16 %v129
  %v562 = vunpack.c.l.b16 %v130
  %v563 = vunpack.c.h.b16 %v130
  %v564 = vunpack.c.l.b16 %v131
  %v565 = vunpack.c.h.b16 %v131
  %v566 = vunpack.c.l.b16 %v132
  %v567 = vunpack.c.h.b16 %v132
  %v568 = vunpack.c.l.b16 %v133
  %v569 = vunpack.c.h.b16 %v133
  %v570 = vunpack.c.l.b16 %v134
  %v571 = vunpack.c.h.b16 %v134
  %v572 = vunpack.c.l.b16 %v135
  %v573 = vunpack.c.h.b16 %v135
  %v574 = vunpack.c.l.b16 %v136
  %v575 = vunpack.c.h.b16 %v136
  %v576 = vunpack.c.l.b16 %v137
  %v577 = vunpack.c.h.b16 %v137
  %v578 = vunpack.c.l.b16 %v138
  %v579 = vunpack.c.h.b16 %v138
  %v580 = vunpack.c.l.b16 %v139
  %v581 = vunpack.c.h.b16 %v139
  %v582 = vunpack.c.l.b16 %v140
  %v583 = vunpack.c.h.b16 %v140
  %v584 = vunpack.c.l.b16 %v141
  %v585 = vunpack.c.h.b16 %v141
  %v586 = vunpack.c.l.b16 %v142
  %v587 = vunpack.c.h.b16 %v142
  %v588 = vunpack.c.l.b16 %v143
  %v589 = vunpack.c.h.b16 %v143
  %v590 = vunpack.c.l.b16 %v144
  %v591 = vunpack.c.h.b16 %v144
  %v592 = vunpack.c.l.b16 %v145
  %v593 = vunpack.c.h.b16 %v145
  %v594 = vpack.c.b16 %v342, %v338
  %v595 = vpack.c.b16 %v343, %v339
  %v596 = vpack.c.b16 %v344, %v340
  %v597 = vpack.c.b16 %v345, %v341
  %v598 = vpack.c.b16 %v350, %v346
  %v599 = vpack.c.b16 %v351, %v347
  %v600 = vpack.c.b16 %v352, %v348
  %v601 = vpack.c.b16 %v353, %v349
  %v602 = vpack.c.b16 %v358, %v354
  %v603 = vpack.c.b16 %v359, %v355
  %v604 = vpack.c.b16 %v360, %v356
  %v605 = vpack.c.b16 %v361, %v357
  %v606 = vpack.c.b16 %v366, %v362
  %v607 = vpack.c.b16 %v367, %v363
  %v608 = vpack.c.b16 %v368, %v364
  %v609 = vpack.c.b16 %v369, %v365
  %v610 = vpack.c.b16 %v374, %v370
  %v611 = vpack.c.b16 %v375, %v371
  %v612 = vpack.c.b16 %v376, %v372
  %v613 = vpack.c.b16 %v377, %v373
  %v614 = vpack.c.b16 %v382, %v378
  %v615 = vpack.c.b16 %v383, %v379
  %v616 = vpack.c.b16 %v384, %v380
  %v617 = vpack.c.b16 %v385, %v381
  %v618 = vpack.c.b16 %v390, %v386
  %v619 = vpack.c.b16 %v391, %v387
  %v620 = vpack.c.b16 %v392, %v388
  %v621 = vpack.c.b16 %v393, %v389
  %v622 = vpack.c.b16 %v398, %v394
  %v623 = vpack.c.b16 %v399, %v395
  %v624 = vpack.c.b16 %v400, %v396
  %v625 = vpack.c.b16 %v401, %v397
  %v626 = vpack.c.b16 %v406, %v402
  %v627 = vpack.c.b16 %v407, %v403
  %v628 = vpack.c.b16 %v408, %v404
  %v629 = vpack.c.b16 %v409, %v405
  %v630 = vpack.c.b16 %v414, %v410
  %v631 = vpack.c.b16 %v415, %v411
  %v632 = vpack.c.b16 %v416, %v412
  %v633 = vpack.c.b16 %v417, %v413
  %v634 = vpack.c.b16 %v422, %v418
  %v635 = vpack.c.b16 %v423, %v419
  %v636 = vpack.c.b16 %v424, %v420
  %v637 = vpack.c.b16 %v425, %v421
  %v638 = vpack.c.b16 %v430, %v426
  %v639 = vpack.c.b16 %v431, %v427
  %v640 = vpack.c.b16 %v432, %v428
  %v641 = vpack.c.b16 %v433, %v429
  %v642 = vpack.c.b16 %v438, %v434
  %v643 = vpack.c.b16 %v439, %v435
  %v644 = vpack.c.b16 %v440, %v436
  %v645 = vpack.c.b16 %v441, %v437
  %v646 = vpack.c.b16 %v446, %v442
  %v647 = vpack.c.b16 %v447, %v443
  %v648 = vpack.c.b16 %v448, %v444
  %v649 = vpack.c.b16 %v449, %v445
  %v650 = vpack.c.b16 %v454, %v450
  %v651 = vpack.c.b16 %v455, %v451
  %v652 = vpack.c.b16 %v456, %v452
  %v653 = vpack.c.b16 %v457, %v453
  %v654 = vpack.c.b16 %v462, %v458
  %v655 = vpack.c.b16 %v463, %v459
  %v656 = vpack.c.b16 %v464, %v460
  %v657 = vpack.c.b16 %v465, %v461
  %v658 = vpack.c.b16 %v470, %v466
  %v659 = vpack.c.b16 %v471, %v467
  %v660 = vpack.c.b16 %v472, %v468
  %v661 = vpack.c.b16 %v473, %v469
  %v662 = vpack.c.b16 %v478, %v474
  %v663 = vpack.c.b16 %v479, %v475
  %v664 = vpack.c.b16 %v480, %v476
  %v665 = vpack.c.b16 %v481, %v477
  %v666 = vpack.c.b16 %v486, %v482
  %v667 = vpack.c.b16 %v487, %v483
  %v668 = vpack.c.b16 %v488, %v484
  %v669 = vpack.c.b16 %v489, %v485
  %v670 = vpack.c.b16 %v494, %v490
  %v671 = vpack.c.b16 %v495, %v491
  %v672 = vpack.c.b16 %v496, %v492
  %v673 = vpack.c.b16 %v497, %v493
  %v674 = vpack.c.b16 %v502, %v498
  %v675 = vpack.c.b16 %v503, %v499
  %v676 = vpack.c.b16 %v504, %v500
  %v677 = vpack.c.b16 %v505, %v501
  %v678 = vpack.c.b16 %v510, %v506
  %v679 = vpack.c.b16 %v511, %v507
  %v680 = vpack.c.b16 %v512, %v508
  %v681 = vpack.c.b16 %v513, %v509
  %v682 = vpack.c.b16 %v518, %v514
  %v683 = vpack.c.b16 %v519, %v515
  %v684 = vpack.c.b16 %v520, %v516
  %v685 = vpack.c.b16 %v521, %v517
  %v686 = vpack.c.b16 %v526, %v522
  %v687 = vpack.c.b16 %v527, %v523
  %v688 = vpack.c.b16 %v528, %v524
  %v689 = vpack.c.b16 %v529, %v525
  %v690 = vpack.c.b16 %v534, %v530
  %v691 = vpack.c.b16 %v535, %v531
  %v692 = vpack.c.b16 %v536, %v532
  %v693 = vpack.c.b16 %v537, %v533
  %v694 = vpack.c.b16 %v542, %v538
  %v695 = vpack.c.b16 %v543, %v539
  %v696 = vpack.c.b16 %v544, %v540
  %v697 = vpack.c.b16 %v545, %v541
  %v698 = vpack.c.b16 %v550, %v546
  %v699 = vpack.c.b16 %v551, %v547
  %v700 = vpack.c.b16 %v552, %v548
  %v701 = vpack.c.b16 %v553, %v549
  %v702 = vpack.c.b16 %v558, %v554
  %v703 = vpack.c.b16 %v559, %v555
  %v704 = vpack.c.b16 %v560, %v556
  %v705 = vpack.c.b16 %v561, %v557
  %v706 = vpack.c.b16 %v566, %v562
  %v707 = vpack.c.b16 %v567, %v563
  %v708 = vpack.c.b16 %v568, %v564
  %v709 = vpack.c.b16 %v569, %v565
  %v710 = vpack.c.b16 %v574, %v570
  %v711 = vpack.c.b16 %v575, %v571
  %v712 = vpack.c.b16 %v576, %v572
  %v713 = vpack.c.b16 %v577, %v573
  %v714 = vpack.c.b16 %v582, %v578
  %v715 = vpack.c.b16 %v583, %v579
  %v716 = vpack.c.b16 %v584, %v580
  %v717 = vpack.c.b16 %v585, %v581
  %v718 = vpack.c.b16 %v590, %v586
  %v719 = vpack.c.b16 %v591, %v587
  %v720 = vpack.c.b16 %v592, %v588
  %v721 = vpack.c.b16 %v593, %v589
  %v914 = vunpack.c.l.b16 %v146
  %v915 = vunpack.c.l.b16 %v147
  %v916 = vunpack.c.l.b16 %v148
  %v917 = vunpack.c.l.b16 %v149
  %v918 = vunpack.c.l.b16 %v150
  %v919 = vunpack.c.l.b16 %v151
  %v920 = vunpack.c.l.b16 %v152
  %v921 = vunpack.c.l.b16 %v153
  %v922 = vunpack.c.l.b16 %v154
  %v923 = vunpack.c.l.b16 %v155
  %v924 = vunpack.c.l.b16 %v156
  %v925 = vunpack.c.l.b16 %v157
  %v926 = vunpack.c.l.b16 %v158
  %v927 = vunpack.c.l.b16 %v159
  %v928 = vunpack.c.l.b16 %v160
  %v929 = vunpack.c.l.b16 %v161
  %v930 = vunpack.c.l.b16 %v162
  %v931 = vunpack.c.l.b16 %v163
  %v932 = vunpack.c.l.b16 %v164
  %v933 = vunpack.c.l.b16 %v165
  %v934 = vunpack.c.l.b16 %v166
  %v935 = vunpack.c.l.b16 %v167
  %v936 = vunpack.c.l.b16 %v168
  %v937 = vunpack.c.l.b16 %v169
  %v938 = vunpack.c.l.b16 %v170
  %v939 = vunpack.c.l.b16 %v171
  %v940 = vunpack.c.l.b16 %v172
  %v941 = vunpack.c.l.b16 %v173
  %v942 = vunpack.c.l.b16 %v174
  %v943 = vunpack.c.l.b16 %v175
  %v944 = vunpack.c.l.b16 %v176
  %v945 = vunpack.c.l.b16 %v177
  %v946 = vunpack.c.l.b16 %v178
  %v947 = vunpack.c.l.b16 %v179
  %v948 = vunpack.c.l.b16 %v180
  %v949 = vunpack.c.l.b16 %v181
  %v950 = vunpack.c.l.b16 %v182
  %v951 = vunpack.c.l.b16 %v183
  %v952 = vunpack.c.l.b16 %v184
  %v953 = vunpack.c.l.b16 %v185
  %v954 = vunpack.c.l.b16 %v186
  %v955 = vunpack.c.l.b16 %v187
  %v956 = vunpack.c.l.b16 %v188
  %v957 = vunpack.c.l.b16 %v189
  %v958 = vunpack.c.l.b16 %v190
  %v959 = vunpack.c.l.b16 %v191
  %v960 = vunpack.c.l.b16 %v192
  %v961 = vunpack.c.l.b16 %v193
  %v962 = vunpack.c.l.b16 %v194
  %v963 = vunpack.c.l.b16 %v195
  %v964 = vunpack.c.l.b16 %v196
  %v965 = vunpack.c.l.b16 %v197
  %v966 = vunpack.c.l.b16 %v198
  %v967 = vunpack.c.l.b16 %v199
  %v968 = vunpack.c.l.b16 %v200
  %v969 = vunpack.c.l.b16 %v201
  %v970 = vunpack.c.l.b16 %v202
  %v971 = vunpack.c.l.b16 %v203
  %v972 = vunpack.c.l.b16 %v204
  %v973 = vunpack.c.l.b16 %v205
  %v974 = vunpack.c.l.b16 %v206
  %v975 = vunpack.c.l.b16 %v207
  %v976 = vunpack.c.l.b16 %v208
  %v977 = vunpack.c.l.b16 %v209
  %v978 = vpack.c.b16 %v915, %v914
  %v979 = vpack.c.b16 %v917, %v916
  %v980 = vpack.c.b16 %v919, %v918
  %v981 = vpack.c.b16 %v921, %v920
  %v982 = vpack.c.b16 %v923, %v922
  %v983 = vpack.c.b16 %v925, %v924
  %v984 = vpack.c.b16 %v927, %v926
  %v985 = vpack.c.b16 %v929, %v928
  %v986 = vpack.c.b16 %v931, %v930
  %v987 = vpack.c.b16 %v933, %v932
  %v988 = vpack.c.b16 %v935, %v934
  %v989 = vpack.c.b16 %v937, %v936
  %v990 = vpack.c.b16 %v939, %v938
  %v991 = vpack.c.b16 %v941, %v940
  %v992 = vpack.c.b16 %v943, %v942
  %v993 = vpack.c.b16 %v945, %v944
  %v994 = vpack.c.b16 %v947, %v946
  %v995 = vpack.c.b16 %v949, %v948
  %v996 = vpack.c.b16 %v951, %v950
  %v997 = vpack.c.b16 %v953, %v952
  %v998 = vpack.c.b16 %v955, %v954
  %v999 = vpack.c.b16 %v957, %v956
  %v1000 = vpack.c.b16 %v959, %v958
  %v1001 = vpack.c.b16 %v961, %v960
  %v1002 = vpack.c.b16 %v963, %v962
  %v1003 = vpack.c.b16 %v965, %v964
  %v1004 = vpack.c.b16 %v967, %v966
  %v1005 = vpack.c.b16 %v969, %v968
  %v1006 = vpack.c.b16 %v971, %v970
  %v1007 = vpack.c.b16 %v973, %v972
  %v1008 = vpack.c.b16 %v975, %v974
  %v1009 = vpack.c.b16 %v977, %v976
  %1042 = vmatprep.subr.bf16.mxu0 0
  %1043 = vmatpush1.bf16.msra.mxu0 %v978
  %1044 = vmatprep.subr.bf16.mxu0 0
  %1045 = vmatpush1.bf16.msra.mxu0 %v979
  %1046 = vmatprep.subr.bf16.mxu0 0
  %1047 = vmatpush1.bf16.msra.mxu0 %v980
  %1048 = vmatprep.subr.bf16.mxu0 0
  %1049 = vmatpush1.bf16.msra.mxu0 %v981
  %1050 = vmatprep.subr.bf16.mxu0 0
  %1051 = vmatpush1.bf16.msra.mxu0 %v982
  %1052 = vmatprep.subr.bf16.mxu0 0
  %1053 = vmatpush1.bf16.msra.mxu0 %v983
  %1054 = vmatprep.subr.bf16.mxu0 0
  %1055 = vmatpush1.bf16.msra.mxu0 %v984
  %1056 = vmatprep.subr.bf16.mxu0 0
  %1057 = vmatpush1.bf16.msra.mxu0 %v985
  %1058 = vmatprep.subr.bf16.mxu0 0
  %1059 = vmatpush1.bf16.msra.mxu0 %v986
  %1060 = vmatprep.subr.bf16.mxu0 0
  %1061 = vmatpush1.bf16.msra.mxu0 %v987
  %1062 = vmatprep.subr.bf16.mxu0 0
  %1063 = vmatpush1.bf16.msra.mxu0 %v988
  %1064 = vmatprep.subr.bf16.mxu0 0
  %1065 = vmatpush1.bf16.msra.mxu0 %v989
  %1066 = vmatprep.subr.bf16.mxu0 0
  %1067 = vmatpush1.bf16.msra.mxu0 %v990
  %1068 = vmatprep.subr.bf16.mxu0 0
  %1069 = vmatpush1.bf16.msra.mxu0 %v991
  %1070 = vmatprep.subr.bf16.mxu0 0
  %1071 = vmatpush1.bf16.msra.mxu0 %v992
  %1072 = vmatprep.subr.bf16.mxu0 0
  %1073 = vmatpush1.bf16.msra.mxu0 %v993
  %1074 = vmatprep.mubr.bf16.mxu0 %v595
  %1075 = vmatmul.mubr.bf16.gmra.mrb[0].mxu0 %v594
  %v1076 = vpop.f32.mrb[0].mxu0
  %v1077 = vadd.f32 0.0, %v1076
  %v1078 = vpop.f32.mrb[0].mxu0
  %v1079 = vpop.f32.mrb[0].mxu0
  %v1080 = vadd.f32 0.0, %v1079
  %v1081 = vpop.f32.mrb[0].mxu0
  %1082 = vmatprep.mubr.bf16.mxu0 %v599
  %1083 = vmatmul.mubr.bf16.gmra.mrb[0].mxu0 %v598
  %v1084 = vpop.f32.mrb[0].mxu0
  %v1085 = vadd.f32 0.0, %v1084
  %v1086 = vpop.f32.mrb[0].mxu0
  %v1087 = vpop.f32.mrb[0].mxu0
  %v1088 = vadd.f32 0.0, %v1087
  %v1089 = vpop.f32.mrb[0].mxu0
  %1090 = vmatprep.mubr.bf16.mxu0 %v603
  %1091 = vmatmul.mubr.bf16.gmra.mrb[0].mxu0 %v602
  %v1092 = vpop.f32.mrb[0].mxu0
  %v1093 = vadd.f32 0.0, %v1092
  %v1094 = vpop.f32.mrb[0].mxu0
  %v1095 = vpop.f32.mrb[0].mxu0
  %v1096 = vadd.f32 0.0, %v1095
  %v1097 = vpop.f32.mrb[0].mxu0
  %1098 = vmatprep.mubr.bf16.mxu0 %v607
  %1099 = vmatmul.mubr.bf16.gmra.mrb[0].mxu0 %v606
  %v1100 = vpop.f32.mrb[0].mxu0
  %v1101 = vadd.f32 0.0, %v1100
  %v1102 = vpop.f32.mrb[0].mxu0
  %v1103 = vpop.f32.mrb[0].mxu0
  %v1104 = vadd.f32 0.0, %v1103
  %v1105 = vpop.f32.mrb[0].mxu0
  %1106 = vmatprep.mubr.bf16.mxu0 %v611
  %1107 = vmatmul.mubr.bf16.gmra.mrb[0].mxu0 %v610
  %v1108 = vpop.f32.mrb[0].mxu0
  %v1109 = vadd.f32 0.0, %v1108
  %v1110 = vpop.f32.mrb[0].mxu0
  %v1111 = vpop.f32.mrb[0].mxu0
  %v1112 = vadd.f32 0.0, %v1111
  %v1113 = vpop.f32.mrb[0].mxu0
  %1114 = vmatprep.mubr.bf16.mxu0 %v615
  %1115 = vmatmul.mubr.bf16.gmra.mrb[0].mxu0 %v614
  %v1116 = vpop.f32.mrb[0].mxu0
  %v1117 = vadd.f32 0.0, %v1116
  %v1118 = vpop.f32.mrb[0].mxu0
  %v1119 = vpop.f32.mrb[0].mxu0
  %v1120 = vadd.f32 0.0, %v1119
  %v1121 = vpop.f32.mrb[0].mxu0
  %1122 = vmatprep.mubr.bf16.mxu0 %v619
  %1123 = vmatmul.mubr.bf16.gmra.mrb[0].mxu0 %v618
  %v1124 = vpop.f32.mrb[0].mxu0
  %v1125 = vadd.f32 0.0, %v1124
  %v1126 = vpop.f32.mrb[0].mxu0
  %v1127 = vpop.f32.mrb[0].mxu0
  %v1128 = vadd.f32 0.0, %v1127
  %v1129 = vpop.f32.mrb[0].mxu0
  %1130 = vmatprep.mubr.bf16.mxu0 %v623
  %1131 = vmatmul.mubr.bf16.gmra.mrb[0].mxu0 %v622
  %v1132 = vpop.f32.mrb[0].mxu0
  %v1133 = vadd.f32 0.0, %v1132
  %v1134 = vpop.f32.mrb[0].mxu0
  %v1135 = vpop.f32.mrb[0].mxu0
  %v1136 = vadd.f32 0.0, %v1135
  %v1137 = vpop.f32.mrb[0].mxu0
  %1138 = vmatprep.mubr.bf16.mxu0 %v627
  %1139 = vmatmul.mubr.bf16.gmra.mrb[0].mxu0 %v626
  %v1140 = vpop.f32.mrb[0].mxu0
  %v1141 = vadd.f32 0.0, %v1140
  %v1142 = vpop.f32.mrb[0].mxu0
  %v1143 = vpop.f32.mrb[0].mxu0
  %v1144 = vadd.f32 0.0, %v1143
  %v1145 = vpop.f32.mrb[0].mxu0
  %1146 = vmatprep.mubr.bf16.mxu0 %v631
  %1147 = vmatmul.mubr.bf16.gmra.mrb[0].mxu0 %v630
  %v1148 = vpop.f32.mrb[0].mxu0
  %v1149 = vadd.f32 0.0, %v1148
  %v1150 = vpop.f32.mrb[0].mxu0
  %v1151 = vpop.f32.mrb[0].mxu0
  %v1152 = vadd.f32 0.0, %v1151
  %v1153 = vpop.f32.mrb[0].mxu0
  %1154 = vmatprep.mubr.bf16.mxu0 %v635
  %1155 = vmatmul.mubr.bf16.gmra.mrb[0].mxu0 %v634
  %v1156 = vpop.f32.mrb[0].mxu0
  %v1157 = vadd.f32 0.0, %v1156
  %v1158 = vpop.f32.mrb[0].mxu0
  %v1159 = vpop.f32.mrb[0].mxu0
  %v1160 = vadd.f32 0.0, %v1159
  %v1161 = vpop.f32.mrb[0].mxu0
  %1162 = vmatprep.mubr.bf16.mxu0 %v639
  %1163 = vmatmul.mubr.bf16.gmra.mrb[0].mxu0 %v638
  %v1164 = vpop.f32.mrb[0].mxu0
  %v1165 = vadd.f32 0.0, %v1164
  %v1166 = vpop.f32.mrb[0].mxu0
  %v1167 = vpop.f32.mrb[0].mxu0
  %v1168 = vadd.f32 0.0, %v1167
  %v1169 = vpop.f32.mrb[0].mxu0
  %1170 = vmatprep.mubr.bf16.mxu0 %v643
  %1171 = vmatmul.mubr.bf16.gmra.mrb[0].mxu0 %v642
  %v1172 = vpop.f32.mrb[0].mxu0
  %v1173 = vadd.f32 0.0, %v1172
  %v1174 = vpop.f32.mrb[0].mxu0
  %v1175 = vpop.f32.mrb[0].mxu0
  %v1176 = vadd.f32 0.0, %v1175
  %v1177 = vpop.f32.mrb[0].mxu0
  %1178 = vmatprep.mubr.bf16.mxu0 %v647
  %1179 = vmatmul.mubr.bf16.gmra.mrb[0].mxu0 %v646
  %v1180 = vpop.f32.mrb[0].mxu0
  %v1181 = vadd.f32 0.0, %v1180
  %v1182 = vpop.f32.mrb[0].mxu0
  %v1183 = vpop.f32.mrb[0].mxu0
  %v1184 = vadd.f32 0.0, %v1183
  %v1185 = vpop.f32.mrb[0].mxu0
  %1186 = vmatprep.mubr.bf16.mxu0 %v651
  %1187 = vmatmul.mubr.bf16.gmra.mrb[0].mxu0 %v650
  %v1188 = vpop.f32.mrb[0].mxu0
  %v1189 = vadd.f32 0.0, %v1188
  %v1190 = vpop.f32.mrb[0].mxu0
  %v1191 = vpop.f32.mrb[0].mxu0
  %v1192 = vadd.f32 0.0, %v1191
  %v1193 = vpop.f32.mrb[0].mxu0
  %1194 = vmatprep.mubr.bf16.mxu0 %v655
  %1195 = vmatmul.mubr.bf16.gmra.mrb[0].mxu0 %v654
  %v1196 = vpop.f32.mrb[0].mxu0
  %v1197 = vadd.f32 0.0, %v1196
  %v1198 = vpop.f32.mrb[0].mxu0
  %v1199 = vpop.f32.mrb[0].mxu0
  %v1200 = vadd.f32 0.0, %v1199
  %v1201 = vpop.f32.mrb[0].mxu0
  %1202 = vmatprep.mubr.bf16.mxu0 %v659
  %1203 = vmatmul.mubr.bf16.gmra.mrb[0].mxu0 %v658
  %v1204 = vpop.f32.mrb[0].mxu0
  %v1205 = vadd.f32 0.0, %v1204
  %v1206 = vpop.f32.mrb[0].mxu0
  %v1207 = vpop.f32.mrb[0].mxu0
  %v1208 = vadd.f32 0.0, %v1207
  %v1209 = vpop.f32.mrb[0].mxu0
  %1210 = vmatprep.mubr.bf16.mxu0 %v663
  %1211 = vmatmul.mubr.bf16.gmra.mrb[0].mxu0 %v662
  %v1212 = vpop.f32.mrb[0].mxu0
  %v1213 = vadd.f32 0.0, %v1212
  %v1214 = vpop.f32.mrb[0].mxu0
  %v1215 = vpop.f32.mrb[0].mxu0
  %v1216 = vadd.f32 0.0, %v1215
  %v1217 = vpop.f32.mrb[0].mxu0
  %1218 = vmatprep.mubr.bf16.mxu0 %v667
  %1219 = vmatmul.mubr.bf16.gmra.mrb[0].mxu0 %v666
  %v1220 = vpop.f32.mrb[0].mxu0
  %v1221 = vadd.f32 0.0, %v1220
  %v1222 = vpop.f32.mrb[0].mxu0
  %v1223 = vpop.f32.mrb[0].mxu0
  %v1224 = vadd.f32 0.0, %v1223
  %v1225 = vpop.f32.mrb[0].mxu0
  %1226 = vmatprep.mubr.bf16.mxu0 %v671
  %1227 = vmatmul.mubr.bf16.gmra.mrb[0].mxu0 %v670
  %v1228 = vpop.f32.mrb[0].mxu0
  %v1229 = vadd.f32 0.0, %v1228
  %v1230 = vpop.f32.mrb[0].mxu0
  %v1231 = vpop.f32.mrb[0].mxu0
  %v1232 = vadd.f32 0.0, %v1231
  %v1233 = vpop.f32.mrb[0].mxu0
  %1234 = vmatprep.mubr.bf16.mxu0 %v675
  %1235 = vmatmul.mubr.bf16.gmra.mrb[0].mxu0 %v674
  %v1236 = vpop.f32.mrb[0].mxu0
  %v1237 = vadd.f32 0.0, %v1236
  %v1238 = vpop.f32.mrb[0].mxu0
  %v1239 = vpop.f32.mrb[0].mxu0
  %v1240 = vadd.f32 0.0, %v1239
  %v1241 = vpop.f32.mrb[0].mxu0
  %1242 = vmatprep.mubr.bf16.mxu0 %v679
  %1243 = vmatmul.mubr.bf16.gmra.mrb[0].mxu0 %v678
  %v1244 = vpop.f32.mrb[0].mxu0
  %v1245 = vadd.f32 0.0, %v1244
  %v1246 = vpop.f32.mrb[0].mxu0
  %v1247 = vpop.f32.mrb[0].mxu0
  %v1248 = vadd.f32 0.0, %v1247
  %v1249 = vpop.f32.mrb[0].mxu0
  %1250 = vmatprep.mubr.bf16.mxu0 %v683
  %1251 = vmatmul.mubr.bf16.gmra.mrb[0].mxu0 %v682
  %v1252 = vpop.f32.mrb[0].mxu0
  %v1253 = vadd.f32 0.0, %v1252
  %v1254 = vpop.f32.mrb[0].mxu0
  %v1255 = vpop.f32.mrb[0].mxu0
  %v1256 = vadd.f32 0.0, %v1255
  %v1257 = vpop.f32.mrb[0].mxu0
  %1258 = vmatprep.mubr.bf16.mxu0 %v687
  %1259 = vmatmul.mubr.bf16.gmra.mrb[0].mxu0 %v686
  %v1260 = vpop.f32.mrb[0].mxu0
  %v1261 = vadd.f32 0.0, %v1260
  %v1262 = vpop.f32.mrb[0].mxu0
  %v1263 = vpop.f32.mrb[0].mxu0
  %v1264 = vadd.f32 0.0, %v1263
  %v1265 = vpop.f32.mrb[0].mxu0
  %1266 = vmatprep.mubr.bf16.mxu0 %v691
  %1267 = vmatmul.mubr.bf16.gmra.mrb[0].mxu0 %v690
  %v1268 = vpop.f32.mrb[0].mxu0
  %v1269 = vadd.f32 0.0, %v1268
  %v1270 = vpop.f32.mrb[0].mxu0
  %v1271 = vpop.f32.mrb[0].mxu0
  %v1272 = vadd.f32 0.0, %v1271
  %v1273 = vpop.f32.mrb[0].mxu0
  %1274 = vmatprep.mubr.bf16.mxu0 %v695
  %1275 = vmatmul.mubr.bf16.gmra.mrb[0].mxu0 %v694
  %v1276 = vpop.f32.mrb[0].mxu0
  %v1277 = vadd.f32 0.0, %v1276
  %v1278 = vpop.f32.mrb[0].mxu0
  %v1279 = vpop.f32.mrb[0].mxu0
  %v1280 = vadd.f32 0.0, %v1279
  %v1281 = vpop.f32.mrb[0].mxu0
  %1282 = vmatprep.mubr.bf16.mxu0 %v699
  %1283 = vmatmul.mubr.bf16.gmra.mrb[0].mxu0 %v698
  %v1284 = vpop.f32.mrb[0].mxu0
  %v1285 = vadd.f32 0.0, %v1284
  %v1286 = vpop.f32.mrb[0].mxu0
  %v1287 = vpop.f32.mrb[0].mxu0
  %v1288 = vadd.f32 0.0, %v1287
  %v1289 = vpop.f32.mrb[0].mxu0
  %1290 = vmatprep.mubr.bf16.mxu0 %v703
  %1291 = vmatmul.mubr.bf16.gmra.mrb[0].mxu0 %v702
  %v1292 = vpop.f32.mrb[0].mxu0
  %v1293 = vadd.f32 0.0, %v1292
  %v1294 = vpop.f32.mrb[0].mxu0
  %v1295 = vpop.f32.mrb[0].mxu0
  %v1296 = vadd.f32 0.0, %v1295
  %v1297 = vpop.f32.mrb[0].mxu0
  %1298 = vmatprep.mubr.bf16.mxu0 %v707
  %1299 = vmatmul.mubr.bf16.gmra.mrb[0].mxu0 %v706
  %v1300 = vpop.f32.mrb[0].mxu0
  %v1301 = vadd.f32 0.0, %v1300
  %v1302 = vpop.f32.mrb[0].mxu0
  %v1303 = vpop.f32.mrb[0].mxu0
  %v1304 = vadd.f32 0.0, %v1303
  %v1305 = vpop.f32.mrb[0].mxu0
  %1306 = vmatprep.mubr.bf16.mxu0 %v711
  %1307 = vmatmul.mubr.bf16.gmra.mrb[0].mxu0 %v710
  %v1308 = vpop.f32.mrb[0].mxu0
  %v1309 = vadd.f32 0.0, %v1308
  %v1310 = vpop.f32.mrb[0].mxu0
  %v1311 = vpop.f32.mrb[0].mxu0
  %v1312 = vadd.f32 0.0, %v1311
  %v1313 = vpop.f32.mrb[0].mxu0
  %1314 = vmatprep.mubr.bf16.mxu0 %v715
  %1315 = vmatmul.mubr.bf16.gmra.mrb[0].mxu0 %v714
  %v1316 = vpop.f32.mrb[0].mxu0
  %v1317 = vadd.f32 0.0, %v1316
  %v1318 = vpop.f32.mrb[0].mxu0
  %v1319 = vpop.f32.mrb[0].mxu0
  %v1320 = vadd.f32 0.0, %v1319
  %v1321 = vpop.f32.mrb[0].mxu0
  %1322 = vmatprep.mubr.bf16.mxu0 %v719
  %1323 = vmatmul.mubr.bf16.gmra.mrb[0].mxu0 %v718
  %v1324 = vpop.f32.mrb[0].mxu0
  %v1325 = vadd.f32 0.0, %v1324
  %v1326 = vpop.f32.mrb[0].mxu0
  %v1327 = vpop.f32.mrb[0].mxu0
  %v1328 = vadd.f32 0.0, %v1327
  %v1329 = vpop.f32.mrb[0].mxu0
  %1330 = vdwg.mxu0
  %1331 = vmatprep.subr.bf16.mxu0 0
  %1332 = vmatpush1.bf16.msra.mxu0 %v994
  %1333 = vmatprep.subr.bf16.mxu0 0
  %1334 = vmatpush1.bf16.msra.mxu0 %v995
  %1335 = vmatprep.subr.bf16.mxu0 0
  %1336 = vmatpush1.bf16.msra.mxu0 %v996
  %1337 = vmatprep.subr.bf16.mxu0 0
  %1338 = vmatpush1.bf16.msra.mxu0 %v997
  %1339 = vmatprep.subr.bf16.mxu0 0
  %1340 = vmatpush1.bf16.msra.mxu0 %v998
  %1341 = vmatprep.subr.bf16.mxu0 0
  %1342 = vmatpush1.bf16.msra.mxu0 %v999
  %1343 = vmatprep.subr.bf16.mxu0 0
  %1344 = vmatpush1.bf16.msra.mxu0 %v1000
  %1345 = vmatprep.subr.bf16.mxu0 0
  %1346 = vmatpush1.bf16.msra.mxu0 %v1001
  %1347 = vmatprep.subr.bf16.mxu0 0
  %1348 = vmatpush1.bf16.msra.mxu0 %v1002
  %1349 = vmatprep.subr.bf16.mxu0 0
  %1350 = vmatpush1.bf16.msra.mxu0 %v1003
  %1351 = vmatprep.subr.bf16.mxu0 0
  %1352 = vmatpush1.bf16.msra.mxu0 %v1004
  %1353 = vmatprep.subr.bf16.mxu0 0
  %1354 = vmatpush1.bf16.msra.mxu0 %v1005
  %1355 = vmatprep.subr.bf16.mxu0 0
  %1356 = vmatpush1.bf16.msra.mxu0 %v1006
  %1357 = vmatprep.subr.bf16.mxu0 0
  %1358 = vmatpush1.bf16.msra.mxu0 %v1007
  %1359 = vmatprep.subr.bf16.mxu0 0
  %1360 = vmatpush1.bf16.msra.mxu0 %v1008
  %1361 = vmatprep.subr.bf16.mxu0 0
  %1362 = vmatpush1.bf16.msra.mxu0 %v1009
  %1363 = vmatprep.mubr.bf16.mxu0 %v597
  %1364 = vmatmul.mubr.bf16.gmra.mrb[0].mxu0 %v596
  %v1365 = vpop.f32.mrb[0].mxu0
  %v1366 = vadd.f32 %v1077, %v1365
  %v1367 = vpop.f32.mrb[0].mxu0
  %v1368 = vpop.f32.mrb[0].mxu0
  %v1369 = vadd.f32 %v1080, %v1368
  %v1370 = vpop.f32.mrb[0].mxu0
  %1371 = vmatprep.mubr.bf16.mxu0 %v601
  %1372 = vmatmul.mubr.bf16.gmra.mrb[0].mxu0 %v600
  %v1373 = vpop.f32.mrb[0].mxu0
  %v1374 = vadd.f32 %v1085, %v1373
  %v1375 = vpop.f32.mrb[0].mxu0
  %v1376 = vpop.f32.mrb[0].mxu0
  %v1377 = vadd.f32 %v1088, %v1376
  %v1378 = vpop.f32.mrb[0].mxu0
  %1379 = vmatprep.mubr.bf16.mxu0 %v605
  %1380 = vmatmul.mubr.bf16.gmra.mrb[0].mxu0 %v604
  %v1381 = vpop.f32.mrb[0].mxu0
  %v1382 = vadd.f32 %v1093, %v1381
  %v1383 = vpop.f32.mrb[0].mxu0
  %v1384 = vpop.f32.mrb[0].mxu0
  %v1385 = vadd.f32 %v1096, %v1384
  %v1386 = vpop.f32.mrb[0].mxu0
  %1387 = vmatprep.mubr.bf16.mxu0 %v609
  %1388 = vmatmul.mubr.bf16.gmra.mrb[0].mxu0 %v608
  %v1389 = vpop.f32.mrb[0].mxu0
  %v1390 = vadd.f32 %v1101, %v1389
  %v1391 = vpop.f32.mrb[0].mxu0
  %v1392 = vpop.f32.mrb[0].mxu0
  %v1393 = vadd.f32 %v1104, %v1392
  %v1394 = vpop.f32.mrb[0].mxu0
  %1395 = vmatprep.mubr.bf16.mxu0 %v613
  %1396 = vmatmul.mubr.bf16.gmra.mrb[0].mxu0 %v612
  %v1397 = vpop.f32.mrb[0].mxu0
  %v1398 = vadd.f32 %v1109, %v1397
  %v1399 = vpop.f32.mrb[0].mxu0
  %v1400 = vpop.f32.mrb[0].mxu0
  %v1401 = vadd.f32 %v1112, %v1400
  %v1402 = vpop.f32.mrb[0].mxu0
  %1403 = vmatprep.mubr.bf16.mxu0 %v617
  %1404 = vmatmul.mubr.bf16.gmra.mrb[0].mxu0 %v616
  %v1405 = vpop.f32.mrb[0].mxu0
  %v1406 = vadd.f32 %v1117, %v1405
  %v1407 = vpop.f32.mrb[0].mxu0
  %v1408 = vpop.f32.mrb[0].mxu0
  %v1409 = vadd.f32 %v1120, %v1408
  %v1410 = vpop.f32.mrb[0].mxu0
  %1411 = vmatprep.mubr.bf16.mxu0 %v621
  %1412 = vmatmul.mubr.bf16.gmra.mrb[0].mxu0 %v620
  %v1413 = vpop.f32.mrb[0].mxu0
  %v1414 = vadd.f32 %v1125, %v1413
  %v1415 = vpop.f32.mrb[0].mxu0
  %v1416 = vpop.f32.mrb[0].mxu0
  %v1417 = vadd.f32 %v1128, %v1416
  %v1418 = vpop.f32.mrb[0].mxu0
  %1419 = vmatprep.mubr.bf16.mxu0 %v625
  %1420 = vmatmul.mubr.bf16.gmra.mrb[0].mxu0 %v624
  %v1421 = vpop.f32.mrb[0].mxu0
  %v1422 = vadd.f32 %v1133, %v1421
  %v1423 = vpop.f32.mrb[0].mxu0
  %v1424 = vpop.f32.mrb[0].mxu0
  %v1425 = vadd.f32 %v1136, %v1424
  %v1426 = vpop.f32.mrb[0].mxu0
  %1427 = vmatprep.mubr.bf16.mxu0 %v629
  %1428 = vmatmul.mubr.bf16.gmra.mrb[0].mxu0 %v628
  %v1429 = vpop.f32.mrb[0].mxu0
  %v1430 = vadd.f32 %v1141, %v1429
  %v1431 = vpop.f32.mrb[0].mxu0
  %v1432 = vpop.f32.mrb[0].mxu0
  %v1433 = vadd.f32 %v1144, %v1432
  %v1434 = vpop.f32.mrb[0].mxu0
  %1435 = vmatprep.mubr.bf16.mxu0 %v633
  %1436 = vmatmul.mubr.bf16.gmra.mrb[0].mxu0 %v632
  %v1437 = vpop.f32.mrb[0].mxu0
  %v1438 = vadd.f32 %v1149, %v1437
  %v1439 = vpop.f32.mrb[0].mxu0
  %v1440 = vpop.f32.mrb[0].mxu0
  %v1441 = vadd.f32 %v1152, %v1440
  %v1442 = vpop.f32.mrb[0].mxu0
  %1443 = vmatprep.mubr.bf16.mxu0 %v637
  %1444 = vmatmul.mubr.bf16.gmra.mrb[0].mxu0 %v636
  %v1445 = vpop.f32.mrb[0].mxu0
  %v1446 = vadd.f32 %v1157, %v1445
  %v1447 = vpop.f32.mrb[0].mxu0
  %v1448 = vpop.f32.mrb[0].mxu0
  %v1449 = vadd.f32 %v1160, %v1448
  %v1450 = vpop.f32.mrb[0].mxu0
  %1451 = vmatprep.mubr.bf16.mxu0 %v641
  %1452 = vmatmul.mubr.bf16.gmra.mrb[0].mxu0 %v640
  %v1453 = vpop.f32.mrb[0].mxu0
  %v1454 = vadd.f32 %v1165, %v1453
  %v1455 = vpop.f32.mrb[0].mxu0
  %v1456 = vpop.f32.mrb[0].mxu0
  %v1457 = vadd.f32 %v1168, %v1456
  %v1458 = vpop.f32.mrb[0].mxu0
  %1459 = vmatprep.mubr.bf16.mxu0 %v645
  %1460 = vmatmul.mubr.bf16.gmra.mrb[0].mxu0 %v644
  %v1461 = vpop.f32.mrb[0].mxu0
  %v1462 = vadd.f32 %v1173, %v1461
  %v1463 = vpop.f32.mrb[0].mxu0
  %v1464 = vpop.f32.mrb[0].mxu0
  %v1465 = vadd.f32 %v1176, %v1464
  %v1466 = vpop.f32.mrb[0].mxu0
  %1467 = vmatprep.mubr.bf16.mxu0 %v649
  %1468 = vmatmul.mubr.bf16.gmra.mrb[0].mxu0 %v648
  %v1469 = vpop.f32.mrb[0].mxu0
  %v1470 = vadd.f32 %v1181, %v1469
  %v1471 = vpop.f32.mrb[0].mxu0
  %v1472 = vpop.f32.mrb[0].mxu0
  %v1473 = vadd.f32 %v1184, %v1472
  %v1474 = vpop.f32.mrb[0].mxu0
  %1475 = vmatprep.mubr.bf16.mxu0 %v653
  %1476 = vmatmul.mubr.bf16.gmra.mrb[0].mxu0 %v652
  %v1477 = vpop.f32.mrb[0].mxu0
  %v1478 = vadd.f32 %v1189, %v1477
  %v1479 = vpop.f32.mrb[0].mxu0
  %v1480 = vpop.f32.mrb[0].mxu0
  %v1481 = vadd.f32 %v1192, %v1480
  %v1482 = vpop.f32.mrb[0].mxu0
  %1483 = vmatprep.mubr.bf16.mxu0 %v657
  %1484 = vmatmul.mubr.bf16.gmra.mrb[0].mxu0 %v656
  %v1485 = vpop.f32.mrb[0].mxu0
  %v1486 = vadd.f32 %v1197, %v1485
  %v1487 = vpop.f32.mrb[0].mxu0
  %v1488 = vpop.f32.mrb[0].mxu0
  %v1489 = vadd.f32 %v1200, %v1488
  %v1490 = vpop.f32.mrb[0].mxu0
  %1491 = vmatprep.mubr.bf16.mxu0 %v661
  %1492 = vmatmul.mubr.bf16.gmra.mrb[0].mxu0 %v660
  %v1493 = vpop.f32.mrb[0].mxu0
  %v1494 = vadd.f32 %v1205, %v1493
  %v1495 = vpop.f32.mrb[0].mxu0
  %v1496 = vpop.f32.mrb[0].mxu0
  %v1497 = vadd.f32 %v1208, %v1496
  %v1498 = vpop.f32.mrb[0].mxu0
  %1499 = vmatprep.mubr.bf16.mxu0 %v665
  %1500 = vmatmul.mubr.bf16.gmra.mrb[0].mxu0 %v664
  %v1501 = vpop.f32.mrb[0].mxu0
  %v1502 = vadd.f32 %v1213, %v1501
  %v1503 = vpop.f32.mrb[0].mxu0
  %v1504 = vpop.f32.mrb[0].mxu0
  %v1505 = vadd.f32 %v1216, %v1504
  %v1506 = vpop.f32.mrb[0].mxu0
  %1507 = vmatprep.mubr.bf16.mxu0 %v669
  %1508 = vmatmul.mubr.bf16.gmra.mrb[0].mxu0 %v668
  %v1509 = vpop.f32.mrb[0].mxu0
  %v1510 = vadd.f32 %v1221, %v1509
  %v1511 = vpop.f32.mrb[0].mxu0
  %v1512 = vpop.f32.mrb[0].mxu0
  %v1513 = vadd.f32 %v1224, %v1512
  %v1514 = vpop.f32.mrb[0].mxu0
  %1515 = vmatprep.mubr.bf16.mxu0 %v673
  %1516 = vmatmul.mubr.bf16.gmra.mrb[0].mxu0 %v672
  %v1517 = vpop.f32.mrb[0].mxu0
  %v1518 = vadd.f32 %v1229, %v1517
  %v1519 = vpop.f32.mrb[0].mxu0
  %v1520 = vpop.f32.mrb[0].mxu0
  %v1521 = vadd.f32 %v1232, %v1520
  %v1522 = vpop.f32.mrb[0].mxu0
  %1523 = vmatprep.mubr.bf16.mxu0 %v677
  %1524 = vmatmul.mubr.bf16.gmra.mrb[0].mxu0 %v676
  %v1525 = vpop.f32.mrb[0].mxu0
  %v1526 = vadd.f32 %v1237, %v1525
  %v1527 = vpop.f32.mrb[0].mxu0
  %v1528 = vpop.f32.mrb[0].mxu0
  %v1529 = vadd.f32 %v1240, %v1528
  %v1530 = vpop.f32.mrb[0].mxu0
  %1531 = vmatprep.mubr.bf16.mxu0 %v681
  %1532 = vmatmul.mubr.bf16.gmra.mrb[0].mxu0 %v680
  %v1533 = vpop.f32.mrb[0].mxu0
  %v1534 = vadd.f32 %v1245, %v1533
  %v1535 = vpop.f32.mrb[0].mxu0
  %v1536 = vpop.f32.mrb[0].mxu0
  %v1537 = vadd.f32 %v1248, %v1536
  %v1538 = vpop.f32.mrb[0].mxu0
  %1539 = vmatprep.mubr.bf16.mxu0 %v685
  %1540 = vmatmul.mubr.bf16.gmra.mrb[0].mxu0 %v684
  %v1541 = vpop.f32.mrb[0].mxu0
  %v1542 = vadd.f32 %v1253, %v1541
  %v1543 = vpop.f32.mrb[0].mxu0
  %v1544 = vpop.f32.mrb[0].mxu0
  %v1545 = vadd.f32 %v1256, %v1544
  %v1546 = vpop.f32.mrb[0].mxu0
  %1547 = vmatprep.mubr.bf16.mxu0 %v689
  %1548 = vmatmul.mubr.bf16.gmra.mrb[0].mxu0 %v688
  %v1549 = vpop.f32.mrb[0].mxu0
  %v1550 = vadd.f32 %v1261, %v1549
  %v1551 = vpop.f32.mrb[0].mxu0
  %v1552 = vpop.f32.mrb[0].mxu0
  %v1553 = vadd.f32 %v1264, %v1552
  %v1554 = vpop.f32.mrb[0].mxu0
  %1555 = vmatprep.mubr.bf16.mxu0 %v693
  %1556 = vmatmul.mubr.bf16.gmra.mrb[0].mxu0 %v692
  %v1557 = vpop.f32.mrb[0].mxu0
  %v1558 = vadd.f32 %v1269, %v1557
  %v1559 = vpop.f32.mrb[0].mxu0
  %v1560 = vpop.f32.mrb[0].mxu0
  %v1561 = vadd.f32 %v1272, %v1560
  %v1562 = vpop.f32.mrb[0].mxu0
  %1563 = vmatprep.mubr.bf16.mxu0 %v697
  %1564 = vmatmul.mubr.bf16.gmra.mrb[0].mxu0 %v696
  %v1565 = vpop.f32.mrb[0].mxu0
  %v1566 = vadd.f32 %v1277, %v1565
  %v1567 = vpop.f32.mrb[0].mxu0
  %v1568 = vpop.f32.mrb[0].mxu0
  %v1569 = vadd.f32 %v1280, %v1568
  %v1570 = vpop.f32.mrb[0].mxu0
  %1571 = vmatprep.mubr.bf16.mxu0 %v701
  %1572 = vmatmul.mubr.bf16.gmra.mrb[0].mxu0 %v700
  %v1573 = vpop.f32.mrb[0].mxu0
  %v1574 = vadd.f32 %v1285, %v1573
  %v1575 = vpop.f32.mrb[0].mxu0
  %v1576 = vpop.f32.mrb[0].mxu0
  %v1577 = vadd.f32 %v1288, %v1576
  %v1578 = vpop.f32.mrb[0].mxu0
  %1579 = vmatprep.mubr.bf16.mxu0 %v705
  %1580 = vmatmul.mubr.bf16.gmra.mrb[0].mxu0 %v704
  %v1581 = vpop.f32.mrb[0].mxu0
  %v1582 = vadd.f32 %v1293, %v1581
  %v1583 = vpop.f32.mrb[0].mxu0
  %v1584 = vpop.f32.mrb[0].mxu0
  %v1585 = vadd.f32 %v1296, %v1584
  %v1586 = vpop.f32.mrb[0].mxu0
  %1587 = vmatprep.mubr.bf16.mxu0 %v709
  %1588 = vmatmul.mubr.bf16.gmra.mrb[0].mxu0 %v708
  %v1589 = vpop.f32.mrb[0].mxu0
  %v1590 = vadd.f32 %v1301, %v1589
  %v1591 = vpop.f32.mrb[0].mxu0
  %v1592 = vpop.f32.mrb[0].mxu0
  %v1593 = vadd.f32 %v1304, %v1592
  %v1594 = vpop.f32.mrb[0].mxu0
  %1595 = vmatprep.mubr.bf16.mxu0 %v713
  %1596 = vmatmul.mubr.bf16.gmra.mrb[0].mxu0 %v712
  %v1597 = vpop.f32.mrb[0].mxu0
  %v1598 = vadd.f32 %v1309, %v1597
  %v1599 = vpop.f32.mrb[0].mxu0
  %v1600 = vpop.f32.mrb[0].mxu0
  %v1601 = vadd.f32 %v1312, %v1600
  %v1602 = vpop.f32.mrb[0].mxu0
  %1603 = vmatprep.mubr.bf16.mxu0 %v717
  %1604 = vmatmul.mubr.bf16.gmra.mrb[0].mxu0 %v716
  %v1605 = vpop.f32.mrb[0].mxu0
  %v1606 = vadd.f32 %v1317, %v1605
  %v1607 = vpop.f32.mrb[0].mxu0
  %v1608 = vpop.f32.mrb[0].mxu0
  %v1609 = vadd.f32 %v1320, %v1608
  %v1610 = vpop.f32.mrb[0].mxu0
  %1611 = vmatprep.mubr.bf16.mxu0 %v721
  %1612 = vmatmul.mubr.bf16.gmra.mrb[0].mxu0 %v720
  %v1613 = vpop.f32.mrb[0].mxu0
  %v1614 = vadd.f32 %v1325, %v1613
  %v1615 = vpop.f32.mrb[0].mxu0
  %v1616 = vpop.f32.mrb[0].mxu0
  %v1617 = vadd.f32 %v1328, %v1616
  %v1618 = vpop.f32.mrb[0].mxu0
  %1619 = vdwg.mxu0
  %s1620 = smul.u32 0, 512
  %s1621 = scalar_lea.vmem [#allocation2], %s1620
  %1622 = vst [vmem:[%s1621] sm:$0xff] %v1366
  %1623 = vst [vmem:[%s1621 + $0x8] sm:$0xff] %v1369
  %1624 = vst [vmem:[%s1621 + $0x10] sm:$0xff] %v1374
  %1625 = vst [vmem:[%s1621 + $0x18] sm:$0xff] %v1377
  %1626 = vst [vmem:[%s1621 + $0x20] sm:$0xff] %v1382
  %1627 = vst [vmem:[%s1621 + $0x28] sm:$0xff] %v1385
  %1628 = vst [vmem:[%s1621 + $0x30] sm:$0xff] %v1390
  %1629 = vst [vmem:[%s1621 + $0x38] sm:$0xff] %v1393
  %1630 = vst [vmem:[%s1621 + $0x40] sm:$0xff] %v1398
  %1631 = vst [vmem:[%s1621 + $0x48] sm:$0xff] %v1401
  %1632 = vst [vmem:[%s1621 + $0x50] sm:$0xff] %v1406
  %1633 = vst [vmem:[%s1621 + $0x58] sm:$0xff] %v1409
  %1634 = vst [vmem:[%s1621 + $0x60] sm:$0xff] %v1414
  %1635 = vst [vmem:[%s1621 + $0x68] sm:$0xff] %v1417
  %1636 = vst [vmem:[%s1621 + $0x70] sm:$0xff] %v1422
  %1637 = vst [vmem:[%s1621 + $0x78] sm:$0xff] %v1425
  %1638 = vst [vmem:[%s1621 + $0x80] sm:$0xff] %v1430
  %1639 = vst [vmem:[%s1621 + $0x88] sm:$0xff] %v1433
  %1640 = vst [vmem:[%s1621 + $0x90] sm:$0xff] %v1438
  %1641 = vst [vmem:[%s1621 + $0x98] sm:$0xff] %v1441
  %1642 = vst [vmem:[%s1621 + $0xa0] sm:$0xff] %v1446
  %1643 = vst [vmem:[%s1621 + $0xa8] sm:$0xff] %v1449
  %1644 = vst [vmem:[%s1621 + $0xb0] sm:$0xff] %v1454
  %1645 = vst [vmem:[%s1621 + $0xb8] sm:$0xff] %v1457
  %1646 = vst [vmem:[%s1621 + $0xc0] sm:$0xff] %v1462
  %1647 = vst [vmem:[%s1621 + $0xc8] sm:$0xff] %v1465
  %1648 = vst [vmem:[%s1621 + $0xd0] sm:$0xff] %v1470
  %1649 = vst [vmem:[%s1621 + $0xd8] sm:$0xff] %v1473
  %1650 = vst [vmem:[%s1621 + $0xe0] sm:$0xff] %v1478
  %1651 = vst [vmem:[%s1621 + $0xe8] sm:$0xff] %v1481
  %1652 = vst [vmem:[%s1621 + $0xf0] sm:$0xff] %v1486
  %1653 = vst [vmem:[%s1621 + $0xf8] sm:$0xff] %v1489
  %1654 = vst [vmem:[%s1621 + $0x100] sm:$0xff] %v1494
  %1655 = vst [vmem:[%s1621 + $0x108] sm:$0xff] %v1497
  %1656 = vst [vmem:[%s1621 + $0x110] sm:$0xff] %v1502
  %1657 = vst [vmem:[%s1621 + $0x118] sm:$0xff] %v1505
  %1658 = vst [vmem:[%s1621 + $0x120] sm:$0xff] %v1510
  %1659 = vst [vmem:[%s1621 + $0x128] sm:$0xff] %v1513
  %1660 = vst [vmem:[%s1621 + $0x130] sm:$0xff] %v1518
  %1661 = vst [vmem:[%s1621 + $0x138] sm:$0xff] %v1521
  %1662 = vst [vmem:[%s1621 + $0x140] sm:$0xff] %v1526
  %1663 = vst [vmem:[%s1621 + $0x148] sm:$0xff] %v1529
  %1664 = vst [vmem:[%s1621 + $0x150] sm:$0xff] %v1534
  %1665 = vst [vmem:[%s1621 + $0x158] sm:$0xff] %v1537
  %1666 = vst [vmem:[%s1621 + $0x160] sm:$0xff] %v1542
  %1667 = vst [vmem:[%s1621 + $0x168] sm:$0xff] %v1545
  %1668 = vst [vmem:[%s1621 + $0x170] sm:$0xff] %v1550
  %1669 = vst [vmem:[%s1621 + $0x178] sm:$0xff] %v1553
  %1670 = vst [vmem:[%s1621 + $0x180] sm:$0xff] %v1558
  %1671 = vst [vmem:[%s1621 + $0x188] sm:$0xff] %v1561
  %1672 = vst [vmem:[%s1621 + $0x190] sm:$0xff] %v1566
  %1673 = vst [vmem:[%s1621 + $0x198] sm:$0xff] %v1569
  %1674 = vst [vmem:[%s1621 + $0x1a0] sm:$0xff] %v1574
  %1675 = vst [vmem:[%s1621 + $0x1a8] sm:$0xff] %v1577
  %1676 = vst [vmem:[%s1621 + $0x1b0] sm:$0xff] %v1582
  %1677 = vst [vmem:[%s1621 + $0x1b8] sm:$0xff] %v1585
  %1678 = vst [vmem:[%s1621 + $0x1c0] sm:$0xff] %v1590
  %1679 = vst [vmem:[%s1621 + $0x1c8] sm:$0xff] %v1593
  %1680 = vst [vmem:[%s1621 + $0x1d0] sm:$0xff] %v1598
  %1681 = vst [vmem:[%s1621 + $0x1d8] sm:$0xff] %v1601
  %1682 = vst [vmem:[%s1621 + $0x1e0] sm:$0xff] %v1606
  %1683 = vst [vmem:[%s1621 + $0x1e8] sm:$0xff] %v1609
  %1684 = vst [vmem:[%s1621 + $0x1f0] sm:$0xff] %v1614
  %1685 = vst [vmem:[%s1621 + $0x1f8] sm:$0xff] %v1617
  %p1686 = scmp.eq.s32.totalorder 0, 0
  // Predicated region
  $region18: #{gnet_forward.7} parent=0 // pred_check
    %p1687 = pneg %p1686
  $region19: #{gnet_forward.7} parent=0 // pred_check_branch
    %1689 = sbr.rel (%p1687) target = $region21
  $region20: #{gnet_forward.7} parent=0 // pred_region
    %1690 = vst [vmem:[#allocation3] sm:$0x1] 0.0
  $region21: #{gnet_forward.7} parent=0 // pred_fallthru
    _
  %v1691 = vld [vmem:[#allocation3] sm:$0x1]
  %v1692 = vadd.f32 %v1366, %v1369
  %v1693 = vadd.f32 %v1692, %v1374
  %v1694 = vadd.f32 %v1693, %v1377
  %v1695 = vadd.f32 %v1694, %v1382
  %v1696 = vadd.f32 %v1695, %v1385
  %v1697 = vadd.f32 %v1696, %v1390
  %v1698 = vadd.f32 %v1697, %v1393
  %v1699 = vadd.f32 %v1698, %v1398
  %v1700 = vadd.f32 %v1699, %v1401
  %v1701 = vadd.f32 %v1700, %v1406
  %v1702 = vadd.f32 %v1701, %v1409
  %v1703 = vadd.f32 %v1702, %v1414
  %v1704 = vadd.f32 %v1703, %v1417
  %v1705 = vadd.f32 %v1704, %v1422
  %v1706 = vadd.f32 %v1705, %v1425
  %v1707 = vadd.f32 %v1706, %v1430
  %v1708 = vadd.f32 %v1707, %v1433
  %v1709 = vadd.f32 %v1708, %v1438
  %v1710 = vadd.f32 %v1709, %v1441
  %v1711 = vadd.f32 %v1710, %v1446
  %v1712 = vadd.f32 %v1711, %v1449
  %v1713 = vadd.f32 %v1712, %v1454
  %v1714 = vadd.f32 %v1713, %v1457
  %v1715 = vadd.f32 %v1714, %v1462
  %v1716 = vadd.f32 %v1715, %v1465
  %v1717 = vadd.f32 %v1716, %v1470
  %v1718 = vadd.f32 %v1717, %v1473
  %v1719 = vadd.f32 %v1718, %v1478
  %v1720 = vadd.f32 %v1719, %v1481
  %v1721 = vadd.f32 %v1720, %v1486
  %v1722 = vadd.f32 %v1721, %v1489
  %v1723 = vadd.f32 %v1722, %v1494
  %v1724 = vadd.f32 %v1723, %v1497
  %v1725 = vadd.f32 %v1724, %v1502
  %v1726 = vadd.f32 %v1725, %v1505
  %v1727 = vadd.f32 %v1726, %v1510
  %v1728 = vadd.f32 %v1727, %v1513
  %v1729 = vadd.f32 %v1728, %v1518
  %v1730 = vadd.f32 %v1729, %v1521
  %v1731 = vadd.f32 %v1730, %v1526
  %v1732 = vadd.f32 %v1731, %v1529
  %v1733 = vadd.f32 %v1732, %v1534
  %v1734 = vadd.f32 %v1733, %v1537
  %v1735 = vadd.f32 %v1734, %v1542
  %v1736 = vadd.f32 %v1735, %v1545
  %v1737 = vadd.f32 %v1736, %v1550
  %v1738 = vadd.f32 %v1737, %v1553
  %v1739 = vadd.f32 %v1738, %v1558
  %v1740 = vadd.f32 %v1739, %v1561
  %v1741 = vadd.f32 %v1740, %v1566
  %v1742 = vadd.f32 %v1741, %v1569
  %v1743 = vadd.f32 %v1742, %v1574
  %v1744 = vadd.f32 %v1743, %v1577
  %v1745 = vadd.f32 %v1744, %v1582
  %v1746 = vadd.f32 %v1745, %v1585
  %v1747 = vadd.f32 %v1746, %v1590
  %v1748 = vadd.f32 %v1747, %v1593
  %v1749 = vadd.f32 %v1748, %v1598
  %v1750 = vadd.f32 %v1749, %v1601
  %v1751 = vadd.f32 %v1750, %v1606
  %v1752 = vadd.f32 %v1751, %v1609
  %v1753 = vadd.f32 %v1752, %v1614
  %v1754 = vadd.f32 %v1753, %v1617
  %v1755 = vrot.slane %v1754, 4
  %v1756 = vadd.f32 %v1754, %v1755
  %v1757 = vrot.slane %v1756, 2
  %v1758 = vadd.f32 %v1756, %v1757
  %v1759 = vrot.slane %v1758, 1
  %v1760 = vadd.f32 %v1758, %v1759
  %v1761 = vadd.f32 %v1691, %v1760
  %1762 = vst [vmem:[#allocation3] sm:$0x1] %v1761
  // Predicated region
  $region22: #{gnet_forward.7} parent=0 // pred_check
    %p1763 = pneg %p1686
  $region23: #{gnet_forward.7} parent=0 // pred_check_branch
    %1765 = sbr.rel (%p1763) target = $region25
  $region24: #{gnet_forward.7} parent=0 // pred_region
    %v1766 = vld [vmem:[#allocation3] sm:$0x1]
    %v1767 = vmul.f32 %v1766, 0.001953125
    %v1768 = vld [vmem:[#allocation2] sm:$0xff]
    %v1769 = vld [vmem:[#allocation2 + $0x8] sm:$0xff]
    %v1770 = vld [vmem:[#allocation2 + $0x10] sm:$0xff]
    %v1771 = vld [vmem:[#allocation2 + $0x18] sm:$0xff]
    %v1772 = vld [vmem:[#allocation2 + $0x20] sm:$0xff]
    %v1773 = vld [vmem:[#allocation2 + $0x28] sm:$0xff]
    %v1774 = vld [vmem:[#allocation2 + $0x30] sm:$0xff]
    %v1775 = vld [vmem:[#allocation2 + $0x38] sm:$0xff]
    %v1776 = vld [vmem:[#allocation2 + $0x40] sm:$0xff]
    %v1777 = vld [vmem:[#allocation2 + $0x48] sm:$0xff]
    %v1778 = vld [vmem:[#allocation2 + $0x50] sm:$0xff]
    %v1779 = vld [vmem:[#allocation2 + $0x58] sm:$0xff]
    %v1780 = vld [vmem:[#allocation2 + $0x60] sm:$0xff]
    %v1781 = vld [vmem:[#allocation2 + $0x68] sm:$0xff]
    %v1782 = vld [vmem:[#allocation2 + $0x70] sm:$0xff]
    %v1783 = vld [vmem:[#allocation2 + $0x78] sm:$0xff]
    %v1784 = vld [vmem:[#allocation2 + $0x80] sm:$0xff]
    %v1785 = vld [vmem:[#allocation2 + $0x88] sm:$0xff]
    %v1786 = vld [vmem:[#allocation2 + $0x90] sm:$0xff]
    %v1787 = vld [vmem:[#allocation2 + $0x98] sm:$0xff]
    %v1788 = vld [vmem:[#allocation2 + $0xa0] sm:$0xff]
    %v1789 = vld [vmem:[#allocation2 + $0xa8] sm:$0xff]
    %v1790 = vld [vmem:[#allocation2 + $0xb0] sm:$0xff]
    %v1791 = vld [vmem:[#allocation2 + $0xb8] sm:$0xff]
    %v1792 = vld [vmem:[#allocation2 + $0xc0] sm:$0xff]
    %v1793 = vld [vmem:[#allocation2 + $0xc8] sm:$0xff]
    %v1794 = vld [vmem:[#allocation2 + $0xd0] sm:$0xff]
    %v1795 = vld [vmem:[#allocation2 + $0xd8] sm:$0xff]
    %v1796 = vld [vmem:[#allocation2 + $0xe0] sm:$0xff]
    %v1797 = vld [vmem:[#allocation2 + $0xe8] sm:$0xff]
    %v1798 = vld [vmem:[#allocation2 + $0xf0] sm:$0xff]
    %v1799 = vld [vmem:[#allocation2 + $0xf8] sm:$0xff]
    %v1800 = vld [vmem:[#allocation2 + $0x100] sm:$0xff]
    %v1801 = vld [vmem:[#allocation2 + $0x108] sm:$0xff]
    %v1802 = vld [vmem:[#allocation2 + $0x110] sm:$0xff]
    %v1803 = vld [vmem:[#allocation2 + $0x118] sm:$0xff]
    %v1804 = vld [vmem:[#allocation2 + $0x120] sm:$0xff]
    %v1805 = vld [vmem:[#allocation2 + $0x128] sm:$0xff]
    %v1806 = vld [vmem:[#allocation2 + $0x130] sm:$0xff]
    %v1807 = vld [vmem:[#allocation2 + $0x138] sm:$0xff]
    %v1808 = vld [vmem:[#allocation2 + $0x140] sm:$0xff]
    %v1809 = vld [vmem:[#allocation2 + $0x148] sm:$0xff]
    %v1810 = vld [vmem:[#allocation2 + $0x150] sm:$0xff]
    %v1811 = vld [vmem:[#allocation2 + $0x158] sm:$0xff]
    %v1812 = vld [vmem:[#allocation2 + $0x160] sm:$0xff]
    %v1813 = vld [vmem:[#allocation2 + $0x168] sm:$0xff]
    %v1814 = vld [vmem:[#allocation2 + $0x170] sm:$0xff]
    %v1815 = vld [vmem:[#allocation2 + $0x178] sm:$0xff]
    %v1816 = vld [vmem:[#allocation2 + $0x180] sm:$0xff]
    %v1817 = vld [vmem:[#allocation2 + $0x188] sm:$0xff]
    %v1818 = vld [vmem:[#allocation2 + $0x190] sm:$0xff]
    %v1819 = vld [vmem:[#allocation2 + $0x198] sm:$0xff]
    %v1820 = vld [vmem:[#allocation2 + $0x1a0] sm:$0xff]
    %v1821 = vld [vmem:[#allocation2 + $0x1a8] sm:$0xff]
    %v1822 = vld [vmem:[#allocation2 + $0x1b0] sm:$0xff]
    %v1823 = vld [vmem:[#allocation2 + $0x1b8] sm:$0xff]
    %v1824 = vld [vmem:[#allocation2 + $0x1c0] sm:$0xff]
    %v1825 = vld [vmem:[#allocation2 + $0x1c8] sm:$0xff]
    %v1826 = vld [vmem:[#allocation2 + $0x1d0] sm:$0xff]
    %v1827 = vld [vmem:[#allocation2 + $0x1d8] sm:$0xff]
    %v1828 = vld [vmem:[#allocation2 + $0x1e0] sm:$0xff]
    %v1829 = vld [vmem:[#allocation2 + $0x1e8] sm:$0xff]
    %v1830 = vld [vmem:[#allocation2 + $0x1f0] sm:$0xff]
    %v1831 = vld [vmem:[#allocation2 + $0x1f8] sm:$0xff]
    %v1833 = vlaneseq
    %v1834 = vshrl.u32 %v1833, 7
    %v1835 = vsub.s32 0, %v1834
    %v1836 = vrot.slane %v1767, %v1835
    %v1838 = vsub.f32 %v1768, %v1836
    %v1839 = vsub.f32 %v1769, %v1836
    %v1840 = vsub.f32 %v1770, %v1836
    %v1841 = vsub.f32 %v1771, %v1836
    %v1842 = vsub.f32 %v1772, %v1836
    %v1843 = vsub.f32 %v1773, %v1836
    %v1844 = vsub.f32 %v1774, %v1836
    %v1845 = vsub.f32 %v1775, %v1836
    %v1846 = vsub.f32 %v1776, %v1836
    %v1847 = vsub.f32 %v1777, %v1836
    %v1848 = vsub.f32 %v1778, %v1836
    %v1849 = vsub.f32 %v1779, %v1836
    %v1850 = vsub.f32 %v1780, %v1836
    %v1851 = vsub.f32 %v1781, %v1836
    %v1852 = vsub.f32 %v1782, %v1836
    %v1853 = vsub.f32 %v1783, %v1836
    %v1854 = vsub.f32 %v1784, %v1836
    %v1855 = vsub.f32 %v1785, %v1836
    %v1856 = vsub.f32 %v1786, %v1836
    %v1857 = vsub.f32 %v1787, %v1836
    %v1858 = vsub.f32 %v1788, %v1836
    %v1859 = vsub.f32 %v1789, %v1836
    %v1860 = vsub.f32 %v1790, %v1836
    %v1861 = vsub.f32 %v1791, %v1836
    %v1862 = vsub.f32 %v1792, %v1836
    %v1863 = vsub.f32 %v1793, %v1836
    %v1864 = vsub.f32 %v1794, %v1836
    %v1865 = vsub.f32 %v1795, %v1836
    %v1866 = vsub.f32 %v1796, %v1836
    %v1867 = vsub.f32 %v1797, %v1836
    %v1868 = vsub.f32 %v1798, %v1836
    %v1869 = vsub.f32 %v1799, %v1836
    %v1870 = vsub.f32 %v1800, %v1836
    %v1871 = vsub.f32 %v1801, %v1836
    %v1872 = vsub.f32 %v1802, %v1836
    %v1873 = vsub.f32 %v1803, %v1836
    %v1874 = vsub.f32 %v1804, %v1836
    %v1875 = vsub.f32 %v1805, %v1836
    %v1876 = vsub.f32 %v1806, %v1836
    %v1877 = vsub.f32 %v1807, %v1836
    %v1878 = vsub.f32 %v1808, %v1836
    %v1879 = vsub.f32 %v1809, %v1836
    %v1880 = vsub.f32 %v1810, %v1836
    %v1881 = vsub.f32 %v1811, %v1836
    %v1882 = vsub.f32 %v1812, %v1836
    %v1883 = vsub.f32 %v1813, %v1836
    %v1884 = vsub.f32 %v1814, %v1836
    %v1885 = vsub.f32 %v1815, %v1836
    %v1886 = vsub.f32 %v1816, %v1836
    %v1887 = vsub.f32 %v1817, %v1836
    %v1888 = vsub.f32 %v1818, %v1836
    %v1889 = vsub.f32 %v1819, %v1836
    %v1890 = vsub.f32 %v1820, %v1836
    %v1891 = vsub.f32 %v1821, %v1836
    %v1892 = vsub.f32 %v1822, %v1836
    %v1893 = vsub.f32 %v1823, %v1836
    %v1894 = vsub.f32 %v1824, %v1836
    %v1895 = vsub.f32 %v1825, %v1836
    %v1896 = vsub.f32 %v1826, %v1836
    %v1897 = vsub.f32 %v1827, %v1836
    %v1898 = vsub.f32 %v1828, %v1836
    %v1899 = vsub.f32 %v1829, %v1836
    %v1900 = vsub.f32 %v1830, %v1836
    %v1901 = vsub.f32 %v1831, %v1836
    %v1902 = vmul.f32 %v1838, %v1838
    %v1903 = vmul.f32 %v1839, %v1839
    %v1904 = vmul.f32 %v1840, %v1840
    %v1905 = vmul.f32 %v1841, %v1841
    %v1906 = vmul.f32 %v1842, %v1842
    %v1907 = vmul.f32 %v1843, %v1843
    %v1908 = vmul.f32 %v1844, %v1844
    %v1909 = vmul.f32 %v1845, %v1845
    %v1910 = vmul.f32 %v1846, %v1846
    %v1911 = vmul.f32 %v1847, %v1847
    %v1912 = vmul.f32 %v1848, %v1848
    %v1913 = vmul.f32 %v1849, %v1849
    %v1914 = vmul.f32 %v1850, %v1850
    %v1915 = vmul.f32 %v1851, %v1851
    %v1916 = vmul.f32 %v1852, %v1852
    %v1917 = vmul.f32 %v1853, %v1853
    %v1918 = vmul.f32 %v1854, %v1854
    %v1919 = vmul.f32 %v1855, %v1855
    %v1920 = vmul.f32 %v1856, %v1856
    %v1921 = vmul.f32 %v1857, %v1857
    %v1922 = vmul.f32 %v1858, %v1858
    %v1923 = vmul.f32 %v1859, %v1859
    %v1924 = vmul.f32 %v1860, %v1860
    %v1925 = vmul.f32 %v1861, %v1861
    %v1926 = vmul.f32 %v1862, %v1862
    %v1927 = vmul.f32 %v1863, %v1863
    %v1928 = vmul.f32 %v1864, %v1864
    %v1929 = vmul.f32 %v1865, %v1865
    %v1930 = vmul.f32 %v1866, %v1866
    %v1931 = vmul.f32 %v1867, %v1867
    %v1932 = vmul.f32 %v1868, %v1868
    %v1933 = vmul.f32 %v1869, %v1869
    %v1934 = vmul.f32 %v1870, %v1870
    %v1935 = vmul.f32 %v1871, %v1871
    %v1936 = vmul.f32 %v1872, %v1872
    %v1937 = vmul.f32 %v1873, %v1873
    %v1938 = vmul.f32 %v1874, %v1874
    %v1939 = vmul.f32 %v1875, %v1875
    %v1940 = vmul.f32 %v1876, %v1876
    %v1941 = vmul.f32 %v1877, %v1877
    %v1942 = vmul.f32 %v1878, %v1878
    %v1943 = vmul.f32 %v1879, %v1879
    %v1944 = vmul.f32 %v1880, %v1880
    %v1945 = vmul.f32 %v1881, %v1881
    %v1946 = vmul.f32 %v1882, %v1882
    %v1947 = vmul.f32 %v1883, %v1883
    %v1948 = vmul.f32 %v1884, %v1884
    %v1949 = vmul.f32 %v1885, %v1885
    %v1950 = vmul.f32 %v1886, %v1886
    %v1951 = vmul.f32 %v1887, %v1887
    %v1952 = vmul.f32 %v1888, %v1888
    %v1953 = vmul.f32 %v1889, %v1889
    %v1954 = vmul.f32 %v1890, %v1890
    %v1955 = vmul.f32 %v1891, %v1891
    %v1956 = vmul.f32 %v1892, %v1892
    %v1957 = vmul.f32 %v1893, %v1893
    %v1958 = vmul.f32 %v1894, %v1894
    %v1959 = vmul.f32 %v1895, %v1895
    %v1960 = vmul.f32 %v1896, %v1896
    %v1961 = vmul.f32 %v1897, %v1897
    %v1962 = vmul.f32 %v1898, %v1898
    %v1963 = vmul.f32 %v1899, %v1899
    %v1964 = vmul.f32 %v1900, %v1900
    %v1965 = vmul.f32 %v1901, %v1901
    %v1966 = vadd.f32 %v1902, %v1903
    %v1967 = vadd.f32 %v1966, %v1904
    %v1968 = vadd.f32 %v1967, %v1905
    %v1969 = vadd.f32 %v1968, %v1906
    %v1970 = vadd.f32 %v1969, %v1907
    %v1971 = vadd.f32 %v1970, %v1908
    %v1972 = vadd.f32 %v1971, %v1909
    %v1973 = vadd.f32 %v1972, %v1910
    %v1974 = vadd.f32 %v1973, %v1911
    %v1975 = vadd.f32 %v1974, %v1912
    %v1976 = vadd.f32 %v1975, %v1913
    %v1977 = vadd.f32 %v1976, %v1914
    %v1978 = vadd.f32 %v1977, %v1915
    %v1979 = vadd.f32 %v1978, %v1916
    %v1980 = vadd.f32 %v1979, %v1917
    %v1981 = vadd.f32 %v1980, %v1918
    %v1982 = vadd.f32 %v1981, %v1919
    %v1983 = vadd.f32 %v1982, %v1920
    %v1984 = vadd.f32 %v1983, %v1921
    %v1985 = vadd.f32 %v1984, %v1922
    %v1986 = vadd.f32 %v1985, %v1923
    %v1987 = vadd.f32 %v1986, %v1924
    %v1988 = vadd.f32 %v1987, %v1925
    %v1989 = vadd.f32 %v1988, %v1926
    %v1990 = vadd.f32 %v1989, %v1927
    %v1991 = vadd.f32 %v1990, %v1928
    %v1992 = vadd.f32 %v1991, %v1929
    %v1993 = vadd.f32 %v1992, %v1930
    %v1994 = vadd.f32 %v1993, %v1931
    %v1995 = vadd.f32 %v1994, %v1932
    %v1996 = vadd.f32 %v1995, %v1933
    %v1997 = vadd.f32 %v1996, %v1934
    %v1998 = vadd.f32 %v1997, %v1935
    %v1999 = vadd.f32 %v1998, %v1936
    %v2000 = vadd.f32 %v1999, %v1937
    %v2001 = vadd.f32 %v2000, %v1938
    %v2002 = vadd.f32 %v2001, %v1939
    %v2003 = vadd.f32 %v2002, %v1940
    %v2004 = vadd.f32 %v2003, %v1941
    %v2005 = vadd.f32 %v2004, %v1942
    %v2006 = vadd.f32 %v2005, %v1943
    %v2007 = vadd.f32 %v2006, %v1944
    %v2008 = vadd.f32 %v2007, %v1945
    %v2009 = vadd.f32 %v2008, %v1946
    %v2010 = vadd.f32 %v2009, %v1947
    %v2011 = vadd.f32 %v2010, %v1948
    %v2012 = vadd.f32 %v2011, %v1949
    %v2013 = vadd.f32 %v2012, %v1950
    %v2014 = vadd.f32 %v2013, %v1951
    %v2015 = vadd.f32 %v2014, %v1952
    %v2016 = vadd.f32 %v2015, %v1953
    %v2017 = vadd.f32 %v2016, %v1954
    %v2018 = vadd.f32 %v2017, %v1955
    %v2019 = vadd.f32 %v2018, %v1956
    %v2020 = vadd.f32 %v2019, %v1957
    %v2021 = vadd.f32 %v2020, %v1958
    %v2022 = vadd.f32 %v2021, %v1959
    %v2023 = vadd.f32 %v2022, %v1960
    %v2024 = vadd.f32 %v2023, %v1961
    %v2025 = vadd.f32 %v2024, %v1962
    %v2026 = vadd.f32 %v2025, %v1963
    %v2027 = vadd.f32 %v2026, %v1964
    %v2028 = vadd.f32 %v2027, %v1965
    %v2029 = vrot.slane %v2028, 4
    %v2030 = vadd.f32 %v2028, %v2029
    %v2031 = vrot.slane %v2030, 2
    %v2032 = vadd.f32 %v2030, %v2031
    %v2033 = vrot.slane %v2032, 1
    %v2034 = vadd.f32 %v2032, %v2033
    %v2035 = vadd.f32 %v2034, 0.0
    %v2036 = vmul.f32 %v2035, 0.001953125
    %v2037 = vld [vmem:[%s2] sm:$0x1]
    %v2038 = vadd.f32 %v2036, 1e-05
    %v2039 = vrsqrt.pop %v2038
    %v2040 = vmul.f32 %v2037, %v2039
    %v2041 = vld [vmem:[%s3] sm:$0x1]
    %v2042 = vmul.f32 %v1767, %v2040
    %v2043 = vsub.f32 %v2041, %v2042
    %v2045 = vlaneseq
    %v2046 = vshrl.u32 %v2045, 7
    %v2047 = vsub.s32 0, %v2046
    %v2048 = vrot.slane %v2040, %v2047
    %v2050 = vmul.f32 %v1768, %v2048
    %v2051 = vmul.f32 %v1769, %v2048
    %v2052 = vmul.f32 %v1770, %v2048
    %v2053 = vmul.f32 %v1771, %v2048
    %v2054 = vmul.f32 %v1772, %v2048
    %v2055 = vmul.f32 %v1773, %v2048
    %v2056 = vmul.f32 %v1774, %v2048
    %v2057 = vmul.f32 %v1775, %v2048
    %v2058 = vmul.f32 %v1776, %v2048
    %v2059 = vmul.f32 %v1777, %v2048
    %v2060 = vmul.f32 %v1778, %v2048
    %v2061 = vmul.f32 %v1779, %v2048
    %v2062 = vmul.f32 %v1780, %v2048
    %v2063 = vmul.f32 %v1781, %v2048
    %v2064 = vmul.f32 %v1782, %v2048
    %v2065 = vmul.f32 %v1783, %v2048
    %v2066 = vmul.f32 %v1784, %v2048
    %v2067 = vmul.f32 %v1785, %v2048
    %v2068 = vmul.f32 %v1786, %v2048
    %v2069 = vmul.f32 %v1787, %v2048
    %v2070 = vmul.f32 %v1788, %v2048
    %v2071 = vmul.f32 %v1789, %v2048
    %v2072 = vmul.f32 %v1790, %v2048
    %v2073 = vmul.f32 %v1791, %v2048
    %v2074 = vmul.f32 %v1792, %v2048
    %v2075 = vmul.f32 %v1793, %v2048
    %v2076 = vmul.f32 %v1794, %v2048
    %v2077 = vmul.f32 %v1795, %v2048
    %v2078 = vmul.f32 %v1796, %v2048
    %v2079 = vmul.f32 %v1797, %v2048
    %v2080 = vmul.f32 %v1798, %v2048
    %v2081 = vmul.f32 %v1799, %v2048
    %v2082 = vmul.f32 %v1800, %v2048
    %v2083 = vmul.f32 %v1801, %v2048
    %v2084 = vmul.f32 %v1802, %v2048
    %v2085 = vmul.f32 %v1803, %v2048
    %v2086 = vmul.f32 %v1804, %v2048
    %v2087 = vmul.f32 %v1805, %v2048
    %v2088 = vmul.f32 %v1806, %v2048
    %v2089 = vmul.f32 %v1807, %v2048
    %v2090 = vmul.f32 %v1808, %v2048
    %v2091 = vmul.f32 %v1809, %v2048
    %v2092 = vmul.f32 %v1810, %v2048
    %v2093 = vmul.f32 %v1811, %v2048
    %v2094 = vmul.f32 %v1812, %v2048
    %v2095 = vmul.f32 %v1813, %v2048
    %v2096 = vmul.f32 %v1814, %v2048
    %v2097 = vmul.f32 %v1815, %v2048
    %v2098 = vmul.f32 %v1816, %v2048
    %v2099 = vmul.f32 %v1817, %v2048
    %v2100 = vmul.f32 %v1818, %v2048
    %v2101 = vmul.f32 %v1819, %v2048
    %v2102 = vmul.f32 %v1820, %v2048
    %v2103 = vmul.f32 %v1821, %v2048
    %v2104 = vmul.f32 %v1822, %v2048
    %v2105 = vmul.f32 %v1823, %v2048
    %v2106 = vmul.f32 %v1824, %v2048
    %v2107 = vmul.f32 %v1825, %v2048
    %v2108 = vmul.f32 %v1826, %v2048
    %v2109 = vmul.f32 %v1827, %v2048
    %v2110 = vmul.f32 %v1828, %v2048
    %v2111 = vmul.f32 %v1829, %v2048
    %v2112 = vmul.f32 %v1830, %v2048
    %v2113 = vmul.f32 %v1831, %v2048
    %v2115 = vlaneseq
    %v2116 = vshrl.u32 %v2115, 7
    %v2117 = vsub.s32 0, %v2116
    %v2118 = vrot.slane %v2043, %v2117
    %v2120 = vadd.f32 %v2050, %v2118
    %v2121 = vadd.f32 %v2051, %v2118
    %v2122 = vadd.f32 %v2052, %v2118
    %v2123 = vadd.f32 %v2053, %v2118
    %v2124 = vadd.f32 %v2054, %v2118
    %v2125 = vadd.f32 %v2055, %v2118
    %v2126 = vadd.f32 %v2056, %v2118
    %v2127 = vadd.f32 %v2057, %v2118
    %v2128 = vadd.f32 %v2058, %v2118
    %v2129 = vadd.f32 %v2059, %v2118
    %v2130 = vadd.f32 %v2060, %v2118
    %v2131 = vadd.f32 %v2061, %v2118
    %v2132 = vadd.f32 %v2062, %v2118
    %v2133 = vadd.f32 %v2063, %v2118
    %v2134 = vadd.f32 %v2064, %v2118
    %v2135 = vadd.f32 %v2065, %v2118
    %v2136 = vadd.f32 %v2066, %v2118
    %v2137 = vadd.f32 %v2067, %v2118
    %v2138 = vadd.f32 %v2068, %v2118
    %v2139 = vadd.f32 %v2069, %v2118
    %v2140 = vadd.f32 %v2070, %v2118
    %v2141 = vadd.f32 %v2071, %v2118
    %v2142 = vadd.f32 %v2072, %v2118
    %v2143 = vadd.f32 %v2073, %v2118
    %v2144 = vadd.f32 %v2074, %v2118
    %v2145 = vadd.f32 %v2075, %v2118
    %v2146 = vadd.f32 %v2076, %v2118
    %v2147 = vadd.f32 %v2077, %v2118
    %v2148 = vadd.f32 %v2078, %v2118
    %v2149 = vadd.f32 %v2079, %v2118
    %v2150 = vadd.f32 %v2080, %v2118
    %v2151 = vadd.f32 %v2081, %v2118
    %v2152 = vadd.f32 %v2082, %v2118
    %v2153 = vadd.f32 %v2083, %v2118
    %v2154 = vadd.f32 %v2084, %v2118
    %v2155 = vadd.f32 %v2085, %v2118
    %v2156 = vadd.f32 %v2086, %v2118
    %v2157 = vadd.f32 %v2087, %v2118
    %v2158 = vadd.f32 %v2088, %v2118
    %v2159 = vadd.f32 %v2089, %v2118
    %v2160 = vadd.f32 %v2090, %v2118
    %v2161 = vadd.f32 %v2091, %v2118
    %v2162 = vadd.f32 %v2092, %v2118
    %v2163 = vadd.f32 %v2093, %v2118
    %v2164 = vadd.f32 %v2094, %v2118
    %v2165 = vadd.f32 %v2095, %v2118
    %v2166 = vadd.f32 %v2096, %v2118
    %v2167 = vadd.f32 %v2097, %v2118
    %v2168 = vadd.f32 %v2098, %v2118
    %v2169 = vadd.f32 %v2099, %v2118
    %v2170 = vadd.f32 %v2100, %v2118
    %v2171 = vadd.f32 %v2101, %v2118
    %v2172 = vadd.f32 %v2102, %v2118
    %v2173 = vadd.f32 %v2103, %v2118
    %v2174 = vadd.f32 %v2104, %v2118
    %v2175 = vadd.f32 %v2105, %v2118
    %v2176 = vadd.f32 %v2106, %v2118
    %v2177 = vadd.f32 %v2107, %v2118
    %v2178 = vadd.f32 %v2108, %v2118
    %v2179 = vadd.f32 %v2109, %v2118
    %v2180 = vadd.f32 %v2110, %v2118
    %v2181 = vadd.f32 %v2111, %v2118
    %v2182 = vadd.f32 %v2112, %v2118
    %v2183 = vadd.f32 %v2113, %v2118
    %v2184 = vmax.f32 %v2120, 0.0
    %v2185 = vmax.f32 %v2121, 0.0
    %v2186 = vmax.f32 %v2122, 0.0
    %v2187 = vmax.f32 %v2123, 0.0
    %v2188 = vmax.f32 %v2124, 0.0
    %v2189 = vmax.f32 %v2125, 0.0
    %v2190 = vmax.f32 %v2126, 0.0
    %v2191 = vmax.f32 %v2127, 0.0
    %v2192 = vmax.f32 %v2128, 0.0
    %v2193 = vmax.f32 %v2129, 0.0
    %v2194 = vmax.f32 %v2130, 0.0
    %v2195 = vmax.f32 %v2131, 0.0
    %v2196 = vmax.f32 %v2132, 0.0
    %v2197 = vmax.f32 %v2133, 0.0
    %v2198 = vmax.f32 %v2134, 0.0
    %v2199 = vmax.f32 %v2135, 0.0
    %v2200 = vmax.f32 %v2136, 0.0
    %v2201 = vmax.f32 %v2137, 0.0
    %v2202 = vmax.f32 %v2138, 0.0
    %v2203 = vmax.f32 %v2139, 0.0
    %v2204 = vmax.f32 %v2140, 0.0
    %v2205 = vmax.f32 %v2141, 0.0
    %v2206 = vmax.f32 %v2142, 0.0
    %v2207 = vmax.f32 %v2143, 0.0
    %v2208 = vmax.f32 %v2144, 0.0
    %v2209 = vmax.f32 %v2145, 0.0
    %v2210 = vmax.f32 %v2146, 0.0
    %v2211 = vmax.f32 %v2147, 0.0
    %v2212 = vmax.f32 %v2148, 0.0
    %v2213 = vmax.f32 %v2149, 0.0
    %v2214 = vmax.f32 %v2150, 0.0
    %v2215 = vmax.f32 %v2151, 0.0
    %v2216 = vmax.f32 %v2152, 0.0
    %v2217 = vmax.f32 %v2153, 0.0
    %v2218 = vmax.f32 %v2154, 0.0
    %v2219 = vmax.f32 %v2155, 0.0
    %v2220 = vmax.f32 %v2156, 0.0
    %v2221 = vmax.f32 %v2157, 0.0
    %v2222 = vmax.f32 %v2158, 0.0
    %v2223 = vmax.f32 %v2159, 0.0
    %v2224 = vmax.f32 %v2160, 0.0
    %v2225 = vmax.f32 %v2161, 0.0
    %v2226 = vmax.f32 %v2162, 0.0
    %v2227 = vmax.f32 %v2163, 0.0
    %v2228 = vmax.f32 %v2164, 0.0
    %v2229 = vmax.f32 %v2165, 0.0
    %v2230 = vmax.f32 %v2166, 0.0
    %v2231 = vmax.f32 %v2167, 0.0
    %v2232 = vmax.f32 %v2168, 0.0
    %v2233 = vmax.f32 %v2169, 0.0
    %v2234 = vmax.f32 %v2170, 0.0
    %v2235 = vmax.f32 %v2171, 0.0
    %v2236 = vmax.f32 %v2172, 0.0
    %v2237 = vmax.f32 %v2173, 0.0
    %v2238 = vmax.f32 %v2174, 0.0
    %v2239 = vmax.f32 %v2175, 0.0
    %v2240 = vmax.f32 %v2176, 0.0
    %v2241 = vmax.f32 %v2177, 0.0
    %v2242 = vmax.f32 %v2178, 0.0
    %v2243 = vmax.f32 %v2179, 0.0
    %v2244 = vmax.f32 %v2180, 0.0
    %v2245 = vmax.f32 %v2181, 0.0
    %v2246 = vmax.f32 %v2182, 0.0
    %v2247 = vmax.f32 %v2183, 0.0
    %v2248 = vpack.c.bf16 %v2185, %v2184
    %v2249 = vpack.c.bf16 %v2187, %v2186
    %v2250 = vpack.c.bf16 %v2189, %v2188
    %v2251 = vpack.c.bf16 %v2191, %v2190
    %v2252 = vpack.c.bf16 %v2193, %v2192
    %v2253 = vpack.c.bf16 %v2195, %v2194
    %v2254 = vpack.c.bf16 %v2197, %v2196
    %v2255 = vpack.c.bf16 %v2199, %v2198
    %v2256 = vpack.c.bf16 %v2201, %v2200
    %v2257 = vpack.c.bf16 %v2203, %v2202
    %v2258 = vpack.c.bf16 %v2205, %v2204
    %v2259 = vpack.c.bf16 %v2207, %v2206
    %v2260 = vpack.c.bf16 %v2209, %v2208
    %v2261 = vpack.c.bf16 %v2211, %v2210
    %v2262 = vpack.c.bf16 %v2213, %v2212
    %v2263 = vpack.c.bf16 %v2215, %v2214
    %v2264 = vpack.c.bf16 %v2217, %v2216
    %v2265 = vpack.c.bf16 %v2219, %v2218
    %v2266 = vpack.c.bf16 %v2221, %v2220
    %v2267 = vpack.c.bf16 %v2223, %v2222
    %v2268 = vpack.c.bf16 %v2225, %v2224
    %v2269 = vpack.c.bf16 %v2227, %v2226
    %v2270 = vpack.c.bf16 %v2229, %v2228
    %v2271 = vpack.c.bf16 %v2231, %v2230
    %v2272 = vpack.c.bf16 %v2233, %v2232
    %v2273 = vpack.c.bf16 %v2235, %v2234
    %v2274 = vpack.c.bf16 %v2237, %v2236
    %v2275 = vpack.c.bf16 %v2239, %v2238
    %v2276 = vpack.c.bf16 %v2241, %v2240
    %v2277 = vpack.c.bf16 %v2243, %v2242
    %v2278 = vpack.c.bf16 %v2245, %v2244
    %v2279 = vpack.c.bf16 %v2247, %v2246
    %v2312 = vunpack.c.l.b16 %v2248
    %v2313 = vunpack.c.h.b16 %v2248
    %v2314 = vunpack.c.l.b16 %v2249
    %v2315 = vunpack.c.h.b16 %v2249
    %v2316 = vunpack.c.l.b16 %v2250
    %v2317 = vunpack.c.h.b16 %v2250
    %v2318 = vunpack.c.l.b16 %v2251
    %v2319 = vunpack.c.h.b16 %v2251
    %v2320 = vunpack.c.l.b16 %v2252
    %v2321 = vunpack.c.h.b16 %v2252
    %v2322 = vunpack.c.l.b16 %v2253
    %v2323 = vunpack.c.h.b16 %v2253
    %v2324 = vunpack.c.l.b16 %v2254
    %v2325 = vunpack.c.h.b16 %v2254
    %v2326 = vunpack.c.l.b16 %v2255
    %v2327 = vunpack.c.h.b16 %v2255
    %v2328 = vunpack.c.l.b16 %v2256
    %v2329 = vunpack.c.h.b16 %v2256
    %v2330 = vunpack.c.l.b16 %v2257
    %v2331 = vunpack.c.h.b16 %v2257
    %v2332 = vunpack.c.l.b16 %v2258
    %v2333 = vunpack.c.h.b16 %v2258
    %v2334 = vunpack.c.l.b16 %v2259
    %v2335 = vunpack.c.h.b16 %v2259
    %v2336 = vunpack.c.l.b16 %v2260
    %v2337 = vunpack.c.h.b16 %v2260
    %v2338 = vunpack.c.l.b16 %v2261
    %v2339 = vunpack.c.h.b16 %v2261
    %v2340 = vunpack.c.l.b16 %v2262
    %v2341 = vunpack.c.h.b16 %v2262
    %v2342 = vunpack.c.l.b16 %v2263
    %v2343 = vunpack.c.h.b16 %v2263
    %v2344 = vunpack.c.l.b16 %v2264
    %v2345 = vunpack.c.h.b16 %v2264
    %v2346 = vunpack.c.l.b16 %v2265
    %v2347 = vunpack.c.h.b16 %v2265
    %v2348 = vunpack.c.l.b16 %v2266
    %v2349 = vunpack.c.h.b16 %v2266
    %v2350 = vunpack.c.l.b16 %v2267
    %v2351 = vunpack.c.h.b16 %v2267
    %v2352 = vunpack.c.l.b16 %v2268
    %v2353 = vunpack.c.h.b16 %v2268
    %v2354 = vunpack.c.l.b16 %v2269
    %v2355 = vunpack.c.h.b16 %v2269
    %v2356 = vunpack.c.l.b16 %v2270
    %v2357 = vunpack.c.h.b16 %v2270
    %v2358 = vunpack.c.l.b16 %v2271
    %v2359 = vunpack.c.h.b16 %v2271
    %v2360 = vunpack.c.l.b16 %v2272
    %v2361 = vunpack.c.h.b16 %v2272
    %v2362 = vunpack.c.l.b16 %v2273
    %v2363 = vunpack.c.h.b16 %v2273
    %v2364 = vunpack.c.l.b16 %v2274
    %v2365 = vunpack.c.h.b16 %v2274
    %v2366 = vunpack.c.l.b16 %v2275
    %v2367 = vunpack.c.h.b16 %v2275
    %v2368 = vunpack.c.l.b16 %v2276
    %v2369 = vunpack.c.h.b16 %v2276
    %v2370 = vunpack.c.l.b16 %v2277
    %v2371 = vunpack.c.h.b16 %v2277
    %v2372 = vunpack.c.l.b16 %v2278
    %v2373 = vunpack.c.h.b16 %v2278
    %v2374 = vunpack.c.l.b16 %v2279
    %v2375 = vunpack.c.h.b16 %v2279
    %v2376 = vpack.c.b16 %v2312, %v2312
    %v2377 = vpack.c.b16 %v2313, %v2313
    %v2378 = vpack.c.b16 %v2314, %v2314
    %v2379 = vpack.c.b16 %v2315, %v2315
    %v2380 = vpack.c.b16 %v2316, %v2316
    %v2381 = vpack.c.b16 %v2317, %v2317
    %v2382 = vpack.c.b16 %v2318, %v2318
    %v2383 = vpack.c.b16 %v2319, %v2319
    %v2384 = vpack.c.b16 %v2320, %v2320
    %v2385 = vpack.c.b16 %v2321, %v2321
    %v2386 = vpack.c.b16 %v2322, %v2322
    %v2387 = vpack.c.b16 %v2323, %v2323
    %v2388 = vpack.c.b16 %v2324, %v2324
    %v2389 = vpack.c.b16 %v2325, %v2325
    %v2390 = vpack.c.b16 %v2326, %v2326
    %v2391 = vpack.c.b16 %v2327, %v2327
    %v2392 = vpack.c.b16 %v2328, %v2328
    %v2393 = vpack.c.b16 %v2329, %v2329
    %v2394 = vpack.c.b16 %v2330, %v2330
    %v2395 = vpack.c.b16 %v2331, %v2331
    %v2396 = vpack.c.b16 %v2332, %v2332
    %v2397 = vpack.c.b16 %v2333, %v2333
    %v2398 = vpack.c.b16 %v2334, %v2334
    %v2399 = vpack.c.b16 %v2335, %v2335
    %v2400 = vpack.c.b16 %v2336, %v2336
    %v2401 = vpack.c.b16 %v2337, %v2337
    %v2402 = vpack.c.b16 %v2338, %v2338
    %v2403 = vpack.c.b16 %v2339, %v2339
    %v2404 = vpack.c.b16 %v2340, %v2340
    %v2405 = vpack.c.b16 %v2341, %v2341
    %v2406 = vpack.c.b16 %v2342, %v2342
    %v2407 = vpack.c.b16 %v2343, %v2343
    %v2408 = vpack.c.b16 %v2344, %v2344
    %v2409 = vpack.c.b16 %v2345, %v2345
    %v2410 = vpack.c.b16 %v2346, %v2346
    %v2411 = vpack.c.b16 %v2347, %v2347
    %v2412 = vpack.c.b16 %v2348, %v2348
    %v2413 = vpack.c.b16 %v2349, %v2349
    %v2414 = vpack.c.b16 %v2350, %v2350
    %v2415 = vpack.c.b16 %v2351, %v2351
    %v2416 = vpack.c.b16 %v2352, %v2352
    %v2417 = vpack.c.b16 %v2353, %v2353
    %v2418 = vpack.c.b16 %v2354, %v2354
    %v2419 = vpack.c.b16 %v2355, %v2355
    %v2420 = vpack.c.b16 %v2356, %v2356
    %v2421 = vpack.c.b16 %v2357, %v2357
    %v2422 = vpack.c.b16 %v2358, %v2358
    %v2423 = vpack.c.b16 %v2359, %v2359
    %v2424 = vpack.c.b16 %v2360, %v2360
    %v2425 = vpack.c.b16 %v2361, %v2361
    %v2426 = vpack.c.b16 %v2362, %v2362
    %v2427 = vpack.c.b16 %v2363, %v2363
    %v2428 = vpack.c.b16 %v2364, %v2364
    %v2429 = vpack.c.b16 %v2365, %v2365
    %v2430 = vpack.c.b16 %v2366, %v2366
    %v2431 = vpack.c.b16 %v2367, %v2367
    %v2432 = vpack.c.b16 %v2368, %v2368
    %v2433 = vpack.c.b16 %v2369, %v2369
    %v2434 = vpack.c.b16 %v2370, %v2370
    %v2435 = vpack.c.b16 %v2371, %v2371
    %v2436 = vpack.c.b16 %v2372, %v2372
    %v2437 = vpack.c.b16 %v2373, %v2373
    %v2438 = vpack.c.b16 %v2374, %v2374
    %v2439 = vpack.c.b16 %v2375, %v2375
    %vm2504 = vcmask 125952
    %2505 = vst.msk [vmem:[%s4] sm:$0xf] %vm2504, %v2376
    %2506 = vst.msk [vmem:[%s4 + $0x4] sm:$0xf] %vm2504, %v2377
    %2507 = vst.msk [vmem:[%s4 + $0x8] sm:$0xf] %vm2504, %v2378
    %2508 = vst.msk [vmem:[%s4 + $0xc] sm:$0xf] %vm2504, %v2379
    %2509 = vst.msk [vmem:[%s4 + $0x10] sm:$0xf] %vm2504, %v2380
    %2510 = vst.msk [vmem:[%s4 + $0x14] sm:$0xf] %vm2504, %v2381
    %2511 = vst.msk [vmem:[%s4 + $0x18] sm:$0xf] %vm2504, %v2382
    %2512 = vst.msk [vmem:[%s4 + $0x1c] sm:$0xf] %vm2504, %v2383
    %2513 = vst.msk [vmem:[%s4 + $0x20] sm:$0xf] %vm2504, %v2384
    %2514 = vst.msk [vmem:[%s4 + $0x24] sm:$0xf] %vm2504, %v2385
    %2515 = vst.msk [vmem:[%s4 + $0x28] sm:$0xf] %vm2504, %v2386
    %2516 = vst.msk [vmem:[%s4 + $0x2c] sm:$0xf] %vm2504, %v2387
    %2517 = vst.msk [vmem:[%s4 + $0x30] sm:$0xf] %vm2504, %v2388
    %2518 = vst.msk [vmem:[%s4 + $0x34] sm:$0xf] %vm2504, %v2389
    %2519 = vst.msk [vmem:[%s4 + $0x38] sm:$0xf] %vm2504, %v2390
    %2520 = vst.msk [vmem:[%s4 + $0x3c] sm:$0xf] %vm2504, %v2391
    %2521 = vst.msk [vmem:[%s4 + $0x40] sm:$0xf] %vm2504, %v2392
    %2522 = vst.msk [vmem:[%s4 + $0x44] sm:$0xf] %vm2504, %v2393
    %2523 = vst.msk [vmem:[%s4 + $0x48] sm:$0xf] %vm2504, %v2394
    %2524 = vst.msk [vmem:[%s4 + $0x4c] sm:$0xf] %vm2504, %v2395
    %2525 = vst.msk [vmem:[%s4 + $0x50] sm:$0xf] %vm2504, %v2396
    %2526 = vst.msk [vmem:[%s4 + $0x54] sm:$0xf] %vm2504, %v2397
    %2527 = vst.msk [vmem:[%s4 + $0x58] sm:$0xf] %vm2504, %v2398
    %2528 = vst.msk [vmem:[%s4 + $0x5c] sm:$0xf] %vm2504, %v2399
    %2529 = vst.msk [vmem:[%s4 + $0x60] sm:$0xf] %vm2504, %v2400
    %2530 = vst.msk [vmem:[%s4 + $0x64] sm:$0xf] %vm2504, %v2401
    %2531 = vst.msk [vmem:[%s4 + $0x68] sm:$0xf] %vm2504, %v2402
    %2532 = vst.msk [vmem:[%s4 + $0x6c] sm:$0xf] %vm2504, %v2403
    %2533 = vst.msk [vmem:[%s4 + $0x70] sm:$0xf] %vm2504, %v2404
    %2534 = vst.msk [vmem:[%s4 + $0x74] sm:$0xf] %vm2504, %v2405
    %2535 = vst.msk [vmem:[%s4 + $0x78] sm:$0xf] %vm2504, %v2406
    %2536 = vst.msk [vmem:[%s4 + $0x7c] sm:$0xf] %vm2504, %v2407
    %2537 = vst.msk [vmem:[%s4 + $0x80] sm:$0xf] %vm2504, %v2408
    %2538 = vst.msk [vmem:[%s4 + $0x84] sm:$0xf] %vm2504, %v2409
    %2539 = vst.msk [vmem:[%s4 + $0x88] sm:$0xf] %vm2504, %v2410
    %2540 = vst.msk [vmem:[%s4 + $0x8c] sm:$0xf] %vm2504, %v2411
    %2541 = vst.msk [vmem:[%s4 + $0x90] sm:$0xf] %vm2504, %v2412
    %2542 = vst.msk [vmem:[%s4 + $0x94] sm:$0xf] %vm2504, %v2413
    %2543 = vst.msk [vmem:[%s4 + $0x98] sm:$0xf] %vm2504, %v2414
    %2544 = vst.msk [vmem:[%s4 + $0x9c] sm:$0xf] %vm2504, %v2415
    %2545 = vst.msk [vmem:[%s4 + $0xa0] sm:$0xf] %vm2504, %v2416
    %2546 = vst.msk [vmem:[%s4 + $0xa4] sm:$0xf] %vm2504, %v2417
    %2547 = vst.msk [vmem:[%s4 + $0xa8] sm:$0xf] %vm2504, %v2418
    %2548 = vst.msk [vmem:[%s4 + $0xac] sm:$0xf] %vm2504, %v2419
    %2549 = vst.msk [vmem:[%s4 + $0xb0] sm:$0xf] %vm2504, %v2420
    %2550 = vst.msk [vmem:[%s4 + $0xb4] sm:$0xf] %vm2504, %v2421
    %2551 = vst.msk [vmem:[%s4 + $0xb8] sm:$0xf] %vm2504, %v2422
    %2552 = vst.msk [vmem:[%s4 + $0xbc] sm:$0xf] %vm2504, %v2423
    %2553 = vst.msk [vmem:[%s4 + $0xc0] sm:$0xf] %vm2504, %v2424
    %2554 = vst.msk [vmem:[%s4 + $0xc4] sm:$0xf] %vm2504, %v2425
    %2555 = vst.msk [vmem:[%s4 + $0xc8] sm:$0xf] %vm2504, %v2426
    %2556 = vst.msk [vmem:[%s4 + $0xcc] sm:$0xf] %vm2504, %v2427
    %2557 = vst.msk [vmem:[%s4 + $0xd0] sm:$0xf] %vm2504, %v2428
    %2558 = vst.msk [vmem:[%s4 + $0xd4] sm:$0xf] %vm2504, %v2429
    %2559 = vst.msk [vmem:[%s4 + $0xd8] sm:$0xf] %vm2504, %v2430
    %2560 = vst.msk [vmem:[%s4 + $0xdc] sm:$0xf] %vm2504, %v2431
    %2561 = vst.msk [vmem:[%s4 + $0xe0] sm:$0xf] %vm2504, %v2432
    %2562 = vst.msk [vmem:[%s4 + $0xe4] sm:$0xf] %vm2504, %v2433
    %2563 = vst.msk [vmem:[%s4 + $0xe8] sm:$0xf] %vm2504, %v2434
    %2564 = vst.msk [vmem:[%s4 + $0xec] sm:$0xf] %vm2504, %v2435
    %2565 = vst.msk [vmem:[%s4 + $0xf0] sm:$0xf] %vm2504, %v2436
    %2566 = vst.msk [vmem:[%s4 + $0xf4] sm:$0xf] %vm2504, %v2437
    %2567 = vst.msk [vmem:[%s4 + $0xf8] sm:$0xf] %vm2504, %v2438
    %2568 = vst.msk [vmem:[%s4 + $0xfc] sm:$0xf] %vm2504, %v2439
  $region25: #{gnet_forward.7} parent=0 // pred_fallthru
    _
  // Predicated region
  $region26: #{gnet_forward.7} parent=0 // pred_check
    _
  $region27: #{gnet_forward.7} parent=0 // pred_check_branch
    %2570 = sbr.rel (0) target = $region29
  $region28: #{gnet_forward.7} parent=0 // pred_region
    _
  $region29: #{gnet_forward.7} parent=0 // pred_fallthru
    _
  // Predicated region
  $region30: #{gnet_forward.7} parent=0 // pred_check
    _
  $region31: #{gnet_forward.7} parent=0 // pred_check_branch
    %2572 = sbr.rel (0) target = $region33
  $region32: #{gnet_forward.7} parent=0 // pred_region
    _
  $region33: #{gnet_forward.7} parent=0 // pred_fallthru
    _

// kernel: gnet_forward.8
$region0: #{gnet_forward.8}
  #allocation0 [shape = 'u32[]', space=smem, size = 0x4, offset = 0x4, fixed_abs, tag = 'smem constant byte address 0x4 - core index']
  #allocation1 [shape = 'u32[144,128]{1,0:T(1,128)}', space=vmem, size = 0x12000, scoped, tag = 'internal scratch']
  #allocation2 [shape = 'f32[2048,128]{1,0:T(8,128)}', space=vmem, size = 0x100000, scoped, tag = 'scratch operand']
  #allocation3 [shape = 'f32[1,128]{1,0:T(1,128)}', space=vmem, size = 0x200, scoped, tag = 'scratch operand']
  %s0 = inlined_call_operand.vmem [shape: bf16[2048,256], index: 0, kind: input, shape index: {}]
  %s1 = inlined_call_operand.vmem [shape: bf16[256,128], index: 1, kind: input, shape index: {}]
  %s2 = inlined_call_operand.vmem [shape: f32[1,128], index: 2, kind: input, shape index: {}]
  %s3 = inlined_call_operand.vmem [shape: f32[1,128], index: 3, kind: input, shape index: {}]
  %s4 = inlined_call_operand.vmem [shape: bf16[2048,8], index: 4, kind: output, shape index: {}]
  %s5 = sld [smem:[#allocation0]]
  $region57: #{gnet_forward.8} parent=0
    _
  %s7 = ssub.s32 1, %s5
  %s8 = scalar_select 0, %s7, %s5
  loop: start=0, step=1, limit=4
  $region2: #{gnet_forward.8} parent=0 // loop_pre_header
    _
  $region3: #{gnet_forward.8} parent=0 // loop_header
    %s10 = sphi 0, %s14
    %p11 = scmp.ge.s32.totalorder %s10, 4
    %s20 = sphi 0, %s22
    %s23 = sphi 0, %s20
    %s24 = sphi 0, %s23
    %s40 = sphi 0, %s24
    %s44 = sphi 0, %s44
    %s46 = sphi 0, %s44
    %s47 = sphi 0, %s46
    %s61 = sphi 0, %s47
    %s65 = sphi 0, %s65
    %s67 = sphi 0, %s65
    %s68 = sphi 0, %s67
    %s82 = sphi 0, %s68
    %s86 = sphi 0, %s86
    %s88 = sphi 0, %s86
    %s89 = sphi 0, %s88
    %s103 = sphi 0, %s89
    %s107 = sphi 0, %s107
    %s109 = sphi 0, %s107
    %s110 = sphi 0, %s109
    %s124 = sphi 0, %s110
  $region4: #{gnet_forward.8} parent=0 // loop_header_branch
    %13 = sbr.rel (%p11) target = $region8
  $region5: #{gnet_forward.8} parent=0 // loop_body
    %s15 = ssub.s32 %s10, 1
    %s16 = ssub.s32 %s10, 2
    %s17 = sadd.s32 %s10, 1
    %s18 = ssub.s32 %s10, %s17
    %p19 = scmp.eq.s32.totalorder %s18, 0
    %s21 = sadd.s32 %s20, 1
    %s22 = scalar_select %p19, %s20, %s21
    %p25 = pneg %p19
    %p26 = scmp.eq.s32.totalorder %s10, 1
    %p27 = por %p25, %p26
    %p28 = scmp.ne.s32.totalorder %s20, %s23
    %p29 = scmp.eq.s32.totalorder %s10, 0
    %p30 = por %p28, %p29
    %p31 = scmp.ne.s32.totalorder %s20, %s23
    %p32 = scmp.eq.s32.totalorder %s15, 1
    %p33 = por %p31, %p32
    %p34 = scmp.ne.s32.totalorder %s23, %s24
    %p35 = scmp.eq.s32.totalorder %s15, 0
    %p36 = por %p34, %p35
    %p37 = scmp.ne.s32.totalorder %s23, %s24
    %p38 = scmp.eq.s32.totalorder %s16, 1
    %p39 = por %p37, %p38
    %p41 = scmp.ne.s32.totalorder %s24, %s40
    %p42 = scmp.eq.s32.totalorder %s16, 0
    %p43 = por %p41, %p42
    %s45 = sadd.s32 %s44, 1
    %p48 = scmp.eq.s32.totalorder %s10, 1
    %p49 = scmp.ne.s32.totalorder %s44, %s46
    %p50 = scmp.eq.s32.totalorder %s10, 0
    %p51 = por %p49, %p50
    %p52 = scmp.ne.s32.totalorder %s44, %s46
    %p53 = scmp.eq.s32.totalorder %s15, 1
    %p54 = por %p52, %p53
    %p55 = scmp.ne.s32.totalorder %s46, %s47
    %p56 = scmp.eq.s32.totalorder %s15, 0
    %p57 = por %p55, %p56
    %p58 = scmp.ne.s32.totalorder %s46, %s47
    %p59 = scmp.eq.s32.totalorder %s16, 1
    %p60 = por %p58, %p59
    %p62 = scmp.ne.s32.totalorder %s47, %s61
    %p63 = scmp.eq.s32.totalorder %s16, 0
    %p64 = por %p62, %p63
    %s66 = sadd.s32 %s65, 1
    %p69 = scmp.eq.s32.totalorder %s10, 1
    %p70 = scmp.ne.s32.totalorder %s65, %s67
    %p71 = scmp.eq.s32.totalorder %s10, 0
    %p72 = por %p70, %p71
    %p73 = scmp.ne.s32.totalorder %s65, %s67
    %p74 = scmp.eq.s32.totalorder %s15, 1
    %p75 = por %p73, %p74
    %p76 = scmp.ne.s32.totalorder %s67, %s68
    %p77 = scmp.eq.s32.totalorder %s15, 0
    %p78 = por %p76, %p77
    %p79 = scmp.ne.s32.totalorder %s67, %s68
    %p80 = scmp.eq.s32.totalorder %s16, 1
    %p81 = por %p79, %p80
    %p83 = scmp.ne.s32.totalorder %s68, %s82
    %p84 = scmp.eq.s32.totalorder %s16, 0
    %p85 = por %p83, %p84
    %s87 = sadd.s32 %s86, 1
    %p90 = scmp.eq.s32.totalorder %s10, 1
    %p91 = scmp.ne.s32.totalorder %s86, %s88
    %p92 = scmp.eq.s32.totalorder %s10, 0
    %p93 = por %p91, %p92
    %p94 = scmp.ne.s32.totalorder %s86, %s88
    %p95 = scmp.eq.s32.totalorder %s15, 1
    %p96 = por %p94, %p95
    %p97 = scmp.ne.s32.totalorder %s88, %s89
    %p98 = scmp.eq.s32.totalorder %s15, 0
    %p99 = por %p97, %p98
    %p100 = scmp.ne.s32.totalorder %s88, %s89
    %p101 = scmp.eq.s32.totalorder %s16, 1
    %p102 = por %p100, %p101
    %p104 = scmp.ne.s32.totalorder %s89, %s103
    %p105 = scmp.eq.s32.totalorder %s16, 0
    %p106 = por %p104, %p105
    %s108 = sadd.s32 %s107, 1
    %p111 = scmp.eq.s32.totalorder %s10, 1
    %p112 = scmp.ne.s32.totalorder %s107, %s109
    %p113 = scmp.eq.s32.totalorder %s10, 0
    %p114 = por %p112, %p113
    %p115 = scmp.ne.s32.totalorder %s107, %s109
    %p116 = scmp.eq.s32.totalorder %s15, 1
    %p117 = por %p115, %p116
    %p118 = scmp.ne.s32.totalorder %s109, %s110
    %p119 = scmp.eq.s32.totalorder %s15, 0
    %p120 = por %p118, %p119
    %p121 = scmp.ne.s32.totalorder %s109, %s110
    %p122 = scmp.eq.s32.totalorder %s16, 1
    %p123 = por %p121, %p122
    %p125 = scmp.ne.s32.totalorder %s110, %s124
    %p126 = scmp.eq.s32.totalorder %s16, 0
    %p127 = por %p125, %p126
    %p128 = scmp.le.s32.totalorder 1, %s10
    %p129 = scmp.lt.s32.totalorder %s10, 3
    %p130 = pnand %p128, %p129
    %p131 = pneg %p130
    // Predicated region
    $region9: #{gnet_forward.8} parent=5 // pred_check
      _
    $region10: #{gnet_forward.8} parent=5 // pred_check_branch
      %133 = sbr.rel (%p130) target = $region12
    $region11: #{gnet_forward.8} parent=5 // pred_region
      %s134 = ssub.s32 %s10, 1
      // Predicated region
      $region13: #{gnet_forward.8} parent=11 // pred_check
        %p135 = pneg %p57
      $region14: #{gnet_forward.8} parent=11 // pred_check_branch
        %137 = sbr.rel (%p135) target = $region16
      $region15: #{gnet_forward.8} parent=11 // pred_region
        _
      $region16: #{gnet_forward.8} parent=11 // pred_fallthru
        _
      // Predicated region
      $region17: #{gnet_forward.8} parent=11 // pred_check
        %p138 = pneg %p78
      $region18: #{gnet_forward.8} parent=11 // pred_check_branch
        %140 = sbr.rel (%p138) target = $region20
      $region19: #{gnet_forward.8} parent=11 // pred_region
        _
      $region20: #{gnet_forward.8} parent=11 // pred_fallthru
        _
      // Predicated region
      $region21: #{gnet_forward.8} parent=11 // pred_check
        %p141 = pneg %p99
      $region22: #{gnet_forward.8} parent=11 // pred_check_branch
        %143 = sbr.rel (%p141) target = $region24
      $region23: #{gnet_forward.8} parent=11 // pred_region
        _
      $region24: #{gnet_forward.8} parent=11 // pred_fallthru
        _
    $region12: #{gnet_forward.8} parent=5 // pred_fallthru
      _
    %p144 = scmp.lt.s32.totalorder %s10, 2
    // Predicated region
    $region25: #{gnet_forward.8} parent=5 // pred_check
      %p145 = pneg %p144
    $region26: #{gnet_forward.8} parent=5 // pred_check_branch
      %147 = sbr.rel (%p145) target = $region28
    $region27: #{gnet_forward.8} parent=5 // pred_region
      // Predicated region
      $region29: #{gnet_forward.8} parent=27 // pred_check
        %p148 = pneg %p30
      $region30: #{gnet_forward.8} parent=27 // pred_check_branch
        %150 = sbr.rel (%p148) target = $region32
      $region31: #{gnet_forward.8} parent=27 // pred_region
        %s151 = smul.u32 128, %s10
        %p152 = scmp.lt.s32.totalorder %s151, 255
        %s153 = scalar_select %p152, %s151, 255
        %s154 = smul.addr %s153, 2
        %s155 = smul.addr %s154, 4
        %s156 = scalar_lea.vmem %s0, %s155
        %s157 = smul.u32 128, %s10
      $region32: #{gnet_forward.8} parent=27 // pred_fallthru
        _
    $region28: #{gnet_forward.8} parent=5 // pred_fallthru
      _
    %p158 = scmp.le.s32.totalorder 1, %s10
    %p159 = scmp.lt.s32.totalorder %s10, 3
    %p160 = pnand %p158, %p159
    %p161 = pneg %p160
    // Predicated region
    $region33: #{gnet_forward.8} parent=5 // pred_check
      _
    $region34: #{gnet_forward.8} parent=5 // pred_check_branch
      %163 = sbr.rel (%p160) target = $region36
    $region35: #{gnet_forward.8} parent=5 // pred_region
      %s164 = ssub.s32 %s10, 1
      %s165 = smul.u32 128, %s15
      %p166 = scmp.lt.s32.totalorder %s165, 255
      %s167 = scalar_select %p166, %s165, 255
      %s168 = smul.addr %s167, 2
      %s169 = smul.addr %s168, 4
      %s170 = scalar_lea.vmem %s0, %s169
      %p171 = pneg %p36
      %p172 = pneg %p33
      %p173 = pneg %p57
      %p174 = pneg %p54
      %p175 = pneg %p78
      %p176 = pneg %p75
      %p177 = pneg %p99
      %p178 = pneg %p96
      %p179 = pneg %p120
      %p180 = pneg %p117
      %s181 = smul.u32 128, %s15
      %p182 = scmp.lt.s32.totalorder %s181, 255
      %s183 = scalar_select %p182, %s181, 255
      %s184 = smul.addr %s183, 2
      %s185 = smul.addr %s184, 4
      %s186 = scalar_lea.vmem %s0, %s185
      %s187 = smul.u32 128, %s15
      %v189 = vld [vmem:[%s186] sm:$0xff]
      %v190 = vld [vmem:[%s186 + $0x8] sm:$0xff]
      %v191 = vld [vmem:[%s186 + $0x10] sm:$0xff]
      %v192 = vld [vmem:[%s186 + $0x18] sm:$0xff]
      %v193 = vld [vmem:[%s186 + $0x20] sm:$0xff]
      %v194 = vld [vmem:[%s186 + $0x28] sm:$0xff]
      %v195 = vld [vmem:[%s186 + $0x30] sm:$0xff]
      %v196 = vld [vmem:[%s186 + $0x38] sm:$0xff]
      %v197 = vld [vmem:[%s186 + $0x40] sm:$0xff]
      %v198 = vld [vmem:[%s186 + $0x48] sm:$0xff]
      %v199 = vld [vmem:[%s186 + $0x50] sm:$0xff]
      %v200 = vld [vmem:[%s186 + $0x58] sm:$0xff]
      %v201 = vld [vmem:[%s186 + $0x60] sm:$0xff]
      %v202 = vld [vmem:[%s186 + $0x68] sm:$0xff]
      %v203 = vld [vmem:[%s186 + $0x70] sm:$0xff]
      %v204 = vld [vmem:[%s186 + $0x78] sm:$0xff]
      %v205 = vld [vmem:[%s186 + $0x80] sm:$0xff]
      %v206 = vld [vmem:[%s186 + $0x88] sm:$0xff]
      %v207 = vld [vmem:[%s186 + $0x90] sm:$0xff]
      %v208 = vld [vmem:[%s186 + $0x98] sm:$0xff]
      %v209 = vld [vmem:[%s186 + $0xa0] sm:$0xff]
      %v210 = vld [vmem:[%s186 + $0xa8] sm:$0xff]
      %v211 = vld [vmem:[%s186 + $0xb0] sm:$0xff]
      %v212 = vld [vmem:[%s186 + $0xb8] sm:$0xff]
      %v213 = vld [vmem:[%s186 + $0xc0] sm:$0xff]
      %v214 = vld [vmem:[%s186 + $0xc8] sm:$0xff]
      %v215 = vld [vmem:[%s186 + $0xd0] sm:$0xff]
      %v216 = vld [vmem:[%s186 + $0xd8] sm:$0xff]
      %v217 = vld [vmem:[%s186 + $0xe0] sm:$0xff]
      %v218 = vld [vmem:[%s186 + $0xe8] sm:$0xff]
      %v219 = vld [vmem:[%s186 + $0xf0] sm:$0xff]
      %v220 = vld [vmem:[%s186 + $0xf8] sm:$0xff]
      %v221 = vld [vmem:[%s186 + $0x100] sm:$0xff]
      %v222 = vld [vmem:[%s186 + $0x108] sm:$0xff]
      %v223 = vld [vmem:[%s186 + $0x110] sm:$0xff]
      %v224 = vld [vmem:[%s186 + $0x118] sm:$0xff]
      %v225 = vld [vmem:[%s186 + $0x120] sm:$0xff]
      %v226 = vld [vmem:[%s186 + $0x128] sm:$0xff]
      %v227 = vld [vmem:[%s186 + $0x130] sm:$0xff]
      %v228 = vld [vmem:[%s186 + $0x138] sm:$0xff]
      %v229 = vld [vmem:[%s186 + $0x140] sm:$0xff]
      %v230 = vld [vmem:[%s186 + $0x148] sm:$0xff]
      %v231 = vld [vmem:[%s186 + $0x150] sm:$0xff]
      %v232 = vld [vmem:[%s186 + $0x158] sm:$0xff]
      %v233 = vld [vmem:[%s186 + $0x160] sm:$0xff]
      %v234 = vld [vmem:[%s186 + $0x168] sm:$0xff]
      %v235 = vld [vmem:[%s186 + $0x170] sm:$0xff]
      %v236 = vld [vmem:[%s186 + $0x178] sm:$0xff]
      %v237 = vld [vmem:[%s186 + $0x180] sm:$0xff]
      %v238 = vld [vmem:[%s186 + $0x188] sm:$0xff]
      %v239 = vld [vmem:[%s186 + $0x190] sm:$0xff]
      %v240 = vld [vmem:[%s186 + $0x198] sm:$0xff]
      %v241 = vld [vmem:[%s186 + $0x1a0] sm:$0xff]
      %v242 = vld [vmem:[%s186 + $0x1a8] sm:$0xff]
      %v243 = vld [vmem:[%s186 + $0x1b0] sm:$0xff]
      %v244 = vld [vmem:[%s186 + $0x1b8] sm:$0xff]
      %v245 = vld [vmem:[%s186 + $0x1c0] sm:$0xff]
      %v246 = vld [vmem:[%s186 + $0x1c8] sm:$0xff]
      %v247 = vld [vmem:[%s186 + $0x1d0] sm:$0xff]
      %v248 = vld [vmem:[%s186 + $0x1d8] sm:$0xff]
      %v249 = vld [vmem:[%s186 + $0x1e0] sm:$0xff]
      %v250 = vld [vmem:[%s186 + $0x1e8] sm:$0xff]
      %v251 = vld [vmem:[%s186 + $0x1f0] sm:$0xff]
      %v252 = vld [vmem:[%s186 + $0x1f8] sm:$0xff]
      %v253 = vld [vmem:[%s186 + $0x200] sm:$0xff]
      %v254 = vld [vmem:[%s186 + $0x208] sm:$0xff]
      %v255 = vld [vmem:[%s186 + $0x210] sm:$0xff]
      %v256 = vld [vmem:[%s186 + $0x218] sm:$0xff]
      %v257 = vld [vmem:[%s186 + $0x220] sm:$0xff]
      %v258 = vld [vmem:[%s186 + $0x228] sm:$0xff]
      %v259 = vld [vmem:[%s186 + $0x230] sm:$0xff]
      %v260 = vld [vmem:[%s186 + $0x238] sm:$0xff]
      %v261 = vld [vmem:[%s186 + $0x240] sm:$0xff]
      %v262 = vld [vmem:[%s186 + $0x248] sm:$0xff]
      %v263 = vld [vmem:[%s186 + $0x250] sm:$0xff]
      %v264 = vld [vmem:[%s186 + $0x258] sm:$0xff]
      %v265 = vld [vmem:[%s186 + $0x260] sm:$0xff]
      %v266 = vld [vmem:[%s186 + $0x268] sm:$0xff]
      %v267 = vld [vmem:[%s186 + $0x270] sm:$0xff]
      %v268 = vld [vmem:[%s186 + $0x278] sm:$0xff]
      %v269 = vld [vmem:[%s186 + $0x280] sm:$0xff]
      %v270 = vld [vmem:[%s186 + $0x288] sm:$0xff]
      %v271 = vld [vmem:[%s186 + $0x290] sm:$0xff]
      %v272 = vld [vmem:[%s186 + $0x298] sm:$0xff]
      %v273 = vld [vmem:[%s186 + $0x2a0] sm:$0xff]
      %v274 = vld [vmem:[%s186 + $0x2a8] sm:$0xff]
      %v275 = vld [vmem:[%s186 + $0x2b0] sm:$0xff]
      %v276 = vld [vmem:[%s186 + $0x2b8] sm:$0xff]
      %v277 = vld [vmem:[%s186 + $0x2c0] sm:$0xff]
      %v278 = vld [vmem:[%s186 + $0x2c8] sm:$0xff]
      %v279 = vld [vmem:[%s186 + $0x2d0] sm:$0xff]
      %v280 = vld [vmem:[%s186 + $0x2d8] sm:$0xff]
      %v281 = vld [vmem:[%s186 + $0x2e0] sm:$0xff]
      %v282 = vld [vmem:[%s186 + $0x2e8] sm:$0xff]
      %v283 = vld [vmem:[%s186 + $0x2f0] sm:$0xff]
      %v284 = vld [vmem:[%s186 + $0x2f8] sm:$0xff]
      %v285 = vld [vmem:[%s186 + $0x300] sm:$0xff]
      %v286 = vld [vmem:[%s186 + $0x308] sm:$0xff]
      %v287 = vld [vmem:[%s186 + $0x310] sm:$0xff]
      %v288 = vld [vmem:[%s186 + $0x318] sm:$0xff]
      %v289 = vld [vmem:[%s186 + $0x320] sm:$0xff]
      %v290 = vld [vmem:[%s186 + $0x328] sm:$0xff]
      %v291 = vld [vmem:[%s186 + $0x330] sm:$0xff]
      %v292 = vld [vmem:[%s186 + $0x338] sm:$0xff]
      %v293 = vld [vmem:[%s186 + $0x340] sm:$0xff]
      %v294 = vld [vmem:[%s186 + $0x348] sm:$0xff]
      %v295 = vld [vmem:[%s186 + $0x350] sm:$0xff]
      %v296 = vld [vmem:[%s186 + $0x358] sm:$0xff]
      %v297 = vld [vmem:[%s186 + $0x360] sm:$0xff]
      %v298 = vld [vmem:[%s186 + $0x368] sm:$0xff]
      %v299 = vld [vmem:[%s186 + $0x370] sm:$0xff]
      %v300 = vld [vmem:[%s186 + $0x378] sm:$0xff]
      %v301 = vld [vmem:[%s186 + $0x380] sm:$0xff]
      %v302 = vld [vmem:[%s186 + $0x388] sm:$0xff]
      %v303 = vld [vmem:[%s186 + $0x390] sm:$0xff]
      %v304 = vld [vmem:[%s186 + $0x398] sm:$0xff]
      %v305 = vld [vmem:[%s186 + $0x3a0] sm:$0xff]
      %v306 = vld [vmem:[%s186 + $0x3a8] sm:$0xff]
      %v307 = vld [vmem:[%s186 + $0x3b0] sm:$0xff]
      %v308 = vld [vmem:[%s186 + $0x3b8] sm:$0xff]
      %v309 = vld [vmem:[%s186 + $0x3c0] sm:$0xff]
      %v310 = vld [vmem:[%s186 + $0x3c8] sm:$0xff]
      %v311 = vld [vmem:[%s186 + $0x3d0] sm:$0xff]
      %v312 = vld [vmem:[%s186 + $0x3d8] sm:$0xff]
      %v313 = vld [vmem:[%s186 + $0x3e0] sm:$0xff]
      %v314 = vld [vmem:[%s186 + $0x3e8] sm:$0xff]
      %v315 = vld [vmem:[%s186 + $0x3f0] sm:$0xff]
      %v316 = vld [vmem:[%s186 + $0x3f8] sm:$0xff]
      %v317 = vld [vmem:[%s1] sm:$0xf]
      %v318 = vld [vmem:[%s1 + $0x4] sm:$0xf]
      %v319 = vld [vmem:[%s1 + $0x8] sm:$0xf]
      %v320 = vld [vmem:[%s1 + $0xc] sm:$0xf]
      %v321 = vld [vmem:[%s1 + $0x10] sm:$0xf]
      %v322 = vld [vmem:[%s1 + $0x14] sm:$0xf]
      %v323 = vld [vmem:[%s1 + $0x18] sm:$0xf]
      %v324 = vld [vmem:[%s1 + $0x1c] sm:$0xf]
      %v325 = vld [vmem:[%s1 + $0x20] sm:$0xf]
      %v326 = vld [vmem:[%s1 + $0x24] sm:$0xf]
      %v327 = vld [vmem:[%s1 + $0x28] sm:$0xf]
      %v328 = vld [vmem:[%s1 + $0x2c] sm:$0xf]
      %v329 = vld [vmem:[%s1 + $0x30] sm:$0xf]
      %v330 = vld [vmem:[%s1 + $0x34] sm:$0xf]
      %v331 = vld [vmem:[%s1 + $0x38] sm:$0xf]
      %v332 = vld [vmem:[%s1 + $0x3c] sm:$0xf]
      %v333 = vld [vmem:[%s1 + $0x40] sm:$0xf]
      %v334 = vld [vmem:[%s1 + $0x44] sm:$0xf]
      %v335 = vld [vmem:[%s1 + $0x48] sm:$0xf]
      %v336 = vld [vmem:[%s1 + $0x4c] sm:$0xf]
      %v337 = vld [vmem:[%s1 + $0x50] sm:$0xf]
      %v338 = vld [vmem:[%s1 + $0x54] sm:$0xf]
      %v339 = vld [vmem:[%s1 + $0x58] sm:$0xf]
      %v340 = vld [vmem:[%s1 + $0x5c] sm:$0xf]
      %v341 = vld [vmem:[%s1 + $0x60] sm:$0xf]
      %v342 = vld [vmem:[%s1 + $0x64] sm:$0xf]
      %v343 = vld [vmem:[%s1 + $0x68] sm:$0xf]
      %v344 = vld [vmem:[%s1 + $0x6c] sm:$0xf]
      %v345 = vld [vmem:[%s1 + $0x70] sm:$0xf]
      %v346 = vld [vmem:[%s1 + $0x74] sm:$0xf]
      %v347 = vld [vmem:[%s1 + $0x78] sm:$0xf]
      %v348 = vld [vmem:[%s1 + $0x7c] sm:$0xf]
      %v477 = vunpack.c.l.b16 %v189
      %v478 = vunpack.c.h.b16 %v189
      %v479 = vunpack.c.l.b16 %v190
      %v480 = vunpack.c.h.b16 %v190
      %v481 = vunpack.c.l.b16 %v191
      %v482 = vunpack.c.h.b16 %v191
      %v483 = vunpack.c.l.b16 %v192
      %v484 = vunpack.c.h.b16 %v192
      %v485 = vunpack.c.l.b16 %v193
      %v486 = vunpack.c.h.b16 %v193
      %v487 = vunpack.c.l.b16 %v194
      %v488 = vunpack.c.h.b16 %v194
      %v489 = vunpack.c.l.b16 %v195
      %v490 = vunpack.c.h.b16 %v195
      %v491 = vunpack.c.l.b16 %v196
      %v492 = vunpack.c.h.b16 %v196
      %v493 = vunpack.c.l.b16 %v197
      %v494 = vunpack.c.h.b16 %v197
      %v495 = vunpack.c.l.b16 %v198
      %v496 = vunpack.c.h.b16 %v198
      %v497 = vunpack.c.l.b16 %v199
      %v498 = vunpack.c.h.b16 %v199
      %v499 = vunpack.c.l.b16 %v200
      %v500 = vunpack.c.h.b16 %v200
      %v501 = vunpack.c.l.b16 %v201
      %v502 = vunpack.c.h.b16 %v201
      %v503 = vunpack.c.l.b16 %v202
      %v504 = vunpack.c.h.b16 %v202
      %v505 = vunpack.c.l.b16 %v203
      %v506 = vunpack.c.h.b16 %v203
      %v507 = vunpack.c.l.b16 %v204
      %v508 = vunpack.c.h.b16 %v204
      %v509 = vunpack.c.l.b16 %v205
      %v510 = vunpack.c.h.b16 %v205
      %v511 = vunpack.c.l.b16 %v206
      %v512 = vunpack.c.h.b16 %v206
      %v513 = vunpack.c.l.b16 %v207
      %v514 = vunpack.c.h.b16 %v207
      %v515 = vunpack.c.l.b16 %v208
      %v516 = vunpack.c.h.b16 %v208
      %v517 = vunpack.c.l.b16 %v209
      %v518 = vunpack.c.h.b16 %v209
      %v519 = vunpack.c.l.b16 %v210
      %v520 = vunpack.c.h.b16 %v210
      %v521 = vunpack.c.l.b16 %v211
      %v522 = vunpack.c.h.b16 %v211
      %v523 = vunpack.c.l.b16 %v212
      %v524 = vunpack.c.h.b16 %v212
      %v525 = vunpack.c.l.b16 %v213
      %v526 = vunpack.c.h.b16 %v213
      %v527 = vunpack.c.l.b16 %v214
      %v528 = vunpack.c.h.b16 %v214
      %v529 = vunpack.c.l.b16 %v215
      %v530 = vunpack.c.h.b16 %v215
      %v531 = vunpack.c.l.b16 %v216
      %v532 = vunpack.c.h.b16 %v216
      %v533 = vunpack.c.l.b16 %v217
      %v534 = vunpack.c.h.b16 %v217
      %v535 = vunpack.c.l.b16 %v218
      %v536 = vunpack.c.h.b16 %v218
      %v537 = vunpack.c.l.b16 %v219
      %v538 = vunpack.c.h.b16 %v219
      %v539 = vunpack.c.l.b16 %v220
      %v540 = vunpack.c.h.b16 %v220
      %v541 = vunpack.c.l.b16 %v221
      %v542 = vunpack.c.h.b16 %v221
      %v543 = vunpack.c.l.b16 %v222
      %v544 = vunpack.c.h.b16 %v222
      %v545 = vunpack.c.l.b16 %v223
      %v546 = vunpack.c.h.b16 %v223
      %v547 = vunpack.c.l.b16 %v224
      %v548 = vunpack.c.h.b16 %v224
      %v549 = vunpack.c.l.b16 %v225
      %v550 = vunpack.c.h.b16 %v225
      %v551 = vunpack.c.l.b16 %v226
      %v552 = vunpack.c.h.b16 %v226
      %v553 = vunpack.c.l.b16 %v227
      %v554 = vunpack.c.h.b16 %v227
      %v555 = vunpack.c.l.b16 %v228
      %v556 = vunpack.c.h.b16 %v228
      %v557 = vunpack.c.l.b16 %v229
      %v558 = vunpack.c.h.b16 %v229
      %v559 = vunpack.c.l.b16 %v230
      %v560 = vunpack.c.h.b16 %v230
      %v561 = vunpack.c.l.b16 %v231
      %v562 = vunpack.c.h.b16 %v231
      %v563 = vunpack.c.l.b16 %v232
      %v564 = vunpack.c.h.b16 %v232
      %v565 = vunpack.c.l.b16 %v233
      %v566 = vunpack.c.h.b16 %v233
      %v567 = vunpack.c.l.b16 %v234
      %v568 = vunpack.c.h.b16 %v234
      %v569 = vunpack.c.l.b16 %v235
      %v570 = vunpack.c.h.b16 %v235
      %v571 = vunpack.c.l.b16 %v236
      %v572 = vunpack.c.h.b16 %v236
      %v573 = vunpack.c.l.b16 %v237
      %v574 = vunpack.c.h.b16 %v237
      %v575 = vunpack.c.l.b16 %v238
      %v576 = vunpack.c.h.b16 %v238
      %v577 = vunpack.c.l.b16 %v239
      %v578 = vunpack.c.h.b16 %v239
      %v579 = vunpack.c.l.b16 %v240
      %v580 = vunpack.c.h.b16 %v240
      %v581 = vunpack.c.l.b16 %v241
      %v582 = vunpack.c.h.b16 %v241
      %v583 = vunpack.c.l.b16 %v242
      %v584 = vunpack.c.h.b16 %v242
      %v585 = vunpack.c.l.b16 %v243
      %v586 = vunpack.c.h.b16 %v243
      %v587 = vunpack.c.l.b16 %v244
      %v588 = vunpack.c.h.b16 %v244
      %v589 = vunpack.c.l.b16 %v245
      %v590 = vunpack.c.h.b16 %v245
      %v591 = vunpack.c.l.b16 %v246
      %v592 = vunpack.c.h.b16 %v246
      %v593 = vunpack.c.l.b16 %v247
      %v594 = vunpack.c.h.b16 %v247
      %v595 = vunpack.c.l.b16 %v248
      %v596 = vunpack.c.h.b16 %v248
      %v597 = vunpack.c.l.b16 %v249
      %v598 = vunpack.c.h.b16 %v249
      %v599 = vunpack.c.l.b16 %v250
      %v600 = vunpack.c.h.b16 %v250
      %v601 = vunpack.c.l.b16 %v251
      %v602 = vunpack.c.h.b16 %v251
      %v603 = vunpack.c.l.b16 %v252
      %v604 = vunpack.c.h.b16 %v252
      %v605 = vunpack.c.l.b16 %v253
      %v606 = vunpack.c.h.b16 %v253
      %v607 = vunpack.c.l.b16 %v254
      %v608 = vunpack.c.h.b16 %v254
      %v609 = vunpack.c.l.b16 %v255
      %v610 = vunpack.c.h.b16 %v255
      %v611 = vunpack.c.l.b16 %v256
      %v612 = vunpack.c.h.b16 %v256
      %v613 = vunpack.c.l.b16 %v257
      %v614 = vunpack.c.h.b16 %v257
      %v615 = vunpack.c.l.b16 %v258
      %v616 = vunpack.c.h.b16 %v258
      %v617 = vunpack.c.l.b16 %v259
      %v618 = vunpack.c.h.b16 %v259
      %v619 = vunpack.c.l.b16 %v260
      %v620 = vunpack.c.h.b16 %v260
      %v621 = vunpack.c.l.b16 %v261
      %v622 = vunpack.c.h.b16 %v261
      %v623 = vunpack.c.l.b16 %v262
      %v624 = vunpack.c.h.b16 %v262
      %v625 = vunpack.c.l.b16 %v263
      %v626 = vunpack.c.h.b16 %v263
      %v627 = vunpack.c.l.b16 %v264
      %v628 = vunpack.c.h.b16 %v264
      %v629 = vunpack.c.l.b16 %v265
      %v630 = vunpack.c.h.b16 %v265
      %v631 = vunpack.c.l.b16 %v266
      %v632 = vunpack.c.h.b16 %v266
      %v633 = vunpack.c.l.b16 %v267
      %v634 = vunpack.c.h.b16 %v267
      %v635 = vunpack.c.l.b16 %v268
      %v636 = vunpack.c.h.b16 %v268
      %v637 = vunpack.c.l.b16 %v269
      %v638 = vunpack.c.h.b16 %v269
      %v639 = vunpack.c.l.b16 %v270
      %v640 = vunpack.c.h.b16 %v270
      %v641 = vunpack.c.l.b16 %v271
      %v642 = vunpack.c.h.b16 %v271
      %v643 = vunpack.c.l.b16 %v272
      %v644 = vunpack.c.h.b16 %v272
      %v645 = vunpack.c.l.b16 %v273
      %v646 = vunpack.c.h.b16 %v273
      %v647 = vunpack.c.l.b16 %v274
      %v648 = vunpack.c.h.b16 %v274
      %v649 = vunpack.c.l.b16 %v275
      %v650 = vunpack.c.h.b16 %v275
      %v651 = vunpack.c.l.b16 %v276
      %v652 = vunpack.c.h.b16 %v276
      %v653 = vunpack.c.l.b16 %v277
      %v654 = vunpack.c.h.b16 %v277
      %v655 = vunpack.c.l.b16 %v278
      %v656 = vunpack.c.h.b16 %v278
      %v657 = vunpack.c.l.b16 %v279
      %v658 = vunpack.c.h.b16 %v279
      %v659 = vunpack.c.l.b16 %v280
      %v660 = vunpack.c.h.b16 %v280
      %v661 = vunpack.c.l.b16 %v281
      %v662 = vunpack.c.h.b16 %v281
      %v663 = vunpack.c.l.b16 %v282
      %v664 = vunpack.c.h.b16 %v282
      %v665 = vunpack.c.l.b16 %v283
      %v666 = vunpack.c.h.b16 %v283
      %v667 = vunpack.c.l.b16 %v284
      %v668 = vunpack.c.h.b16 %v284
      %v669 = vunpack.c.l.b16 %v285
      %v670 = vunpack.c.h.b16 %v285
      %v671 = vunpack.c.l.b16 %v286
      %v672 = vunpack.c.h.b16 %v286
      %v673 = vunpack.c.l.b16 %v287
      %v674 = vunpack.c.h.b16 %v287
      %v675 = vunpack.c.l.b16 %v288
      %v676 = vunpack.c.h.b16 %v288
      %v677 = vunpack.c.l.b16 %v289
      %v678 = vunpack.c.h.b16 %v289
      %v679 = vunpack.c.l.b16 %v290
      %v680 = vunpack.c.h.b16 %v290
      %v681 = vunpack.c.l.b16 %v291
      %v682 = vunpack.c.h.b16 %v291
      %v683 = vunpack.c.l.b16 %v292
      %v684 = vunpack.c.h.b16 %v292
      %v685 = vunpack.c.l.b16 %v293
      %v686 = vunpack.c.h.b16 %v293
      %v687 = vunpack.c.l.b16 %v294
      %v688 = vunpack.c.h.b16 %v294
      %v689 = vunpack.c.l.b16 %v295
      %v690 = vunpack.c.h.b16 %v295
      %v691 = vunpack.c.l.b16 %v296
      %v692 = vunpack.c.h.b16 %v296
      %v693 = vunpack.c.l.b16 %v297
      %v694 = vunpack.c.h.b16 %v297
      %v695 = vunpack.c.l.b16 %v298
      %v696 = vunpack.c.h.b16 %v298
      %v697 = vunpack.c.l.b16 %v299
      %v698 = vunpack.c.h.b16 %v299
      %v699 = vunpack.c.l.b16 %v300
      %v700 = vunpack.c.h.b16 %v300
      %v701 = vunpack.c.l.b16 %v301
      %v702 = vunpack.c.h.b16 %v301
      %v703 = vunpack.c.l.b16 %v302
      %v704 = vunpack.c.h.b16 %v302
      %v705 = vunpack.c.l.b16 %v303
      %v706 = vunpack.c.h.b16 %v303
      %v707 = vunpack.c.l.b16 %v304
      %v708 = vunpack.c.h.b16 %v304
      %v709 = vunpack.c.l.b16 %v305
      %v710 = vunpack.c.h.b16 %v305
      %v711 = vunpack.c.l.b16 %v306
      %v712 = vunpack.c.h.b16 %v306
      %v713 = vunpack.c.l.b16 %v307
      %v714 = vunpack.c.h.b16 %v307
      %v715 = vunpack.c.l.b16 %v308
      %v716 = vunpack.c.h.b16 %v308
      %v717 = vunpack.c.l.b16 %v309
      %v718 = vunpack.c.h.b16 %v309
      %v719 = vunpack.c.l.b16 %v310
      %v720 = vunpack.c.h.b16 %v310
      %v721 = vunpack.c.l.b16 %v311
      %v722 = vunpack.c.h.b16 %v311
      %v723 = vunpack.c.l.b16 %v312
      %v724 = vunpack.c.h.b16 %v312
      %v725 = vunpack.c.l.b16 %v313
      %v726 = vunpack.c.h.b16 %v313
      %v727 = vunpack.c.l.b16 %v314
      %v728 = vunpack.c.h.b16 %v314
      %v729 = vunpack.c.l.b16 %v315
      %v730 = vunpack.c.h.b16 %v315
      %v731 = vunpack.c.l.b16 %v316
      %v732 = vunpack.c.h.b16 %v316
      %v733 = vpack.c.b16 %v479, %v477
      %v734 = vpack.c.b16 %v480, %v478
      %v735 = vpack.c.b16 %v483, %v481
      %v736 = vpack.c.b16 %v484, %v482
      %v737 = vpack.c.b16 %v487, %v485
      %v738 = vpack.c.b16 %v488, %v486
      %v739 = vpack.c.b16 %v491, %v489
      %v740 = vpack.c.b16 %v492, %v490
      %v741 = vpack.c.b16 %v495, %v493
      %v742 = vpack.c.b16 %v496, %v494
      %v743 = vpack.c.b16 %v499, %v497
      %v744 = vpack.c.b16 %v500, %v498
      %v745 = vpack.c.b16 %v503, %v501
      %v746 = vpack.c.b16 %v504, %v502
      %v747 = vpack.c.b16 %v507, %v505
      %v748 = vpack.c.b16 %v508, %v506
      %v749 = vpack.c.b16 %v511, %v509
      %v750 = vpack.c.b16 %v512, %v510
      %v751 = vpack.c.b16 %v515, %v513
      %v752 = vpack.c.b16 %v516, %v514
      %v753 = vpack.c.b16 %v519, %v517
      %v754 = vpack.c.b16 %v520, %v518
      %v755 = vpack.c.b16 %v523, %v521
      %v756 = vpack.c.b16 %v524, %v522
      %v757 = vpack.c.b16 %v527, %v525
      %v758 = vpack.c.b16 %v528, %v526
      %v759 = vpack.c.b16 %v531, %v529
      %v760 = vpack.c.b16 %v532, %v530
      %v761 = vpack.c.b16 %v535, %v533
      %v762 = vpack.c.b16 %v536, %v534
      %v763 = vpack.c.b16 %v539, %v537
      %v764 = vpack.c.b16 %v540, %v538
      %v765 = vpack.c.b16 %v543, %v541
      %v766 = vpack.c.b16 %v544, %v542
      %v767 = vpack.c.b16 %v547, %v545
      %v768 = vpack.c.b16 %v548, %v546
      %v769 = vpack.c.b16 %v551, %v549
      %v770 = vpack.c.b16 %v552, %v550
      %v771 = vpack.c.b16 %v555, %v553
      %v772 = vpack.c.b16 %v556, %v554
      %v773 = vpack.c.b16 %v559, %v557
      %v774 = vpack.c.b16 %v560, %v558
      %v775 = vpack.c.b16 %v563, %v561
      %v776 = vpack.c.b16 %v564, %v562
      %v777 = vpack.c.b16 %v567, %v565
      %v778 = vpack.c.b16 %v568, %v566
      %v779 = vpack.c.b16 %v571, %v569
      %v780 = vpack.c.b16 %v572, %v570
      %v781 = vpack.c.b16 %v575, %v573
      %v782 = vpack.c.b16 %v576, %v574
      %v783 = vpack.c.b16 %v579, %v577
      %v784 = vpack.c.b16 %v580, %v578
      %v785 = vpack.c.b16 %v583, %v581
      %v786 = vpack.c.b16 %v584, %v582
      %v787 = vpack.c.b16 %v587, %v585
      %v788 = vpack.c.b16 %v588, %v586
      %v789 = vpack.c.b16 %v591, %v589
      %v790 = vpack.c.b16 %v592, %v590
      %v791 = vpack.c.b16 %v595, %v593
      %v792 = vpack.c.b16 %v596, %v594
      %v793 = vpack.c.b16 %v599, %v597
      %v794 = vpack.c.b16 %v600, %v598
      %v795 = vpack.c.b16 %v603, %v601
      %v796 = vpack.c.b16 %v604, %v602
      %v797 = vpack.c.b16 %v607, %v605
      %v798 = vpack.c.b16 %v608, %v606
      %v799 = vpack.c.b16 %v611, %v609
      %v800 = vpack.c.b16 %v612, %v610
      %v801 = vpack.c.b16 %v615, %v613
      %v802 = vpack.c.b16 %v616, %v614
      %v803 = vpack.c.b16 %v619, %v617
      %v804 = vpack.c.b16 %v620, %v618
      %v805 = vpack.c.b16 %v623, %v621
      %v806 = vpack.c.b16 %v624, %v622
      %v807 = vpack.c.b16 %v627, %v625
      %v808 = vpack.c.b16 %v628, %v626
      %v809 = vpack.c.b16 %v631, %v629
      %v810 = vpack.c.b16 %v632, %v630
      %v811 = vpack.c.b16 %v635, %v633
      %v812 = vpack.c.b16 %v636, %v634
      %v813 = vpack.c.b16 %v639, %v637
      %v814 = vpack.c.b16 %v640, %v638
      %v815 = vpack.c.b16 %v643, %v641
      %v816 = vpack.c.b16 %v644, %v642
      %v817 = vpack.c.b16 %v647, %v645
      %v818 = vpack.c.b16 %v648, %v646
      %v819 = vpack.c.b16 %v651, %v649
      %v820 = vpack.c.b16 %v652, %v650
      %v821 = vpack.c.b16 %v655, %v653
      %v822 = vpack.c.b16 %v656, %v654
      %v823 = vpack.c.b16 %v659, %v657
      %v824 = vpack.c.b16 %v660, %v658
      %v825 = vpack.c.b16 %v663, %v661
      %v826 = vpack.c.b16 %v664, %v662
      %v827 = vpack.c.b16 %v667, %v665
      %v828 = vpack.c.b16 %v668, %v666
      %v829 = vpack.c.b16 %v671, %v669
      %v830 = vpack.c.b16 %v672, %v670
      %v831 = vpack.c.b16 %v675, %v673
      %v832 = vpack.c.b16 %v676, %v674
      %v833 = vpack.c.b16 %v679, %v677
      %v834 = vpack.c.b16 %v680, %v678
      %v835 = vpack.c.b16 %v683, %v681
      %v836 = vpack.c.b16 %v684, %v682
      %v837 = vpack.c.b16 %v687, %v685
      %v838 = vpack.c.b16 %v688, %v686
      %v839 = vpack.c.b16 %v691, %v689
      %v840 = vpack.c.b16 %v692, %v690
      %v841 = vpack.c.b16 %v695, %v693
      %v842 = vpack.c.b16 %v696, %v694
      %v843 = vpack.c.b16 %v699, %v697
      %v844 = vpack.c.b16 %v700, %v698
      %v845 = vpack.c.b16 %v703, %v701
      %v846 = vpack.c.b16 %v704, %v702
      %v847 = vpack.c.b16 %v707, %v705
      %v848 = vpack.c.b16 %v708, %v706
      %v849 = vpack.c.b16 %v711, %v709
      %v850 = vpack.c.b16 %v712, %v710
      %v851 = vpack.c.b16 %v715, %v713
      %v852 = vpack.c.b16 %v716, %v714
      %v853 = vpack.c.b16 %v719, %v717
      %v854 = vpack.c.b16 %v720, %v718
      %v855 = vpack.c.b16 %v723, %v721
      %v856 = vpack.c.b16 %v724, %v722
      %v857 = vpack.c.b16 %v727, %v725
      %v858 = vpack.c.b16 %v728, %v726
      %v859 = vpack.c.b16 %v731, %v729
      %v860 = vpack.c.b16 %v732, %v730
      %v1021 = vunpack.c.l.b16 %v317
      %v1022 = vunpack.c.l.b16 %v318
      %v1023 = vunpack.c.l.b16 %v319
      %v1024 = vunpack.c.l.b16 %v320
      %v1025 = vunpack.c.l.b16 %v321
      %v1026 = vunpack.c.l.b16 %v322
      %v1027 = vunpack.c.l.b16 %v323
      %v1028 = vunpack.c.l.b16 %v324
      %v1029 = vunpack.c.l.b16 %v325
      %v1030 = vunpack.c.l.b16 %v326
      %v1031 = vunpack.c.l.b16 %v327
      %v1032 = vunpack.c.l.b16 %v328
      %v1033 = vunpack.c.l.b16 %v329
      %v1034 = vunpack.c.l.b16 %v330
      %v1035 = vunpack.c.l.b16 %v331
      %v1036 = vunpack.c.l.b16 %v332
      %v1037 = vunpack.c.l.b16 %v333
      %v1038 = vunpack.c.l.b16 %v334
      %v1039 = vunpack.c.l.b16 %v335
      %v1040 = vunpack.c.l.b16 %v336
      %v1041 = vunpack.c.l.b16 %v337
      %v1042 = vunpack.c.l.b16 %v338
      %v1043 = vunpack.c.l.b16 %v339
      %v1044 = vunpack.c.l.b16 %v340
      %v1045 = vunpack.c.l.b16 %v341
      %v1046 = vunpack.c.l.b16 %v342
      %v1047 = vunpack.c.l.b16 %v343
      %v1048 = vunpack.c.l.b16 %v344
      %v1049 = vunpack.c.l.b16 %v345
      %v1050 = vunpack.c.l.b16 %v346
      %v1051 = vunpack.c.l.b16 %v347
      %v1052 = vunpack.c.l.b16 %v348
      %v1053 = vpack.c.b16 %v1022, %v1021
      %v1054 = vpack.c.b16 %v1024, %v1023
      %v1055 = vpack.c.b16 %v1026, %v1025
      %v1056 = vpack.c.b16 %v1028, %v1027
      %v1057 = vpack.c.b16 %v1030, %v1029
      %v1058 = vpack.c.b16 %v1032, %v1031
      %v1059 = vpack.c.b16 %v1034, %v1033
      %v1060 = vpack.c.b16 %v1036, %v1035
      %v1061 = vpack.c.b16 %v1038, %v1037
      %v1062 = vpack.c.b16 %v1040, %v1039
      %v1063 = vpack.c.b16 %v1042, %v1041
      %v1064 = vpack.c.b16 %v1044, %v1043
      %v1065 = vpack.c.b16 %v1046, %v1045
      %v1066 = vpack.c.b16 %v1048, %v1047
      %v1067 = vpack.c.b16 %v1050, %v1049
      %v1068 = vpack.c.b16 %v1052, %v1051
      %1085 = vmatprep.subr.bf16.mxu0 0
      %1086 = vmatpush1.bf16.msra.mxu0 %v1053
      %1087 = vmatprep.subr.bf16.mxu0 0
      %1088 = vmatpush1.bf16.msra.mxu0 %v1054
      %1089 = vmatprep.subr.bf16.mxu0 0
      %1090 = vmatpush1.bf16.msra.mxu0 %v1055
      %1091 = vmatprep.subr.bf16.mxu0 0
      %1092 = vmatpush1.bf16.msra.mxu0 %v1056
      %1093 = vmatprep.subr.bf16.mxu0 0
      %1094 = vmatpush1.bf16.msra.mxu0 %v1057
      %1095 = vmatprep.subr.bf16.mxu0 0
      %1096 = vmatpush1.bf16.msra.mxu0 %v1058
      %1097 = vmatprep.subr.bf16.mxu0 0
      %1098 = vmatpush1.bf16.msra.mxu0 %v1059
      %1099 = vmatprep.subr.bf16.mxu0 0
      %1100 = vmatpush1.bf16.msra.mxu0 %v1060
      %1101 = vmatprep.subr.bf16.mxu0 0
      %1102 = vmatpush1.bf16.msra.mxu0 %v1061
      %1103 = vmatprep.subr.bf16.mxu0 0
      %1104 = vmatpush1.bf16.msra.mxu0 %v1062
      %1105 = vmatprep.subr.bf16.mxu0 0
      %1106 = vmatpush1.bf16.msra.mxu0 %v1063
      %1107 = vmatprep.subr.bf16.mxu0 0
      %1108 = vmatpush1.bf16.msra.mxu0 %v1064
      %1109 = vmatprep.subr.bf16.mxu0 0
      %1110 = vmatpush1.bf16.msra.mxu0 %v1065
      %1111 = vmatprep.subr.bf16.mxu0 0
      %1112 = vmatpush1.bf16.msra.mxu0 %v1066
      %1113 = vmatprep.subr.bf16.mxu0 0
      %1114 = vmatpush1.bf16.msra.mxu0 %v1067
      %1115 = vmatprep.subr.bf16.mxu0 0
      %1116 = vmatpush1.bf16.msra.mxu0 %v1068
      %1117 = vmatprep.mubr.bf16.mxu0 %v734
      %1118 = vmatmul.mubr.bf16.gmra.mrb[0].mxu0 %v733
      %v1119 = vpop.f32.mrb[0].mxu0
      %v1120 = vadd.f32 0.0, %v1119
      %v1121 = vpop.f32.mrb[0].mxu0
      %v1122 = vpop.f32.mrb[0].mxu0
      %v1123 = vadd.f32 0.0, %v1122
      %v1124 = vpop.f32.mrb[0].mxu0
      %1125 = vmatprep.mubr.bf16.mxu0 %v736
      %1126 = vmatmul.mubr.bf16.gmra.mrb[0].mxu0 %v735
      %v1127 = vpop.f32.mrb[0].mxu0
      %v1128 = vadd.f32 0.0, %v1127
      %v1129 = vpop.f32.mrb[0].mxu0
      %v1130 = vpop.f32.mrb[0].mxu0
      %v1131 = vadd.f32 0.0, %v1130
      %v1132 = vpop.f32.mrb[0].mxu0
      %1133 = vmatprep.mubr.bf16.mxu0 %v738
      %1134 = vmatmul.mubr.bf16.gmra.mrb[0].mxu0 %v737
      %v1135 = vpop.f32.mrb[0].mxu0
      %v1136 = vadd.f32 0.0, %v1135
      %v1137 = vpop.f32.mrb[0].mxu0
      %v1138 = vpop.f32.mrb[0].mxu0
      %v1139 = vadd.f32 0.0, %v1138
      %v1140 = vpop.f32.mrb[0].mxu0
      %1141 = vmatprep.mubr.bf16.mxu0 %v740
      %1142 = vmatmul.mubr.bf16.gmra.mrb[0].mxu0 %v739
      %v1143 = vpop.f32.mrb[0].mxu0
      %v1144 = vadd.f32 0.0, %v1143
      %v1145 = vpop.f32.mrb[0].mxu0
      %v1146 = vpop.f32.mrb[0].mxu0
      %v1147 = vadd.f32 0.0, %v1146
      %v1148 = vpop.f32.mrb[0].mxu0
      %1149 = vmatprep.mubr.bf16.mxu0 %v742
      %1150 = vmatmul.mubr.bf16.gmra.mrb[0].mxu0 %v741
      %v1151 = vpop.f32.mrb[0].mxu0
      %v1152 = vadd.f32 0.0, %v1151
      %v1153 = vpop.f32.mrb[0].mxu0
      %v1154 = vpop.f32.mrb[0].mxu0
      %v1155 = vadd.f32 0.0, %v1154
      %v1156 = vpop.f32.mrb[0].mxu0
      %1157 = vmatprep.mubr.bf16.mxu0 %v744
      %1158 = vmatmul.mubr.bf16.gmra.mrb[0].mxu0 %v743
      %v1159 = vpop.f32.mrb[0].mxu0
      %v1160 = vadd.f32 0.0, %v1159
      %v1161 = vpop.f32.mrb[0].mxu0
      %v1162 = vpop.f32.mrb[0].mxu0
      %v1163 = vadd.f32 0.0, %v1162
      %v1164 = vpop.f32.mrb[0].mxu0
      %1165 = vmatprep.mubr.bf16.mxu0 %v746
      %1166 = vmatmul.mubr.bf16.gmra.mrb[0].mxu0 %v745
      %v1167 = vpop.f32.mrb[0].mxu0
      %v1168 = vadd.f32 0.0, %v1167
      %v1169 = vpop.f32.mrb[0].mxu0
      %v1170 = vpop.f32.mrb[0].mxu0
      %v1171 = vadd.f32 0.0, %v1170
      %v1172 = vpop.f32.mrb[0].mxu0
      %1173 = vmatprep.mubr.bf16.mxu0 %v748
      %1174 = vmatmul.mubr.bf16.gmra.mrb[0].mxu0 %v747
      %v1175 = vpop.f32.mrb[0].mxu0
      %v1176 = vadd.f32 0.0, %v1175
      %v1177 = vpop.f32.mrb[0].mxu0
      %v1178 = vpop.f32.mrb[0].mxu0
      %v1179 = vadd.f32 0.0, %v1178
      %v1180 = vpop.f32.mrb[0].mxu0
      %1181 = vmatprep.mubr.bf16.mxu0 %v750
      %1182 = vmatmul.mubr.bf16.gmra.mrb[0].mxu0 %v749
      %v1183 = vpop.f32.mrb[0].mxu0
      %v1184 = vadd.f32 0.0, %v1183
      %v1185 = vpop.f32.mrb[0].mxu0
      %v1186 = vpop.f32.mrb[0].mxu0
      %v1187 = vadd.f32 0.0, %v1186
      %v1188 = vpop.f32.mrb[0].mxu0
      %1189 = vmatprep.mubr.bf16.mxu0 %v752
      %1190 = vmatmul.mubr.bf16.gmra.mrb[0].mxu0 %v751
      %v1191 = vpop.f32.mrb[0].mxu0
      %v1192 = vadd.f32 0.0, %v1191
      %v1193 = vpop.f32.mrb[0].mxu0
      %v1194 = vpop.f32.mrb[0].mxu0
      %v1195 = vadd.f32 0.0, %v1194
      %v1196 = vpop.f32.mrb[0].mxu0
      %1197 = vmatprep.mubr.bf16.mxu0 %v754
      %1198 = vmatmul.mubr.bf16.gmra.mrb[0].mxu0 %v753
      %v1199 = vpop.f32.mrb[0].mxu0
      %v1200 = vadd.f32 0.0, %v1199
      %v1201 = vpop.f32.mrb[0].mxu0
      %v1202 = vpop.f32.mrb[0].mxu0
      %v1203 = vadd.f32 0.0, %v1202
      %v1204 = vpop.f32.mrb[0].mxu0
      %1205 = vmatprep.mubr.bf16.mxu0 %v756
      %1206 = vmatmul.mubr.bf16.gmra.mrb[0].mxu0 %v755
      %v1207 = vpop.f32.mrb[0].mxu0
      %v1208 = vadd.f32 0.0, %v1207
      %v1209 = vpop.f32.mrb[0].mxu0
      %v1210 = vpop.f32.mrb[0].mxu0
      %v1211 = vadd.f32 0.0, %v1210
      %v1212 = vpop.f32.mrb[0].mxu0
      %1213 = vmatprep.mubr.bf16.mxu0 %v758
      %1214 = vmatmul.mubr.bf16.gmra.mrb[0].mxu0 %v757
      %v1215 = vpop.f32.mrb[0].mxu0
      %v1216 = vadd.f32 0.0, %v1215
      %v1217 = vpop.f32.mrb[0].mxu0
      %v1218 = vpop.f32.mrb[0].mxu0
      %v1219 = vadd.f32 0.0, %v1218
      %v1220 = vpop.f32.mrb[0].mxu0
      %1221 = vmatprep.mubr.bf16.mxu0 %v760
      %1222 = vmatmul.mubr.bf16.gmra.mrb[0].mxu0 %v759
      %v1223 = vpop.f32.mrb[0].mxu0
      %v1224 = vadd.f32 0.0, %v1223
      %v1225 = vpop.f32.mrb[0].mxu0
      %v1226 = vpop.f32.mrb[0].mxu0
      %v1227 = vadd.f32 0.0, %v1226
      %v1228 = vpop.f32.mrb[0].mxu0
      %1229 = vmatprep.mubr.bf16.mxu0 %v762
      %1230 = vmatmul.mubr.bf16.gmra.mrb[0].mxu0 %v761
      %v1231 = vpop.f32.mrb[0].mxu0
      %v1232 = vadd.f32 0.0, %v1231
      %v1233 = vpop.f32.mrb[0].mxu0
      %v1234 = vpop.f32.mrb[0].mxu0
      %v1235 = vadd.f32 0.0, %v1234
      %v1236 = vpop.f32.mrb[0].mxu0
      %1237 = vmatprep.mubr.bf16.mxu0 %v764
      %1238 = vmatmul.mubr.bf16.gmra.mrb[0].mxu0 %v763
      %v1239 = vpop.f32.mrb[0].mxu0
      %v1240 = vadd.f32 0.0, %v1239
      %v1241 = vpop.f32.mrb[0].mxu0
      %v1242 = vpop.f32.mrb[0].mxu0
      %v1243 = vadd.f32 0.0, %v1242
      %v1244 = vpop.f32.mrb[0].mxu0
      %1245 = vmatprep.mubr.bf16.mxu0 %v766
      %1246 = vmatmul.mubr.bf16.gmra.mrb[0].mxu0 %v765
      %v1247 = vpop.f32.mrb[0].mxu0
      %v1248 = vadd.f32 0.0, %v1247
      %v1249 = vpop.f32.mrb[0].mxu0
      %v1250 = vpop.f32.mrb[0].mxu0
      %v1251 = vadd.f32 0.0, %v1250
      %v1252 = vpop.f32.mrb[0].mxu0
      %1253 = vmatprep.mubr.bf16.mxu0 %v768
      %1254 = vmatmul.mubr.bf16.gmra.mrb[0].mxu0 %v767
      %v1255 = vpop.f32.mrb[0].mxu0
      %v1256 = vadd.f32 0.0, %v1255
      %v1257 = vpop.f32.mrb[0].mxu0
      %v1258 = vpop.f32.mrb[0].mxu0
      %v1259 = vadd.f32 0.0, %v1258
      %v1260 = vpop.f32.mrb[0].mxu0
      %1261 = vmatprep.mubr.bf16.mxu0 %v770
      %1262 = vmatmul.mubr.bf16.gmra.mrb[0].mxu0 %v769
      %v1263 = vpop.f32.mrb[0].mxu0
      %v1264 = vadd.f32 0.0, %v1263
      %v1265 = vpop.f32.mrb[0].mxu0
      %v1266 = vpop.f32.mrb[0].mxu0
      %v1267 = vadd.f32 0.0, %v1266
      %v1268 = vpop.f32.mrb[0].mxu0
      %1269 = vmatprep.mubr.bf16.mxu0 %v772
      %1270 = vmatmul.mubr.bf16.gmra.mrb[0].mxu0 %v771
      %v1271 = vpop.f32.mrb[0].mxu0
      %v1272 = vadd.f32 0.0, %v1271
      %v1273 = vpop.f32.mrb[0].mxu0
      %v1274 = vpop.f32.mrb[0].mxu0
      %v1275 = vadd.f32 0.0, %v1274
      %v1276 = vpop.f32.mrb[0].mxu0
      %1277 = vmatprep.mubr.bf16.mxu0 %v774
      %1278 = vmatmul.mubr.bf16.gmra.mrb[0].mxu0 %v773
      %v1279 = vpop.f32.mrb[0].mxu0
      %v1280 = vadd.f32 0.0, %v1279
      %v1281 = vpop.f32.mrb[0].mxu0
      %v1282 = vpop.f32.mrb[0].mxu0
      %v1283 = vadd.f32 0.0, %v1282
      %v1284 = vpop.f32.mrb[0].mxu0
      %1285 = vmatprep.mubr.bf16.mxu0 %v776
      %1286 = vmatmul.mubr.bf16.gmra.mrb[0].mxu0 %v775
      %v1287 = vpop.f32.mrb[0].mxu0
      %v1288 = vadd.f32 0.0, %v1287
      %v1289 = vpop.f32.mrb[0].mxu0
      %v1290 = vpop.f32.mrb[0].mxu0
      %v1291 = vadd.f32 0.0, %v1290
      %v1292 = vpop.f32.mrb[0].mxu0
      %1293 = vmatprep.mubr.bf16.mxu0 %v778
      %1294 = vmatmul.mubr.bf16.gmra.mrb[0].mxu0 %v777
      %v1295 = vpop.f32.mrb[0].mxu0
      %v1296 = vadd.f32 0.0, %v1295
      %v1297 = vpop.f32.mrb[0].mxu0
      %v1298 = vpop.f32.mrb[0].mxu0
      %v1299 = vadd.f32 0.0, %v1298
      %v1300 = vpop.f32.mrb[0].mxu0
      %1301 = vmatprep.mubr.bf16.mxu0 %v780
      %1302 = vmatmul.mubr.bf16.gmra.mrb[0].mxu0 %v779
      %v1303 = vpop.f32.mrb[0].mxu0
      %v1304 = vadd.f32 0.0, %v1303
      %v1305 = vpop.f32.mrb[0].mxu0
      %v1306 = vpop.f32.mrb[0].mxu0
      %v1307 = vadd.f32 0.0, %v1306
      %v1308 = vpop.f32.mrb[0].mxu0
      %1309 = vmatprep.mubr.bf16.mxu0 %v782
      %1310 = vmatmul.mubr.bf16.gmra.mrb[0].mxu0 %v781
      %v1311 = vpop.f32.mrb[0].mxu0
      %v1312 = vadd.f32 0.0, %v1311
      %v1313 = vpop.f32.mrb[0].mxu0
      %v1314 = vpop.f32.mrb[0].mxu0
      %v1315 = vadd.f32 0.0, %v1314
      %v1316 = vpop.f32.mrb[0].mxu0
      %1317 = vmatprep.mubr.bf16.mxu0 %v784
      %1318 = vmatmul.mubr.bf16.gmra.mrb[0].mxu0 %v783
      %v1319 = vpop.f32.mrb[0].mxu0
      %v1320 = vadd.f32 0.0, %v1319
      %v1321 = vpop.f32.mrb[0].mxu0
      %v1322 = vpop.f32.mrb[0].mxu0
      %v1323 = vadd.f32 0.0, %v1322
      %v1324 = vpop.f32.mrb[0].mxu0
      %1325 = vmatprep.mubr.bf16.mxu0 %v786
      %1326 = vmatmul.mubr.bf16.gmra.mrb[0].mxu0 %v785
      %v1327 = vpop.f32.mrb[0].mxu0
      %v1328 = vadd.f32 0.0, %v1327
      %v1329 = vpop.f32.mrb[0].mxu0
      %v1330 = vpop.f32.mrb[0].mxu0
      %v1331 = vadd.f32 0.0, %v1330
      %v1332 = vpop.f32.mrb[0].mxu0
      %1333 = vmatprep.mubr.bf16.mxu0 %v788
      %1334 = vmatmul.mubr.bf16.gmra.mrb[0].mxu0 %v787
      %v1335 = vpop.f32.mrb[0].mxu0
      %v1336 = vadd.f32 0.0, %v1335
      %v1337 = vpop.f32.mrb[0].mxu0
      %v1338 = vpop.f32.mrb[0].mxu0
      %v1339 = vadd.f32 0.0, %v1338
      %v1340 = vpop.f32.mrb[0].mxu0
      %1341 = vmatprep.mubr.bf16.mxu0 %v790
      %1342 = vmatmul.mubr.bf16.gmra.mrb[0].mxu0 %v789
      %v1343 = vpop.f32.mrb[0].mxu0
      %v1344 = vadd.f32 0.0, %v1343
      %v1345 = vpop.f32.mrb[0].mxu0
      %v1346 = vpop.f32.mrb[0].mxu0
      %v1347 = vadd.f32 0.0, %v1346
      %v1348 = vpop.f32.mrb[0].mxu0
      %1349 = vmatprep.mubr.bf16.mxu0 %v792
      %1350 = vmatmul.mubr.bf16.gmra.mrb[0].mxu0 %v791
      %v1351 = vpop.f32.mrb[0].mxu0
      %v1352 = vadd.f32 0.0, %v1351
      %v1353 = vpop.f32.mrb[0].mxu0
      %v1354 = vpop.f32.mrb[0].mxu0
      %v1355 = vadd.f32 0.0, %v1354
      %v1356 = vpop.f32.mrb[0].mxu0
      %1357 = vmatprep.mubr.bf16.mxu0 %v794
      %1358 = vmatmul.mubr.bf16.gmra.mrb[0].mxu0 %v793
      %v1359 = vpop.f32.mrb[0].mxu0
      %v1360 = vadd.f32 0.0, %v1359
      %v1361 = vpop.f32.mrb[0].mxu0
      %v1362 = vpop.f32.mrb[0].mxu0
      %v1363 = vadd.f32 0.0, %v1362
      %v1364 = vpop.f32.mrb[0].mxu0
      %1365 = vmatprep.mubr.bf16.mxu0 %v796
      %1366 = vmatmul.mubr.bf16.gmra.mrb[0].mxu0 %v795
      %v1367 = vpop.f32.mrb[0].mxu0
      %v1368 = vadd.f32 0.0, %v1367
      %v1369 = vpop.f32.mrb[0].mxu0
      %v1370 = vpop.f32.mrb[0].mxu0
      %v1371 = vadd.f32 0.0, %v1370
      %v1372 = vpop.f32.mrb[0].mxu0
      %1373 = vmatprep.mubr.bf16.mxu0 %v798
      %1374 = vmatmul.mubr.bf16.gmra.mrb[0].mxu0 %v797
      %v1375 = vpop.f32.mrb[0].mxu0
      %v1376 = vadd.f32 0.0, %v1375
      %v1377 = vpop.f32.mrb[0].mxu0
      %v1378 = vpop.f32.mrb[0].mxu0
      %v1379 = vadd.f32 0.0, %v1378
      %v1380 = vpop.f32.mrb[0].mxu0
      %1381 = vmatprep.mubr.bf16.mxu0 %v800
      %1382 = vmatmul.mubr.bf16.gmra.mrb[0].mxu0 %v799
      %v1383 = vpop.f32.mrb[0].mxu0
      %v1384 = vadd.f32 0.0, %v1383
      %v1385 = vpop.f32.mrb[0].mxu0
      %v1386 = vpop.f32.mrb[0].mxu0
      %v1387 = vadd.f32 0.0, %v1386
      %v1388 = vpop.f32.mrb[0].mxu0
      %1389 = vmatprep.mubr.bf16.mxu0 %v802
      %1390 = vmatmul.mubr.bf16.gmra.mrb[0].mxu0 %v801
      %v1391 = vpop.f32.mrb[0].mxu0
      %v1392 = vadd.f32 0.0, %v1391
      %v1393 = vpop.f32.mrb[0].mxu0
      %v1394 = vpop.f32.mrb[0].mxu0
      %v1395 = vadd.f32 0.0, %v1394
      %v1396 = vpop.f32.mrb[0].mxu0
      %1397 = vmatprep.mubr.bf16.mxu0 %v804
      %1398 = vmatmul.mubr.bf16.gmra.mrb[0].mxu0 %v803
      %v1399 = vpop.f32.mrb[0].mxu0
      %v1400 = vadd.f32 0.0, %v1399
      %v1401 = vpop.f32.mrb[0].mxu0
      %v1402 = vpop.f32.mrb[0].mxu0
      %v1403 = vadd.f32 0.0, %v1402
      %v1404 = vpop.f32.mrb[0].mxu0
      %1405 = vmatprep.mubr.bf16.mxu0 %v806
      %1406 = vmatmul.mubr.bf16.gmra.mrb[0].mxu0 %v805
      %v1407 = vpop.f32.mrb[0].mxu0
      %v1408 = vadd.f32 0.0, %v1407
      %v1409 = vpop.f32.mrb[0].mxu0
      %v1410 = vpop.f32.mrb[0].mxu0
      %v1411 = vadd.f32 0.0, %v1410
      %v1412 = vpop.f32.mrb[0].mxu0
      %1413 = vmatprep.mubr.bf16.mxu0 %v808
      %1414 = vmatmul.mubr.bf16.gmra.mrb[0].mxu0 %v807
      %v1415 = vpop.f32.mrb[0].mxu0
      %v1416 = vadd.f32 0.0, %v1415
      %v1417 = vpop.f32.mrb[0].mxu0
      %v1418 = vpop.f32.mrb[0].mxu0
      %v1419 = vadd.f32 0.0, %v1418
      %v1420 = vpop.f32.mrb[0].mxu0
      %1421 = vmatprep.mubr.bf16.mxu0 %v810
      %1422 = vmatmul.mubr.bf16.gmra.mrb[0].mxu0 %v809
      %v1423 = vpop.f32.mrb[0].mxu0
      %v1424 = vadd.f32 0.0, %v1423
      %v1425 = vpop.f32.mrb[0].mxu0
      %v1426 = vpop.f32.mrb[0].mxu0
      %v1427 = vadd.f32 0.0, %v1426
      %v1428 = vpop.f32.mrb[0].mxu0
      %1429 = vmatprep.mubr.bf16.mxu0 %v812
      %1430 = vmatmul.mubr.bf16.gmra.mrb[0].mxu0 %v811
      %v1431 = vpop.f32.mrb[0].mxu0
      %v1432 = vadd.f32 0.0, %v1431
      %v1433 = vpop.f32.mrb[0].mxu0
      %v1434 = vpop.f32.mrb[0].mxu0
      %v1435 = vadd.f32 0.0, %v1434
      %v1436 = vpop.f32.mrb[0].mxu0
      %1437 = vmatprep.mubr.bf16.mxu0 %v814
      %1438 = vmatmul.mubr.bf16.gmra.mrb[0].mxu0 %v813
      %v1439 = vpop.f32.mrb[0].mxu0
      %v1440 = vadd.f32 0.0, %v1439
      %v1441 = vpop.f32.mrb[0].mxu0
      %v1442 = vpop.f32.mrb[0].mxu0
      %v1443 = vadd.f32 0.0, %v1442
      %v1444 = vpop.f32.mrb[0].mxu0
      %1445 = vmatprep.mubr.bf16.mxu0 %v816
      %1446 = vmatmul.mubr.bf16.gmra.mrb[0].mxu0 %v815
      %v1447 = vpop.f32.mrb[0].mxu0
      %v1448 = vadd.f32 0.0, %v1447
      %v1449 = vpop.f32.mrb[0].mxu0
      %v1450 = vpop.f32.mrb[0].mxu0
      %v1451 = vadd.f32 0.0, %v1450
      %v1452 = vpop.f32.mrb[0].mxu0
      %1453 = vmatprep.mubr.bf16.mxu0 %v818
      %1454 = vmatmul.mubr.bf16.gmra.mrb[0].mxu0 %v817
      %v1455 = vpop.f32.mrb[0].mxu0
      %v1456 = vadd.f32 0.0, %v1455
      %v1457 = vpop.f32.mrb[0].mxu0
      %v1458 = vpop.f32.mrb[0].mxu0
      %v1459 = vadd.f32 0.0, %v1458
      %v1460 = vpop.f32.mrb[0].mxu0
      %1461 = vmatprep.mubr.bf16.mxu0 %v820
      %1462 = vmatmul.mubr.bf16.gmra.mrb[0].mxu0 %v819
      %v1463 = vpop.f32.mrb[0].mxu0
      %v1464 = vadd.f32 0.0, %v1463
      %v1465 = vpop.f32.mrb[0].mxu0
      %v1466 = vpop.f32.mrb[0].mxu0
      %v1467 = vadd.f32 0.0, %v1466
      %v1468 = vpop.f32.mrb[0].mxu0
      %1469 = vmatprep.mubr.bf16.mxu0 %v822
      %1470 = vmatmul.mubr.bf16.gmra.mrb[0].mxu0 %v821
      %v1471 = vpop.f32.mrb[0].mxu0
      %v1472 = vadd.f32 0.0, %v1471
      %v1473 = vpop.f32.mrb[0].mxu0
      %v1474 = vpop.f32.mrb[0].mxu0
      %v1475 = vadd.f32 0.0, %v1474
      %v1476 = vpop.f32.mrb[0].mxu0
      %1477 = vmatprep.mubr.bf16.mxu0 %v824
      %1478 = vmatmul.mubr.bf16.gmra.mrb[0].mxu0 %v823
      %v1479 = vpop.f32.mrb[0].mxu0
      %v1480 = vadd.f32 0.0, %v1479
      %v1481 = vpop.f32.mrb[0].mxu0
      %v1482 = vpop.f32.mrb[0].mxu0
      %v1483 = vadd.f32 0.0, %v1482
      %v1484 = vpop.f32.mrb[0].mxu0
      %1485 = vmatprep.mubr.bf16.mxu0 %v826
      %1486 = vmatmul.mubr.bf16.gmra.mrb[0].mxu0 %v825
      %v1487 = vpop.f32.mrb[0].mxu0
      %v1488 = vadd.f32 0.0, %v1487
      %v1489 = vpop.f32.mrb[0].mxu0
      %v1490 = vpop.f32.mrb[0].mxu0
      %v1491 = vadd.f32 0.0, %v1490
      %v1492 = vpop.f32.mrb[0].mxu0
      %1493 = vmatprep.mubr.bf16.mxu0 %v828
      %1494 = vmatmul.mubr.bf16.gmra.mrb[0].mxu0 %v827
      %v1495 = vpop.f32.mrb[0].mxu0
      %v1496 = vadd.f32 0.0, %v1495
      %v1497 = vpop.f32.mrb[0].mxu0
      %v1498 = vpop.f32.mrb[0].mxu0
      %v1499 = vadd.f32 0.0, %v1498
      %v1500 = vpop.f32.mrb[0].mxu0
      %1501 = vmatprep.mubr.bf16.mxu0 %v830
      %1502 = vmatmul.mubr.bf16.gmra.mrb[0].mxu0 %v829
      %v1503 = vpop.f32.mrb[0].mxu0
      %v1504 = vadd.f32 0.0, %v1503
      %v1505 = vpop.f32.mrb[0].mxu0
      %v1506 = vpop.f32.mrb[0].mxu0
      %v1507 = vadd.f32 0.0, %v1506
      %v1508 = vpop.f32.mrb[0].mxu0
      %1509 = vmatprep.mubr.bf16.mxu0 %v832
      %1510 = vmatmul.mubr.bf16.gmra.mrb[0].mxu0 %v831
      %v1511 = vpop.f32.mrb[0].mxu0
      %v1512 = vadd.f32 0.0, %v1511
      %v1513 = vpop.f32.mrb[0].mxu0
      %v1514 = vpop.f32.mrb[0].mxu0
      %v1515 = vadd.f32 0.0, %v1514
      %v1516 = vpop.f32.mrb[0].mxu0
      %1517 = vmatprep.mubr.bf16.mxu0 %v834
      %1518 = vmatmul.mubr.bf16.gmra.mrb[0].mxu0 %v833
      %v1519 = vpop.f32.mrb[0].mxu0
      %v1520 = vadd.f32 0.0, %v1519
      %v1521 = vpop.f32.mrb[0].mxu0
      %v1522 = vpop.f32.mrb[0].mxu0
      %v1523 = vadd.f32 0.0, %v1522
      %v1524 = vpop.f32.mrb[0].mxu0
      %1525 = vmatprep.mubr.bf16.mxu0 %v836
      %1526 = vmatmul.mubr.bf16.gmra.mrb[0].mxu0 %v835
      %v1527 = vpop.f32.mrb[0].mxu0
      %v1528 = vadd.f32 0.0, %v1527
      %v1529 = vpop.f32.mrb[0].mxu0
      %v1530 = vpop.f32.mrb[0].mxu0
      %v1531 = vadd.f32 0.0, %v1530
      %v1532 = vpop.f32.mrb[0].mxu0
      %1533 = vmatprep.mubr.bf16.mxu0 %v838
      %1534 = vmatmul.mubr.bf16.gmra.mrb[0].mxu0 %v837
      %v1535 = vpop.f32.mrb[0].mxu0
      %v1536 = vadd.f32 0.0, %v1535
      %v1537 = vpop.f32.mrb[0].mxu0
      %v1538 = vpop.f32.mrb[0].mxu0
      %v1539 = vadd.f32 0.0, %v1538
      %v1540 = vpop.f32.mrb[0].mxu0
      %1541 = vmatprep.mubr.bf16.mxu0 %v840
      %1542 = vmatmul.mubr.bf16.gmra.mrb[0].mxu0 %v839
      %v1543 = vpop.f32.mrb[0].mxu0
      %v1544 = vadd.f32 0.0, %v1543
      %v1545 = vpop.f32.mrb[0].mxu0
      %v1546 = vpop.f32.mrb[0].mxu0
      %v1547 = vadd.f32 0.0, %v1546
      %v1548 = vpop.f32.mrb[0].mxu0
      %1549 = vmatprep.mubr.bf16.mxu0 %v842
      %1550 = vmatmul.mubr.bf16.gmra.mrb[0].mxu0 %v841
      %v1551 = vpop.f32.mrb[0].mxu0
      %v1552 = vadd.f32 0.0, %v1551
      %v1553 = vpop.f32.mrb[0].mxu0
      %v1554 = vpop.f32.mrb[0].mxu0
      %v1555 = vadd.f32 0.0, %v1554
      %v1556 = vpop.f32.mrb[0].mxu0
      %1557 = vmatprep.mubr.bf16.mxu0 %v844
      %1558 = vmatmul.mubr.bf16.gmra.mrb[0].mxu0 %v843
      %v1559 = vpop.f32.mrb[0].mxu0
      %v1560 = vadd.f32 0.0, %v1559
      %v1561 = vpop.f32.mrb[0].mxu0
      %v1562 = vpop.f32.mrb[0].mxu0
      %v1563 = vadd.f32 0.0, %v1562
      %v1564 = vpop.f32.mrb[0].mxu0
      %1565 = vmatprep.mubr.bf16.mxu0 %v846
      %1566 = vmatmul.mubr.bf16.gmra.mrb[0].mxu0 %v845
      %v1567 = vpop.f32.mrb[0].mxu0
      %v1568 = vadd.f32 0.0, %v1567
      %v1569 = vpop.f32.mrb[0].mxu0
      %v1570 = vpop.f32.mrb[0].mxu0
      %v1571 = vadd.f32 0.0, %v1570
      %v1572 = vpop.f32.mrb[0].mxu0
      %1573 = vmatprep.mubr.bf16.mxu0 %v848
      %1574 = vmatmul.mubr.bf16.gmra.mrb[0].mxu0 %v847
      %v1575 = vpop.f32.mrb[0].mxu0
      %v1576 = vadd.f32 0.0, %v1575
      %v1577 = vpop.f32.mrb[0].mxu0
      %v1578 = vpop.f32.mrb[0].mxu0
      %v1579 = vadd.f32 0.0, %v1578
      %v1580 = vpop.f32.mrb[0].mxu0
      %1581 = vmatprep.mubr.bf16.mxu0 %v850
      %1582 = vmatmul.mubr.bf16.gmra.mrb[0].mxu0 %v849
      %v1583 = vpop.f32.mrb[0].mxu0
      %v1584 = vadd.f32 0.0, %v1583
      %v1585 = vpop.f32.mrb[0].mxu0
      %v1586 = vpop.f32.mrb[0].mxu0
      %v1587 = vadd.f32 0.0, %v1586
      %v1588 = vpop.f32.mrb[0].mxu0
      %1589 = vmatprep.mubr.bf16.mxu0 %v852
      %1590 = vmatmul.mubr.bf16.gmra.mrb[0].mxu0 %v851
      %v1591 = vpop.f32.mrb[0].mxu0
      %v1592 = vadd.f32 0.0, %v1591
      %v1593 = vpop.f32.mrb[0].mxu0
      %v1594 = vpop.f32.mrb[0].mxu0
      %v1595 = vadd.f32 0.0, %v1594
      %v1596 = vpop.f32.mrb[0].mxu0
      %1597 = vmatprep.mubr.bf16.mxu0 %v854
      %1598 = vmatmul.mubr.bf16.gmra.mrb[0].mxu0 %v853
      %v1599 = vpop.f32.mrb[0].mxu0
      %v1600 = vadd.f32 0.0, %v1599
      %v1601 = vpop.f32.mrb[0].mxu0
      %v1602 = vpop.f32.mrb[0].mxu0
      %v1603 = vadd.f32 0.0, %v1602
      %v1604 = vpop.f32.mrb[0].mxu0
      %1605 = vmatprep.mubr.bf16.mxu0 %v856
      %1606 = vmatmul.mubr.bf16.gmra.mrb[0].mxu0 %v855
      %v1607 = vpop.f32.mrb[0].mxu0
      %v1608 = vadd.f32 0.0, %v1607
      %v1609 = vpop.f32.mrb[0].mxu0
      %v1610 = vpop.f32.mrb[0].mxu0
      %v1611 = vadd.f32 0.0, %v1610
      %v1612 = vpop.f32.mrb[0].mxu0
      %1613 = vmatprep.mubr.bf16.mxu0 %v858
      %1614 = vmatmul.mubr.bf16.gmra.mrb[0].mxu0 %v857
      %v1615 = vpop.f32.mrb[0].mxu0
      %v1616 = vadd.f32 0.0, %v1615
      %v1617 = vpop.f32.mrb[0].mxu0
      %v1618 = vpop.f32.mrb[0].mxu0
      %v1619 = vadd.f32 0.0, %v1618
      %v1620 = vpop.f32.mrb[0].mxu0
      %1621 = vmatprep.mubr.bf16.mxu0 %v860
      %1622 = vmatmul.mubr.bf16.gmra.mrb[0].mxu0 %v859
      %v1623 = vpop.f32.mrb[0].mxu0
      %v1624 = vadd.f32 0.0, %v1623
      %v1625 = vpop.f32.mrb[0].mxu0
      %v1626 = vpop.f32.mrb[0].mxu0
      %v1627 = vadd.f32 0.0, %v1626
      %v1628 = vpop.f32.mrb[0].mxu0
      %1629 = vdwg.mxu0
      %s1630 = smul.u32 %s15, 1024
      %s1631 = scalar_lea.vmem [#allocation2], %s1630
      %1632 = vst [vmem:[%s1631] sm:$0xff] %v1120
      %1633 = vst [vmem:[%s1631 + $0x8] sm:$0xff] %v1123
      %1634 = vst [vmem:[%s1631 + $0x10] sm:$0xff] %v1128
      %1635 = vst [vmem:[%s1631 + $0x18] sm:$0xff] %v1131
      %1636 = vst [vmem:[%s1631 + $0x20] sm:$0xff] %v1136
      %1637 = vst [vmem:[%s1631 + $0x28] sm:$0xff] %v1139
      %1638 = vst [vmem:[%s1631 + $0x30] sm:$0xff] %v1144
      %1639 = vst [vmem:[%s1631 + $0x38] sm:$0xff] %v1147
      %1640 = vst [vmem:[%s1631 + $0x40] sm:$0xff] %v1152
      %1641 = vst [vmem:[%s1631 + $0x48] sm:$0xff] %v1155
      %1642 = vst [vmem:[%s1631 + $0x50] sm:$0xff] %v1160
      %1643 = vst [vmem:[%s1631 + $0x58] sm:$0xff] %v1163
      %1644 = vst [vmem:[%s1631 + $0x60] sm:$0xff] %v1168
      %1645 = vst [vmem:[%s1631 + $0x68] sm:$0xff] %v1171
      %1646 = vst [vmem:[%s1631 + $0x70] sm:$0xff] %v1176
      %1647 = vst [vmem:[%s1631 + $0x78] sm:$0xff] %v1179
      %1648 = vst [vmem:[%s1631 + $0x80] sm:$0xff] %v1184
      %1649 = vst [vmem:[%s1631 + $0x88] sm:$0xff] %v1187
      %1650 = vst [vmem:[%s1631 + $0x90] sm:$0xff] %v1192
      %1651 = vst [vmem:[%s1631 + $0x98] sm:$0xff] %v1195
      %1652 = vst [vmem:[%s1631 + $0xa0] sm:$0xff] %v1200
      %1653 = vst [vmem:[%s1631 + $0xa8] sm:$0xff] %v1203
      %1654 = vst [vmem:[%s1631 + $0xb0] sm:$0xff] %v1208
      %1655 = vst [vmem:[%s1631 + $0xb8] sm:$0xff] %v1211
      %1656 = vst [vmem:[%s1631 + $0xc0] sm:$0xff] %v1216
      %1657 = vst [vmem:[%s1631 + $0xc8] sm:$0xff] %v1219
      %1658 = vst [vmem:[%s1631 + $0xd0] sm:$0xff] %v1224
      %1659 = vst [vmem:[%s1631 + $0xd8] sm:$0xff] %v1227
      %1660 = vst [vmem:[%s1631 + $0xe0] sm:$0xff] %v1232
      %1661 = vst [vmem:[%s1631 + $0xe8] sm:$0xff] %v1235
      %1662 = vst [vmem:[%s1631 + $0xf0] sm:$0xff] %v1240
      %1663 = vst [vmem:[%s1631 + $0xf8] sm:$0xff] %v1243
      %1664 = vst [vmem:[%s1631 + $0x100] sm:$0xff] %v1248
      %1665 = vst [vmem:[%s1631 + $0x108] sm:$0xff] %v1251
      %1666 = vst [vmem:[%s1631 + $0x110] sm:$0xff] %v1256
      %1667 = vst [vmem:[%s1631 + $0x118] sm:$0xff] %v1259
      %1668 = vst [vmem:[%s1631 + $0x120] sm:$0xff] %v1264
      %1669 = vst [vmem:[%s1631 + $0x128] sm:$0xff] %v1267
      %1670 = vst [vmem:[%s1631 + $0x130] sm:$0xff] %v1272
      %1671 = vst [vmem:[%s1631 + $0x138] sm:$0xff] %v1275
      %1672 = vst [vmem:[%s1631 + $0x140] sm:$0xff] %v1280
      %1673 = vst [vmem:[%s1631 + $0x148] sm:$0xff] %v1283
      %1674 = vst [vmem:[%s1631 + $0x150] sm:$0xff] %v1288
      %1675 = vst [vmem:[%s1631 + $0x158] sm:$0xff] %v1291
      %1676 = vst [vmem:[%s1631 + $0x160] sm:$0xff] %v1296
      %1677 = vst [vmem:[%s1631 + $0x168] sm:$0xff] %v1299
      %1678 = vst [vmem:[%s1631 + $0x170] sm:$0xff] %v1304
      %1679 = vst [vmem:[%s1631 + $0x178] sm:$0xff] %v1307
      %1680 = vst [vmem:[%s1631 + $0x180] sm:$0xff] %v1312
      %1681 = vst [vmem:[%s1631 + $0x188] sm:$0xff] %v1315
      %1682 = vst [vmem:[%s1631 + $0x190] sm:$0xff] %v1320
      %1683 = vst [vmem:[%s1631 + $0x198] sm:$0xff] %v1323
      %1684 = vst [vmem:[%s1631 + $0x1a0] sm:$0xff] %v1328
      %1685 = vst [vmem:[%s1631 + $0x1a8] sm:$0xff] %v1331
      %1686 = vst [vmem:[%s1631 + $0x1b0] sm:$0xff] %v1336
      %1687 = vst [vmem:[%s1631 + $0x1b8] sm:$0xff] %v1339
      %1688 = vst [vmem:[%s1631 + $0x1c0] sm:$0xff] %v1344
      %1689 = vst [vmem:[%s1631 + $0x1c8] sm:$0xff] %v1347
      %1690 = vst [vmem:[%s1631 + $0x1d0] sm:$0xff] %v1352
      %1691 = vst [vmem:[%s1631 + $0x1d8] sm:$0xff] %v1355
      %1692 = vst [vmem:[%s1631 + $0x1e0] sm:$0xff] %v1360
      %1693 = vst [vmem:[%s1631 + $0x1e8] sm:$0xff] %v1363
      %1694 = vst [vmem:[%s1631 + $0x1f0] sm:$0xff] %v1368
      %1695 = vst [vmem:[%s1631 + $0x1f8] sm:$0xff] %v1371
      %1696 = vst [vmem:[%s1631 + $0x200] sm:$0xff] %v1376
      %1697 = vst [vmem:[%s1631 + $0x208] sm:$0xff] %v1379
      %1698 = vst [vmem:[%s1631 + $0x210] sm:$0xff] %v1384
      %1699 = vst [vmem:[%s1631 + $0x218] sm:$0xff] %v1387
      %1700 = vst [vmem:[%s1631 + $0x220] sm:$0xff] %v1392
      %1701 = vst [vmem:[%s1631 + $0x228] sm:$0xff] %v1395
      %1702 = vst [vmem:[%s1631 + $0x230] sm:$0xff] %v1400
      %1703 = vst [vmem:[%s1631 + $0x238] sm:$0xff] %v1403
      %1704 = vst [vmem:[%s1631 + $0x240] sm:$0xff] %v1408
      %1705 = vst [vmem:[%s1631 + $0x248] sm:$0xff] %v1411
      %1706 = vst [vmem:[%s1631 + $0x250] sm:$0xff] %v1416
      %1707 = vst [vmem:[%s1631 + $0x258] sm:$0xff] %v1419
      %1708 = vst [vmem:[%s1631 + $0x260] sm:$0xff] %v1424
      %1709 = vst [vmem:[%s1631 + $0x268] sm:$0xff] %v1427
      %1710 = vst [vmem:[%s1631 + $0x270] sm:$0xff] %v1432
      %1711 = vst [vmem:[%s1631 + $0x278] sm:$0xff] %v1435
      %1712 = vst [vmem:[%s1631 + $0x280] sm:$0xff] %v1440
      %1713 = vst [vmem:[%s1631 + $0x288] sm:$0xff] %v1443
      %1714 = vst [vmem:[%s1631 + $0x290] sm:$0xff] %v1448
      %1715 = vst [vmem:[%s1631 + $0x298] sm:$0xff] %v1451
      %1716 = vst [vmem:[%s1631 + $0x2a0] sm:$0xff] %v1456
      %1717 = vst [vmem:[%s1631 + $0x2a8] sm:$0xff] %v1459
      %1718 = vst [vmem:[%s1631 + $0x2b0] sm:$0xff] %v1464
      %1719 = vst [vmem:[%s1631 + $0x2b8] sm:$0xff] %v1467
      %1720 = vst [vmem:[%s1631 + $0x2c0] sm:$0xff] %v1472
      %1721 = vst [vmem:[%s1631 + $0x2c8] sm:$0xff] %v1475
      %1722 = vst [vmem:[%s1631 + $0x2d0] sm:$0xff] %v1480
      %1723 = vst [vmem:[%s1631 + $0x2d8] sm:$0xff] %v1483
      %1724 = vst [vmem:[%s1631 + $0x2e0] sm:$0xff] %v1488
      %1725 = vst [vmem:[%s1631 + $0x2e8] sm:$0xff] %v1491
      %1726 = vst [vmem:[%s1631 + $0x2f0] sm:$0xff] %v1496
      %1727 = vst [vmem:[%s1631 + $0x2f8] sm:$0xff] %v1499
      %1728 = vst [vmem:[%s1631 + $0x300] sm:$0xff] %v1504
      %1729 = vst [vmem:[%s1631 + $0x308] sm:$0xff] %v1507
      %1730 = vst [vmem:[%s1631 + $0x310] sm:$0xff] %v1512
      %1731 = vst [vmem:[%s1631 + $0x318] sm:$0xff] %v1515
      %1732 = vst [vmem:[%s1631 + $0x320] sm:$0xff] %v1520
      %1733 = vst [vmem:[%s1631 + $0x328] sm:$0xff] %v1523
      %1734 = vst [vmem:[%s1631 + $0x330] sm:$0xff] %v1528
      %1735 = vst [vmem:[%s1631 + $0x338] sm:$0xff] %v1531
      %1736 = vst [vmem:[%s1631 + $0x340] sm:$0xff] %v1536
      %1737 = vst [vmem:[%s1631 + $0x348] sm:$0xff] %v1539
      %1738 = vst [vmem:[%s1631 + $0x350] sm:$0xff] %v1544
      %1739 = vst [vmem:[%s1631 + $0x358] sm:$0xff] %v1547
      %1740 = vst [vmem:[%s1631 + $0x360] sm:$0xff] %v1552
      %1741 = vst [vmem:[%s1631 + $0x368] sm:$0xff] %v1555
      %1742 = vst [vmem:[%s1631 + $0x370] sm:$0xff] %v1560
      %1743 = vst [vmem:[%s1631 + $0x378] sm:$0xff] %v1563
      %1744 = vst [vmem:[%s1631 + $0x380] sm:$0xff] %v1568
      %1745 = vst [vmem:[%s1631 + $0x388] sm:$0xff] %v1571
      %1746 = vst [vmem:[%s1631 + $0x390] sm:$0xff] %v1576
      %1747 = vst [vmem:[%s1631 + $0x398] sm:$0xff] %v1579
      %1748 = vst [vmem:[%s1631 + $0x3a0] sm:$0xff] %v1584
      %1749 = vst [vmem:[%s1631 + $0x3a8] sm:$0xff] %v1587
      %1750 = vst [vmem:[%s1631 + $0x3b0] sm:$0xff] %v1592
      %1751 = vst [vmem:[%s1631 + $0x3b8] sm:$0xff] %v1595
      %1752 = vst [vmem:[%s1631 + $0x3c0] sm:$0xff] %v1600
      %1753 = vst [vmem:[%s1631 + $0x3c8] sm:$0xff] %v1603
      %1754 = vst [vmem:[%s1631 + $0x3d0] sm:$0xff] %v1608
      %1755 = vst [vmem:[%s1631 + $0x3d8] sm:$0xff] %v1611
      %1756 = vst [vmem:[%s1631 + $0x3e0] sm:$0xff] %v1616
      %1757 = vst [vmem:[%s1631 + $0x3e8] sm:$0xff] %v1619
      %1758 = vst [vmem:[%s1631 + $0x3f0] sm:$0xff] %v1624
      %1759 = vst [vmem:[%s1631 + $0x3f8] sm:$0xff] %v1627
      %p1760 = scmp.eq.s32.totalorder %s15, 0
      // Predicated region
      $region37: #{gnet_forward.8} parent=35 // pred_check
        %p1761 = pneg %p1760
      $region38: #{gnet_forward.8} parent=35 // pred_check_branch
        %1763 = sbr.rel (%p1761) target = $region40
      $region39: #{gnet_forward.8} parent=35 // pred_region
        %1764 = vst [vmem:[#allocation3] sm:$0x1] 0.0
      $region40: #{gnet_forward.8} parent=35 // pred_fallthru
        _
      %v1765 = vld [vmem:[#allocation3] sm:$0x1]
      %v1766 = vadd.f32 %v1120, %v1123
      %v1767 = vadd.f32 %v1766, %v1128
      %v1768 = vadd.f32 %v1767, %v1131
      %v1769 = vadd.f32 %v1768, %v1136
      %v1770 = vadd.f32 %v1769, %v1139
      %v1771 = vadd.f32 %v1770, %v1144
      %v1772 = vadd.f32 %v1771, %v1147
      %v1773 = vadd.f32 %v1772, %v1152
      %v1774 = vadd.f32 %v1773, %v1155
      %v1775 = vadd.f32 %v1774, %v1160
      %v1776 = vadd.f32 %v1775, %v1163
      %v1777 = vadd.f32 %v1776, %v1168
      %v1778 = vadd.f32 %v1777, %v1171
      %v1779 = vadd.f32 %v1778, %v1176
      %v1780 = vadd.f32 %v1779, %v1179
      %v1781 = vadd.f32 %v1780, %v1184
      %v1782 = vadd.f32 %v1781, %v1187
      %v1783 = vadd.f32 %v1782, %v1192
      %v1784 = vadd.f32 %v1783, %v1195
      %v1785 = vadd.f32 %v1784, %v1200
      %v1786 = vadd.f32 %v1785, %v1203
      %v1787 = vadd.f32 %v1786, %v1208
      %v1788 = vadd.f32 %v1787, %v1211
      %v1789 = vadd.f32 %v1788, %v1216
      %v1790 = vadd.f32 %v1789, %v1219
      %v1791 = vadd.f32 %v1790, %v1224
      %v1792 = vadd.f32 %v1791, %v1227
      %v1793 = vadd.f32 %v1792, %v1232
      %v1794 = vadd.f32 %v1793, %v1235
      %v1795 = vadd.f32 %v1794, %v1240
      %v1796 = vadd.f32 %v1795, %v1243
      %v1797 = vadd.f32 %v1796, %v1248
      %v1798 = vadd.f32 %v1797, %v1251
      %v1799 = vadd.f32 %v1798, %v1256
      %v1800 = vadd.f32 %v1799, %v1259
      %v1801 = vadd.f32 %v1800, %v1264
      %v1802 = vadd.f32 %v1801, %v1267
      %v1803 = vadd.f32 %v1802, %v1272
      %v1804 = vadd.f32 %v1803, %v1275
      %v1805 = vadd.f32 %v1804, %v1280
      %v1806 = vadd.f32 %v1805, %v1283
      %v1807 = vadd.f32 %v1806, %v1288
      %v1808 = vadd.f32 %v1807, %v1291
      %v1809 = vadd.f32 %v1808, %v1296
      %v1810 = vadd.f32 %v1809, %v1299
      %v1811 = vadd.f32 %v1810, %v1304
      %v1812 = vadd.f32 %v1811, %v1307
      %v1813 = vadd.f32 %v1812, %v1312
      %v1814 = vadd.f32 %v1813, %v1315
      %v1815 = vadd.f32 %v1814, %v1320
      %v1816 = vadd.f32 %v1815, %v1323
      %v1817 = vadd.f32 %v1816, %v1328
      %v1818 = vadd.f32 %v1817, %v1331
      %v1819 = vadd.f32 %v1818, %v1336
      %v1820 = vadd.f32 %v1819, %v1339
      %v1821 = vadd.f32 %v1820, %v1344
      %v1822 = vadd.f32 %v1821, %v1347
      %v1823 = vadd.f32 %v1822, %v1352
      %v1824 = vadd.f32 %v1823, %v1355
      %v1825 = vadd.f32 %v1824, %v1360
      %v1826 = vadd.f32 %v1825, %v1363
      %v1827 = vadd.f32 %v1826, %v1368
      %v1828 = vadd.f32 %v1827, %v1371
      %v1829 = vadd.f32 %v1828, %v1376
      %v1830 = vadd.f32 %v1829, %v1379
      %v1831 = vadd.f32 %v1830, %v1384
      %v1832 = vadd.f32 %v1831, %v1387
      %v1833 = vadd.f32 %v1832, %v1392
      %v1834 = vadd.f32 %v1833, %v1395
      %v1835 = vadd.f32 %v1834, %v1400
      %v1836 = vadd.f32 %v1835, %v1403
      %v1837 = vadd.f32 %v1836, %v1408
      %v1838 = vadd.f32 %v1837, %v1411
      %v1839 = vadd.f32 %v1838, %v1416
      %v1840 = vadd.f32 %v1839, %v1419
      %v1841 = vadd.f32 %v1840, %v1424
      %v1842 = vadd.f32 %v1841, %v1427
      %v1843 = vadd.f32 %v1842, %v1432
      %v1844 = vadd.f32 %v1843, %v1435
      %v1845 = vadd.f32 %v1844, %v1440
      %v1846 = vadd.f32 %v1845, %v1443
      %v1847 = vadd.f32 %v1846, %v1448
      %v1848 = vadd.f32 %v1847, %v1451
      %v1849 = vadd.f32 %v1848, %v1456
      %v1850 = vadd.f32 %v1849, %v1459
      %v1851 = vadd.f32 %v1850, %v1464
      %v1852 = vadd.f32 %v1851, %v1467
      %v1853 = vadd.f32 %v1852, %v1472
      %v1854 = vadd.f32 %v1853, %v1475
      %v1855 = vadd.f32 %v1854, %v1480
      %v1856 = vadd.f32 %v1855, %v1483
      %v1857 = vadd.f32 %v1856, %v1488
      %v1858 = vadd.f32 %v1857, %v1491
      %v1859 = vadd.f32 %v1858, %v1496
      %v1860 = vadd.f32 %v1859, %v1499
      %v1861 = vadd.f32 %v1860, %v1504
      %v1862 = vadd.f32 %v1861, %v1507
      %v1863 = vadd.f32 %v1862, %v1512
      %v1864 = vadd.f32 %v1863, %v1515
      %v1865 = vadd.f32 %v1864, %v1520
      %v1866 = vadd.f32 %v1865, %v1523
      %v1867 = vadd.f32 %v1866, %v1528
      %v1868 = vadd.f32 %v1867, %v1531
      %v1869 = vadd.f32 %v1868, %v1536
      %v1870 = vadd.f32 %v1869, %v1539
      %v1871 = vadd.f32 %v1870, %v1544
      %v1872 = vadd.f32 %v1871, %v1547
      %v1873 = vadd.f32 %v1872, %v1552
      %v1874 = vadd.f32 %v1873, %v1555
      %v1875 = vadd.f32 %v1874, %v1560
      %v1876 = vadd.f32 %v1875, %v1563
      %v1877 = vadd.f32 %v1876, %v1568
      %v1878 = vadd.f32 %v1877, %v1571
      %v1879 = vadd.f32 %v1878, %v1576
      %v1880 = vadd.f32 %v1879, %v1579
      %v1881 = vadd.f32 %v1880, %v1584
      %v1882 = vadd.f32 %v1881, %v1587
      %v1883 = vadd.f32 %v1882, %v1592
      %v1884 = vadd.f32 %v1883, %v1595
      %v1885 = vadd.f32 %v1884, %v1600
      %v1886 = vadd.f32 %v1885, %v1603
      %v1887 = vadd.f32 %v1886, %v1608
      %v1888 = vadd.f32 %v1887, %v1611
      %v1889 = vadd.f32 %v1888, %v1616
      %v1890 = vadd.f32 %v1889, %v1619
      %v1891 = vadd.f32 %v1890, %v1624
      %v1892 = vadd.f32 %v1891, %v1627
      %v1893 = vrot.slane %v1892, 4
      %v1894 = vadd.f32 %v1892, %v1893
      %v1895 = vrot.slane %v1894, 2
      %v1896 = vadd.f32 %v1894, %v1895
      %v1897 = vrot.slane %v1896, 1
      %v1898 = vadd.f32 %v1896, %v1897
      %v1899 = vadd.f32 %v1765, %v1898
      %1900 = vst [vmem:[#allocation3] sm:$0x1] %v1899
      %p1901 = scmp.eq.s32.totalorder %s15, 1
      // Predicated region
      $region41: #{gnet_forward.8} parent=35 // pred_check
        %p1902 = pneg %p1901
      $region42: #{gnet_forward.8} parent=35 // pred_check_branch
        %1904 = sbr.rel (%p1902) target = $region44
      $region43: #{gnet_forward.8} parent=35 // pred_region
        %v1905 = vld [vmem:[#allocation3] sm:$0x1]
        %v1906 = vmul.f32 %v1905, 0.00048828125
        %v1907 = vld [vmem:[#allocation2] sm:$0xff]
        %v1908 = vld [vmem:[#allocation2 + $0x8] sm:$0xff]
        %v1909 = vld [vmem:[#allocation2 + $0x10] sm:$0xff]
        %v1910 = vld [vmem:[#allocation2 + $0x18] sm:$0xff]
        %v1911 = vld [vmem:[#allocation2 + $0x20] sm:$0xff]
        %v1912 = vld [vmem:[#allocation2 + $0x28] sm:$0xff]
        %v1913 = vld [vmem:[#allocation2 + $0x30] sm:$0xff]
        %v1914 = vld [vmem:[#allocation2 + $0x38] sm:$0xff]
        %v1915 = vld [vmem:[#allocation2 + $0x40] sm:$0xff]
        %v1916 = vld [vmem:[#allocation2 + $0x48] sm:$0xff]
        %v1917 = vld [vmem:[#allocation2 + $0x50] sm:$0xff]
        %v1918 = vld [vmem:[#allocation2 + $0x58] sm:$0xff]
        %v1919 = vld [vmem:[#allocation2 + $0x60] sm:$0xff]
        %v1920 = vld [vmem:[#allocation2 + $0x68] sm:$0xff]
        %v1921 = vld [vmem:[#allocation2 + $0x70] sm:$0xff]
        %v1922 = vld [vmem:[#allocation2 + $0x78] sm:$0xff]
        %v1923 = vld [vmem:[#allocation2 + $0x80] sm:$0xff]
        %v1924 = vld [vmem:[#allocation2 + $0x88] sm:$0xff]
        %v1925 = vld [vmem:[#allocation2 + $0x90] sm:$0xff]
        %v1926 = vld [vmem:[#allocation2 + $0x98] sm:$0xff]
        %v1927 = vld [vmem:[#allocation2 + $0xa0] sm:$0xff]
        %v1928 = vld [vmem:[#allocation2 + $0xa8] sm:$0xff]
        %v1929 = vld [vmem:[#allocation2 + $0xb0] sm:$0xff]
        %v1930 = vld [vmem:[#allocation2 + $0xb8] sm:$0xff]
        %v1931 = vld [vmem:[#allocation2 + $0xc0] sm:$0xff]
        %v1932 = vld [vmem:[#allocation2 + $0xc8] sm:$0xff]
        %v1933 = vld [vmem:[#allocation2 + $0xd0] sm:$0xff]
        %v1934 = vld [vmem:[#allocation2 + $0xd8] sm:$0xff]
        %v1935 = vld [vmem:[#allocation2 + $0xe0] sm:$0xff]
        %v1936 = vld [vmem:[#allocation2 + $0xe8] sm:$0xff]
        %v1937 = vld [vmem:[#allocation2 + $0xf0] sm:$0xff]
        %v1938 = vld [vmem:[#allocation2 + $0xf8] sm:$0xff]
        %v1939 = vld [vmem:[#allocation2 + $0x100] sm:$0xff]
        %v1940 = vld [vmem:[#allocation2 + $0x108] sm:$0xff]
        %v1941 = vld [vmem:[#allocation2 + $0x110] sm:$0xff]
        %v1942 = vld [vmem:[#allocation2 + $0x118] sm:$0xff]
        %v1943 = vld [vmem:[#allocation2 + $0x120] sm:$0xff]
        %v1944 = vld [vmem:[#allocation2 + $0x128] sm:$0xff]
        %v1945 = vld [vmem:[#allocation2 + $0x130] sm:$0xff]
        %v1946 = vld [vmem:[#allocation2 + $0x138] sm:$0xff]
        %v1947 = vld [vmem:[#allocation2 + $0x140] sm:$0xff]
        %v1948 = vld [vmem:[#allocation2 + $0x148] sm:$0xff]
        %v1949 = vld [vmem:[#allocation2 + $0x150] sm:$0xff]
        %v1950 = vld [vmem:[#allocation2 + $0x158] sm:$0xff]
        %v1951 = vld [vmem:[#allocation2 + $0x160] sm:$0xff]
        %v1952 = vld [vmem:[#allocation2 + $0x168] sm:$0xff]
        %v1953 = vld [vmem:[#allocation2 + $0x170] sm:$0xff]
        %v1954 = vld [vmem:[#allocation2 + $0x178] sm:$0xff]
        %v1955 = vld [vmem:[#allocation2 + $0x180] sm:$0xff]
        %v1956 = vld [vmem:[#allocation2 + $0x188] sm:$0xff]
        %v1957 = vld [vmem:[#allocation2 + $0x190] sm:$0xff]
        %v1958 = vld [vmem:[#allocation2 + $0x198] sm:$0xff]
        %v1959 = vld [vmem:[#allocation2 + $0x1a0] sm:$0xff]
        %v1960 = vld [vmem:[#allocation2 + $0x1a8] sm:$0xff]
        %v1961 = vld [vmem:[#allocation2 + $0x1b0] sm:$0xff]
        %v1962 = vld [vmem:[#allocation2 + $0x1b8] sm:$0xff]
        %v1963 = vld [vmem:[#allocation2 + $0x1c0] sm:$0xff]
        %v1964 = vld [vmem:[#allocation2 + $0x1c8] sm:$0xff]
        %v1965 = vld [vmem:[#allocation2 + $0x1d0] sm:$0xff]
        %v1966 = vld [vmem:[#allocation2 + $0x1d8] sm:$0xff]
        %v1967 = vld [vmem:[#allocation2 + $0x1e0] sm:$0xff]
        %v1968 = vld [vmem:[#allocation2 + $0x1e8] sm:$0xff]
        %v1969 = vld [vmem:[#allocation2 + $0x1f0] sm:$0xff]
        %v1970 = vld [vmem:[#allocation2 + $0x1f8] sm:$0xff]
        %v1971 = vld [vmem:[#allocation2 + $0x200] sm:$0xff]
        %v1972 = vld [vmem:[#allocation2 + $0x208] sm:$0xff]
        %v1973 = vld [vmem:[#allocation2 + $0x210] sm:$0xff]
        %v1974 = vld [vmem:[#allocation2 + $0x218] sm:$0xff]
        %v1975 = vld [vmem:[#allocation2 + $0x220] sm:$0xff]
        %v1976 = vld [vmem:[#allocation2 + $0x228] sm:$0xff]
        %v1977 = vld [vmem:[#allocation2 + $0x230] sm:$0xff]
        %v1978 = vld [vmem:[#allocation2 + $0x238] sm:$0xff]
        %v1979 = vld [vmem:[#allocation2 + $0x240] sm:$0xff]
        %v1980 = vld [vmem:[#allocation2 + $0x248] sm:$0xff]
        %v1981 = vld [vmem:[#allocation2 + $0x250] sm:$0xff]
        %v1982 = vld [vmem:[#allocation2 + $0x258] sm:$0xff]
        %v1983 = vld [vmem:[#allocation2 + $0x260] sm:$0xff]
        %v1984 = vld [vmem:[#allocation2 + $0x268] sm:$0xff]
        %v1985 = vld [vmem:[#allocation2 + $0x270] sm:$0xff]
        %v1986 = vld [vmem:[#allocation2 + $0x278] sm:$0xff]
        %v1987 = vld [vmem:[#allocation2 + $0x280] sm:$0xff]
        %v1988 = vld [vmem:[#allocation2 + $0x288] sm:$0xff]
        %v1989 = vld [vmem:[#allocation2 + $0x290] sm:$0xff]
        %v1990 = vld [vmem:[#allocation2 + $0x298] sm:$0xff]
        %v1991 = vld [vmem:[#allocation2 + $0x2a0] sm:$0xff]
        %v1992 = vld [vmem:[#allocation2 + $0x2a8] sm:$0xff]
        %v1993 = vld [vmem:[#allocation2 + $0x2b0] sm:$0xff]
        %v1994 = vld [vmem:[#allocation2 + $0x2b8] sm:$0xff]
        %v1995 = vld [vmem:[#allocation2 + $0x2c0] sm:$0xff]
        %v1996 = vld [vmem:[#allocation2 + $0x2c8] sm:$0xff]
        %v1997 = vld [vmem:[#allocation2 + $0x2d0] sm:$0xff]
        %v1998 = vld [vmem:[#allocation2 + $0x2d8] sm:$0xff]
        %v1999 = vld [vmem:[#allocation2 + $0x2e0] sm:$0xff]
        %v2000 = vld [vmem:[#allocation2 + $0x2e8] sm:$0xff]
        %v2001 = vld [vmem:[#allocation2 + $0x2f0] sm:$0xff]
        %v2002 = vld [vmem:[#allocation2 + $0x2f8] sm:$0xff]
        %v2003 = vld [vmem:[#allocation2 + $0x300] sm:$0xff]
        %v2004 = vld [vmem:[#allocation2 + $0x308] sm:$0xff]
        %v2005 = vld [vmem:[#allocation2 + $0x310] sm:$0xff]
        %v2006 = vld [vmem:[#allocation2 + $0x318] sm:$0xff]
        %v2007 = vld [vmem:[#allocation2 + $0x320] sm:$0xff]
        %v2008 = vld [vmem:[#allocation2 + $0x328] sm:$0xff]
        %v2009 = vld [vmem:[#allocation2 + $0x330] sm:$0xff]
        %v2010 = vld [vmem:[#allocation2 + $0x338] sm:$0xff]
        %v2011 = vld [vmem:[#allocation2 + $0x340] sm:$0xff]
        %v2012 = vld [vmem:[#allocation2 + $0x348] sm:$0xff]
        %v2013 = vld [vmem:[#allocation2 + $0x350] sm:$0xff]
        %v2014 = vld [vmem:[#allocation2 + $0x358] sm:$0xff]
        %v2015 = vld [vmem:[#allocation2 + $0x360] sm:$0xff]
        %v2016 = vld [vmem:[#allocation2 + $0x368] sm:$0xff]
        %v2017 = vld [vmem:[#allocation2 + $0x370] sm:$0xff]
        %v2018 = vld [vmem:[#allocation2 + $0x378] sm:$0xff]
        %v2019 = vld [vmem:[#allocation2 + $0x380] sm:$0xff]
        %v2020 = vld [vmem:[#allocation2 + $0x388] sm:$0xff]
        %v2021 = vld [vmem:[#allocation2 + $0x390] sm:$0xff]
        %v2022 = vld [vmem:[#allocation2 + $0x398] sm:$0xff]
        %v2023 = vld [vmem:[#allocation2 + $0x3a0] sm:$0xff]
        %v2024 = vld [vmem:[#allocation2 + $0x3a8] sm:$0xff]
        %v2025 = vld [vmem:[#allocation2 + $0x3b0] sm:$0xff]
        %v2026 = vld [vmem:[#allocation2 + $0x3b8] sm:$0xff]
        %v2027 = vld [vmem:[#allocation2 + $0x3c0] sm:$0xff]
        %v2028 = vld [vmem:[#allocation2 + $0x3c8] sm:$0xff]
        %v2029 = vld [vmem:[#allocation2 + $0x3d0] sm:$0xff]
        %v2030 = vld [vmem:[#allocation2 + $0x3d8] sm:$0xff]
        %v2031 = vld [vmem:[#allocation2 + $0x3e0] sm:$0xff]
        %v2032 = vld [vmem:[#allocation2 + $0x3e8] sm:$0xff]
        %v2033 = vld [vmem:[#allocation2 + $0x3f0] sm:$0xff]
        %v2034 = vld [vmem:[#allocation2 + $0x3f8] sm:$0xff]
        %v2036 = vlaneseq
        %v2037 = vshrl.u32 %v2036, 7
        %v2038 = vsub.s32 0, %v2037
        %v2039 = vrot.slane %v1906, %v2038
        %v2041 = vsub.f32 %v1907, %v2039
        %v2042 = vsub.f32 %v1908, %v2039
        %v2043 = vsub.f32 %v1909, %v2039
        %v2044 = vsub.f32 %v1910, %v2039
        %v2045 = vsub.f32 %v1911, %v2039
        %v2046 = vsub.f32 %v1912, %v2039
        %v2047 = vsub.f32 %v1913, %v2039
        %v2048 = vsub.f32 %v1914, %v2039
        %v2049 = vsub.f32 %v1915, %v2039
        %v2050 = vsub.f32 %v1916, %v2039
        %v2051 = vsub.f32 %v1917, %v2039
        %v2052 = vsub.f32 %v1918, %v2039
        %v2053 = vsub.f32 %v1919, %v2039
        %v2054 = vsub.f32 %v1920, %v2039
        %v2055 = vsub.f32 %v1921, %v2039
        %v2056 = vsub.f32 %v1922, %v2039
        %v2057 = vsub.f32 %v1923, %v2039
        %v2058 = vsub.f32 %v1924, %v2039
        %v2059 = vsub.f32 %v1925, %v2039
        %v2060 = vsub.f32 %v1926, %v2039
        %v2061 = vsub.f32 %v1927, %v2039
        %v2062 = vsub.f32 %v1928, %v2039
        %v2063 = vsub.f32 %v1929, %v2039
        %v2064 = vsub.f32 %v1930, %v2039
        %v2065 = vsub.f32 %v1931, %v2039
        %v2066 = vsub.f32 %v1932, %v2039
        %v2067 = vsub.f32 %v1933, %v2039
        %v2068 = vsub.f32 %v1934, %v2039
        %v2069 = vsub.f32 %v1935, %v2039
        %v2070 = vsub.f32 %v1936, %v2039
        %v2071 = vsub.f32 %v1937, %v2039
        %v2072 = vsub.f32 %v1938, %v2039
        %v2073 = vsub.f32 %v1939, %v2039
        %v2074 = vsub.f32 %v1940, %v2039
        %v2075 = vsub.f32 %v1941, %v2039
        %v2076 = vsub.f32 %v1942, %v2039
        %v2077 = vsub.f32 %v1943, %v2039
        %v2078 = vsub.f32 %v1944, %v2039
        %v2079 = vsub.f32 %v1945, %v2039
        %v2080 = vsub.f32 %v1946, %v2039
        %v2081 = vsub.f32 %v1947, %v2039
        %v2082 = vsub.f32 %v1948, %v2039
        %v2083 = vsub.f32 %v1949, %v2039
        %v2084 = vsub.f32 %v1950, %v2039
        %v2085 = vsub.f32 %v1951, %v2039
        %v2086 = vsub.f32 %v1952, %v2039
        %v2087 = vsub.f32 %v1953, %v2039
        %v2088 = vsub.f32 %v1954, %v2039
        %v2089 = vsub.f32 %v1955, %v2039
        %v2090 = vsub.f32 %v1956, %v2039
        %v2091 = vsub.f32 %v1957, %v2039
        %v2092 = vsub.f32 %v1958, %v2039
        %v2093 = vsub.f32 %v1959, %v2039
        %v2094 = vsub.f32 %v1960, %v2039
        %v2095 = vsub.f32 %v1961, %v2039
        %v2096 = vsub.f32 %v1962, %v2039
        %v2097 = vsub.f32 %v1963, %v2039
        %v2098 = vsub.f32 %v1964, %v2039
        %v2099 = vsub.f32 %v1965, %v2039
        %v2100 = vsub.f32 %v1966, %v2039
        %v2101 = vsub.f32 %v1967, %v2039
        %v2102 = vsub.f32 %v1968, %v2039
        %v2103 = vsub.f32 %v1969, %v2039
        %v2104 = vsub.f32 %v1970, %v2039
        %v2105 = vsub.f32 %v1971, %v2039
        %v2106 = vsub.f32 %v1972, %v2039
        %v2107 = vsub.f32 %v1973, %v2039
        %v2108 = vsub.f32 %v1974, %v2039
        %v2109 = vsub.f32 %v1975, %v2039
        %v2110 = vsub.f32 %v1976, %v2039
        %v2111 = vsub.f32 %v1977, %v2039
        %v2112 = vsub.f32 %v1978, %v2039
        %v2113 = vsub.f32 %v1979, %v2039
        %v2114 = vsub.f32 %v1980, %v2039
        %v2115 = vsub.f32 %v1981, %v2039
        %v2116 = vsub.f32 %v1982, %v2039
        %v2117 = vsub.f32 %v1983, %v2039
        %v2118 = vsub.f32 %v1984, %v2039
        %v2119 = vsub.f32 %v1985, %v2039
        %v2120 = vsub.f32 %v1986, %v2039
        %v2121 = vsub.f32 %v1987, %v2039
        %v2122 = vsub.f32 %v1988, %v2039
        %v2123 = vsub.f32 %v1989, %v2039
        %v2124 = vsub.f32 %v1990, %v2039
        %v2125 = vsub.f32 %v1991, %v2039
        %v2126 = vsub.f32 %v1992, %v2039
        %v2127 = vsub.f32 %v1993, %v2039
        %v2128 = vsub.f32 %v1994, %v2039
        %v2129 = vsub.f32 %v1995, %v2039
        %v2130 = vsub.f32 %v1996, %v2039
        %v2131 = vsub.f32 %v1997, %v2039
        %v2132 = vsub.f32 %v1998, %v2039
        %v2133 = vsub.f32 %v1999, %v2039
        %v2134 = vsub.f32 %v2000, %v2039
        %v2135 = vsub.f32 %v2001, %v2039
        %v2136 = vsub.f32 %v2002, %v2039
        %v2137 = vsub.f32 %v2003, %v2039
        %v2138 = vsub.f32 %v2004, %v2039
        %v2139 = vsub.f32 %v2005, %v2039
        %v2140 = vsub.f32 %v2006, %v2039
        %v2141 = vsub.f32 %v2007, %v2039
        %v2142 = vsub.f32 %v2008, %v2039
        %v2143 = vsub.f32 %v2009, %v2039
        %v2144 = vsub.f32 %v2010, %v2039
        %v2145 = vsub.f32 %v2011, %v2039
        %v2146 = vsub.f32 %v2012, %v2039
        %v2147 = vsub.f32 %v2013, %v2039
        %v2148 = vsub.f32 %v2014, %v2039
        %v2149 = vsub.f32 %v2015, %v2039
        %v2150 = vsub.f32 %v2016, %v2039
        %v2151 = vsub.f32 %v2017, %v2039
        %v2152 = vsub.f32 %v2018, %v2039
        %v2153 = vsub.f32 %v2019, %v2039
        %v2154 = vsub.f32 %v2020, %v2039
        %v2155 = vsub.f32 %v2021, %v2039
        %v2156 = vsub.f32 %v2022, %v2039
        %v2157 = vsub.f32 %v2023, %v2039
        %v2158 = vsub.f32 %v2024, %v2039
        %v2159 = vsub.f32 %v2025, %v2039
        %v2160 = vsub.f32 %v2026, %v2039
        %v2161 = vsub.f32 %v2027, %v2039
        %v2162 = vsub.f32 %v2028, %v2039
        %v2163 = vsub.f32 %v2029, %v2039
        %v2164 = vsub.f32 %v2030, %v2039
        %v2165 = vsub.f32 %v2031, %v2039
        %v2166 = vsub.f32 %v2032, %v2039
        %v2167 = vsub.f32 %v2033, %v2039
        %v2168 = vsub.f32 %v2034, %v2039
        %v2169 = vmul.f32 %v2041, %v2041
        %v2170 = vmul.f32 %v2042, %v2042
        %v2171 = vmul.f32 %v2043, %v2043
        %v2172 = vmul.f32 %v2044, %v2044
        %v2173 = vmul.f32 %v2045, %v2045
        %v2174 = vmul.f32 %v2046, %v2046
        %v2175 = vmul.f32 %v2047, %v2047
        %v2176 = vmul.f32 %v2048, %v2048
        %v2177 = vmul.f32 %v2049, %v2049
        %v2178 = vmul.f32 %v2050, %v2050
        %v2179 = vmul.f32 %v2051, %v2051
        %v2180 = vmul.f32 %v2052, %v2052
        %v2181 = vmul.f32 %v2053, %v2053
        %v2182 = vmul.f32 %v2054, %v2054
        %v2183 = vmul.f32 %v2055, %v2055
        %v2184 = vmul.f32 %v2056, %v2056
        %v2185 = vmul.f32 %v2057, %v2057
        %v2186 = vmul.f32 %v2058, %v2058
        %v2187 = vmul.f32 %v2059, %v2059
        %v2188 = vmul.f32 %v2060, %v2060
        %v2189 = vmul.f32 %v2061, %v2061
        %v2190 = vmul.f32 %v2062, %v2062
        %v2191 = vmul.f32 %v2063, %v2063
        %v2192 = vmul.f32 %v2064, %v2064
        %v2193 = vmul.f32 %v2065, %v2065
        %v2194 = vmul.f32 %v2066, %v2066
        %v2195 = vmul.f32 %v2067, %v2067
        %v2196 = vmul.f32 %v2068, %v2068
        %v2197 = vmul.f32 %v2069, %v2069
        %v2198 = vmul.f32 %v2070, %v2070
        %v2199 = vmul.f32 %v2071, %v2071
        %v2200 = vmul.f32 %v2072, %v2072
        %v2201 = vmul.f32 %v2073, %v2073
        %v2202 = vmul.f32 %v2074, %v2074
        %v2203 = vmul.f32 %v2075, %v2075
        %v2204 = vmul.f32 %v2076, %v2076
        %v2205 = vmul.f32 %v2077, %v2077
        %v2206 = vmul.f32 %v2078, %v2078
        %v2207 = vmul.f32 %v2079, %v2079
        %v2208 = vmul.f32 %v2080, %v2080
        %v2209 = vmul.f32 %v2081, %v2081
        %v2210 = vmul.f32 %v2082, %v2082
        %v2211 = vmul.f32 %v2083, %v2083
        %v2212 = vmul.f32 %v2084, %v2084
        %v2213 = vmul.f32 %v2085, %v2085
        %v2214 = vmul.f32 %v2086, %v2086
        %v2215 = vmul.f32 %v2087, %v2087
        %v2216 = vmul.f32 %v2088, %v2088
        %v2217 = vmul.f32 %v2089, %v2089
        %v2218 = vmul.f32 %v2090, %v2090
        %v2219 = vmul.f32 %v2091, %v2091
        %v2220 = vmul.f32 %v2092, %v2092
        %v2221 = vmul.f32 %v2093, %v2093
        %v2222 = vmul.f32 %v2094, %v2094
        %v2223 = vmul.f32 %v2095, %v2095
        %v2224 = vmul.f32 %v2096, %v2096
        %v2225 = vmul.f32 %v2097, %v2097
        %v2226 = vmul.f32 %v2098, %v2098
        %v2227 = vmul.f32 %v2099, %v2099
        %v2228 = vmul.f32 %v2100, %v2100
        %v2229 = vmul.f32 %v2101, %v2101
        %v2230 = vmul.f32 %v2102, %v2102
        %v2231 = vmul.f32 %v2103, %v2103
        %v2232 = vmul.f32 %v2104, %v2104
        %v2233 = vmul.f32 %v2105, %v2105
        %v2234 = vmul.f32 %v2106, %v2106
        %v2235 = vmul.f32 %v2107, %v2107
        %v2236 = vmul.f32 %v2108, %v2108
        %v2237 = vmul.f32 %v2109, %v2109
        %v2238 = vmul.f32 %v2110, %v2110
        %v2239 = vmul.f32 %v2111, %v2111
        %v2240 = vmul.f32 %v2112, %v2112
        %v2241 = vmul.f32 %v2113, %v2113
        %v2242 = vmul.f32 %v2114, %v2114
        %v2243 = vmul.f32 %v2115, %v2115
        %v2244 = vmul.f32 %v2116, %v2116
        %v2245 = vmul.f32 %v2117, %v2117
        %v2246 = vmul.f32 %v2118, %v2118
        %v2247 = vmul.f32 %v2119, %v2119
        %v2248 = vmul.f32 %v2120, %v2120
        %v2249 = vmul.f32 %v2121, %v2121
        %v2250 = vmul.f32 %v2122, %v2122
        %v2251 = vmul.f32 %v2123, %v2123
        %v2252 = vmul.f32 %v2124, %v2124
        %v2253 = vmul.f32 %v2125, %v2125
        %v2254 = vmul.f32 %v2126, %v2126
        %v2255 = vmul.f32 %v2127, %v2127
        %v2256 = vmul.f32 %v2128, %v2128
        %v2257 = vmul.f32 %v2129, %v2129
        %v2258 = vmul.f32 %v2130, %v2130
        %v2259 = vmul.f32 %v2131, %v2131
        %v2260 = vmul.f32 %v2132, %v2132
        %v2261 = vmul.f32 %v2133, %v2133
        %v2262 = vmul.f32 %v2134, %v2134
        %v2263 = vmul.f32 %v2135, %v2135
        %v2264 = vmul.f32 %v2136, %v2136
        %v2265 = vmul.f32 %v2137, %v2137
        %v2266 = vmul.f32 %v2138, %v2138
        %v2267 = vmul.f32 %v2139, %v2139
        %v2268 = vmul.f32 %v2140, %v2140
        %v2269 = vmul.f32 %v2141, %v2141
        %v2270 = vmul.f32 %v2142, %v2142
        %v2271 = vmul.f32 %v2143, %v2143
        %v2272 = vmul.f32 %v2144, %v2144
        %v2273 = vmul.f32 %v2145, %v2145
        %v2274 = vmul.f32 %v2146, %v2146
        %v2275 = vmul.f32 %v2147, %v2147
        %v2276 = vmul.f32 %v2148, %v2148
        %v2277 = vmul.f32 %v2149, %v2149
        %v2278 = vmul.f32 %v2150, %v2150
        %v2279 = vmul.f32 %v2151, %v2151
        %v2280 = vmul.f32 %v2152, %v2152
        %v2281 = vmul.f32 %v2153, %v2153
        %v2282 = vmul.f32 %v2154, %v2154
        %v2283 = vmul.f32 %v2155, %v2155
        %v2284 = vmul.f32 %v2156, %v2156
        %v2285 = vmul.f32 %v2157, %v2157
        %v2286 = vmul.f32 %v2158, %v2158
        %v2287 = vmul.f32 %v2159, %v2159
        %v2288 = vmul.f32 %v2160, %v2160
        %v2289 = vmul.f32 %v2161, %v2161
        %v2290 = vmul.f32 %v2162, %v2162
        %v2291 = vmul.f32 %v2163, %v2163
        %v2292 = vmul.f32 %v2164, %v2164
        %v2293 = vmul.f32 %v2165, %v2165
        %v2294 = vmul.f32 %v2166, %v2166
        %v2295 = vmul.f32 %v2167, %v2167
        %v2296 = vmul.f32 %v2168, %v2168
        %v2297 = vadd.f32 %v2169, %v2170
        %v2298 = vadd.f32 %v2297, %v2171
        %v2299 = vadd.f32 %v2298, %v2172
        %v2300 = vadd.f32 %v2299, %v2173
        %v2301 = vadd.f32 %v2300, %v2174
        %v2302 = vadd.f32 %v2301, %v2175
        %v2303 = vadd.f32 %v2302, %v2176
        %v2304 = vadd.f32 %v2303, %v2177
        %v2305 = vadd.f32 %v2304, %v2178
        %v2306 = vadd.f32 %v2305, %v2179
        %v2307 = vadd.f32 %v2306, %v2180
        %v2308 = vadd.f32 %v2307, %v2181
        %v2309 = vadd.f32 %v2308, %v2182
        %v2310 = vadd.f32 %v2309, %v2183
        %v2311 = vadd.f32 %v2310, %v2184
        %v2312 = vadd.f32 %v2311, %v2185
        %v2313 = vadd.f32 %v2312, %v2186
        %v2314 = vadd.f32 %v2313, %v2187
        %v2315 = vadd.f32 %v2314, %v2188
        %v2316 = vadd.f32 %v2315, %v2189
        %v2317 = vadd.f32 %v2316, %v2190
        %v2318 = vadd.f32 %v2317, %v2191
        %v2319 = vadd.f32 %v2318, %v2192
        %v2320 = vadd.f32 %v2319, %v2193
        %v2321 = vadd.f32 %v2320, %v2194
        %v2322 = vadd.f32 %v2321, %v2195
        %v2323 = vadd.f32 %v2322, %v2196
        %v2324 = vadd.f32 %v2323, %v2197
        %v2325 = vadd.f32 %v2324, %v2198
        %v2326 = vadd.f32 %v2325, %v2199
        %v2327 = vadd.f32 %v2326, %v2200
        %v2328 = vadd.f32 %v2327, %v2201
        %v2329 = vadd.f32 %v2328, %v2202
        %v2330 = vadd.f32 %v2329, %v2203
        %v2331 = vadd.f32 %v2330, %v2204
        %v2332 = vadd.f32 %v2331, %v2205
        %v2333 = vadd.f32 %v2332, %v2206
        %v2334 = vadd.f32 %v2333, %v2207
        %v2335 = vadd.f32 %v2334, %v2208
        %v2336 = vadd.f32 %v2335, %v2209
        %v2337 = vadd.f32 %v2336, %v2210
        %v2338 = vadd.f32 %v2337, %v2211
        %v2339 = vadd.f32 %v2338, %v2212
        %v2340 = vadd.f32 %v2339, %v2213
        %v2341 = vadd.f32 %v2340, %v2214
        %v2342 = vadd.f32 %v2341, %v2215
        %v2343 = vadd.f32 %v2342, %v2216
        %v2344 = vadd.f32 %v2343, %v2217
        %v2345 = vadd.f32 %v2344, %v2218
        %v2346 = vadd.f32 %v2345, %v2219
        %v2347 = vadd.f32 %v2346, %v2220
        %v2348 = vadd.f32 %v2347, %v2221
        %v2349 = vadd.f32 %v2348, %v2222
        %v2350 = vadd.f32 %v2349, %v2223
        %v2351 = vadd.f32 %v2350, %v2224
        %v2352 = vadd.f32 %v2351, %v2225
        %v2353 = vadd.f32 %v2352, %v2226
        %v2354 = vadd.f32 %v2353, %v2227
        %v2355 = vadd.f32 %v2354, %v2228
        %v2356 = vadd.f32 %v2355, %v2229
        %v2357 = vadd.f32 %v2356, %v2230
        %v2358 = vadd.f32 %v2357, %v2231
        %v2359 = vadd.f32 %v2358, %v2232
        %v2360 = vadd.f32 %v2359, %v2233
        %v2361 = vadd.f32 %v2360, %v2234
        %v2362 = vadd.f32 %v2361, %v2235
        %v2363 = vadd.f32 %v2362, %v2236
        %v2364 = vadd.f32 %v2363, %v2237
        %v2365 = vadd.f32 %v2364, %v2238
        %v2366 = vadd.f32 %v2365, %v2239
        %v2367 = vadd.f32 %v2366, %v2240
        %v2368 = vadd.f32 %v2367, %v2241
        %v2369 = vadd.f32 %v2368, %v2242
        %v2370 = vadd.f32 %v2369, %v2243
        %v2371 = vadd.f32 %v2370, %v2244
        %v2372 = vadd.f32 %v2371, %v2245
        %v2373 = vadd.f32 %v2372, %v2246
        %v2374 = vadd.f32 %v2373, %v2247
        %v2375 = vadd.f32 %v2374, %v2248
        %v2376 = vadd.f32 %v2375, %v2249
        %v2377 = vadd.f32 %v2376, %v2250
        %v2378 = vadd.f32 %v2377, %v2251
        %v2379 = vadd.f32 %v2378, %v2252
        %v2380 = vadd.f32 %v2379, %v2253
        %v2381 = vadd.f32 %v2380, %v2254
        %v2382 = vadd.f32 %v2381, %v2255
        %v2383 = vadd.f32 %v2382, %v2256
        %v2384 = vadd.f32 %v2383, %v2257
        %v2385 = vadd.f32 %v2384, %v2258
        %v2386 = vadd.f32 %v2385, %v2259
        %v2387 = vadd.f32 %v2386, %v2260
        %v2388 = vadd.f32 %v2387, %v2261
        %v2389 = vadd.f32 %v2388, %v2262
        %v2390 = vadd.f32 %v2389, %v2263
        %v2391 = vadd.f32 %v2390, %v2264
        %v2392 = vadd.f32 %v2391, %v2265
        %v2393 = vadd.f32 %v2392, %v2266
        %v2394 = vadd.f32 %v2393, %v2267
        %v2395 = vadd.f32 %v2394, %v2268
        %v2396 = vadd.f32 %v2395, %v2269
        %v2397 = vadd.f32 %v2396, %v2270
        %v2398 = vadd.f32 %v2397, %v2271
        %v2399 = vadd.f32 %v2398, %v2272
        %v2400 = vadd.f32 %v2399, %v2273
        %v2401 = vadd.f32 %v2400, %v2274
        %v2402 = vadd.f32 %v2401, %v2275
        %v2403 = vadd.f32 %v2402, %v2276
        %v2404 = vadd.f32 %v2403, %v2277
        %v2405 = vadd.f32 %v2404, %v2278
        %v2406 = vadd.f32 %v2405, %v2279
        %v2407 = vadd.f32 %v2406, %v2280
        %v2408 = vadd.f32 %v2407, %v2281
        %v2409 = vadd.f32 %v2408, %v2282
        %v2410 = vadd.f32 %v2409, %v2283
        %v2411 = vadd.f32 %v2410, %v2284
        %v2412 = vadd.f32 %v2411, %v2285
        %v2413 = vadd.f32 %v2412, %v2286
        %v2414 = vadd.f32 %v2413, %v2287
        %v2415 = vadd.f32 %v2414, %v2288
        %v2416 = vadd.f32 %v2415, %v2289
        %v2417 = vadd.f32 %v2416, %v2290
        %v2418 = vadd.f32 %v2417, %v2291
        %v2419 = vadd.f32 %v2418, %v2292
        %v2420 = vadd.f32 %v2419, %v2293
        %v2421 = vadd.f32 %v2420, %v2294
        %v2422 = vadd.f32 %v2421, %v2295
        %v2423 = vadd.f32 %v2422, %v2296
        %v2424 = vrot.slane %v2423, 4
        %v2425 = vadd.f32 %v2423, %v2424
        %v2426 = vrot.slane %v2425, 2
        %v2427 = vadd.f32 %v2425, %v2426
        %v2428 = vrot.slane %v2427, 1
        %v2429 = vadd.f32 %v2427, %v2428
        %v2430 = vadd.f32 %v2429, 0.0
        %v2431 = vld [vmem:[#allocation2 + $0x400] sm:$0xff]
        %v2432 = vld [vmem:[#allocation2 + $0x408] sm:$0xff]
        %v2433 = vld [vmem:[#allocation2 + $0x410] sm:$0xff]
        %v2434 = vld [vmem:[#allocation2 + $0x418] sm:$0xff]
        %v2435 = vld [vmem:[#allocation2 + $0x420] sm:$0xff]
        %v2436 = vld [vmem:[#allocation2 + $0x428] sm:$0xff]
        %v2437 = vld [vmem:[#allocation2 + $0x430] sm:$0xff]
        %v2438 = vld [vmem:[#allocation2 + $0x438] sm:$0xff]
        %v2439 = vld [vmem:[#allocation2 + $0x440] sm:$0xff]
        %v2440 = vld [vmem:[#allocation2 + $0x448] sm:$0xff]
        %v2441 = vld [vmem:[#allocation2 + $0x450] sm:$0xff]
        %v2442 = vld [vmem:[#allocation2 + $0x458] sm:$0xff]
        %v2443 = vld [vmem:[#allocation2 + $0x460] sm:$0xff]
        %v2444 = vld [vmem:[#allocation2 + $0x468] sm:$0xff]
        %v2445 = vld [vmem:[#allocation2 + $0x470] sm:$0xff]
        %v2446 = vld [vmem:[#allocation2 + $0x478] sm:$0xff]
        %v2447 = vld [vmem:[#allocation2 + $0x480] sm:$0xff]
        %v2448 = vld [vmem:[#allocation2 + $0x488] sm:$0xff]
        %v2449 = vld [vmem:[#allocation2 + $0x490] sm:$0xff]
        %v2450 = vld [vmem:[#allocation2 + $0x498] sm:$0xff]
        %v2451 = vld [vmem:[#allocation2 + $0x4a0] sm:$0xff]
        %v2452 = vld [vmem:[#allocation2 + $0x4a8] sm:$0xff]
        %v2453 = vld [vmem:[#allocation2 + $0x4b0] sm:$0xff]
        %v2454 = vld [vmem:[#allocation2 + $0x4b8] sm:$0xff]
        %v2455 = vld [vmem:[#allocation2 + $0x4c0] sm:$0xff]
        %v2456 = vld [vmem:[#allocation2 + $0x4c8] sm:$0xff]
        %v2457 = vld [vmem:[#allocation2 + $0x4d0] sm:$0xff]
        %v2458 = vld [vmem:[#allocation2 + $0x4d8] sm:$0xff]
        %v2459 = vld [vmem:[#allocation2 + $0x4e0] sm:$0xff]
        %v2460 = vld [vmem:[#allocation2 + $0x4e8] sm:$0xff]
        %v2461 = vld [vmem:[#allocation2 + $0x4f0] sm:$0xff]
        %v2462 = vld [vmem:[#allocation2 + $0x4f8] sm:$0xff]
        %v2463 = vld [vmem:[#allocation2 + $0x500] sm:$0xff]
        %v2464 = vld [vmem:[#allocation2 + $0x508] sm:$0xff]
        %v2465 = vld [vmem:[#allocation2 + $0x510] sm:$0xff]
        %v2466 = vld [vmem:[#allocation2 + $0x518] sm:$0xff]
        %v2467 = vld [vmem:[#allocation2 + $0x520] sm:$0xff]
        %v2468 = vld [vmem:[#allocation2 + $0x528] sm:$0xff]
        %v2469 = vld [vmem:[#allocation2 + $0x530] sm:$0xff]
        %v2470 = vld [vmem:[#allocation2 + $0x538] sm:$0xff]
        %v2471 = vld [vmem:[#allocation2 + $0x540] sm:$0xff]
        %v2472 = vld [vmem:[#allocation2 + $0x548] sm:$0xff]
        %v2473 = vld [vmem:[#allocation2 + $0x550] sm:$0xff]
        %v2474 = vld [vmem:[#allocation2 + $0x558] sm:$0xff]
        %v2475 = vld [vmem:[#allocation2 + $0x560] sm:$0xff]
        %v2476 = vld [vmem:[#allocation2 + $0x568] sm:$0xff]
        %v2477 = vld [vmem:[#allocation2 + $0x570] sm:$0xff]
        %v2478 = vld [vmem:[#allocation2 + $0x578] sm:$0xff]
        %v2479 = vld [vmem:[#allocation2 + $0x580] sm:$0xff]
        %v2480 = vld [vmem:[#allocation2 + $0x588] sm:$0xff]
        %v2481 = vld [vmem:[#allocation2 + $0x590] sm:$0xff]
        %v2482 = vld [vmem:[#allocation2 + $0x598] sm:$0xff]
        %v2483 = vld [vmem:[#allocation2 + $0x5a0] sm:$0xff]
        %v2484 = vld [vmem:[#allocation2 + $0x5a8] sm:$0xff]
        %v2485 = vld [vmem:[#allocation2 + $0x5b0] sm:$0xff]
        %v2486 = vld [vmem:[#allocation2 + $0x5b8] sm:$0xff]
        %v2487 = vld [vmem:[#allocation2 + $0x5c0] sm:$0xff]
        %v2488 = vld [vmem:[#allocation2 + $0x5c8] sm:$0xff]
        %v2489 = vld [vmem:[#allocation2 + $0x5d0] sm:$0xff]
        %v2490 = vld [vmem:[#allocation2 + $0x5d8] sm:$0xff]
        %v2491 = vld [vmem:[#allocation2 + $0x5e0] sm:$0xff]
        %v2492 = vld [vmem:[#allocation2 + $0x5e8] sm:$0xff]
        %v2493 = vld [vmem:[#allocation2 + $0x5f0] sm:$0xff]
        %v2494 = vld [vmem:[#allocation2 + $0x5f8] sm:$0xff]
        %v2495 = vld [vmem:[#allocation2 + $0x600] sm:$0xff]
        %v2496 = vld [vmem:[#allocation2 + $0x608] sm:$0xff]
        %v2497 = vld [vmem:[#allocation2 + $0x610] sm:$0xff]
        %v2498 = vld [vmem:[#allocation2 + $0x618] sm:$0xff]
        %v2499 = vld [vmem:[#allocation2 + $0x620] sm:$0xff]
        %v2500 = vld [vmem:[#allocation2 + $0x628] sm:$0xff]
        %v2501 = vld [vmem:[#allocation2 + $0x630] sm:$0xff]
        %v2502 = vld [vmem:[#allocation2 + $0x638] sm:$0xff]
        %v2503 = vld [vmem:[#allocation2 + $0x640] sm:$0xff]
        %v2504 = vld [vmem:[#allocation2 + $0x648] sm:$0xff]
        %v2505 = vld [vmem:[#allocation2 + $0x650] sm:$0xff]
        %v2506 = vld [vmem:[#allocation2 + $0x658] sm:$0xff]
        %v2507 = vld [vmem:[#allocation2 + $0x660] sm:$0xff]
        %v2508 = vld [vmem:[#allocation2 + $0x668] sm:$0xff]
        %v2509 = vld [vmem:[#allocation2 + $0x670] sm:$0xff]
        %v2510 = vld [vmem:[#allocation2 + $0x678] sm:$0xff]
        %v2511 = vld [vmem:[#allocation2 + $0x680] sm:$0xff]
        %v2512 = vld [vmem:[#allocation2 + $0x688] sm:$0xff]
        %v2513 = vld [vmem:[#allocation2 + $0x690] sm:$0xff]
        %v2514 = vld [vmem:[#allocation2 + $0x698] sm:$0xff]
        %v2515 = vld [vmem:[#allocation2 + $0x6a0] sm:$0xff]
        %v2516 = vld [vmem:[#allocation2 + $0x6a8] sm:$0xff]
        %v2517 = vld [vmem:[#allocation2 + $0x6b0] sm:$0xff]
        %v2518 = vld [vmem:[#allocation2 + $0x6b8] sm:$0xff]
        %v2519 = vld [vmem:[#allocation2 + $0x6c0] sm:$0xff]
        %v2520 = vld [vmem:[#allocation2 + $0x6c8] sm:$0xff]
        %v2521 = vld [vmem:[#allocation2 + $0x6d0] sm:$0xff]
        %v2522 = vld [vmem:[#allocation2 + $0x6d8] sm:$0xff]
        %v2523 = vld [vmem:[#allocation2 + $0x6e0] sm:$0xff]
        %v2524 = vld [vmem:[#allocation2 + $0x6e8] sm:$0xff]
        %v2525 = vld [vmem:[#allocation2 + $0x6f0] sm:$0xff]
        %v2526 = vld [vmem:[#allocation2 + $0x6f8] sm:$0xff]
        %v2527 = vld [vmem:[#allocation2 + $0x700] sm:$0xff]
        %v2528 = vld [vmem:[#allocation2 + $0x708] sm:$0xff]
        %v2529 = vld [vmem:[#allocation2 + $0x710] sm:$0xff]
        %v2530 = vld [vmem:[#allocation2 + $0x718] sm:$0xff]
        %v2531 = vld [vmem:[#allocation2 + $0x720] sm:$0xff]
        %v2532 = vld [vmem:[#allocation2 + $0x728] sm:$0xff]
        %v2533 = vld [vmem:[#allocation2 + $0x730] sm:$0xff]
        %v2534 = vld [vmem:[#allocation2 + $0x738] sm:$0xff]
        %v2535 = vld [vmem:[#allocation2 + $0x740] sm:$0xff]
        %v2536 = vld [vmem:[#allocation2 + $0x748] sm:$0xff]
        %v2537 = vld [vmem:[#allocation2 + $0x750] sm:$0xff]
        %v2538 = vld [vmem:[#allocation2 + $0x758] sm:$0xff]
        %v2539 = vld [vmem:[#allocation2 + $0x760] sm:$0xff]
        %v2540 = vld [vmem:[#allocation2 + $0x768] sm:$0xff]
        %v2541 = vld [vmem:[#allocation2 + $0x770] sm:$0xff]
        %v2542 = vld [vmem:[#allocation2 + $0x778] sm:$0xff]
        %v2543 = vld [vmem:[#allocation2 + $0x780] sm:$0xff]
        %v2544 = vld [vmem:[#allocation2 + $0x788] sm:$0xff]
        %v2545 = vld [vmem:[#allocation2 + $0x790] sm:$0xff]
        %v2546 = vld [vmem:[#allocation2 + $0x798] sm:$0xff]
        %v2547 = vld [vmem:[#allocation2 + $0x7a0] sm:$0xff]
        %v2548 = vld [vmem:[#allocation2 + $0x7a8] sm:$0xff]
        %v2549 = vld [vmem:[#allocation2 + $0x7b0] sm:$0xff]
        %v2550 = vld [vmem:[#allocation2 + $0x7b8] sm:$0xff]
        %v2551 = vld [vmem:[#allocation2 + $0x7c0] sm:$0xff]
        %v2552 = vld [vmem:[#allocation2 + $0x7c8] sm:$0xff]
        %v2553 = vld [vmem:[#allocation2 + $0x7d0] sm:$0xff]
        %v2554 = vld [vmem:[#allocation2 + $0x7d8] sm:$0xff]
        %v2555 = vld [vmem:[#allocation2 + $0x7e0] sm:$0xff]
        %v2556 = vld [vmem:[#allocation2 + $0x7e8] sm:$0xff]
        %v2557 = vld [vmem:[#allocation2 + $0x7f0] sm:$0xff]
        %v2558 = vld [vmem:[#allocation2 + $0x7f8] sm:$0xff]
        %v2559 = vsub.f32 %v2431, %v2039
        %v2560 = vsub.f32 %v2432, %v2039
        %v2561 = vsub.f32 %v2433, %v2039
        %v2562 = vsub.f32 %v2434, %v2039
        %v2563 = vsub.f32 %v2435, %v2039
        %v2564 = vsub.f32 %v2436, %v2039
        %v2565 = vsub.f32 %v2437, %v2039
        %v2566 = vsub.f32 %v2438, %v2039
        %v2567 = vsub.f32 %v2439, %v2039
        %v2568 = vsub.f32 %v2440, %v2039
        %v2569 = vsub.f32 %v2441, %v2039
        %v2570 = vsub.f32 %v2442, %v2039
        %v2571 = vsub.f32 %v2443, %v2039
        %v2572 = vsub.f32 %v2444, %v2039
        %v2573 = vsub.f32 %v2445, %v2039
        %v2574 = vsub.f32 %v2446, %v2039
        %v2575 = vsub.f32 %v2447, %v2039
        %v2576 = vsub.f32 %v2448, %v2039
        %v2577 = vsub.f32 %v2449, %v2039
        %v2578 = vsub.f32 %v2450, %v2039
        %v2579 = vsub.f32 %v2451, %v2039
        %v2580 = vsub.f32 %v2452, %v2039
        %v2581 = vsub.f32 %v2453, %v2039
        %v2582 = vsub.f32 %v2454, %v2039
        %v2583 = vsub.f32 %v2455, %v2039
        %v2584 = vsub.f32 %v2456, %v2039
        %v2585 = vsub.f32 %v2457, %v2039
        %v2586 = vsub.f32 %v2458, %v2039
        %v2587 = vsub.f32 %v2459, %v2039
        %v2588 = vsub.f32 %v2460, %v2039
        %v2589 = vsub.f32 %v2461, %v2039
        %v2590 = vsub.f32 %v2462, %v2039
        %v2591 = vsub.f32 %v2463, %v2039
        %v2592 = vsub.f32 %v2464, %v2039
        %v2593 = vsub.f32 %v2465, %v2039
        %v2594 = vsub.f32 %v2466, %v2039
        %v2595 = vsub.f32 %v2467, %v2039
        %v2596 = vsub.f32 %v2468, %v2039
        %v2597 = vsub.f32 %v2469, %v2039
        %v2598 = vsub.f32 %v2470, %v2039
        %v2599 = vsub.f32 %v2471, %v2039
        %v2600 = vsub.f32 %v2472, %v2039
        %v2601 = vsub.f32 %v2473, %v2039
        %v2602 = vsub.f32 %v2474, %v2039
        %v2603 = vsub.f32 %v2475, %v2039
        %v2604 = vsub.f32 %v2476, %v2039
        %v2605 = vsub.f32 %v2477, %v2039
        %v2606 = vsub.f32 %v2478, %v2039
        %v2607 = vsub.f32 %v2479, %v2039
        %v2608 = vsub.f32 %v2480, %v2039
        %v2609 = vsub.f32 %v2481, %v2039
        %v2610 = vsub.f32 %v2482, %v2039
        %v2611 = vsub.f32 %v2483, %v2039
        %v2612 = vsub.f32 %v2484, %v2039
        %v2613 = vsub.f32 %v2485, %v2039
        %v2614 = vsub.f32 %v2486, %v2039
        %v2615 = vsub.f32 %v2487, %v2039
        %v2616 = vsub.f32 %v2488, %v2039
        %v2617 = vsub.f32 %v2489, %v2039
        %v2618 = vsub.f32 %v2490, %v2039
        %v2619 = vsub.f32 %v2491, %v2039
        %v2620 = vsub.f32 %v2492, %v2039
        %v2621 = vsub.f32 %v2493, %v2039
        %v2622 = vsub.f32 %v2494, %v2039
        %v2623 = vsub.f32 %v2495, %v2039
        %v2624 = vsub.f32 %v2496, %v2039
        %v2625 = vsub.f32 %v2497, %v2039
        %v2626 = vsub.f32 %v2498, %v2039
        %v2627 = vsub.f32 %v2499, %v2039
        %v2628 = vsub.f32 %v2500, %v2039
        %v2629 = vsub.f32 %v2501, %v2039
        %v2630 = vsub.f32 %v2502, %v2039
        %v2631 = vsub.f32 %v2503, %v2039
        %v2632 = vsub.f32 %v2504, %v2039
        %v2633 = vsub.f32 %v2505, %v2039
        %v2634 = vsub.f32 %v2506, %v2039
        %v2635 = vsub.f32 %v2507, %v2039
        %v2636 = vsub.f32 %v2508, %v2039
        %v2637 = vsub.f32 %v2509, %v2039
        %v2638 = vsub.f32 %v2510, %v2039
        %v2639 = vsub.f32 %v2511, %v2039
        %v2640 = vsub.f32 %v2512, %v2039
        %v2641 = vsub.f32 %v2513, %v2039
        %v2642 = vsub.f32 %v2514, %v2039
        %v2643 = vsub.f32 %v2515, %v2039
        %v2644 = vsub.f32 %v2516, %v2039
        %v2645 = vsub.f32 %v2517, %v2039
        %v2646 = vsub.f32 %v2518, %v2039
        %v2647 = vsub.f32 %v2519, %v2039
        %v2648 = vsub.f32 %v2520, %v2039
        %v2649 = vsub.f32 %v2521, %v2039
        %v2650 = vsub.f32 %v2522, %v2039
        %v2651 = vsub.f32 %v2523, %v2039
        %v2652 = vsub.f32 %v2524, %v2039
        %v2653 = vsub.f32 %v2525, %v2039
        %v2654 = vsub.f32 %v2526, %v2039
        %v2655 = vsub.f32 %v2527, %v2039
        %v2656 = vsub.f32 %v2528, %v2039
        %v2657 = vsub.f32 %v2529, %v2039
        %v2658 = vsub.f32 %v2530, %v2039
        %v2659 = vsub.f32 %v2531, %v2039
        %v2660 = vsub.f32 %v2532, %v2039
        %v2661 = vsub.f32 %v2533, %v2039
        %v2662 = vsub.f32 %v2534, %v2039
        %v2663 = vsub.f32 %v2535, %v2039
        %v2664 = vsub.f32 %v2536, %v2039
        %v2665 = vsub.f32 %v2537, %v2039
        %v2666 = vsub.f32 %v2538, %v2039
        %v2667 = vsub.f32 %v2539, %v2039
        %v2668 = vsub.f32 %v2540, %v2039
        %v2669 = vsub.f32 %v2541, %v2039
        %v2670 = vsub.f32 %v2542, %v2039
        %v2671 = vsub.f32 %v2543, %v2039
        %v2672 = vsub.f32 %v2544, %v2039
        %v2673 = vsub.f32 %v2545, %v2039
        %v2674 = vsub.f32 %v2546, %v2039
        %v2675 = vsub.f32 %v2547, %v2039
        %v2676 = vsub.f32 %v2548, %v2039
        %v2677 = vsub.f32 %v2549, %v2039
        %v2678 = vsub.f32 %v2550, %v2039
        %v2679 = vsub.f32 %v2551, %v2039
        %v2680 = vsub.f32 %v2552, %v2039
        %v2681 = vsub.f32 %v2553, %v2039
        %v2682 = vsub.f32 %v2554, %v2039
        %v2683 = vsub.f32 %v2555, %v2039
        %v2684 = vsub.f32 %v2556, %v2039
        %v2685 = vsub.f32 %v2557, %v2039
        %v2686 = vsub.f32 %v2558, %v2039
        %v2687 = vmul.f32 %v2559, %v2559
        %v2688 = vmul.f32 %v2560, %v2560
        %v2689 = vmul.f32 %v2561, %v2561
        %v2690 = vmul.f32 %v2562, %v2562
        %v2691 = vmul.f32 %v2563, %v2563
        %v2692 = vmul.f32 %v2564, %v2564
        %v2693 = vmul.f32 %v2565, %v2565
        %v2694 = vmul.f32 %v2566, %v2566
        %v2695 = vmul.f32 %v2567, %v2567
        %v2696 = vmul.f32 %v2568, %v2568
        %v2697 = vmul.f32 %v2569, %v2569
        %v2698 = vmul.f32 %v2570, %v2570
        %v2699 = vmul.f32 %v2571, %v2571
        %v2700 = vmul.f32 %v2572, %v2572
        %v2701 = vmul.f32 %v2573, %v2573
        %v2702 = vmul.f32 %v2574, %v2574
        %v2703 = vmul.f32 %v2575, %v2575
        %v2704 = vmul.f32 %v2576, %v2576
        %v2705 = vmul.f32 %v2577, %v2577
        %v2706 = vmul.f32 %v2578, %v2578
        %v2707 = vmul.f32 %v2579, %v2579
        %v2708 = vmul.f32 %v2580, %v2580
        %v2709 = vmul.f32 %v2581, %v2581
        %v2710 = vmul.f32 %v2582, %v2582
        %v2711 = vmul.f32 %v2583, %v2583
        %v2712 = vmul.f32 %v2584, %v2584
        %v2713 = vmul.f32 %v2585, %v2585
        %v2714 = vmul.f32 %v2586, %v2586
        %v2715 = vmul.f32 %v2587, %v2587
        %v2716 = vmul.f32 %v2588, %v2588
        %v2717 = vmul.f32 %v2589, %v2589
        %v2718 = vmul.f32 %v2590, %v2590
        %v2719 = vmul.f32 %v2591, %v2591
        %v2720 = vmul.f32 %v2592, %v2592
        %v2721 = vmul.f32 %v2593, %v2593
        %v2722 = vmul.f32 %v2594, %v2594
        %v2723 = vmul.f32 %v2595, %v2595
        %v2724 = vmul.f32 %v2596, %v2596
        %v2725 = vmul.f32 %v2597, %v2597
        %v2726 = vmul.f32 %v2598, %v2598
        %v2727 = vmul.f32 %v2599, %v2599
        %v2728 = vmul.f32 %v2600, %v2600
        %v2729 = vmul.f32 %v2601, %v2601
        %v2730 = vmul.f32 %v2602, %v2602
        %v2731 = vmul.f32 %v2603, %v2603
        %v2732 = vmul.f32 %v2604, %v2604
        %v2733 = vmul.f32 %v2605, %v2605
        %v2734 = vmul.f32 %v2606, %v2606
        %v2735 = vmul.f32 %v2607, %v2607
        %v2736 = vmul.f32 %v2608, %v2608
        %v2737 = vmul.f32 %v2609, %v2609
        %v2738 = vmul.f32 %v2610, %v2610
        %v2739 = vmul.f32 %v2611, %v2611
        %v2740 = vmul.f32 %v2612, %v2612
        %v2741 = vmul.f32 %v2613, %v2613
        %v2742 = vmul.f32 %v2614, %v2614
        %v2743 = vmul.f32 %v2615, %v2615
        %v2744 = vmul.f32 %v2616, %v2616
        %v2745 = vmul.f32 %v2617, %v2617
        %v2746 = vmul.f32 %v2618, %v2618
        %v2747 = vmul.f32 %v2619, %v2619
        %v2748 = vmul.f32 %v2620, %v2620
        %v2749 = vmul.f32 %v2621, %v2621
        %v2750 = vmul.f32 %v2622, %v2622
        %v2751 = vmul.f32 %v2623, %v2623
        %v2752 = vmul.f32 %v2624, %v2624
        %v2753 = vmul.f32 %v2625, %v2625
        %v2754 = vmul.f32 %v2626, %v2626
        %v2755 = vmul.f32 %v2627, %v2627
        %v2756 = vmul.f32 %v2628, %v2628
        %v2757 = vmul.f32 %v2629, %v2629
        %v2758 = vmul.f32 %v2630, %v2630
        %v2759 = vmul.f32 %v2631, %v2631
        %v2760 = vmul.f32 %v2632, %v2632
        %v2761 = vmul.f32 %v2633, %v2633
        %v2762 = vmul.f32 %v2634, %v2634
        %v2763 = vmul.f32 %v2635, %v2635
        %v2764 = vmul.f32 %v2636, %v2636
        %v2765 = vmul.f32 %v2637, %v2637
        %v2766 = vmul.f32 %v2638, %v2638
        %v2767 = vmul.f32 %v2639, %v2639
        %v2768 = vmul.f32 %v2640, %v2640
        %v2769 = vmul.f32 %v2641, %v2641
        %v2770 = vmul.f32 %v2642, %v2642
        %v2771 = vmul.f32 %v2643, %v2643
        %v2772 = vmul.f32 %v2644, %v2644
        %v2773 = vmul.f32 %v2645, %v2645
        %v2774 = vmul.f32 %v2646, %v2646
        %v2775 = vmul.f32 %v2647, %v2647
        %v2776 = vmul.f32 %v2648, %v2648
        %v2777 = vmul.f32 %v2649, %v2649
        %v2778 = vmul.f32 %v2650, %v2650
        %v2779 = vmul.f32 %v2651, %v2651
        %v2780 = vmul.f32 %v2652, %v2652
        %v2781 = vmul.f32 %v2653, %v2653
        %v2782 = vmul.f32 %v2654, %v2654
        %v2783 = vmul.f32 %v2655, %v2655
        %v2784 = vmul.f32 %v2656, %v2656
        %v2785 = vmul.f32 %v2657, %v2657
        %v2786 = vmul.f32 %v2658, %v2658
        %v2787 = vmul.f32 %v2659, %v2659
        %v2788 = vmul.f32 %v2660, %v2660
        %v2789 = vmul.f32 %v2661, %v2661
        %v2790 = vmul.f32 %v2662, %v2662
        %v2791 = vmul.f32 %v2663, %v2663
        %v2792 = vmul.f32 %v2664, %v2664
        %v2793 = vmul.f32 %v2665, %v2665
        %v2794 = vmul.f32 %v2666, %v2666
        %v2795 = vmul.f32 %v2667, %v2667
        %v2796 = vmul.f32 %v2668, %v2668
        %v2797 = vmul.f32 %v2669, %v2669
        %v2798 = vmul.f32 %v2670, %v2670
        %v2799 = vmul.f32 %v2671, %v2671
        %v2800 = vmul.f32 %v2672, %v2672
        %v2801 = vmul.f32 %v2673, %v2673
        %v2802 = vmul.f32 %v2674, %v2674
        %v2803 = vmul.f32 %v2675, %v2675
        %v2804 = vmul.f32 %v2676, %v2676
        %v2805 = vmul.f32 %v2677, %v2677
        %v2806 = vmul.f32 %v2678, %v2678
        %v2807 = vmul.f32 %v2679, %v2679
        %v2808 = vmul.f32 %v2680, %v2680
        %v2809 = vmul.f32 %v2681, %v2681
        %v2810 = vmul.f32 %v2682, %v2682
        %v2811 = vmul.f32 %v2683, %v2683
        %v2812 = vmul.f32 %v2684, %v2684
        %v2813 = vmul.f32 %v2685, %v2685
        %v2814 = vmul.f32 %v2686, %v2686
        %v2815 = vadd.f32 %v2687, %v2688
        %v2816 = vadd.f32 %v2815, %v2689
        %v2817 = vadd.f32 %v2816, %v2690
        %v2818 = vadd.f32 %v2817, %v2691
        %v2819 = vadd.f32 %v2818, %v2692
        %v2820 = vadd.f32 %v2819, %v2693
        %v2821 = vadd.f32 %v2820, %v2694
        %v2822 = vadd.f32 %v2821, %v2695
        %v2823 = vadd.f32 %v2822, %v2696
        %v2824 = vadd.f32 %v2823, %v2697
        %v2825 = vadd.f32 %v2824, %v2698
        %v2826 = vadd.f32 %v2825, %v2699
        %v2827 = vadd.f32 %v2826, %v2700
        %v2828 = vadd.f32 %v2827, %v2701
        %v2829 = vadd.f32 %v2828, %v2702
        %v2830 = vadd.f32 %v2829, %v2703
        %v2831 = vadd.f32 %v2830, %v2704
        %v2832 = vadd.f32 %v2831, %v2705
        %v2833 = vadd.f32 %v2832, %v2706
        %v2834 = vadd.f32 %v2833, %v2707
        %v2835 = vadd.f32 %v2834, %v2708
        %v2836 = vadd.f32 %v2835, %v2709
        %v2837 = vadd.f32 %v2836, %v2710
        %v2838 = vadd.f32 %v2837, %v2711
        %v2839 = vadd.f32 %v2838, %v2712
        %v2840 = vadd.f32 %v2839, %v2713
        %v2841 = vadd.f32 %v2840, %v2714
        %v2842 = vadd.f32 %v2841, %v2715
        %v2843 = vadd.f32 %v2842, %v2716
        %v2844 = vadd.f32 %v2843, %v2717
        %v2845 = vadd.f32 %v2844, %v2718
        %v2846 = vadd.f32 %v2845, %v2719
        %v2847 = vadd.f32 %v2846, %v2720
        %v2848 = vadd.f32 %v2847, %v2721
        %v2849 = vadd.f32 %v2848, %v2722
        %v2850 = vadd.f32 %v2849, %v2723
        %v2851 = vadd.f32 %v2850, %v2724
        %v2852 = vadd.f32 %v2851, %v2725
        %v2853 = vadd.f32 %v2852, %v2726
        %v2854 = vadd.f32 %v2853, %v2727
        %v2855 = vadd.f32 %v2854, %v2728
        %v2856 = vadd.f32 %v2855, %v2729
        %v2857 = vadd.f32 %v2856, %v2730
        %v2858 = vadd.f32 %v2857, %v2731
        %v2859 = vadd.f32 %v2858, %v2732
        %v2860 = vadd.f32 %v2859, %v2733
        %v2861 = vadd.f32 %v2860, %v2734
        %v2862 = vadd.f32 %v2861, %v2735
        %v2863 = vadd.f32 %v2862, %v2736
        %v2864 = vadd.f32 %v2863, %v2737
        %v2865 = vadd.f32 %v2864, %v2738
        %v2866 = vadd.f32 %v2865, %v2739
        %v2867 = vadd.f32 %v2866, %v2740
        %v2868 = vadd.f32 %v2867, %v2741
        %v2869 = vadd.f32 %v2868, %v2742
        %v2870 = vadd.f32 %v2869, %v2743
        %v2871 = vadd.f32 %v2870, %v2744
        %v2872 = vadd.f32 %v2871, %v2745
        %v2873 = vadd.f32 %v2872, %v2746
        %v2874 = vadd.f32 %v2873, %v2747
        %v2875 = vadd.f32 %v2874, %v2748
        %v2876 = vadd.f32 %v2875, %v2749
        %v2877 = vadd.f32 %v2876, %v2750
        %v2878 = vadd.f32 %v2877, %v2751
        %v2879 = vadd.f32 %v2878, %v2752
        %v2880 = vadd.f32 %v2879, %v2753
        %v2881 = vadd.f32 %v2880, %v2754
        %v2882 = vadd.f32 %v2881, %v2755
        %v2883 = vadd.f32 %v2882, %v2756
        %v2884 = vadd.f32 %v2883, %v2757
        %v2885 = vadd.f32 %v2884, %v2758
        %v2886 = vadd.f32 %v2885, %v2759
        %v2887 = vadd.f32 %v2886, %v2760
        %v2888 = vadd.f32 %v2887, %v2761
        %v2889 = vadd.f32 %v2888, %v2762
        %v2890 = vadd.f32 %v2889, %v2763
        %v2891 = vadd.f32 %v2890, %v2764
        %v2892 = vadd.f32 %v2891, %v2765
        %v2893 = vadd.f32 %v2892, %v2766
        %v2894 = vadd.f32 %v2893, %v2767
        %v2895 = vadd.f32 %v2894, %v2768
        %v2896 = vadd.f32 %v2895, %v2769
        %v2897 = vadd.f32 %v2896, %v2770
        %v2898 = vadd.f32 %v2897, %v2771
        %v2899 = vadd.f32 %v2898, %v2772
        %v2900 = vadd.f32 %v2899, %v2773
        %v2901 = vadd.f32 %v2900, %v2774
        %v2902 = vadd.f32 %v2901, %v2775
        %v2903 = vadd.f32 %v2902, %v2776
        %v2904 = vadd.f32 %v2903, %v2777
        %v2905 = vadd.f32 %v2904, %v2778
        %v2906 = vadd.f32 %v2905, %v2779
        %v2907 = vadd.f32 %v2906, %v2780
        %v2908 = vadd.f32 %v2907, %v2781
        %v2909 = vadd.f32 %v2908, %v2782
        %v2910 = vadd.f32 %v2909, %v2783
        %v2911 = vadd.f32 %v2910, %v2784
        %v2912 = vadd.f32 %v2911, %v2785
        %v2913 = vadd.f32 %v2912, %v2786
        %v2914 = vadd.f32 %v2913, %v2787
        %v2915 = vadd.f32 %v2914, %v2788
        %v2916 = vadd.f32 %v2915, %v2789
        %v2917 = vadd.f32 %v2916, %v2790
        %v2918 = vadd.f32 %v2917, %v2791
        %v2919 = vadd.f32 %v2918, %v2792
        %v2920 = vadd.f32 %v2919, %v2793
        %v2921 = vadd.f32 %v2920, %v2794
        %v2922 = vadd.f32 %v2921, %v2795
        %v2923 = vadd.f32 %v2922, %v2796
        %v2924 = vadd.f32 %v2923, %v2797
        %v2925 = vadd.f32 %v2924, %v2798
        %v2926 = vadd.f32 %v2925, %v2799
        %v2927 = vadd.f32 %v2926, %v2800
        %v2928 = vadd.f32 %v2927, %v2801
        %v2929 = vadd.f32 %v2928, %v2802
        %v2930 = vadd.f32 %v2929, %v2803
        %v2931 = vadd.f32 %v2930, %v2804
        %v2932 = vadd.f32 %v2931, %v2805
        %v2933 = vadd.f32 %v2932, %v2806
        %v2934 = vadd.f32 %v2933, %v2807
        %v2935 = vadd.f32 %v2934, %v2808
        %v2936 = vadd.f32 %v2935, %v2809
        %v2937 = vadd.f32 %v2936, %v2810
        %v2938 = vadd.f32 %v2937, %v2811
        %v2939 = vadd.f32 %v2938, %v2812
        %v2940 = vadd.f32 %v2939, %v2813
        %v2941 = vadd.f32 %v2940, %v2814
        %v2942 = vrot.slane %v2941, 4
        %v2943 = vadd.f32 %v2941, %v2942
        %v2944 = vrot.slane %v2943, 2
        %v2945 = vadd.f32 %v2943, %v2944
        %v2946 = vrot.slane %v2945, 1
        %v2947 = vadd.f32 %v2945, %v2946
        %v2948 = vadd.f32 %v2430, %v2947
        %v2949 = vmul.f32 %v2948, 0.00048828125
        %v2950 = vld [vmem:[%s2] sm:$0x1]
        %v2951 = vadd.f32 %v2949, 1e-05
        %v2952 = vrsqrt.pop %v2951
        %v2953 = vmul.f32 %v2950, %v2952
        %v2954 = vld [vmem:[%s3] sm:$0x1]
        %v2955 = vmul.f32 %v1906, %v2953
        %v2956 = vsub.f32 %v2954, %v2955
        %v2958 = vlaneseq
        %v2959 = vshrl.u32 %v2958, 7
        %v2960 = vsub.s32 0, %v2959
        %v2961 = vrot.slane %v2953, %v2960
        %v2963 = vmul.f32 %v1907, %v2961
        %v2964 = vmul.f32 %v1908, %v2961
        %v2965 = vmul.f32 %v1909, %v2961
        %v2966 = vmul.f32 %v1910, %v2961
        %v2967 = vmul.f32 %v1911, %v2961
        %v2968 = vmul.f32 %v1912, %v2961
        %v2969 = vmul.f32 %v1913, %v2961
        %v2970 = vmul.f32 %v1914, %v2961
        %v2971 = vmul.f32 %v1915, %v2961
        %v2972 = vmul.f32 %v1916, %v2961
        %v2973 = vmul.f32 %v1917, %v2961
        %v2974 = vmul.f32 %v1918, %v2961
        %v2975 = vmul.f32 %v1919, %v2961
        %v2976 = vmul.f32 %v1920, %v2961
        %v2977 = vmul.f32 %v1921, %v2961
        %v2978 = vmul.f32 %v1922, %v2961
        %v2979 = vmul.f32 %v1923, %v2961
        %v2980 = vmul.f32 %v1924, %v2961
        %v2981 = vmul.f32 %v1925, %v2961
        %v2982 = vmul.f32 %v1926, %v2961
        %v2983 = vmul.f32 %v1927, %v2961
        %v2984 = vmul.f32 %v1928, %v2961
        %v2985 = vmul.f32 %v1929, %v2961
        %v2986 = vmul.f32 %v1930, %v2961
        %v2987 = vmul.f32 %v1931, %v2961
        %v2988 = vmul.f32 %v1932, %v2961
        %v2989 = vmul.f32 %v1933, %v2961
        %v2990 = vmul.f32 %v1934, %v2961
        %v2991 = vmul.f32 %v1935, %v2961
        %v2992 = vmul.f32 %v1936, %v2961
        %v2993 = vmul.f32 %v1937, %v2961
        %v2994 = vmul.f32 %v1938, %v2961
        %v2995 = vmul.f32 %v1939, %v2961
        %v2996 = vmul.f32 %v1940, %v2961
        %v2997 = vmul.f32 %v1941, %v2961
        %v2998 = vmul.f32 %v1942, %v2961
        %v2999 = vmul.f32 %v1943, %v2961
        %v3000 = vmul.f32 %v1944, %v2961
        %v3001 = vmul.f32 %v1945, %v2961
        %v3002 = vmul.f32 %v1946, %v2961
        %v3003 = vmul.f32 %v1947, %v2961
        %v3004 = vmul.f32 %v1948, %v2961
        %v3005 = vmul.f32 %v1949, %v2961
        %v3006 = vmul.f32 %v1950, %v2961
        %v3007 = vmul.f32 %v1951, %v2961
        %v3008 = vmul.f32 %v1952, %v2961
        %v3009 = vmul.f32 %v1953, %v2961
        %v3010 = vmul.f32 %v1954, %v2961
        %v3011 = vmul.f32 %v1955, %v2961
        %v3012 = vmul.f32 %v1956, %v2961
        %v3013 = vmul.f32 %v1957, %v2961
        %v3014 = vmul.f32 %v1958, %v2961
        %v3015 = vmul.f32 %v1959, %v2961
        %v3016 = vmul.f32 %v1960, %v2961
        %v3017 = vmul.f32 %v1961, %v2961
        %v3018 = vmul.f32 %v1962, %v2961
        %v3019 = vmul.f32 %v1963, %v2961
        %v3020 = vmul.f32 %v1964, %v2961
        %v3021 = vmul.f32 %v1965, %v2961
        %v3022 = vmul.f32 %v1966, %v2961
        %v3023 = vmul.f32 %v1967, %v2961
        %v3024 = vmul.f32 %v1968, %v2961
        %v3025 = vmul.f32 %v1969, %v2961
        %v3026 = vmul.f32 %v1970, %v2961
        %v3027 = vmul.f32 %v1971, %v2961
        %v3028 = vmul.f32 %v1972, %v2961
        %v3029 = vmul.f32 %v1973, %v2961
        %v3030 = vmul.f32 %v1974, %v2961
        %v3031 = vmul.f32 %v1975, %v2961
        %v3032 = vmul.f32 %v1976, %v2961
        %v3033 = vmul.f32 %v1977, %v2961
        %v3034 = vmul.f32 %v1978, %v2961
        %v3035 = vmul.f32 %v1979, %v2961
        %v3036 = vmul.f32 %v1980, %v2961
        %v3037 = vmul.f32 %v1981, %v2961
        %v3038 = vmul.f32 %v1982, %v2961
        %v3039 = vmul.f32 %v1983, %v2961
        %v3040 = vmul.f32 %v1984, %v2961
        %v3041 = vmul.f32 %v1985, %v2961
        %v3042 = vmul.f32 %v1986, %v2961
        %v3043 = vmul.f32 %v1987, %v2961
        %v3044 = vmul.f32 %v1988, %v2961
        %v3045 = vmul.f32 %v1989, %v2961
        %v3046 = vmul.f32 %v1990, %v2961
        %v3047 = vmul.f32 %v1991, %v2961
        %v3048 = vmul.f32 %v1992, %v2961
        %v3049 = vmul.f32 %v1993, %v2961
        %v3050 = vmul.f32 %v1994, %v2961
        %v3051 = vmul.f32 %v1995, %v2961
        %v3052 = vmul.f32 %v1996, %v2961
        %v3053 = vmul.f32 %v1997, %v2961
        %v3054 = vmul.f32 %v1998, %v2961
        %v3055 = vmul.f32 %v1999, %v2961
        %v3056 = vmul.f32 %v2000, %v2961
        %v3057 = vmul.f32 %v2001, %v2961
        %v3058 = vmul.f32 %v2002, %v2961
        %v3059 = vmul.f32 %v2003, %v2961
        %v3060 = vmul.f32 %v2004, %v2961
        %v3061 = vmul.f32 %v2005, %v2961
        %v3062 = vmul.f32 %v2006, %v2961
        %v3063 = vmul.f32 %v2007, %v2961
        %v3064 = vmul.f32 %v2008, %v2961
        %v3065 = vmul.f32 %v2009, %v2961
        %v3066 = vmul.f32 %v2010, %v2961
        %v3067 = vmul.f32 %v2011, %v2961
        %v3068 = vmul.f32 %v2012, %v2961
        %v3069 = vmul.f32 %v2013, %v2961
        %v3070 = vmul.f32 %v2014, %v2961
        %v3071 = vmul.f32 %v2015, %v2961
        %v3072 = vmul.f32 %v2016, %v2961
        %v3073 = vmul.f32 %v2017, %v2961
        %v3074 = vmul.f32 %v2018, %v2961
        %v3075 = vmul.f32 %v2019, %v2961
        %v3076 = vmul.f32 %v2020, %v2961
        %v3077 = vmul.f32 %v2021, %v2961
        %v3078 = vmul.f32 %v2022, %v2961
        %v3079 = vmul.f32 %v2023, %v2961
        %v3080 = vmul.f32 %v2024, %v2961
        %v3081 = vmul.f32 %v2025, %v2961
        %v3082 = vmul.f32 %v2026, %v2961
        %v3083 = vmul.f32 %v2027, %v2961
        %v3084 = vmul.f32 %v2028, %v2961
        %v3085 = vmul.f32 %v2029, %v2961
        %v3086 = vmul.f32 %v2030, %v2961
        %v3087 = vmul.f32 %v2031, %v2961
        %v3088 = vmul.f32 %v2032, %v2961
        %v3089 = vmul.f32 %v2033, %v2961
        %v3090 = vmul.f32 %v2034, %v2961
        %v3092 = vlaneseq
        %v3093 = vshrl.u32 %v3092, 7
        %v3094 = vsub.s32 0, %v3093
        %v3095 = vrot.slane %v2956, %v3094
        %v3097 = vadd.f32 %v2963, %v3095
        %v3098 = vadd.f32 %v2964, %v3095
        %v3099 = vadd.f32 %v2965, %v3095
        %v3100 = vadd.f32 %v2966, %v3095
        %v3101 = vadd.f32 %v2967, %v3095
        %v3102 = vadd.f32 %v2968, %v3095
        %v3103 = vadd.f32 %v2969, %v3095
        %v3104 = vadd.f32 %v2970, %v3095
        %v3105 = vadd.f32 %v2971, %v3095
        %v3106 = vadd.f32 %v2972, %v3095
        %v3107 = vadd.f32 %v2973, %v3095
        %v3108 = vadd.f32 %v2974, %v3095
        %v3109 = vadd.f32 %v2975, %v3095
        %v3110 = vadd.f32 %v2976, %v3095
        %v3111 = vadd.f32 %v2977, %v3095
        %v3112 = vadd.f32 %v2978, %v3095
        %v3113 = vadd.f32 %v2979, %v3095
        %v3114 = vadd.f32 %v2980, %v3095
        %v3115 = vadd.f32 %v2981, %v3095
        %v3116 = vadd.f32 %v2982, %v3095
        %v3117 = vadd.f32 %v2983, %v3095
        %v3118 = vadd.f32 %v2984, %v3095
        %v3119 = vadd.f32 %v2985, %v3095
        %v3120 = vadd.f32 %v2986, %v3095
        %v3121 = vadd.f32 %v2987, %v3095
        %v3122 = vadd.f32 %v2988, %v3095
        %v3123 = vadd.f32 %v2989, %v3095
        %v3124 = vadd.f32 %v2990, %v3095
        %v3125 = vadd.f32 %v2991, %v3095
        %v3126 = vadd.f32 %v2992, %v3095
        %v3127 = vadd.f32 %v2993, %v3095
        %v3128 = vadd.f32 %v2994, %v3095
        %v3129 = vadd.f32 %v2995, %v3095
        %v3130 = vadd.f32 %v2996, %v3095
        %v3131 = vadd.f32 %v2997, %v3095
        %v3132 = vadd.f32 %v2998, %v3095
        %v3133 = vadd.f32 %v2999, %v3095
        %v3134 = vadd.f32 %v3000, %v3095
        %v3135 = vadd.f32 %v3001, %v3095
        %v3136 = vadd.f32 %v3002, %v3095
        %v3137 = vadd.f32 %v3003, %v3095
        %v3138 = vadd.f32 %v3004, %v3095
        %v3139 = vadd.f32 %v3005, %v3095
        %v3140 = vadd.f32 %v3006, %v3095
        %v3141 = vadd.f32 %v3007, %v3095
        %v3142 = vadd.f32 %v3008, %v3095
        %v3143 = vadd.f32 %v3009, %v3095
        %v3144 = vadd.f32 %v3010, %v3095
        %v3145 = vadd.f32 %v3011, %v3095
        %v3146 = vadd.f32 %v3012, %v3095
        %v3147 = vadd.f32 %v3013, %v3095
        %v3148 = vadd.f32 %v3014, %v3095
        %v3149 = vadd.f32 %v3015, %v3095
        %v3150 = vadd.f32 %v3016, %v3095
        %v3151 = vadd.f32 %v3017, %v3095
        %v3152 = vadd.f32 %v3018, %v3095
        %v3153 = vadd.f32 %v3019, %v3095
        %v3154 = vadd.f32 %v3020, %v3095
        %v3155 = vadd.f32 %v3021, %v3095
        %v3156 = vadd.f32 %v3022, %v3095
        %v3157 = vadd.f32 %v3023, %v3095
        %v3158 = vadd.f32 %v3024, %v3095
        %v3159 = vadd.f32 %v3025, %v3095
        %v3160 = vadd.f32 %v3026, %v3095
        %v3161 = vadd.f32 %v3027, %v3095
        %v3162 = vadd.f32 %v3028, %v3095
        %v3163 = vadd.f32 %v3029, %v3095
        %v3164 = vadd.f32 %v3030, %v3095
        %v3165 = vadd.f32 %v3031, %v3095
        %v3166 = vadd.f32 %v3032, %v3095
        %v3167 = vadd.f32 %v3033, %v3095
        %v3168 = vadd.f32 %v3034, %v3095
        %v3169 = vadd.f32 %v3035, %v3095
        %v3170 = vadd.f32 %v3036, %v3095
        %v3171 = vadd.f32 %v3037, %v3095
        %v3172 = vadd.f32 %v3038, %v3095
        %v3173 = vadd.f32 %v3039, %v3095
        %v3174 = vadd.f32 %v3040, %v3095
        %v3175 = vadd.f32 %v3041, %v3095
        %v3176 = vadd.f32 %v3042, %v3095
        %v3177 = vadd.f32 %v3043, %v3095
        %v3178 = vadd.f32 %v3044, %v3095
        %v3179 = vadd.f32 %v3045, %v3095
        %v3180 = vadd.f32 %v3046, %v3095
        %v3181 = vadd.f32 %v3047, %v3095
        %v3182 = vadd.f32 %v3048, %v3095
        %v3183 = vadd.f32 %v3049, %v3095
        %v3184 = vadd.f32 %v3050, %v3095
        %v3185 = vadd.f32 %v3051, %v3095
        %v3186 = vadd.f32 %v3052, %v3095
        %v3187 = vadd.f32 %v3053, %v3095
        %v3188 = vadd.f32 %v3054, %v3095
        %v3189 = vadd.f32 %v3055, %v3095
        %v3190 = vadd.f32 %v3056, %v3095
        %v3191 = vadd.f32 %v3057, %v3095
        %v3192 = vadd.f32 %v3058, %v3095
        %v3193 = vadd.f32 %v3059, %v3095
        %v3194 = vadd.f32 %v3060, %v3095
        %v3195 = vadd.f32 %v3061, %v3095
        %v3196 = vadd.f32 %v3062, %v3095
        %v3197 = vadd.f32 %v3063, %v3095
        %v3198 = vadd.f32 %v3064, %v3095
        %v3199 = vadd.f32 %v3065, %v3095
        %v3200 = vadd.f32 %v3066, %v3095
        %v3201 = vadd.f32 %v3067, %v3095
        %v3202 = vadd.f32 %v3068, %v3095
        %v3203 = vadd.f32 %v3069, %v3095
        %v3204 = vadd.f32 %v3070, %v3095
        %v3205 = vadd.f32 %v3071, %v3095
        %v3206 = vadd.f32 %v3072, %v3095
        %v3207 = vadd.f32 %v3073, %v3095
        %v3208 = vadd.f32 %v3074, %v3095
        %v3209 = vadd.f32 %v3075, %v3095
        %v3210 = vadd.f32 %v3076, %v3095
        %v3211 = vadd.f32 %v3077, %v3095
        %v3212 = vadd.f32 %v3078, %v3095
        %v3213 = vadd.f32 %v3079, %v3095
        %v3214 = vadd.f32 %v3080, %v3095
        %v3215 = vadd.f32 %v3081, %v3095
        %v3216 = vadd.f32 %v3082, %v3095
        %v3217 = vadd.f32 %v3083, %v3095
        %v3218 = vadd.f32 %v3084, %v3095
        %v3219 = vadd.f32 %v3085, %v3095
        %v3220 = vadd.f32 %v3086, %v3095
        %v3221 = vadd.f32 %v3087, %v3095
        %v3222 = vadd.f32 %v3088, %v3095
        %v3223 = vadd.f32 %v3089, %v3095
        %v3224 = vadd.f32 %v3090, %v3095
        %v3225 = vmax.f32 %v3097, 0.0
        %v3226 = vmax.f32 %v3098, 0.0
        %v3227 = vmax.f32 %v3099, 0.0
        %v3228 = vmax.f32 %v3100, 0.0
        %v3229 = vmax.f32 %v3101, 0.0
        %v3230 = vmax.f32 %v3102, 0.0
        %v3231 = vmax.f32 %v3103, 0.0
        %v3232 = vmax.f32 %v3104, 0.0
        %v3233 = vmax.f32 %v3105, 0.0
        %v3234 = vmax.f32 %v3106, 0.0
        %v3235 = vmax.f32 %v3107, 0.0
        %v3236 = vmax.f32 %v3108, 0.0
        %v3237 = vmax.f32 %v3109, 0.0
        %v3238 = vmax.f32 %v3110, 0.0
        %v3239 = vmax.f32 %v3111, 0.0
        %v3240 = vmax.f32 %v3112, 0.0
        %v3241 = vmax.f32 %v3113, 0.0
        %v3242 = vmax.f32 %v3114, 0.0
        %v3243 = vmax.f32 %v3115, 0.0
        %v3244 = vmax.f32 %v3116, 0.0
        %v3245 = vmax.f32 %v3117, 0.0
        %v3246 = vmax.f32 %v3118, 0.0
        %v3247 = vmax.f32 %v3119, 0.0
        %v3248 = vmax.f32 %v3120, 0.0
        %v3249 = vmax.f32 %v3121, 0.0
        %v3250 = vmax.f32 %v3122, 0.0
        %v3251 = vmax.f32 %v3123, 0.0
        %v3252 = vmax.f32 %v3124, 0.0
        %v3253 = vmax.f32 %v3125, 0.0
        %v3254 = vmax.f32 %v3126, 0.0
        %v3255 = vmax.f32 %v3127, 0.0
        %v3256 = vmax.f32 %v3128, 0.0
        %v3257 = vmax.f32 %v3129, 0.0
        %v3258 = vmax.f32 %v3130, 0.0
        %v3259 = vmax.f32 %v3131, 0.0
        %v3260 = vmax.f32 %v3132, 0.0
        %v3261 = vmax.f32 %v3133, 0.0
        %v3262 = vmax.f32 %v3134, 0.0
        %v3263 = vmax.f32 %v3135, 0.0
        %v3264 = vmax.f32 %v3136, 0.0
        %v3265 = vmax.f32 %v3137, 0.0
        %v3266 = vmax.f32 %v3138, 0.0
        %v3267 = vmax.f32 %v3139, 0.0
        %v3268 = vmax.f32 %v3140, 0.0
        %v3269 = vmax.f32 %v3141, 0.0
        %v3270 = vmax.f32 %v3142, 0.0
        %v3271 = vmax.f32 %v3143, 0.0
        %v3272 = vmax.f32 %v3144, 0.0
        %v3273 = vmax.f32 %v3145, 0.0
        %v3274 = vmax.f32 %v3146, 0.0
        %v3275 = vmax.f32 %v3147, 0.0
        %v3276 = vmax.f32 %v3148, 0.0
        %v3277 = vmax.f32 %v3149, 0.0
        %v3278 = vmax.f32 %v3150, 0.0
        %v3279 = vmax.f32 %v3151, 0.0
        %v3280 = vmax.f32 %v3152, 0.0
        %v3281 = vmax.f32 %v3153, 0.0
        %v3282 = vmax.f32 %v3154, 0.0
        %v3283 = vmax.f32 %v3155, 0.0
        %v3284 = vmax.f32 %v3156, 0.0
        %v3285 = vmax.f32 %v3157, 0.0
        %v3286 = vmax.f32 %v3158, 0.0
        %v3287 = vmax.f32 %v3159, 0.0
        %v3288 = vmax.f32 %v3160, 0.0
        %v3289 = vmax.f32 %v3161, 0.0
        %v3290 = vmax.f32 %v3162, 0.0
        %v3291 = vmax.f32 %v3163, 0.0
        %v3292 = vmax.f32 %v3164, 0.0
        %v3293 = vmax.f32 %v3165, 0.0
        %v3294 = vmax.f32 %v3166, 0.0
        %v3295 = vmax.f32 %v3167, 0.0
        %v3296 = vmax.f32 %v3168, 0.0
        %v3297 = vmax.f32 %v3169, 0.0
        %v3298 = vmax.f32 %v3170, 0.0
        %v3299 = vmax.f32 %v3171, 0.0
        %v3300 = vmax.f32 %v3172, 0.0
        %v3301 = vmax.f32 %v3173, 0.0
        %v3302 = vmax.f32 %v3174, 0.0
        %v3303 = vmax.f32 %v3175, 0.0
        %v3304 = vmax.f32 %v3176, 0.0
        %v3305 = vmax.f32 %v3177, 0.0
        %v3306 = vmax.f32 %v3178, 0.0
        %v3307 = vmax.f32 %v3179, 0.0
        %v3308 = vmax.f32 %v3180, 0.0
        %v3309 = vmax.f32 %v3181, 0.0
        %v3310 = vmax.f32 %v3182, 0.0
        %v3311 = vmax.f32 %v3183, 0.0
        %v3312 = vmax.f32 %v3184, 0.0
        %v3313 = vmax.f32 %v3185, 0.0
        %v3314 = vmax.f32 %v3186, 0.0
        %v3315 = vmax.f32 %v3187, 0.0
        %v3316 = vmax.f32 %v3188, 0.0
        %v3317 = vmax.f32 %v3189, 0.0
        %v3318 = vmax.f32 %v3190, 0.0
        %v3319 = vmax.f32 %v3191, 0.0
        %v3320 = vmax.f32 %v3192, 0.0
        %v3321 = vmax.f32 %v3193, 0.0
        %v3322 = vmax.f32 %v3194, 0.0
        %v3323 = vmax.f32 %v3195, 0.0
        %v3324 = vmax.f32 %v3196, 0.0
        %v3325 = vmax.f32 %v3197, 0.0
        %v3326 = vmax.f32 %v3198, 0.0
        %v3327 = vmax.f32 %v3199, 0.0
        %v3328 = vmax.f32 %v3200, 0.0
        %v3329 = vmax.f32 %v3201, 0.0
        %v3330 = vmax.f32 %v3202, 0.0
        %v3331 = vmax.f32 %v3203, 0.0
        %v3332 = vmax.f32 %v3204, 0.0
        %v3333 = vmax.f32 %v3205, 0.0
        %v3334 = vmax.f32 %v3206, 0.0
        %v3335 = vmax.f32 %v3207, 0.0
        %v3336 = vmax.f32 %v3208, 0.0
        %v3337 = vmax.f32 %v3209, 0.0
        %v3338 = vmax.f32 %v3210, 0.0
        %v3339 = vmax.f32 %v3211, 0.0
        %v3340 = vmax.f32 %v3212, 0.0
        %v3341 = vmax.f32 %v3213, 0.0
        %v3342 = vmax.f32 %v3214, 0.0
        %v3343 = vmax.f32 %v3215, 0.0
        %v3344 = vmax.f32 %v3216, 0.0
        %v3345 = vmax.f32 %v3217, 0.0
        %v3346 = vmax.f32 %v3218, 0.0
        %v3347 = vmax.f32 %v3219, 0.0
        %v3348 = vmax.f32 %v3220, 0.0
        %v3349 = vmax.f32 %v3221, 0.0
        %v3350 = vmax.f32 %v3222, 0.0
        %v3351 = vmax.f32 %v3223, 0.0
        %v3352 = vmax.f32 %v3224, 0.0
        %v3353 = vpack.c.bf16 %v3226, %v3225
        %v3354 = vpack.c.bf16 %v3228, %v3227
        %v3355 = vpack.c.bf16 %v3230, %v3229
        %v3356 = vpack.c.bf16 %v3232, %v3231
        %v3357 = vpack.c.bf16 %v3234, %v3233
        %v3358 = vpack.c.bf16 %v3236, %v3235
        %v3359 = vpack.c.bf16 %v3238, %v3237
        %v3360 = vpack.c.bf16 %v3240, %v3239
        %v3361 = vpack.c.bf16 %v3242, %v3241
        %v3362 = vpack.c.bf16 %v3244, %v3243
        %v3363 = vpack.c.bf16 %v3246, %v3245
        %v3364 = vpack.c.bf16 %v3248, %v3247
        %v3365 = vpack.c.bf16 %v3250, %v3249
        %v3366 = vpack.c.bf16 %v3252, %v3251
        %v3367 = vpack.c.bf16 %v3254, %v3253
        %v3368 = vpack.c.bf16 %v3256, %v3255
        %v3369 = vpack.c.bf16 %v3258, %v3257
        %v3370 = vpack.c.bf16 %v3260, %v3259
        %v3371 = vpack.c.bf16 %v3262, %v3261
        %v3372 = vpack.c.bf16 %v3264, %v3263
        %v3373 = vpack.c.bf16 %v3266, %v3265
        %v3374 = vpack.c.bf16 %v3268, %v3267
        %v3375 = vpack.c.bf16 %v3270, %v3269
        %v3376 = vpack.c.bf16 %v3272, %v3271
        %v3377 = vpack.c.bf16 %v3274, %v3273
        %v3378 = vpack.c.bf16 %v3276, %v3275
        %v3379 = vpack.c.bf16 %v3278, %v3277
        %v3380 = vpack.c.bf16 %v3280, %v3279
        %v3381 = vpack.c.bf16 %v3282, %v3281
        %v3382 = vpack.c.bf16 %v3284, %v3283
        %v3383 = vpack.c.bf16 %v3286, %v3285
        %v3384 = vpack.c.bf16 %v3288, %v3287
        %v3385 = vpack.c.bf16 %v3290, %v3289
        %v3386 = vpack.c.bf16 %v3292, %v3291
        %v3387 = vpack.c.bf16 %v3294, %v3293
        %v3388 = vpack.c.bf16 %v3296, %v3295
        %v3389 = vpack.c.bf16 %v3298, %v3297
        %v3390 = vpack.c.bf16 %v3300, %v3299
        %v3391 = vpack.c.bf16 %v3302, %v3301
        %v3392 = vpack.c.bf16 %v3304, %v3303
        %v3393 = vpack.c.bf16 %v3306, %v3305
        %v3394 = vpack.c.bf16 %v3308, %v3307
        %v3395 = vpack.c.bf16 %v3310, %v3309
        %v3396 = vpack.c.bf16 %v3312, %v3311
        %v3397 = vpack.c.bf16 %v3314, %v3313
        %v3398 = vpack.c.bf16 %v3316, %v3315
        %v3399 = vpack.c.bf16 %v3318, %v3317
        %v3400 = vpack.c.bf16 %v3320, %v3319
        %v3401 = vpack.c.bf16 %v3322, %v3321
        %v3402 = vpack.c.bf16 %v3324, %v3323
        %v3403 = vpack.c.bf16 %v3326, %v3325
        %v3404 = vpack.c.bf16 %v3328, %v3327
        %v3405 = vpack.c.bf16 %v3330, %v3329
        %v3406 = vpack.c.bf16 %v3332, %v3331
        %v3407 = vpack.c.bf16 %v3334, %v3333
        %v3408 = vpack.c.bf16 %v3336, %v3335
        %v3409 = vpack.c.bf16 %v3338, %v3337
        %v3410 = vpack.c.bf16 %v3340, %v3339
        %v3411 = vpack.c.bf16 %v3342, %v3341
        %v3412 = vpack.c.bf16 %v3344, %v3343
        %v3413 = vpack.c.bf16 %v3346, %v3345
        %v3414 = vpack.c.bf16 %v3348, %v3347
        %v3415 = vpack.c.bf16 %v3350, %v3349
        %v3416 = vpack.c.bf16 %v3352, %v3351
        %v3481 = vunpack.c.l.b16 %v3353
        %v3482 = vunpack.c.h.b16 %v3353
        %v3483 = vunpack.c.l.b16 %v3354
        %v3484 = vunpack.c.h.b16 %v3354
        %v3485 = vunpack.c.l.b16 %v3355
        %v3486 = vunpack.c.h.b16 %v3355
        %v3487 = vunpack.c.l.b16 %v3356
        %v3488 = vunpack.c.h.b16 %v3356
        %v3489 = vunpack.c.l.b16 %v3357
        %v3490 = vunpack.c.h.b16 %v3357
        %v3491 = vunpack.c.l.b16 %v3358
        %v3492 = vunpack.c.h.b16 %v3358
        %v3493 = vunpack.c.l.b16 %v3359
        %v3494 = vunpack.c.h.b16 %v3359
        %v3495 = vunpack.c.l.b16 %v3360
        %v3496 = vunpack.c.h.b16 %v3360
        %v3497 = vunpack.c.l.b16 %v3361
        %v3498 = vunpack.c.h.b16 %v3361
        %v3499 = vunpack.c.l.b16 %v3362
        %v3500 = vunpack.c.h.b16 %v3362
        %v3501 = vunpack.c.l.b16 %v3363
        %v3502 = vunpack.c.h.b16 %v3363
        %v3503 = vunpack.c.l.b16 %v3364
        %v3504 = vunpack.c.h.b16 %v3364
        %v3505 = vunpack.c.l.b16 %v3365
        %v3506 = vunpack.c.h.b16 %v3365
        %v3507 = vunpack.c.l.b16 %v3366
        %v3508 = vunpack.c.h.b16 %v3366
        %v3509 = vunpack.c.l.b16 %v3367
        %v3510 = vunpack.c.h.b16 %v3367
        %v3511 = vunpack.c.l.b16 %v3368
        %v3512 = vunpack.c.h.b16 %v3368
        %v3513 = vunpack.c.l.b16 %v3369
        %v3514 = vunpack.c.h.b16 %v3369
        %v3515 = vunpack.c.l.b16 %v3370
        %v3516 = vunpack.c.h.b16 %v3370
        %v3517 = vunpack.c.l.b16 %v3371
        %v3518 = vunpack.c.h.b16 %v3371
        %v3519 = vunpack.c.l.b16 %v3372
        %v3520 = vunpack.c.h.b16 %v3372
        %v3521 = vunpack.c.l.b16 %v3373
        %v3522 = vunpack.c.h.b16 %v3373
        %v3523 = vunpack.c.l.b16 %v3374
        %v3524 = vunpack.c.h.b16 %v3374
        %v3525 = vunpack.c.l.b16 %v3375
        %v3526 = vunpack.c.h.b16 %v3375
        %v3527 = vunpack.c.l.b16 %v3376
        %v3528 = vunpack.c.h.b16 %v3376
        %v3529 = vunpack.c.l.b16 %v3377
        %v3530 = vunpack.c.h.b16 %v3377
        %v3531 = vunpack.c.l.b16 %v3378
        %v3532 = vunpack.c.h.b16 %v3378
        %v3533 = vunpack.c.l.b16 %v3379
        %v3534 = vunpack.c.h.b16 %v3379
        %v3535 = vunpack.c.l.b16 %v3380
        %v3536 = vunpack.c.h.b16 %v3380
        %v3537 = vunpack.c.l.b16 %v3381
        %v3538 = vunpack.c.h.b16 %v3381
        %v3539 = vunpack.c.l.b16 %v3382
        %v3540 = vunpack.c.h.b16 %v3382
        %v3541 = vunpack.c.l.b16 %v3383
        %v3542 = vunpack.c.h.b16 %v3383
        %v3543 = vunpack.c.l.b16 %v3384
        %v3544 = vunpack.c.h.b16 %v3384
        %v3545 = vunpack.c.l.b16 %v3385
        %v3546 = vunpack.c.h.b16 %v3385
        %v3547 = vunpack.c.l.b16 %v3386
        %v3548 = vunpack.c.h.b16 %v3386
        %v3549 = vunpack.c.l.b16 %v3387
        %v3550 = vunpack.c.h.b16 %v3387
        %v3551 = vunpack.c.l.b16 %v3388
        %v3552 = vunpack.c.h.b16 %v3388
        %v3553 = vunpack.c.l.b16 %v3389
        %v3554 = vunpack.c.h.b16 %v3389
        %v3555 = vunpack.c.l.b16 %v3390
        %v3556 = vunpack.c.h.b16 %v3390
        %v3557 = vunpack.c.l.b16 %v3391
        %v3558 = vunpack.c.h.b16 %v3391
        %v3559 = vunpack.c.l.b16 %v3392
        %v3560 = vunpack.c.h.b16 %v3392
        %v3561 = vunpack.c.l.b16 %v3393
        %v3562 = vunpack.c.h.b16 %v3393
        %v3563 = vunpack.c.l.b16 %v3394
        %v3564 = vunpack.c.h.b16 %v3394
        %v3565 = vunpack.c.l.b16 %v3395
        %v3566 = vunpack.c.h.b16 %v3395
        %v3567 = vunpack.c.l.b16 %v3396
        %v3568 = vunpack.c.h.b16 %v3396
        %v3569 = vunpack.c.l.b16 %v3397
        %v3570 = vunpack.c.h.b16 %v3397
        %v3571 = vunpack.c.l.b16 %v3398
        %v3572 = vunpack.c.h.b16 %v3398
        %v3573 = vunpack.c.l.b16 %v3399
        %v3574 = vunpack.c.h.b16 %v3399
        %v3575 = vunpack.c.l.b16 %v3400
        %v3576 = vunpack.c.h.b16 %v3400
        %v3577 = vunpack.c.l.b16 %v3401
        %v3578 = vunpack.c.h.b16 %v3401
        %v3579 = vunpack.c.l.b16 %v3402
        %v3580 = vunpack.c.h.b16 %v3402
        %v3581 = vunpack.c.l.b16 %v3403
        %v3582 = vunpack.c.h.b16 %v3403
        %v3583 = vunpack.c.l.b16 %v3404
        %v3584 = vunpack.c.h.b16 %v3404
        %v3585 = vunpack.c.l.b16 %v3405
        %v3586 = vunpack.c.h.b16 %v3405
        %v3587 = vunpack.c.l.b16 %v3406
        %v3588 = vunpack.c.h.b16 %v3406
        %v3589 = vunpack.c.l.b16 %v3407
        %v3590 = vunpack.c.h.b16 %v3407
        %v3591 = vunpack.c.l.b16 %v3408
        %v3592 = vunpack.c.h.b16 %v3408
        %v3593 = vunpack.c.l.b16 %v3409
        %v3594 = vunpack.c.h.b16 %v3409
        %v3595 = vunpack.c.l.b16 %v3410
        %v3596 = vunpack.c.h.b16 %v3410
        %v3597 = vunpack.c.l.b16 %v3411
        %v3598 = vunpack.c.h.b16 %v3411
        %v3599 = vunpack.c.l.b16 %v3412
        %v3600 = vunpack.c.h.b16 %v3412
        %v3601 = vunpack.c.l.b16 %v3413
        %v3602 = vunpack.c.h.b16 %v3413
        %v3603 = vunpack.c.l.b16 %v3414
        %v3604 = vunpack.c.h.b16 %v3414
        %v3605 = vunpack.c.l.b16 %v3415
        %v3606 = vunpack.c.h.b16 %v3415
        %v3607 = vunpack.c.l.b16 %v3416
        %v3608 = vunpack.c.h.b16 %v3416
        %v3609 = vpack.c.b16 %v3481, %v3481
        %v3610 = vpack.c.b16 %v3482, %v3482
        %v3611 = vpack.c.b16 %v3483, %v3483
        %v3612 = vpack.c.b16 %v3484, %v3484
        %v3613 = vpack.c.b16 %v3485, %v3485
        %v3614 = vpack.c.b16 %v3486, %v3486
        %v3615 = vpack.c.b16 %v3487, %v3487
        %v3616 = vpack.c.b16 %v3488, %v3488
        %v3617 = vpack.c.b16 %v3489, %v3489
        %v3618 = vpack.c.b16 %v3490, %v3490
        %v3619 = vpack.c.b16 %v3491, %v3491
        %v3620 = vpack.c.b16 %v3492, %v3492
        %v3621 = vpack.c.b16 %v3493, %v3493
        %v3622 = vpack.c.b16 %v3494, %v3494
        %v3623 = vpack.c.b16 %v3495, %v3495
        %v3624 = vpack.c.b16 %v3496, %v3496
        %v3625 = vpack.c.b16 %v3497, %v3497
        %v3626 = vpack.c.b16 %v3498, %v3498
        %v3627 = vpack.c.b16 %v3499, %v3499
        %v3628 = vpack.c.b16 %v3500, %v3500
        %v3629 = vpack.c.b16 %v3501, %v3501
        %v3630 = vpack.c.b16 %v3502, %v3502
        %v3631 = vpack.c.b16 %v3503, %v3503
        %v3632 = vpack.c.b16 %v3504, %v3504
        %v3633 = vpack.c.b16 %v3505, %v3505
        %v3634 = vpack.c.b16 %v3506, %v3506
        %v3635 = vpack.c.b16 %v3507, %v3507
        %v3636 = vpack.c.b16 %v3508, %v3508
        %v3637 = vpack.c.b16 %v3509, %v3509
        %v3638 = vpack.c.b16 %v3510, %v3510
        %v3639 = vpack.c.b16 %v3511, %v3511
        %v3640 = vpack.c.b16 %v3512, %v3512
        %v3641 = vpack.c.b16 %v3513, %v3513
        %v3642 = vpack.c.b16 %v3514, %v3514
        %v3643 = vpack.c.b16 %v3515, %v3515
        %v3644 = vpack.c.b16 %v3516, %v3516
        %v3645 = vpack.c.b16 %v3517, %v3517
        %v3646 = vpack.c.b16 %v3518, %v3518
        %v3647 = vpack.c.b16 %v3519, %v3519
        %v3648 = vpack.c.b16 %v3520, %v3520
        %v3649 = vpack.c.b16 %v3521, %v3521
        %v3650 = vpack.c.b16 %v3522, %v3522
        %v3651 = vpack.c.b16 %v3523, %v3523
        %v3652 = vpack.c.b16 %v3524, %v3524
        %v3653 = vpack.c.b16 %v3525, %v3525
        %v3654 = vpack.c.b16 %v3526, %v3526
        %v3655 = vpack.c.b16 %v3527, %v3527
        %v3656 = vpack.c.b16 %v3528, %v3528
        %v3657 = vpack.c.b16 %v3529, %v3529
        %v3658 = vpack.c.b16 %v3530, %v3530
        %v3659 = vpack.c.b16 %v3531, %v3531
        %v3660 = vpack.c.b16 %v3532, %v3532
        %v3661 = vpack.c.b16 %v3533, %v3533
        %v3662 = vpack.c.b16 %v3534, %v3534
        %v3663 = vpack.c.b16 %v3535, %v3535
        %v3664 = vpack.c.b16 %v3536, %v3536
        %v3665 = vpack.c.b16 %v3537, %v3537
        %v3666 = vpack.c.b16 %v3538, %v3538
        %v3667 = vpack.c.b16 %v3539, %v3539
        %v3668 = vpack.c.b16 %v3540, %v3540
        %v3669 = vpack.c.b16 %v3541, %v3541
        %v3670 = vpack.c.b16 %v3542, %v3542
        %v3671 = vpack.c.b16 %v3543, %v3543
        %v3672 = vpack.c.b16 %v3544, %v3544
        %v3673 = vpack.c.b16 %v3545, %v3545
        %v3674 = vpack.c.b16 %v3546, %v3546
        %v3675 = vpack.c.b16 %v3547, %v3547
        %v3676 = vpack.c.b16 %v3548, %v3548
        %v3677 = vpack.c.b16 %v3549, %v3549
        %v3678 = vpack.c.b16 %v3550, %v3550
        %v3679 = vpack.c.b16 %v3551, %v3551
        %v3680 = vpack.c.b16 %v3552, %v3552
        %v3681 = vpack.c.b16 %v3553, %v3553
        %v3682 = vpack.c.b16 %v3554, %v3554
        %v3683 = vpack.c.b16 %v3555, %v3555
        %v3684 = vpack.c.b16 %v3556, %v3556
        %v3685 = vpack.c.b16 %v3557, %v3557
        %v3686 = vpack.c.b16 %v3558, %v3558
        %v3687 = vpack.c.b16 %v3559, %v3559
        %v3688 = vpack.c.b16 %v3560, %v3560
        %v3689 = vpack.c.b16 %v3561, %v3561
        %v3690 = vpack.c.b16 %v3562, %v3562
        %v3691 = vpack.c.b16 %v3563, %v3563
        %v3692 = vpack.c.b16 %v3564, %v3564
        %v3693 = vpack.c.b16 %v3565, %v3565
        %v3694 = vpack.c.b16 %v3566, %v3566
        %v3695 = vpack.c.b16 %v3567, %v3567
        %v3696 = vpack.c.b16 %v3568, %v3568
        %v3697 = vpack.c.b16 %v3569, %v3569
        %v3698 = vpack.c.b16 %v3570, %v3570
        %v3699 = vpack.c.b16 %v3571, %v3571
        %v3700 = vpack.c.b16 %v3572, %v3572
        %v3701 = vpack.c.b16 %v3573, %v3573
        %v3702 = vpack.c.b16 %v3574, %v3574
        %v3703 = vpack.c.b16 %v3575, %v3575
        %v3704 = vpack.c.b16 %v3576, %v3576
        %v3705 = vpack.c.b16 %v3577, %v3577
        %v3706 = vpack.c.b16 %v3578, %v3578
        %v3707 = vpack.c.b16 %v3579, %v3579
        %v3708 = vpack.c.b16 %v3580, %v3580
        %v3709 = vpack.c.b16 %v3581, %v3581
        %v3710 = vpack.c.b16 %v3582, %v3582
        %v3711 = vpack.c.b16 %v3583, %v3583
        %v3712 = vpack.c.b16 %v3584, %v3584
        %v3713 = vpack.c.b16 %v3585, %v3585
        %v3714 = vpack.c.b16 %v3586, %v3586
        %v3715 = vpack.c.b16 %v3587, %v3587
        %v3716 = vpack.c.b16 %v3588, %v3588
        %v3717 = vpack.c.b16 %v3589, %v3589
        %v3718 = vpack.c.b16 %v3590, %v3590
        %v3719 = vpack.c.b16 %v3591, %v3591
        %v3720 = vpack.c.b16 %v3592, %v3592
        %v3721 = vpack.c.b16 %v3593, %v3593
        %v3722 = vpack.c.b16 %v3594, %v3594
        %v3723 = vpack.c.b16 %v3595, %v3595
        %v3724 = vpack.c.b16 %v3596, %v3596
        %v3725 = vpack.c.b16 %v3597, %v3597
        %v3726 = vpack.c.b16 %v3598, %v3598
        %v3727 = vpack.c.b16 %v3599, %v3599
        %v3728 = vpack.c.b16 %v3600, %v3600
        %v3729 = vpack.c.b16 %v3601, %v3601
        %v3730 = vpack.c.b16 %v3602, %v3602
        %v3731 = vpack.c.b16 %v3603, %v3603
        %v3732 = vpack.c.b16 %v3604, %v3604
        %v3733 = vpack.c.b16 %v3605, %v3605
        %v3734 = vpack.c.b16 %v3606, %v3606
        %v3735 = vpack.c.b16 %v3607, %v3607
        %v3736 = vpack.c.b16 %v3608, %v3608
        %vm3865 = vcmask 60416
        %3866 = vst.msk [vmem:[%s4] sm:$0xf] %vm3865, %v3609
        %3867 = vst.msk [vmem:[%s4 + $0x4] sm:$0xf] %vm3865, %v3610
        %3868 = vst.msk [vmem:[%s4 + $0x8] sm:$0xf] %vm3865, %v3611
        %3869 = vst.msk [vmem:[%s4 + $0xc] sm:$0xf] %vm3865, %v3612
        %3870 = vst.msk [vmem:[%s4 + $0x10] sm:$0xf] %vm3865, %v3613
        %3871 = vst.msk [vmem:[%s4 + $0x14] sm:$0xf] %vm3865, %v3614
        %3872 = vst.msk [vmem:[%s4 + $0x18] sm:$0xf] %vm3865, %v3615
        %3873 = vst.msk [vmem:[%s4 + $0x1c] sm:$0xf] %vm3865, %v3616
        %3874 = vst.msk [vmem:[%s4 + $0x20] sm:$0xf] %vm3865, %v3617
        %3875 = vst.msk [vmem:[%s4 + $0x24] sm:$0xf] %vm3865, %v3618
        %3876 = vst.msk [vmem:[%s4 + $0x28] sm:$0xf] %vm3865, %v3619
        %3877 = vst.msk [vmem:[%s4 + $0x2c] sm:$0xf] %vm3865, %v3620
        %3878 = vst.msk [vmem:[%s4 + $0x30] sm:$0xf] %vm3865, %v3621
        %3879 = vst.msk [vmem:[%s4 + $0x34] sm:$0xf] %vm3865, %v3622
        %3880 = vst.msk [vmem:[%s4 + $0x38] sm:$0xf] %vm3865, %v3623
        %3881 = vst.msk [vmem:[%s4 + $0x3c] sm:$0xf] %vm3865, %v3624
        %3882 = vst.msk [vmem:[%s4 + $0x40] sm:$0xf] %vm3865, %v3625
        %3883 = vst.msk [vmem:[%s4 + $0x44] sm:$0xf] %vm3865, %v3626
        %3884 = vst.msk [vmem:[%s4 + $0x48] sm:$0xf] %vm3865, %v3627
        %3885 = vst.msk [vmem:[%s4 + $0x4c] sm:$0xf] %vm3865, %v3628
        %3886 = vst.msk [vmem:[%s4 + $0x50] sm:$0xf] %vm3865, %v3629
        %3887 = vst.msk [vmem:[%s4 + $0x54] sm:$0xf] %vm3865, %v3630
        %3888 = vst.msk [vmem:[%s4 + $0x58] sm:$0xf] %vm3865, %v3631
        %3889 = vst.msk [vmem:[%s4 + $0x5c] sm:$0xf] %vm3865, %v3632
        %3890 = vst.msk [vmem:[%s4 + $0x60] sm:$0xf] %vm3865, %v3633
        %3891 = vst.msk [vmem:[%s4 + $0x64] sm:$0xf] %vm3865, %v3634
        %3892 = vst.msk [vmem:[%s4 + $0x68] sm:$0xf] %vm3865, %v3635
        %3893 = vst.msk [vmem:[%s4 + $0x6c] sm:$0xf] %vm3865, %v3636
        %3894 = vst.msk [vmem:[%s4 + $0x70] sm:$0xf] %vm3865, %v3637
        %3895 = vst.msk [vmem:[%s4 + $0x74] sm:$0xf] %vm3865, %v3638
        %3896 = vst.msk [vmem:[%s4 + $0x78] sm:$0xf] %vm3865, %v3639
        %3897 = vst.msk [vmem:[%s4 + $0x7c] sm:$0xf] %vm3865, %v3640
        %3898 = vst.msk [vmem:[%s4 + $0x80] sm:$0xf] %vm3865, %v3641
        %3899 = vst.msk [vmem:[%s4 + $0x84] sm:$0xf] %vm3865, %v3642
        %3900 = vst.msk [vmem:[%s4 + $0x88] sm:$0xf] %vm3865, %v3643
        %3901 = vst.msk [vmem:[%s4 + $0x8c] sm:$0xf] %vm3865, %v3644
        %3902 = vst.msk [vmem:[%s4 + $0x90] sm:$0xf] %vm3865, %v3645
        %3903 = vst.msk [vmem:[%s4 + $0x94] sm:$0xf] %vm3865, %v3646
        %3904 = vst.msk [vmem:[%s4 + $0x98] sm:$0xf] %vm3865, %v3647
        %3905 = vst.msk [vmem:[%s4 + $0x9c] sm:$0xf] %vm3865, %v3648
        %3906 = vst.msk [vmem:[%s4 + $0xa0] sm:$0xf] %vm3865, %v3649
        %3907 = vst.msk [vmem:[%s4 + $0xa4] sm:$0xf] %vm3865, %v3650
        %3908 = vst.msk [vmem:[%s4 + $0xa8] sm:$0xf] %vm3865, %v3651
        %3909 = vst.msk [vmem:[%s4 + $0xac] sm:$0xf] %vm3865, %v3652
        %3910 = vst.msk [vmem:[%s4 + $0xb0] sm:$0xf] %vm3865, %v3653
        %3911 = vst.msk [vmem:[%s4 + $0xb4] sm:$0xf] %vm3865, %v3654
        %3912 = vst.msk [vmem:[%s4 + $0xb8] sm:$0xf] %vm3865, %v3655
        %3913 = vst.msk [vmem:[%s4 + $0xbc] sm:$0xf] %vm3865, %v3656
        %3914 = vst.msk [vmem:[%s4 + $0xc0] sm:$0xf] %vm3865, %v3657
        %3915 = vst.msk [vmem:[%s4 + $0xc4] sm:$0xf] %vm3865, %v3658
        %3916 = vst.msk [vmem:[%s4 + $0xc8] sm:$0xf] %vm3865, %v3659
        %3917 = vst.msk [vmem:[%s4 + $0xcc] sm:$0xf] %vm3865, %v3660
        %3918 = vst.msk [vmem:[%s4 + $0xd0] sm:$0xf] %vm3865, %v3661
        %3919 = vst.msk [vmem:[%s4 + $0xd4] sm:$0xf] %vm3865, %v3662
        %3920 = vst.msk [vmem:[%s4 + $0xd8] sm:$0xf] %vm3865, %v3663
        %3921 = vst.msk [vmem:[%s4 + $0xdc] sm:$0xf] %vm3865, %v3664
        %3922 = vst.msk [vmem:[%s4 + $0xe0] sm:$0xf] %vm3865, %v3665
        %3923 = vst.msk [vmem:[%s4 + $0xe4] sm:$0xf] %vm3865, %v3666
        %3924 = vst.msk [vmem:[%s4 + $0xe8] sm:$0xf] %vm3865, %v3667
        %3925 = vst.msk [vmem:[%s4 + $0xec] sm:$0xf] %vm3865, %v3668
        %3926 = vst.msk [vmem:[%s4 + $0xf0] sm:$0xf] %vm3865, %v3669
        %3927 = vst.msk [vmem:[%s4 + $0xf4] sm:$0xf] %vm3865, %v3670
        %3928 = vst.msk [vmem:[%s4 + $0xf8] sm:$0xf] %vm3865, %v3671
        %3929 = vst.msk [vmem:[%s4 + $0xfc] sm:$0xf] %vm3865, %v3672
        %3930 = vst.msk [vmem:[%s4 + $0x100] sm:$0xf] %vm3865, %v3673
        %3931 = vst.msk [vmem:[%s4 + $0x104] sm:$0xf] %vm3865, %v3674
        %3932 = vst.msk [vmem:[%s4 + $0x108] sm:$0xf] %vm3865, %v3675
        %3933 = vst.msk [vmem:[%s4 + $0x10c] sm:$0xf] %vm3865, %v3676
        %3934 = vst.msk [vmem:[%s4 + $0x110] sm:$0xf] %vm3865, %v3677
        %3935 = vst.msk [vmem:[%s4 + $0x114] sm:$0xf] %vm3865, %v3678
        %3936 = vst.msk [vmem:[%s4 + $0x118] sm:$0xf] %vm3865, %v3679
        %3937 = vst.msk [vmem:[%s4 + $0x11c] sm:$0xf] %vm3865, %v3680
        %3938 = vst.msk [vmem:[%s4 + $0x120] sm:$0xf] %vm3865, %v3681
        %3939 = vst.msk [vmem:[%s4 + $0x124] sm:$0xf] %vm3865, %v3682
        %3940 = vst.msk [vmem:[%s4 + $0x128] sm:$0xf] %vm3865, %v3683
        %3941 = vst.msk [vmem:[%s4 + $0x12c] sm:$0xf] %vm3865, %v3684
        %3942 = vst.msk [vmem:[%s4 + $0x130] sm:$0xf] %vm3865, %v3685
        %3943 = vst.msk [vmem:[%s4 + $0x134] sm:$0xf] %vm3865, %v3686
        %3944 = vst.msk [vmem:[%s4 + $0x138] sm:$0xf] %vm3865, %v3687
        %3945 = vst.msk [vmem:[%s4 + $0x13c] sm:$0xf] %vm3865, %v3688
        %3946 = vst.msk [vmem:[%s4 + $0x140] sm:$0xf] %vm3865, %v3689
        %3947 = vst.msk [vmem:[%s4 + $0x144] sm:$0xf] %vm3865, %v3690
        %3948 = vst.msk [vmem:[%s4 + $0x148] sm:$0xf] %vm3865, %v3691
        %3949 = vst.msk [vmem:[%s4 + $0x14c] sm:$0xf] %vm3865, %v3692
        %3950 = vst.msk [vmem:[%s4 + $0x150] sm:$0xf] %vm3865, %v3693
        %3951 = vst.msk [vmem:[%s4 + $0x154] sm:$0xf] %vm3865, %v3694
        %3952 = vst.msk [vmem:[%s4 + $0x158] sm:$0xf] %vm3865, %v3695
        %3953 = vst.msk [vmem:[%s4 + $0x15c] sm:$0xf] %vm3865, %v3696
        %3954 = vst.msk [vmem:[%s4 + $0x160] sm:$0xf] %vm3865, %v3697
        %3955 = vst.msk [vmem:[%s4 + $0x164] sm:$0xf] %vm3865, %v3698
        %3956 = vst.msk [vmem:[%s4 + $0x168] sm:$0xf] %vm3865, %v3699
        %3957 = vst.msk [vmem:[%s4 + $0x16c] sm:$0xf] %vm3865, %v3700
        %3958 = vst.msk [vmem:[%s4 + $0x170] sm:$0xf] %vm3865, %v3701
        %3959 = vst.msk [vmem:[%s4 + $0x174] sm:$0xf] %vm3865, %v3702
        %3960 = vst.msk [vmem:[%s4 + $0x178] sm:$0xf] %vm3865, %v3703
        %3961 = vst.msk [vmem:[%s4 + $0x17c] sm:$0xf] %vm3865, %v3704
        %3962 = vst.msk [vmem:[%s4 + $0x180] sm:$0xf] %vm3865, %v3705
        %3963 = vst.msk [vmem:[%s4 + $0x184] sm:$0xf] %vm3865, %v3706
        %3964 = vst.msk [vmem:[%s4 + $0x188] sm:$0xf] %vm3865, %v3707
        %3965 = vst.msk [vmem:[%s4 + $0x18c] sm:$0xf] %vm3865, %v3708
        %3966 = vst.msk [vmem:[%s4 + $0x190] sm:$0xf] %vm3865, %v3709
        %3967 = vst.msk [vmem:[%s4 + $0x194] sm:$0xf] %vm3865, %v3710
        %3968 = vst.msk [vmem:[%s4 + $0x198] sm:$0xf] %vm3865, %v3711
        %3969 = vst.msk [vmem:[%s4 + $0x19c] sm:$0xf] %vm3865, %v3712
        %3970 = vst.msk [vmem:[%s4 + $0x1a0] sm:$0xf] %vm3865, %v3713
        %3971 = vst.msk [vmem:[%s4 + $0x1a4] sm:$0xf] %vm3865, %v3714
        %3972 = vst.msk [vmem:[%s4 + $0x1a8] sm:$0xf] %vm3865, %v3715
        %3973 = vst.msk [vmem:[%s4 + $0x1ac] sm:$0xf] %vm3865, %v3716
        %3974 = vst.msk [vmem:[%s4 + $0x1b0] sm:$0xf] %vm3865, %v3717
        %3975 = vst.msk [vmem:[%s4 + $0x1b4] sm:$0xf] %vm3865, %v3718
        %3976 = vst.msk [vmem:[%s4 + $0x1b8] sm:$0xf] %vm3865, %v3719
        %3977 = vst.msk [vmem:[%s4 + $0x1bc] sm:$0xf] %vm3865, %v3720
        %3978 = vst.msk [vmem:[%s4 + $0x1c0] sm:$0xf] %vm3865, %v3721
        %3979 = vst.msk [vmem:[%s4 + $0x1c4] sm:$0xf] %vm3865, %v3722
        %3980 = vst.msk [vmem:[%s4 + $0x1c8] sm:$0xf] %vm3865, %v3723
        %3981 = vst.msk [vmem:[%s4 + $0x1cc] sm:$0xf] %vm3865, %v3724
        %3982 = vst.msk [vmem:[%s4 + $0x1d0] sm:$0xf] %vm3865, %v3725
        %3983 = vst.msk [vmem:[%s4 + $0x1d4] sm:$0xf] %vm3865, %v3726
        %3984 = vst.msk [vmem:[%s4 + $0x1d8] sm:$0xf] %vm3865, %v3727
        %3985 = vst.msk [vmem:[%s4 + $0x1dc] sm:$0xf] %vm3865, %v3728
        %3986 = vst.msk [vmem:[%s4 + $0x1e0] sm:$0xf] %vm3865, %v3729
        %3987 = vst.msk [vmem:[%s4 + $0x1e4] sm:$0xf] %vm3865, %v3730
        %3988 = vst.msk [vmem:[%s4 + $0x1e8] sm:$0xf] %vm3865, %v3731
        %3989 = vst.msk [vmem:[%s4 + $0x1ec] sm:$0xf] %vm3865, %v3732
        %3990 = vst.msk [vmem:[%s4 + $0x1f0] sm:$0xf] %vm3865, %v3733
        %3991 = vst.msk [vmem:[%s4 + $0x1f4] sm:$0xf] %vm3865, %v3734
        %3992 = vst.msk [vmem:[%s4 + $0x1f8] sm:$0xf] %vm3865, %v3735
        %3993 = vst.msk [vmem:[%s4 + $0x1fc] sm:$0xf] %vm3865, %v3736
        %v3994 = vld [vmem:[#allocation2 + $0x400] sm:$0xff]
        %v3995 = vld [vmem:[#allocation2 + $0x408] sm:$0xff]
        %v3996 = vld [vmem:[#allocation2 + $0x410] sm:$0xff]
        %v3997 = vld [vmem:[#allocation2 + $0x418] sm:$0xff]
        %v3998 = vld [vmem:[#allocation2 + $0x420] sm:$0xff]
        %v3999 = vld [vmem:[#allocation2 + $0x428] sm:$0xff]
        %v4000 = vld [vmem:[#allocation2 + $0x430] sm:$0xff]
        %v4001 = vld [vmem:[#allocation2 + $0x438] sm:$0xff]
        %v4002 = vld [vmem:[#allocation2 + $0x440] sm:$0xff]
        %v4003 = vld [vmem:[#allocation2 + $0x448] sm:$0xff]
        %v4004 = vld [vmem:[#allocation2 + $0x450] sm:$0xff]
        %v4005 = vld [vmem:[#allocation2 + $0x458] sm:$0xff]
        %v4006 = vld [vmem:[#allocation2 + $0x460] sm:$0xff]
        %v4007 = vld [vmem:[#allocation2 + $0x468] sm:$0xff]
        %v4008 = vld [vmem:[#allocation2 + $0x470] sm:$0xff]
        %v4009 = vld [vmem:[#allocation2 + $0x478] sm:$0xff]
        %v4010 = vld [vmem:[#allocation2 + $0x480] sm:$0xff]
        %v4011 = vld [vmem:[#allocation2 + $0x488] sm:$0xff]
        %v4012 = vld [vmem:[#allocation2 + $0x490] sm:$0xff]
        %v4013 = vld [vmem:[#allocation2 + $0x498] sm:$0xff]
        %v4014 = vld [vmem:[#allocation2 + $0x4a0] sm:$0xff]
        %v4015 = vld [vmem:[#allocation2 + $0x4a8] sm:$0xff]
        %v4016 = vld [vmem:[#allocation2 + $0x4b0] sm:$0xff]
        %v4017 = vld [vmem:[#allocation2 + $0x4b8] sm:$0xff]
        %v4018 = vld [vmem:[#allocation2 + $0x4c0] sm:$0xff]
        %v4019 = vld [vmem:[#allocation2 + $0x4c8] sm:$0xff]
        %v4020 = vld [vmem:[#allocation2 + $0x4d0] sm:$0xff]
        %v4021 = vld [vmem:[#allocation2 + $0x4d8] sm:$0xff]
        %v4022 = vld [vmem:[#allocation2 + $0x4e0] sm:$0xff]
        %v4023 = vld [vmem:[#allocation2 + $0x4e8] sm:$0xff]
        %v4024 = vld [vmem:[#allocation2 + $0x4f0] sm:$0xff]
        %v4025 = vld [vmem:[#allocation2 + $0x4f8] sm:$0xff]
        %v4026 = vld [vmem:[#allocation2 + $0x500] sm:$0xff]
        %v4027 = vld [vmem:[#allocation2 + $0x508] sm:$0xff]
        %v4028 = vld [vmem:[#allocation2 + $0x510] sm:$0xff]
        %v4029 = vld [vmem:[#allocation2 + $0x518] sm:$0xff]
        %v4030 = vld [vmem:[#allocation2 + $0x520] sm:$0xff]
        %v4031 = vld [vmem:[#allocation2 + $0x528] sm:$0xff]
        %v4032 = vld [vmem:[#allocation2 + $0x530] sm:$0xff]
        %v4033 = vld [vmem:[#allocation2 + $0x538] sm:$0xff]
        %v4034 = vld [vmem:[#allocation2 + $0x540] sm:$0xff]
        %v4035 = vld [vmem:[#allocation2 + $0x548] sm:$0xff]
        %v4036 = vld [vmem:[#allocation2 + $0x550] sm:$0xff]
        %v4037 = vld [vmem:[#allocation2 + $0x558] sm:$0xff]
        %v4038 = vld [vmem:[#allocation2 + $0x560] sm:$0xff]
        %v4039 = vld [vmem:[#allocation2 + $0x568] sm:$0xff]
        %v4040 = vld [vmem:[#allocation2 + $0x570] sm:$0xff]
        %v4041 = vld [vmem:[#allocation2 + $0x578] sm:$0xff]
        %v4042 = vld [vmem:[#allocation2 + $0x580] sm:$0xff]
        %v4043 = vld [vmem:[#allocation2 + $0x588] sm:$0xff]
        %v4044 = vld [vmem:[#allocation2 + $0x590] sm:$0xff]
        %v4045 = vld [vmem:[#allocation2 + $0x598] sm:$0xff]
        %v4046 = vld [vmem:[#allocation2 + $0x5a0] sm:$0xff]
        %v4047 = vld [vmem:[#allocation2 + $0x5a8] sm:$0xff]
        %v4048 = vld [vmem:[#allocation2 + $0x5b0] sm:$0xff]
        %v4049 = vld [vmem:[#allocation2 + $0x5b8] sm:$0xff]
        %v4050 = vld [vmem:[#allocation2 + $0x5c0] sm:$0xff]
        %v4051 = vld [vmem:[#allocation2 + $0x5c8] sm:$0xff]
        %v4052 = vld [vmem:[#allocation2 + $0x5d0] sm:$0xff]
        %v4053 = vld [vmem:[#allocation2 + $0x5d8] sm:$0xff]
        %v4054 = vld [vmem:[#allocation2 + $0x5e0] sm:$0xff]
        %v4055 = vld [vmem:[#allocation2 + $0x5e8] sm:$0xff]
        %v4056 = vld [vmem:[#allocation2 + $0x5f0] sm:$0xff]
        %v4057 = vld [vmem:[#allocation2 + $0x5f8] sm:$0xff]
        %v4058 = vld [vmem:[#allocation2 + $0x600] sm:$0xff]
        %v4059 = vld [vmem:[#allocation2 + $0x608] sm:$0xff]
        %v4060 = vld [vmem:[#allocation2 + $0x610] sm:$0xff]
        %v4061 = vld [vmem:[#allocation2 + $0x618] sm:$0xff]
        %v4062 = vld [vmem:[#allocation2 + $0x620] sm:$0xff]
        %v4063 = vld [vmem:[#allocation2 + $0x628] sm:$0xff]
        %v4064 = vld [vmem:[#allocation2 + $0x630] sm:$0xff]
        %v4065 = vld [vmem:[#allocation2 + $0x638] sm:$0xff]
        %v4066 = vld [vmem:[#allocation2 + $0x640] sm:$0xff]
        %v4067 = vld [vmem:[#allocation2 + $0x648] sm:$0xff]
        %v4068 = vld [vmem:[#allocation2 + $0x650] sm:$0xff]
        %v4069 = vld [vmem:[#allocation2 + $0x658] sm:$0xff]
        %v4070 = vld [vmem:[#allocation2 + $0x660] sm:$0xff]
        %v4071 = vld [vmem:[#allocation2 + $0x668] sm:$0xff]
        %v4072 = vld [vmem:[#allocation2 + $0x670] sm:$0xff]
        %v4073 = vld [vmem:[#allocation2 + $0x678] sm:$0xff]
        %v4074 = vld [vmem:[#allocation2 + $0x680] sm:$0xff]
        %v4075 = vld [vmem:[#allocation2 + $0x688] sm:$0xff]
        %v4076 = vld [vmem:[#allocation2 + $0x690] sm:$0xff]
        %v4077 = vld [vmem:[#allocation2 + $0x698] sm:$0xff]
        %v4078 = vld [vmem:[#allocation2 + $0x6a0] sm:$0xff]
        %v4079 = vld [vmem:[#allocation2 + $0x6a8] sm:$0xff]
        %v4080 = vld [vmem:[#allocation2 + $0x6b0] sm:$0xff]
        %v4081 = vld [vmem:[#allocation2 + $0x6b8] sm:$0xff]
        %v4082 = vld [vmem:[#allocation2 + $0x6c0] sm:$0xff]
        %v4083 = vld [vmem:[#allocation2 + $0x6c8] sm:$0xff]
        %v4084 = vld [vmem:[#allocation2 + $0x6d0] sm:$0xff]
        %v4085 = vld [vmem:[#allocation2 + $0x6d8] sm:$0xff]
        %v4086 = vld [vmem:[#allocation2 + $0x6e0] sm:$0xff]
        %v4087 = vld [vmem:[#allocation2 + $0x6e8] sm:$0xff]
        %v4088 = vld [vmem:[#allocation2 + $0x6f0] sm:$0xff]
        %v4089 = vld [vmem:[#allocation2 + $0x6f8] sm:$0xff]
        %v4090 = vld [vmem:[#allocation2 + $0x700] sm:$0xff]
        %v4091 = vld [vmem:[#allocation2 + $0x708] sm:$0xff]
        %v4092 = vld [vmem:[#allocation2 + $0x710] sm:$0xff]
        %v4093 = vld [vmem:[#allocation2 + $0x718] sm:$0xff]
        %v4094 = vld [vmem:[#allocation2 + $0x720] sm:$0xff]
        %v4095 = vld [vmem:[#allocation2 + $0x728] sm:$0xff]
        %v4096 = vld [vmem:[#allocation2 + $0x730] sm:$0xff]
        %v4097 = vld [vmem:[#allocation2 + $0x738] sm:$0xff]
        %v4098 = vld [vmem:[#allocation2 + $0x740] sm:$0xff]
        %v4099 = vld [vmem:[#allocation2 + $0x748] sm:$0xff]
        %v4100 = vld [vmem:[#allocation2 + $0x750] sm:$0xff]
        %v4101 = vld [vmem:[#allocation2 + $0x758] sm:$0xff]
        %v4102 = vld [vmem:[#allocation2 + $0x760] sm:$0xff]
        %v4103 = vld [vmem:[#allocation2 + $0x768] sm:$0xff]
        %v4104 = vld [vmem:[#allocation2 + $0x770] sm:$0xff]
        %v4105 = vld [vmem:[#allocation2 + $0x778] sm:$0xff]
        %v4106 = vld [vmem:[#allocation2 + $0x780] sm:$0xff]
        %v4107 = vld [vmem:[#allocation2 + $0x788] sm:$0xff]
        %v4108 = vld [vmem:[#allocation2 + $0x790] sm:$0xff]
        %v4109 = vld [vmem:[#allocation2 + $0x798] sm:$0xff]
        %v4110 = vld [vmem:[#allocation2 + $0x7a0] sm:$0xff]
        %v4111 = vld [vmem:[#allocation2 + $0x7a8] sm:$0xff]
        %v4112 = vld [vmem:[#allocation2 + $0x7b0] sm:$0xff]
        %v4113 = vld [vmem:[#allocation2 + $0x7b8] sm:$0xff]
        %v4114 = vld [vmem:[#allocation2 + $0x7c0] sm:$0xff]
        %v4115 = vld [vmem:[#allocation2 + $0x7c8] sm:$0xff]
        %v4116 = vld [vmem:[#allocation2 + $0x7d0] sm:$0xff]
        %v4117 = vld [vmem:[#allocation2 + $0x7d8] sm:$0xff]
        %v4118 = vld [vmem:[#allocation2 + $0x7e0] sm:$0xff]
        %v4119 = vld [vmem:[#allocation2 + $0x7e8] sm:$0xff]
        %v4120 = vld [vmem:[#allocation2 + $0x7f0] sm:$0xff]
        %v4121 = vld [vmem:[#allocation2 + $0x7f8] sm:$0xff]
        %v4122 = vmul.f32 %v3994, %v2961
        %v4123 = vmul.f32 %v3995, %v2961
        %v4124 = vmul.f32 %v3996, %v2961
        %v4125 = vmul.f32 %v3997, %v2961
        %v4126 = vmul.f32 %v3998, %v2961
        %v4127 = vmul.f32 %v3999, %v2961
        %v4128 = vmul.f32 %v4000, %v2961
        %v4129 = vmul.f32 %v4001, %v2961
        %v4130 = vmul.f32 %v4002, %v2961
        %v4131 = vmul.f32 %v4003, %v2961
        %v4132 = vmul.f32 %v4004, %v2961
        %v4133 = vmul.f32 %v4005, %v2961
        %v4134 = vmul.f32 %v4006, %v2961
        %v4135 = vmul.f32 %v4007, %v2961
        %v4136 = vmul.f32 %v4008, %v2961
        %v4137 = vmul.f32 %v4009, %v2961
        %v4138 = vmul.f32 %v4010, %v2961
        %v4139 = vmul.f32 %v4011, %v2961
        %v4140 = vmul.f32 %v4012, %v2961
        %v4141 = vmul.f32 %v4013, %v2961
        %v4142 = vmul.f32 %v4014, %v2961
        %v4143 = vmul.f32 %v4015, %v2961
        %v4144 = vmul.f32 %v4016, %v2961
        %v4145 = vmul.f32 %v4017, %v2961
        %v4146 = vmul.f32 %v4018, %v2961
        %v4147 = vmul.f32 %v4019, %v2961
        %v4148 = vmul.f32 %v4020, %v2961
        %v4149 = vmul.f32 %v4021, %v2961
        %v4150 = vmul.f32 %v4022, %v2961
        %v4151 = vmul.f32 %v4023, %v2961
        %v4152 = vmul.f32 %v4024, %v2961
        %v4153 = vmul.f32 %v4025, %v2961
        %v4154 = vmul.f32 %v4026, %v2961
        %v4155 = vmul.f32 %v4027, %v2961
        %v4156 = vmul.f32 %v4028, %v2961
        %v4157 = vmul.f32 %v4029, %v2961
        %v4158 = vmul.f32 %v4030, %v2961
        %v4159 = vmul.f32 %v4031, %v2961
        %v4160 = vmul.f32 %v4032, %v2961
        %v4161 = vmul.f32 %v4033, %v2961
        %v4162 = vmul.f32 %v4034, %v2961
        %v4163 = vmul.f32 %v4035, %v2961
        %v4164 = vmul.f32 %v4036, %v2961
        %v4165 = vmul.f32 %v4037, %v2961
        %v4166 = vmul.f32 %v4038, %v2961
        %v4167 = vmul.f32 %v4039, %v2961
        %v4168 = vmul.f32 %v4040, %v2961
        %v4169 = vmul.f32 %v4041, %v2961
        %v4170 = vmul.f32 %v4042, %v2961
        %v4171 = vmul.f32 %v4043, %v2961
        %v4172 = vmul.f32 %v4044, %v2961
        %v4173 = vmul.f32 %v4045, %v2961
        %v4174 = vmul.f32 %v4046, %v2961
        %v4175 = vmul.f32 %v4047, %v2961
        %v4176 = vmul.f32 %v4048, %v2961
        %v4177 = vmul.f32 %v4049, %v2961
        %v4178 = vmul.f32 %v4050, %v2961
        %v4179 = vmul.f32 %v4051, %v2961
        %v4180 = vmul.f32 %v4052, %v2961
        %v4181 = vmul.f32 %v4053, %v2961
        %v4182 = vmul.f32 %v4054, %v2961
        %v4183 = vmul.f32 %v4055, %v2961
        %v4184 = vmul.f32 %v4056, %v2961
        %v4185 = vmul.f32 %v4057, %v2961
        %v4186 = vmul.f32 %v4058, %v2961
        %v4187 = vmul.f32 %v4059, %v2961
        %v4188 = vmul.f32 %v4060, %v2961
        %v4189 = vmul.f32 %v4061, %v2961
        %v4190 = vmul.f32 %v4062, %v2961
        %v4191 = vmul.f32 %v4063, %v2961
        %v4192 = vmul.f32 %v4064, %v2961
        %v4193 = vmul.f32 %v4065, %v2961
        %v4194 = vmul.f32 %v4066, %v2961
        %v4195 = vmul.f32 %v4067, %v2961
        %v4196 = vmul.f32 %v4068, %v2961
        %v4197 = vmul.f32 %v4069, %v2961
        %v4198 = vmul.f32 %v4070, %v2961
        %v4199 = vmul.f32 %v4071, %v2961
        %v4200 = vmul.f32 %v4072, %v2961
        %v4201 = vmul.f32 %v4073, %v2961
        %v4202 = vmul.f32 %v4074, %v2961
        %v4203 = vmul.f32 %v4075, %v2961
        %v4204 = vmul.f32 %v4076, %v2961
        %v4205 = vmul.f32 %v4077, %v2961
        %v4206 = vmul.f32 %v4078, %v2961
        %v4207 = vmul.f32 %v4079, %v2961
        %v4208 = vmul.f32 %v4080, %v2961
        %v4209 = vmul.f32 %v4081, %v2961
        %v4210 = vmul.f32 %v4082, %v2961
        %v4211 = vmul.f32 %v4083, %v2961
        %v4212 = vmul.f32 %v4084, %v2961
        %v4213 = vmul.f32 %v4085, %v2961
        %v4214 = vmul.f32 %v4086, %v2961
        %v4215 = vmul.f32 %v4087, %v2961
        %v4216 = vmul.f32 %v4088, %v2961
        %v4217 = vmul.f32 %v4089, %v2961
        %v4218 = vmul.f32 %v4090, %v2961
        %v4219 = vmul.f32 %v4091, %v2961
        %v4220 = vmul.f32 %v4092, %v2961
        %v4221 = vmul.f32 %v4093, %v2961
        %v4222 = vmul.f32 %v4094, %v2961
        %v4223 = vmul.f32 %v4095, %v2961
        %v4224 = vmul.f32 %v4096, %v2961
        %v4225 = vmul.f32 %v4097, %v2961
        %v4226 = vmul.f32 %v4098, %v2961
        %v4227 = vmul.f32 %v4099, %v2961
        %v4228 = vmul.f32 %v4100, %v2961
        %v4229 = vmul.f32 %v4101, %v2961
        %v4230 = vmul.f32 %v4102, %v2961
        %v4231 = vmul.f32 %v4103, %v2961
        %v4232 = vmul.f32 %v4104, %v2961
        %v4233 = vmul.f32 %v4105, %v2961
        %v4234 = vmul.f32 %v4106, %v2961
        %v4235 = vmul.f32 %v4107, %v2961
        %v4236 = vmul.f32 %v4108, %v2961
        %v4237 = vmul.f32 %v4109, %v2961
        %v4238 = vmul.f32 %v4110, %v2961
        %v4239 = vmul.f32 %v4111, %v2961
        %v4240 = vmul.f32 %v4112, %v2961
        %v4241 = vmul.f32 %v4113, %v2961
        %v4242 = vmul.f32 %v4114, %v2961
        %v4243 = vmul.f32 %v4115, %v2961
        %v4244 = vmul.f32 %v4116, %v2961
        %v4245 = vmul.f32 %v4117, %v2961
        %v4246 = vmul.f32 %v4118, %v2961
        %v4247 = vmul.f32 %v4119, %v2961
        %v4248 = vmul.f32 %v4120, %v2961
        %v4249 = vmul.f32 %v4121, %v2961
        %v4250 = vadd.f32 %v4122, %v3095
        %v4251 = vadd.f32 %v4123, %v3095
        %v4252 = vadd.f32 %v4124, %v3095
        %v4253 = vadd.f32 %v4125, %v3095
        %v4254 = vadd.f32 %v4126, %v3095
        %v4255 = vadd.f32 %v4127, %v3095
        %v4256 = vadd.f32 %v4128, %v3095
        %v4257 = vadd.f32 %v4129, %v3095
        %v4258 = vadd.f32 %v4130, %v3095
        %v4259 = vadd.f32 %v4131, %v3095
        %v4260 = vadd.f32 %v4132, %v3095
        %v4261 = vadd.f32 %v4133, %v3095
        %v4262 = vadd.f32 %v4134, %v3095
        %v4263 = vadd.f32 %v4135, %v3095
        %v4264 = vadd.f32 %v4136, %v3095
        %v4265 = vadd.f32 %v4137, %v3095
        %v4266 = vadd.f32 %v4138, %v3095
        %v4267 = vadd.f32 %v4139, %v3095
        %v4268 = vadd.f32 %v4140, %v3095
        %v4269 = vadd.f32 %v4141, %v3095
        %v4270 = vadd.f32 %v4142, %v3095
        %v4271 = vadd.f32 %v4143, %v3095
        %v4272 = vadd.f32 %v4144, %v3095
        %v4273 = vadd.f32 %v4145, %v3095
        %v4274 = vadd.f32 %v4146, %v3095
        %v4275 = vadd.f32 %v4147, %v3095
        %v4276 = vadd.f32 %v4148, %v3095
        %v4277 = vadd.f32 %v4149, %v3095
        %v4278 = vadd.f32 %v4150, %v3095
        %v4279 = vadd.f32 %v4151, %v3095
        %v4280 = vadd.f32 %v4152, %v3095
        %v4281 = vadd.f32 %v4153, %v3095
        %v4282 = vadd.f32 %v4154, %v3095
        %v4283 = vadd.f32 %v4155, %v3095
        %v4284 = vadd.f32 %v4156, %v3095
        %v4285 = vadd.f32 %v4157, %v3095
        %v4286 = vadd.f32 %v4158, %v3095
        %v4287 = vadd.f32 %v4159, %v3095
        %v4288 = vadd.f32 %v4160, %v3095
        %v4289 = vadd.f32 %v4161, %v3095
        %v4290 = vadd.f32 %v4162, %v3095
        %v4291 = vadd.f32 %v4163, %v3095
        %v4292 = vadd.f32 %v4164, %v3095
        %v4293 = vadd.f32 %v4165, %v3095
        %v4294 = vadd.f32 %v4166, %v3095
        %v4295 = vadd.f32 %v4167, %v3095
        %v4296 = vadd.f32 %v4168, %v3095
        %v4297 = vadd.f32 %v4169, %v3095
        %v4298 = vadd.f32 %v4170, %v3095
        %v4299 = vadd.f32 %v4171, %v3095
        %v4300 = vadd.f32 %v4172, %v3095
        %v4301 = vadd.f32 %v4173, %v3095
        %v4302 = vadd.f32 %v4174, %v3095
        %v4303 = vadd.f32 %v4175, %v3095
        %v4304 = vadd.f32 %v4176, %v3095
        %v4305 = vadd.f32 %v4177, %v3095
        %v4306 = vadd.f32 %v4178, %v3095
        %v4307 = vadd.f32 %v4179, %v3095
        %v4308 = vadd.f32 %v4180, %v3095
        %v4309 = vadd.f32 %v4181, %v3095
        %v4310 = vadd.f32 %v4182, %v3095
        %v4311 = vadd.f32 %v4183, %v3095
        %v4312 = vadd.f32 %v4184, %v3095
        %v4313 = vadd.f32 %v4185, %v3095
        %v4314 = vadd.f32 %v4186, %v3095
        %v4315 = vadd.f32 %v4187, %v3095
        %v4316 = vadd.f32 %v4188, %v3095
        %v4317 = vadd.f32 %v4189, %v3095
        %v4318 = vadd.f32 %v4190, %v3095
        %v4319 = vadd.f32 %v4191, %v3095
        %v4320 = vadd.f32 %v4192, %v3095
        %v4321 = vadd.f32 %v4193, %v3095
        %v4322 = vadd.f32 %v4194, %v3095
        %v4323 = vadd.f32 %v4195, %v3095
        %v4324 = vadd.f32 %v4196, %v3095
        %v4325 = vadd.f32 %v4197, %v3095
        %v4326 = vadd.f32 %v4198, %v3095
        %v4327 = vadd.f32 %v4199, %v3095
        %v4328 = vadd.f32 %v4200, %v3095
        %v4329 = vadd.f32 %v4201, %v3095
        %v4330 = vadd.f32 %v4202, %v3095
        %v4331 = vadd.f32 %v4203, %v3095
        %v4332 = vadd.f32 %v4204, %v3095
        %v4333 = vadd.f32 %v4205, %v3095
        %v4334 = vadd.f32 %v4206, %v3095
        %v4335 = vadd.f32 %v4207, %v3095
        %v4336 = vadd.f32 %v4208, %v3095
        %v4337 = vadd.f32 %v4209, %v3095
        %v4338 = vadd.f32 %v4210, %v3095
        %v4339 = vadd.f32 %v4211, %v3095
        %v4340 = vadd.f32 %v4212, %v3095
        %v4341 = vadd.f32 %v4213, %v3095
        %v4342 = vadd.f32 %v4214, %v3095
        %v4343 = vadd.f32 %v4215, %v3095
        %v4344 = vadd.f32 %v4216, %v3095
        %v4345 = vadd.f32 %v4217, %v3095
        %v4346 = vadd.f32 %v4218, %v3095
        %v4347 = vadd.f32 %v4219, %v3095
        %v4348 = vadd.f32 %v4220, %v3095
        %v4349 = vadd.f32 %v4221, %v3095
        %v4350 = vadd.f32 %v4222, %v3095
        %v4351 = vadd.f32 %v4223, %v3095
        %v4352 = vadd.f32 %v4224, %v3095
        %v4353 = vadd.f32 %v4225, %v3095
        %v4354 = vadd.f32 %v4226, %v3095
        %v4355 = vadd.f32 %v4227, %v3095
        %v4356 = vadd.f32 %v4228, %v3095
        %v4357 = vadd.f32 %v4229, %v3095
        %v4358 = vadd.f32 %v4230, %v3095
        %v4359 = vadd.f32 %v4231, %v3095
        %v4360 = vadd.f32 %v4232, %v3095
        %v4361 = vadd.f32 %v4233, %v3095
        %v4362 = vadd.f32 %v4234, %v3095
        %v4363 = vadd.f32 %v4235, %v3095
        %v4364 = vadd.f32 %v4236, %v3095
        %v4365 = vadd.f32 %v4237, %v3095
        %v4366 = vadd.f32 %v4238, %v3095
        %v4367 = vadd.f32 %v4239, %v3095
        %v4368 = vadd.f32 %v4240, %v3095
        %v4369 = vadd.f32 %v4241, %v3095
        %v4370 = vadd.f32 %v4242, %v3095
        %v4371 = vadd.f32 %v4243, %v3095
        %v4372 = vadd.f32 %v4244, %v3095
        %v4373 = vadd.f32 %v4245, %v3095
        %v4374 = vadd.f32 %v4246, %v3095
        %v4375 = vadd.f32 %v4247, %v3095
        %v4376 = vadd.f32 %v4248, %v3095
        %v4377 = vadd.f32 %v4249, %v3095
        %v4378 = vmax.f32 %v4250, 0.0
        %v4379 = vmax.f32 %v4251, 0.0
        %v4380 = vmax.f32 %v4252, 0.0
        %v4381 = vmax.f32 %v4253, 0.0
        %v4382 = vmax.f32 %v4254, 0.0
        %v4383 = vmax.f32 %v4255, 0.0
        %v4384 = vmax.f32 %v4256, 0.0
        %v4385 = vmax.f32 %v4257, 0.0
        %v4386 = vmax.f32 %v4258, 0.0
        %v4387 = vmax.f32 %v4259, 0.0
        %v4388 = vmax.f32 %v4260, 0.0
        %v4389 = vmax.f32 %v4261, 0.0
        %v4390 = vmax.f32 %v4262, 0.0
        %v4391 = vmax.f32 %v4263, 0.0
        %v4392 = vmax.f32 %v4264, 0.0
        %v4393 = vmax.f32 %v4265, 0.0
        %v4394 = vmax.f32 %v4266, 0.0
        %v4395 = vmax.f32 %v4267, 0.0
        %v4396 = vmax.f32 %v4268, 0.0
        %v4397 = vmax.f32 %v4269, 0.0
        %v4398 = vmax.f32 %v4270, 0.0
        %v4399 = vmax.f32 %v4271, 0.0
        %v4400 = vmax.f32 %v4272, 0.0
        %v4401 = vmax.f32 %v4273, 0.0
        %v4402 = vmax.f32 %v4274, 0.0
        %v4403 = vmax.f32 %v4275, 0.0
        %v4404 = vmax.f32 %v4276, 0.0
        %v4405 = vmax.f32 %v4277, 0.0
        %v4406 = vmax.f32 %v4278, 0.0
        %v4407 = vmax.f32 %v4279, 0.0
        %v4408 = vmax.f32 %v4280, 0.0
        %v4409 = vmax.f32 %v4281, 0.0
        %v4410 = vmax.f32 %v4282, 0.0
        %v4411 = vmax.f32 %v4283, 0.0
        %v4412 = vmax.f32 %v4284, 0.0
        %v4413 = vmax.f32 %v4285, 0.0
        %v4414 = vmax.f32 %v4286, 0.0
        %v4415 = vmax.f32 %v4287, 0.0
        %v4416 = vmax.f32 %v4288, 0.0
        %v4417 = vmax.f32 %v4289, 0.0
        %v4418 = vmax.f32 %v4290, 0.0
        %v4419 = vmax.f32 %v4291, 0.0
        %v4420 = vmax.f32 %v4292, 0.0
        %v4421 = vmax.f32 %v4293, 0.0
        %v4422 = vmax.f32 %v4294, 0.0
        %v4423 = vmax.f32 %v4295, 0.0
        %v4424 = vmax.f32 %v4296, 0.0
        %v4425 = vmax.f32 %v4297, 0.0
        %v4426 = vmax.f32 %v4298, 0.0
        %v4427 = vmax.f32 %v4299, 0.0
        %v4428 = vmax.f32 %v4300, 0.0
        %v4429 = vmax.f32 %v4301, 0.0
        %v4430 = vmax.f32 %v4302, 0.0
        %v4431 = vmax.f32 %v4303, 0.0
        %v4432 = vmax.f32 %v4304, 0.0
        %v4433 = vmax.f32 %v4305, 0.0
        %v4434 = vmax.f32 %v4306, 0.0
        %v4435 = vmax.f32 %v4307, 0.0
        %v4436 = vmax.f32 %v4308, 0.0
        %v4437 = vmax.f32 %v4309, 0.0
        %v4438 = vmax.f32 %v4310, 0.0
        %v4439 = vmax.f32 %v4311, 0.0
        %v4440 = vmax.f32 %v4312, 0.0
        %v4441 = vmax.f32 %v4313, 0.0
        %v4442 = vmax.f32 %v4314, 0.0
        %v4443 = vmax.f32 %v4315, 0.0
        %v4444 = vmax.f32 %v4316, 0.0
        %v4445 = vmax.f32 %v4317, 0.0
        %v4446 = vmax.f32 %v4318, 0.0
        %v4447 = vmax.f32 %v4319, 0.0
        %v4448 = vmax.f32 %v4320, 0.0
        %v4449 = vmax.f32 %v4321, 0.0
        %v4450 = vmax.f32 %v4322, 0.0
        %v4451 = vmax.f32 %v4323, 0.0
        %v4452 = vmax.f32 %v4324, 0.0
        %v4453 = vmax.f32 %v4325, 0.0
        %v4454 = vmax.f32 %v4326, 0.0
        %v4455 = vmax.f32 %v4327, 0.0
        %v4456 = vmax.f32 %v4328, 0.0
        %v4457 = vmax.f32 %v4329, 0.0
        %v4458 = vmax.f32 %v4330, 0.0
        %v4459 = vmax.f32 %v4331, 0.0
        %v4460 = vmax.f32 %v4332, 0.0
        %v4461 = vmax.f32 %v4333, 0.0
        %v4462 = vmax.f32 %v4334, 0.0
        %v4463 = vmax.f32 %v4335, 0.0
        %v4464 = vmax.f32 %v4336, 0.0
        %v4465 = vmax.f32 %v4337, 0.0
        %v4466 = vmax.f32 %v4338, 0.0
        %v4467 = vmax.f32 %v4339, 0.0
        %v4468 = vmax.f32 %v4340, 0.0
        %v4469 = vmax.f32 %v4341, 0.0
        %v4470 = vmax.f32 %v4342, 0.0
        %v4471 = vmax.f32 %v4343, 0.0
        %v4472 = vmax.f32 %v4344, 0.0
        %v4473 = vmax.f32 %v4345, 0.0
        %v4474 = vmax.f32 %v4346, 0.0
        %v4475 = vmax.f32 %v4347, 0.0
        %v4476 = vmax.f32 %v4348, 0.0
        %v4477 = vmax.f32 %v4349, 0.0
        %v4478 = vmax.f32 %v4350, 0.0
        %v4479 = vmax.f32 %v4351, 0.0
        %v4480 = vmax.f32 %v4352, 0.0
        %v4481 = vmax.f32 %v4353, 0.0
        %v4482 = vmax.f32 %v4354, 0.0
        %v4483 = vmax.f32 %v4355, 0.0
        %v4484 = vmax.f32 %v4356, 0.0
        %v4485 = vmax.f32 %v4357, 0.0
        %v4486 = vmax.f32 %v4358, 0.0
        %v4487 = vmax.f32 %v4359, 0.0
        %v4488 = vmax.f32 %v4360, 0.0
        %v4489 = vmax.f32 %v4361, 0.0
        %v4490 = vmax.f32 %v4362, 0.0
        %v4491 = vmax.f32 %v4363, 0.0
        %v4492 = vmax.f32 %v4364, 0.0
        %v4493 = vmax.f32 %v4365, 0.0
        %v4494 = vmax.f32 %v4366, 0.0
        %v4495 = vmax.f32 %v4367, 0.0
        %v4496 = vmax.f32 %v4368, 0.0
        %v4497 = vmax.f32 %v4369, 0.0
        %v4498 = vmax.f32 %v4370, 0.0
        %v4499 = vmax.f32 %v4371, 0.0
        %v4500 = vmax.f32 %v4372, 0.0
        %v4501 = vmax.f32 %v4373, 0.0
        %v4502 = vmax.f32 %v4374, 0.0
        %v4503 = vmax.f32 %v4375, 0.0
        %v4504 = vmax.f32 %v4376, 0.0
        %v4505 = vmax.f32 %v4377, 0.0
        %v4506 = vpack.c.bf16 %v4379, %v4378
        %v4507 = vpack.c.bf16 %v4381, %v4380
        %v4508 = vpack.c.bf16 %v4383, %v4382
        %v4509 = vpack.c.bf16 %v4385, %v4384
        %v4510 = vpack.c.bf16 %v4387, %v4386
        %v4511 = vpack.c.bf16 %v4389, %v4388
        %v4512 = vpack.c.bf16 %v4391, %v4390
        %v4513 = vpack.c.bf16 %v4393, %v4392
        %v4514 = vpack.c.bf16 %v4395, %v4394
        %v4515 = vpack.c.bf16 %v4397, %v4396
        %v4516 = vpack.c.bf16 %v4399, %v4398
        %v4517 = vpack.c.bf16 %v4401, %v4400
        %v4518 = vpack.c.bf16 %v4403, %v4402
        %v4519 = vpack.c.bf16 %v4405, %v4404
        %v4520 = vpack.c.bf16 %v4407, %v4406
        %v4521 = vpack.c.bf16 %v4409, %v4408
        %v4522 = vpack.c.bf16 %v4411, %v4410
        %v4523 = vpack.c.bf16 %v4413, %v4412
        %v4524 = vpack.c.bf16 %v4415, %v4414
        %v4525 = vpack.c.bf16 %v4417, %v4416
        %v4526 = vpack.c.bf16 %v4419, %v4418
        %v4527 = vpack.c.bf16 %v4421, %v4420
        %v4528 = vpack.c.bf16 %v4423, %v4422
        %v4529 = vpack.c.bf16 %v4425, %v4424
        %v4530 = vpack.c.bf16 %v4427, %v4426
        %v4531 = vpack.c.bf16 %v4429, %v4428
        %v4532 = vpack.c.bf16 %v4431, %v4430
        %v4533 = vpack.c.bf16 %v4433, %v4432
        %v4534 = vpack.c.bf16 %v4435, %v4434
        %v4535 = vpack.c.bf16 %v4437, %v4436
        %v4536 = vpack.c.bf16 %v4439, %v4438
        %v4537 = vpack.c.bf16 %v4441, %v4440
        %v4538 = vpack.c.bf16 %v4443, %v4442
        %v4539 = vpack.c.bf16 %v4445, %v4444
        %v4540 = vpack.c.bf16 %v4447, %v4446
        %v4541 = vpack.c.bf16 %v4449, %v4448
        %v4542 = vpack.c.bf16 %v4451, %v4450
        %v4543 = vpack.c.bf16 %v4453, %v4452
        %v4544 = vpack.c.bf16 %v4455, %v4454
        %v4545 = vpack.c.bf16 %v4457, %v4456
        %v4546 = vpack.c.bf16 %v4459, %v4458
        %v4547 = vpack.c.bf16 %v4461, %v4460
        %v4548 = vpack.c.bf16 %v4463, %v4462
        %v4549 = vpack.c.bf16 %v4465, %v4464
        %v4550 = vpack.c.bf16 %v4467, %v4466
        %v4551 = vpack.c.bf16 %v4469, %v4468
        %v4552 = vpack.c.bf16 %v4471, %v4470
        %v4553 = vpack.c.bf16 %v4473, %v4472
        %v4554 = vpack.c.bf16 %v4475, %v4474
        %v4555 = vpack.c.bf16 %v4477, %v4476
        %v4556 = vpack.c.bf16 %v4479, %v4478
        %v4557 = vpack.c.bf16 %v4481, %v4480
        %v4558 = vpack.c.bf16 %v4483, %v4482
        %v4559 = vpack.c.bf16 %v4485, %v4484
        %v4560 = vpack.c.bf16 %v4487, %v4486
        %v4561 = vpack.c.bf16 %v4489, %v4488
        %v4562 = vpack.c.bf16 %v4491, %v4490
        %v4563 = vpack.c.bf16 %v4493, %v4492
        %v4564 = vpack.c.bf16 %v4495, %v4494
        %v4565 = vpack.c.bf16 %v4497, %v4496
        %v4566 = vpack.c.bf16 %v4499, %v4498
        %v4567 = vpack.c.bf16 %v4501, %v4500
        %v4568 = vpack.c.bf16 %v4503, %v4502
        %v4569 = vpack.c.bf16 %v4505, %v4504
        %v4634 = vunpack.c.l.b16 %v4506
        %v4635 = vunpack.c.h.b16 %v4506
        %v4636 = vunpack.c.l.b16 %v4507
        %v4637 = vunpack.c.h.b16 %v4507
        %v4638 = vunpack.c.l.b16 %v4508
        %v4639 = vunpack.c.h.b16 %v4508
        %v4640 = vunpack.c.l.b16 %v4509
        %v4641 = vunpack.c.h.b16 %v4509
        %v4642 = vunpack.c.l.b16 %v4510
        %v4643 = vunpack.c.h.b16 %v4510
        %v4644 = vunpack.c.l.b16 %v4511
        %v4645 = vunpack.c.h.b16 %v4511
        %v4646 = vunpack.c.l.b16 %v4512
        %v4647 = vunpack.c.h.b16 %v4512
        %v4648 = vunpack.c.l.b16 %v4513
        %v4649 = vunpack.c.h.b16 %v4513
        %v4650 = vunpack.c.l.b16 %v4514
        %v4651 = vunpack.c.h.b16 %v4514
        %v4652 = vunpack.c.l.b16 %v4515
        %v4653 = vunpack.c.h.b16 %v4515
        %v4654 = vunpack.c.l.b16 %v4516
        %v4655 = vunpack.c.h.b16 %v4516
        %v4656 = vunpack.c.l.b16 %v4517
        %v4657 = vunpack.c.h.b16 %v4517
        %v4658 = vunpack.c.l.b16 %v4518
        %v4659 = vunpack.c.h.b16 %v4518
        %v4660 = vunpack.c.l.b16 %v4519
        %v4661 = vunpack.c.h.b16 %v4519
        %v4662 = vunpack.c.l.b16 %v4520
        %v4663 = vunpack.c.h.b16 %v4520
        %v4664 = vunpack.c.l.b16 %v4521
        %v4665 = vunpack.c.h.b16 %v4521
        %v4666 = vunpack.c.l.b16 %v4522
        %v4667 = vunpack.c.h.b16 %v4522
        %v4668 = vunpack.c.l.b16 %v4523
        %v4669 = vunpack.c.h.b16 %v4523
        %v4670 = vunpack.c.l.b16 %v4524
        %v4671 = vunpack.c.h.b16 %v4524
        %v4672 = vunpack.c.l.b16 %v4525
        %v4673 = vunpack.c.h.b16 %v4525
        %v4674 = vunpack.c.l.b16 %v4526
        %v4675 = vunpack.c.h.b16 %v4526
        %v4676 = vunpack.c.l.b16 %v4527
        %v4677 = vunpack.c.h.b16 %v4527
        %v4678 = vunpack.c.l.b16 %v4528
        %v4679 = vunpack.c.h.b16 %v4528
        %v4680 = vunpack.c.l.b16 %v4529
        %v4681 = vunpack.c.h.b16 %v4529
        %v4682 = vunpack.c.l.b16 %v4530
        %v4683 = vunpack.c.h.b16 %v4530
        %v4684 = vunpack.c.l.b16 %v4531
        %v4685 = vunpack.c.h.b16 %v4531
        %v4686 = vunpack.c.l.b16 %v4532
        %v4687 = vunpack.c.h.b16 %v4532
        %v4688 = vunpack.c.l.b16 %v4533
        %v4689 = vunpack.c.h.b16 %v4533
        %v4690 = vunpack.c.l.b16 %v4534
        %v4691 = vunpack.c.h.b16 %v4534
        %v4692 = vunpack.c.l.b16 %v4535
        %v4693 = vunpack.c.h.b16 %v4535
        %v4694 = vunpack.c.l.b16 %v4536
        %v4695 = vunpack.c.h.b16 %v4536
        %v4696 = vunpack.c.l.b16 %v4537
        %v4697 = vunpack.c.h.b16 %v4537
        %v4698 = vunpack.c.l.b16 %v4538
        %v4699 = vunpack.c.h.b16 %v4538
        %v4700 = vunpack.c.l.b16 %v4539
        %v4701 = vunpack.c.h.b16 %v4539
        %v4702 = vunpack.c.l.b16 %v4540
        %v4703 = vunpack.c.h.b16 %v4540
        %v4704 = vunpack.c.l.b16 %v4541
        %v4705 = vunpack.c.h.b16 %v4541
        %v4706 = vunpack.c.l.b16 %v4542
        %v4707 = vunpack.c.h.b16 %v4542
        %v4708 = vunpack.c.l.b16 %v4543
        %v4709 = vunpack.c.h.b16 %v4543
        %v4710 = vunpack.c.l.b16 %v4544
        %v4711 = vunpack.c.h.b16 %v4544
        %v4712 = vunpack.c.l.b16 %v4545
        %v4713 = vunpack.c.h.b16 %v4545
        %v4714 = vunpack.c.l.b16 %v4546
        %v4715 = vunpack.c.h.b16 %v4546
        %v4716 = vunpack.c.l.b16 %v4547
        %v4717 = vunpack.c.h.b16 %v4547
        %v4718 = vunpack.c.l.b16 %v4548
        %v4719 = vunpack.c.h.b16 %v4548
        %v4720 = vunpack.c.l.b16 %v4549
        %v4721 = vunpack.c.h.b16 %v4549
        %v4722 = vunpack.c.l.b16 %v4550
        %v4723 = vunpack.c.h.b16 %v4550
        %v4724 = vunpack.c.l.b16 %v4551
        %v4725 = vunpack.c.h.b16 %v4551
        %v4726 = vunpack.c.l.b16 %v4552
        %v4727 = vunpack.c.h.b16 %v4552
        %v4728 = vunpack.c.l.b16 %v4553
        %v4729 = vunpack.c.h.b16 %v4553
        %v4730 = vunpack.c.l.b16 %v4554
        %v4731 = vunpack.c.h.b16 %v4554
        %v4732 = vunpack.c.l.b16 %v4555
        %v4733 = vunpack.c.h.b16 %v4555
        %v4734 = vunpack.c.l.b16 %v4556
        %v4735 = vunpack.c.h.b16 %v4556
        %v4736 = vunpack.c.l.b16 %v4557
        %v4737 = vunpack.c.h.b16 %v4557
        %v4738 = vunpack.c.l.b16 %v4558
        %v4739 = vunpack.c.h.b16 %v4558
        %v4740 = vunpack.c.l.b16 %v4559
        %v4741 = vunpack.c.h.b16 %v4559
        %v4742 = vunpack.c.l.b16 %v4560
        %v4743 = vunpack.c.h.b16 %v4560
        %v4744 = vunpack.c.l.b16 %v4561
        %v4745 = vunpack.c.h.b16 %v4561
        %v4746 = vunpack.c.l.b16 %v4562
        %v4747 = vunpack.c.h.b16 %v4562
        %v4748 = vunpack.c.l.b16 %v4563
        %v4749 = vunpack.c.h.b16 %v4563
        %v4750 = vunpack.c.l.b16 %v4564
        %v4751 = vunpack.c.h.b16 %v4564
        %v4752 = vunpack.c.l.b16 %v4565
        %v4753 = vunpack.c.h.b16 %v4565
        %v4754 = vunpack.c.l.b16 %v4566
        %v4755 = vunpack.c.h.b16 %v4566
        %v4756 = vunpack.c.l.b16 %v4567
        %v4757 = vunpack.c.h.b16 %v4567
        %v4758 = vunpack.c.l.b16 %v4568
        %v4759 = vunpack.c.h.b16 %v4568
        %v4760 = vunpack.c.l.b16 %v4569
        %v4761 = vunpack.c.h.b16 %v4569
        %v4762 = vpack.c.b16 %v4634, %v4634
        %v4763 = vpack.c.b16 %v4635, %v4635
        %v4764 = vpack.c.b16 %v4636, %v4636
        %v4765 = vpack.c.b16 %v4637, %v4637
        %v4766 = vpack.c.b16 %v4638, %v4638
        %v4767 = vpack.c.b16 %v4639, %v4639
        %v4768 = vpack.c.b16 %v4640, %v4640
        %v4769 = vpack.c.b16 %v4641, %v4641
        %v4770 = vpack.c.b16 %v4642, %v4642
        %v4771 = vpack.c.b16 %v4643, %v4643
        %v4772 = vpack.c.b16 %v4644, %v4644
        %v4773 = vpack.c.b16 %v4645, %v4645
        %v4774 = vpack.c.b16 %v4646, %v4646
        %v4775 = vpack.c.b16 %v4647, %v4647
        %v4776 = vpack.c.b16 %v4648, %v4648
        %v4777 = vpack.c.b16 %v4649, %v4649
        %v4778 = vpack.c.b16 %v4650, %v4650
        %v4779 = vpack.c.b16 %v4651, %v4651
        %v4780 = vpack.c.b16 %v4652, %v4652
        %v4781 = vpack.c.b16 %v4653, %v4653
        %v4782 = vpack.c.b16 %v4654, %v4654
        %v4783 = vpack.c.b16 %v4655, %v4655
        %v4784 = vpack.c.b16 %v4656, %v4656
        %v4785 = vpack.c.b16 %v4657, %v4657
        %v4786 = vpack.c.b16 %v4658, %v4658
        %v4787 = vpack.c.b16 %v4659, %v4659
        %v4788 = vpack.c.b16 %v4660, %v4660
        %v4789 = vpack.c.b16 %v4661, %v4661
        %v4790 = vpack.c.b16 %v4662, %v4662
        %v4791 = vpack.c.b16 %v4663, %v4663
        %v4792 = vpack.c.b16 %v4664, %v4664
        %v4793 = vpack.c.b16 %v4665, %v4665
        %v4794 = vpack.c.b16 %v4666, %v4666
        %v4795 = vpack.c.b16 %v4667, %v4667
        %v4796 = vpack.c.b16 %v4668, %v4668
        %v4797 = vpack.c.b16 %v4669, %v4669
        %v4798 = vpack.c.b16 %v4670, %v4670
        %v4799 = vpack.c.b16 %v4671, %v4671
        %v4800 = vpack.c.b16 %v4672, %v4672
        %v4801 = vpack.c.b16 %v4673, %v4673
        %v4802 = vpack.c.b16 %v4674, %v4674
        %v4803 = vpack.c.b16 %v4675, %v4675
        %v4804 = vpack.c.b16 %v4676, %v4676
        %v4805 = vpack.c.b16 %v4677, %v4677
        %v4806 = vpack.c.b16 %v4678, %v4678
        %v4807 = vpack.c.b16 %v4679, %v4679
        %v4808 = vpack.c.b16 %v4680, %v4680
        %v4809 = vpack.c.b16 %v4681, %v4681
        %v4810 = vpack.c.b16 %v4682, %v4682
        %v4811 = vpack.c.b16 %v4683, %v4683
        %v4812 = vpack.c.b16 %v4684, %v4684
        %v4813 = vpack.c.b16 %v4685, %v4685
        %v4814 = vpack.c.b16 %v4686, %v4686
        %v4815 = vpack.c.b16 %v4687, %v4687
        %v4816 = vpack.c.b16 %v4688, %v4688
        %v4817 = vpack.c.b16 %v4689, %v4689
        %v4818 = vpack.c.b16 %v4690, %v4690
        %v4819 = vpack.c.b16 %v4691, %v4691
        %v4820 = vpack.c.b16 %v4692, %v4692
        %v4821 = vpack.c.b16 %v4693, %v4693
        %v4822 = vpack.c.b16 %v4694, %v4694
        %v4823 = vpack.c.b16 %v4695, %v4695
        %v4824 = vpack.c.b16 %v4696, %v4696
        %v4825 = vpack.c.b16 %v4697, %v4697
        %v4826 = vpack.c.b16 %v4698, %v4698
        %v4827 = vpack.c.b16 %v4699, %v4699
        %v4828 = vpack.c.b16 %v4700, %v4700
        %v4829 = vpack.c.b16 %v4701, %v4701
        %v4830 = vpack.c.b16 %v4702, %v4702
        %v4831 = vpack.c.b16 %v4703, %v4703
        %v4832 = vpack.c.b16 %v4704, %v4704
        %v4833 = vpack.c.b16 %v4705, %v4705
        %v4834 = vpack.c.b16 %v4706, %v4706
        %v4835 = vpack.c.b16 %v4707, %v4707
        %v4836 = vpack.c.b16 %v4708, %v4708
        %v4837 = vpack.c.b16 %v4709, %v4709
        %v4838 = vpack.c.b16 %v4710, %v4710
        %v4839 = vpack.c.b16 %v4711, %v4711
        %v4840 = vpack.c.b16 %v4712, %v4712
        %v4841 = vpack.c.b16 %v4713, %v4713
        %v4842 = vpack.c.b16 %v4714, %v4714
        %v4843 = vpack.c.b16 %v4715, %v4715
        %v4844 = vpack.c.b16 %v4716, %v4716
        %v4845 = vpack.c.b16 %v4717, %v4717
        %v4846 = vpack.c.b16 %v4718, %v4718
        %v4847 = vpack.c.b16 %v4719, %v4719
        %v4848 = vpack.c.b16 %v4720, %v4720
        %v4849 = vpack.c.b16 %v4721, %v4721
        %v4850 = vpack.c.b16 %v4722, %v4722
        %v4851 = vpack.c.b16 %v4723, %v4723
        %v4852 = vpack.c.b16 %v4724, %v4724
        %v4853 = vpack.c.b16 %v4725, %v4725
        %v4854 = vpack.c.b16 %v4726, %v4726
        %v4855 = vpack.c.b16 %v4727, %v4727
        %v4856 = vpack.c.b16 %v4728, %v4728
        %v4857 = vpack.c.b16 %v4729, %v4729
        %v4858 = vpack.c.b16 %v4730, %v4730
        %v4859 = vpack.c.b16 %v4731, %v4731
        %v4860 = vpack.c.b16 %v4732, %v4732
        %v4861 = vpack.c.b16 %v4733, %v4733
        %v4862 = vpack.c.b16 %v4734, %v4734
        %v4863 = vpack.c.b16 %v4735, %v4735
        %v4864 = vpack.c.b16 %v4736, %v4736
        %v4865 = vpack.c.b16 %v4737, %v4737
        %v4866 = vpack.c.b16 %v4738, %v4738
        %v4867 = vpack.c.b16 %v4739, %v4739
        %v4868 = vpack.c.b16 %v4740, %v4740
        %v4869 = vpack.c.b16 %v4741, %v4741
        %v4870 = vpack.c.b16 %v4742, %v4742
        %v4871 = vpack.c.b16 %v4743, %v4743
        %v4872 = vpack.c.b16 %v4744, %v4744
        %v4873 = vpack.c.b16 %v4745, %v4745
        %v4874 = vpack.c.b16 %v4746, %v4746
        %v4875 = vpack.c.b16 %v4747, %v4747
        %v4876 = vpack.c.b16 %v4748, %v4748
        %v4877 = vpack.c.b16 %v4749, %v4749
        %v4878 = vpack.c.b16 %v4750, %v4750
        %v4879 = vpack.c.b16 %v4751, %v4751
        %v4880 = vpack.c.b16 %v4752, %v4752
        %v4881 = vpack.c.b16 %v4753, %v4753
        %v4882 = vpack.c.b16 %v4754, %v4754
        %v4883 = vpack.c.b16 %v4755, %v4755
        %v4884 = vpack.c.b16 %v4756, %v4756
        %v4885 = vpack.c.b16 %v4757, %v4757
        %v4886 = vpack.c.b16 %v4758, %v4758
        %v4887 = vpack.c.b16 %v4759, %v4759
        %v4888 = vpack.c.b16 %v4760, %v4760
        %v4889 = vpack.c.b16 %v4761, %v4761
        %5018 = vst.msk [vmem:[%s4 + $0x200] sm:$0xf] %vm3865, %v4762
        %5019 = vst.msk [vmem:[%s4 + $0x204] sm:$0xf] %vm3865, %v4763
        %5020 = vst.msk [vmem:[%s4 + $0x208] sm:$0xf] %vm3865, %v4764
        %5021 = vst.msk [vmem:[%s4 + $0x20c] sm:$0xf] %vm3865, %v4765
        %5022 = vst.msk [vmem:[%s4 + $0x210] sm:$0xf] %vm3865, %v4766
        %5023 = vst.msk [vmem:[%s4 + $0x214] sm:$0xf] %vm3865, %v4767
        %5024 = vst.msk [vmem:[%s4 + $0x218] sm:$0xf] %vm3865, %v4768
        %5025 = vst.msk [vmem:[%s4 + $0x21c] sm:$0xf] %vm3865, %v4769
        %5026 = vst.msk [vmem:[%s4 + $0x220] sm:$0xf] %vm3865, %v4770
        %5027 = vst.msk [vmem:[%s4 + $0x224] sm:$0xf] %vm3865, %v4771
        %5028 = vst.msk [vmem:[%s4 + $0x228] sm:$0xf] %vm3865, %v4772
        %5029 = vst.msk [vmem:[%s4 + $0x22c] sm:$0xf] %vm3865, %v4773
        %5030 = vst.msk [vmem:[%s4 + $0x230] sm:$0xf] %vm3865, %v4774
        %5031 = vst.msk [vmem:[%s4 + $0x234] sm:$0xf] %vm3865, %v4775
        %5032 = vst.msk [vmem:[%s4 + $0x238] sm:$0xf] %vm3865, %v4776
        %5033 = vst.msk [vmem:[%s4 + $0x23c] sm:$0xf] %vm3865, %v4777
        %5034 = vst.msk [vmem:[%s4 + $0x240] sm:$0xf] %vm3865, %v4778
        %5035 = vst.msk [vmem:[%s4 + $0x244] sm:$0xf] %vm3865, %v4779
        %5036 = vst.msk [vmem:[%s4 + $0x248] sm:$0xf] %vm3865, %v4780
        %5037 = vst.msk [vmem:[%s4 + $0x24c] sm:$0xf] %vm3865, %v4781
        %5038 = vst.msk [vmem:[%s4 + $0x250] sm:$0xf] %vm3865, %v4782
        %5039 = vst.msk [vmem:[%s4 + $0x254] sm:$0xf] %vm3865, %v4783
        %5040 = vst.msk [vmem:[%s4 + $0x258] sm:$0xf] %vm3865, %v4784
        %5041 = vst.msk [vmem:[%s4 + $0x25c] sm:$0xf] %vm3865, %v4785
        %5042 = vst.msk [vmem:[%s4 + $0x260] sm:$0xf] %vm3865, %v4786
        %5043 = vst.msk [vmem:[%s4 + $0x264] sm:$0xf] %vm3865, %v4787
        %5044 = vst.msk [vmem:[%s4 + $0x268] sm:$0xf] %vm3865, %v4788
        %5045 = vst.msk [vmem:[%s4 + $0x26c] sm:$0xf] %vm3865, %v4789
        %5046 = vst.msk [vmem:[%s4 + $0x270] sm:$0xf] %vm3865, %v4790
        %5047 = vst.msk [vmem:[%s4 + $0x274] sm:$0xf] %vm3865, %v4791
        %5048 = vst.msk [vmem:[%s4 + $0x278] sm:$0xf] %vm3865, %v4792
        %5049 = vst.msk [vmem:[%s4 + $0x27c] sm:$0xf] %vm3865, %v4793
        %5050 = vst.msk [vmem:[%s4 + $0x280] sm:$0xf] %vm3865, %v4794
        %5051 = vst.msk [vmem:[%s4 + $0x284] sm:$0xf] %vm3865, %v4795
        %5052 = vst.msk [vmem:[%s4 + $0x288] sm:$0xf] %vm3865, %v4796
        %5053 = vst.msk [vmem:[%s4 + $0x28c] sm:$0xf] %vm3865, %v4797
        %5054 = vst.msk [vmem:[%s4 + $0x290] sm:$0xf] %vm3865, %v4798
        %5055 = vst.msk [vmem:[%s4 + $0x294] sm:$0xf] %vm3865, %v4799
        %5056 = vst.msk [vmem:[%s4 + $0x298] sm:$0xf] %vm3865, %v4800
        %5057 = vst.msk [vmem:[%s4 + $0x29c] sm:$0xf] %vm3865, %v4801
        %5058 = vst.msk [vmem:[%s4 + $0x2a0] sm:$0xf] %vm3865, %v4802
        %5059 = vst.msk [vmem:[%s4 + $0x2a4] sm:$0xf] %vm3865, %v4803
        %5060 = vst.msk [vmem:[%s4 + $0x2a8] sm:$0xf] %vm3865, %v4804
        %5061 = vst.msk [vmem:[%s4 + $0x2ac] sm:$0xf] %vm3865, %v4805
        %5062 = vst.msk [vmem:[%s4 + $0x2b0] sm:$0xf] %vm3865, %v4806
        %5063 = vst.msk [vmem:[%s4 + $0x2b4] sm:$0xf] %vm3865, %v4807
        %5064 = vst.msk [vmem:[%s4 + $0x2b8] sm:$0xf] %vm3865, %v4808
        %5065 = vst.msk [vmem:[%s4 + $0x2bc] sm:$0xf] %vm3865, %v4809
        %5066 = vst.msk [vmem:[%s4 + $0x2c0] sm:$0xf] %vm3865, %v4810
        %5067 = vst.msk [vmem:[%s4 + $0x2c4] sm:$0xf] %vm3865, %v4811
        %5068 = vst.msk [vmem:[%s4 + $0x2c8] sm:$0xf] %vm3865, %v4812
        %5069 = vst.msk [vmem:[%s4 + $0x2cc] sm:$0xf] %vm3865, %v4813
        %5070 = vst.msk [vmem:[%s4 + $0x2d0] sm:$0xf] %vm3865, %v4814
        %5071 = vst.msk [vmem:[%s4 + $0x2d4] sm:$0xf] %vm3865, %v4815
        %5072 = vst.msk [vmem:[%s4 + $0x2d8] sm:$0xf] %vm3865, %v4816
        %5073 = vst.msk [vmem:[%s4 + $0x2dc] sm:$0xf] %vm3865, %v4817
        %5074 = vst.msk [vmem:[%s4 + $0x2e0] sm:$0xf] %vm3865, %v4818
        %5075 = vst.msk [vmem:[%s4 + $0x2e4] sm:$0xf] %vm3865, %v4819
        %5076 = vst.msk [vmem:[%s4 + $0x2e8] sm:$0xf] %vm3865, %v4820
        %5077 = vst.msk [vmem:[%s4 + $0x2ec] sm:$0xf] %vm3865, %v4821
        %5078 = vst.msk [vmem:[%s4 + $0x2f0] sm:$0xf] %vm3865, %v4822
        %5079 = vst.msk [vmem:[%s4 + $0x2f4] sm:$0xf] %vm3865, %v4823
        %5080 = vst.msk [vmem:[%s4 + $0x2f8] sm:$0xf] %vm3865, %v4824
        %5081 = vst.msk [vmem:[%s4 + $0x2fc] sm:$0xf] %vm3865, %v4825
        %5082 = vst.msk [vmem:[%s4 + $0x300] sm:$0xf] %vm3865, %v4826
        %5083 = vst.msk [vmem:[%s4 + $0x304] sm:$0xf] %vm3865, %v4827
        %5084 = vst.msk [vmem:[%s4 + $0x308] sm:$0xf] %vm3865, %v4828
        %5085 = vst.msk [vmem:[%s4 + $0x30c] sm:$0xf] %vm3865, %v4829
        %5086 = vst.msk [vmem:[%s4 + $0x310] sm:$0xf] %vm3865, %v4830
        %5087 = vst.msk [vmem:[%s4 + $0x314] sm:$0xf] %vm3865, %v4831
        %5088 = vst.msk [vmem:[%s4 + $0x318] sm:$0xf] %vm3865, %v4832
        %5089 = vst.msk [vmem:[%s4 + $0x31c] sm:$0xf] %vm3865, %v4833
        %5090 = vst.msk [vmem:[%s4 + $0x320] sm:$0xf] %vm3865, %v4834
        %5091 = vst.msk [vmem:[%s4 + $0x324] sm:$0xf] %vm3865, %v4835
        %5092 = vst.msk [vmem:[%s4 + $0x328] sm:$0xf] %vm3865, %v4836
        %5093 = vst.msk [vmem:[%s4 + $0x32c] sm:$0xf] %vm3865, %v4837
        %5094 = vst.msk [vmem:[%s4 + $0x330] sm:$0xf] %vm3865, %v4838
        %5095 = vst.msk [vmem:[%s4 + $0x334] sm:$0xf] %vm3865, %v4839
        %5096 = vst.msk [vmem:[%s4 + $0x338] sm:$0xf] %vm3865, %v4840
        %5097 = vst.msk [vmem:[%s4 + $0x33c] sm:$0xf] %vm3865, %v4841
        %5098 = vst.msk [vmem:[%s4 + $0x340] sm:$0xf] %vm3865, %v4842
        %5099 = vst.msk [vmem:[%s4 + $0x344] sm:$0xf] %vm3865, %v4843
        %5100 = vst.msk [vmem:[%s4 + $0x348] sm:$0xf] %vm3865, %v4844
        %5101 = vst.msk [vmem:[%s4 + $0x34c] sm:$0xf] %vm3865, %v4845
        %5102 = vst.msk [vmem:[%s4 + $0x350] sm:$0xf] %vm3865, %v4846
        %5103 = vst.msk [vmem:[%s4 + $0x354] sm:$0xf] %vm3865, %v4847
        %5104 = vst.msk [vmem:[%s4 + $0x358] sm:$0xf] %vm3865, %v4848
        %5105 = vst.msk [vmem:[%s4 + $0x35c] sm:$0xf] %vm3865, %v4849
        %5106 = vst.msk [vmem:[%s4 + $0x360] sm:$0xf] %vm3865, %v4850
        %5107 = vst.msk [vmem:[%s4 + $0x364] sm:$0xf] %vm3865, %v4851
        %5108 = vst.msk [vmem:[%s4 + $0x368] sm:$0xf] %vm3865, %v4852
        %5109 = vst.msk [vmem:[%s4 + $0x36c] sm:$0xf] %vm3865, %v4853
        %5110 = vst.msk [vmem:[%s4 + $0x370] sm:$0xf] %vm3865, %v4854
        %5111 = vst.msk [vmem:[%s4 + $0x374] sm:$0xf] %vm3865, %v4855
        %5112 = vst.msk [vmem:[%s4 + $0x378] sm:$0xf] %vm3865, %v4856
        %5113 = vst.msk [vmem:[%s4 + $0x37c] sm:$0xf] %vm3865, %v4857
        %5114 = vst.msk [vmem:[%s4 + $0x380] sm:$0xf] %vm3865, %v4858
        %5115 = vst.msk [vmem:[%s4 + $0x384] sm:$0xf] %vm3865, %v4859
        %5116 = vst.msk [vmem:[%s4 + $0x388] sm:$0xf] %vm3865, %v4860
        %5117 = vst.msk [vmem:[%s4 + $0x38c] sm:$0xf] %vm3865, %v4861
        %5118 = vst.msk [vmem:[%s4 + $0x390] sm:$0xf] %vm3865, %v4862
        %5119 = vst.msk [vmem:[%s4 + $0x394] sm:$0xf] %vm3865, %v4863
        %5120 = vst.msk [vmem:[%s4 + $0x398] sm:$0xf] %vm3865, %v4864
        %5121 = vst.msk [vmem:[%s4 + $0x39c] sm:$0xf] %vm3865, %v4865
        %5122 = vst.msk [vmem:[%s4 + $0x3a0] sm:$0xf] %vm3865, %v4866
        %5123 = vst.msk [vmem:[%s4 + $0x3a4] sm:$0xf] %vm3865, %v4867
        %5124 = vst.msk [vmem:[%s4 + $0x3a8] sm:$0xf] %vm3865, %v4868
        %5125 = vst.msk [vmem:[%s4 + $0x3ac] sm:$0xf] %vm3865, %v4869
        %5126 = vst.msk [vmem:[%s4 + $0x3b0] sm:$0xf] %vm3865, %v4870
        %5127 = vst.msk [vmem:[%s4 + $0x3b4] sm:$0xf] %vm3865, %v4871
        %5128 = vst.msk [vmem:[%s4 + $0x3b8] sm:$0xf] %vm3865, %v4872
        %5129 = vst.msk [vmem:[%s4 + $0x3bc] sm:$0xf] %vm3865, %v4873
        %5130 = vst.msk [vmem:[%s4 + $0x3c0] sm:$0xf] %vm3865, %v4874
        %5131 = vst.msk [vmem:[%s4 + $0x3c4] sm:$0xf] %vm3865, %v4875
        %5132 = vst.msk [vmem:[%s4 + $0x3c8] sm:$0xf] %vm3865, %v4876
        %5133 = vst.msk [vmem:[%s4 + $0x3cc] sm:$0xf] %vm3865, %v4877
        %5134 = vst.msk [vmem:[%s4 + $0x3d0] sm:$0xf] %vm3865, %v4878
        %5135 = vst.msk [vmem:[%s4 + $0x3d4] sm:$0xf] %vm3865, %v4879
        %5136 = vst.msk [vmem:[%s4 + $0x3d8] sm:$0xf] %vm3865, %v4880
        %5137 = vst.msk [vmem:[%s4 + $0x3dc] sm:$0xf] %vm3865, %v4881
        %5138 = vst.msk [vmem:[%s4 + $0x3e0] sm:$0xf] %vm3865, %v4882
        %5139 = vst.msk [vmem:[%s4 + $0x3e4] sm:$0xf] %vm3865, %v4883
        %5140 = vst.msk [vmem:[%s4 + $0x3e8] sm:$0xf] %vm3865, %v4884
        %5141 = vst.msk [vmem:[%s4 + $0x3ec] sm:$0xf] %vm3865, %v4885
        %5142 = vst.msk [vmem:[%s4 + $0x3f0] sm:$0xf] %vm3865, %v4886
        %5143 = vst.msk [vmem:[%s4 + $0x3f4] sm:$0xf] %vm3865, %v4887
        %5144 = vst.msk [vmem:[%s4 + $0x3f8] sm:$0xf] %vm3865, %v4888
        %5145 = vst.msk [vmem:[%s4 + $0x3fc] sm:$0xf] %vm3865, %v4889
      $region44: #{gnet_forward.8} parent=35 // pred_fallthru
        _
      // Predicated region
      $region45: #{gnet_forward.8} parent=35 // pred_check
        %p5146 = pneg %p117
      $region46: #{gnet_forward.8} parent=35 // pred_check_branch
        %5148 = sbr.rel (%p5146) target = $region48
      $region47: #{gnet_forward.8} parent=35 // pred_region
        _
      $region48: #{gnet_forward.8} parent=35 // pred_fallthru
        _
      // Predicated region
      $region49: #{gnet_forward.8} parent=35 // pred_check
        %p5149 = pneg %p117
      $region50: #{gnet_forward.8} parent=35 // pred_check_branch
        %5151 = sbr.rel (%p5149) target = $region52
      $region51: #{gnet_forward.8} parent=35 // pred_region
        _
      $region52: #{gnet_forward.8} parent=35 // pred_fallthru
        _
    $region36: #{gnet_forward.8} parent=5 // pred_fallthru
      _
    %p5152 = scmp.le.s32.totalorder 2, %s10
    // Predicated region
    $region53: #{gnet_forward.8} parent=5 // pred_check
      %p5153 = pneg %p5152
    $region54: #{gnet_forward.8} parent=5 // pred_check_branch
      %5155 = sbr.rel (%p5153) target = $region56
    $region55: #{gnet_forward.8} parent=5 // pred_region
      %s5156 = ssub.s32 %s10, 2
    $region56: #{gnet_forward.8} parent=5 // pred_fallthru
      _
  $region6: #{gnet_forward.8} parent=0 // loop_footer
    %s14 = sadd.s32 1, %s10
  $region7: #{gnet_forward.8} parent=0 // loop_footer_branch
    %9 = sbr.rel target = $region3
  $region8: #{gnet_forward.8} parent=0 // loop_exit
    _

// kernel: gnet_forward.9
$region0: #{gnet_forward.9}
  #allocation0 [shape = 'u32[]', space=smem, size = 0x4, offset = 0x4, fixed_abs, tag = 'smem constant byte address 0x4 - core index']
  #allocation1 [shape = 'u32[144,128]{1,0:T(1,128)}', space=vmem, size = 0x12000, scoped, tag = 'internal scratch']
  %s0 = inlined_call_operand.vmem [shape: bf16[8192,128], index: 0, kind: input, shape index: {}]
  %s1 = inlined_call_operand.vmem [shape: bf16[128,128], index: 1, kind: input, shape index: {}]
  %s2 = inlined_call_operand.vmem [shape: f32[8192,3], index: 2, kind: output, shape index: {}]
  %s3 = sld [smem:[#allocation0]]
  $region41: #{gnet_forward.9} parent=0
    _
  %s5 = ssub.s32 1, %s3
  %s6 = scalar_select 0, %s5, %s3
  loop: start=0, step=1, limit=10
  $region2: #{gnet_forward.9} parent=0 // loop_pre_header
    _
  $region3: #{gnet_forward.9} parent=0 // loop_header
    %s8 = sphi 0, %s12
    %p9 = scmp.ge.s32.totalorder %s8, 10
    %s18 = sphi 0, %s20
    %s21 = sphi 0, %s18
    %s22 = sphi 0, %s21
    %s38 = sphi 0, %s22
    %s42 = sphi 0, %s42
    %s44 = sphi 0, %s42
    %s45 = sphi 0, %s44
    %s59 = sphi 0, %s45
    %s65 = sphi 0, %s67
    %s68 = sphi 0, %s65
    %s69 = sphi 0, %s68
    %s85 = sphi 0, %s69
  $region4: #{gnet_forward.9} parent=0 // loop_header_branch
    %11 = sbr.rel (%p9) target = $region8
  $region5: #{gnet_forward.9} parent=0 // loop_body
    %s13 = ssub.s32 %s8, 1
    %s14 = ssub.s32 %s8, 2
    %s15 = sadd.s32 %s8, 1
    %s16 = ssub.s32 %s8, %s15
    %p17 = scmp.eq.s32.totalorder %s16, 0
    %s19 = sadd.s32 %s18, 1
    %s20 = scalar_select %p17, %s18, %s19
    %p23 = pneg %p17
    %p24 = scmp.eq.s32.totalorder %s8, 7
    %p25 = por %p23, %p24
    %p26 = scmp.ne.s32.totalorder %s18, %s21
    %p27 = scmp.eq.s32.totalorder %s8, 0
    %p28 = por %p26, %p27
    %p29 = scmp.ne.s32.totalorder %s18, %s21
    %p30 = scmp.eq.s32.totalorder %s13, 7
    %p31 = por %p29, %p30
    %p32 = scmp.ne.s32.totalorder %s21, %s22
    %p33 = scmp.eq.s32.totalorder %s13, 0
    %p34 = por %p32, %p33
    %p35 = scmp.ne.s32.totalorder %s21, %s22
    %p36 = scmp.eq.s32.totalorder %s14, 7
    %p37 = por %p35, %p36
    %p39 = scmp.ne.s32.totalorder %s22, %s38
    %p40 = scmp.eq.s32.totalorder %s14, 0
    %p41 = por %p39, %p40
    %s43 = sadd.s32 %s42, 1
    %p46 = scmp.eq.s32.totalorder %s8, 7
    %p47 = scmp.ne.s32.totalorder %s42, %s44
    %p48 = scmp.eq.s32.totalorder %s8, 0
    %p49 = por %p47, %p48
    %p50 = scmp.ne.s32.totalorder %s42, %s44
    %p51 = scmp.eq.s32.totalorder %s13, 7
    %p52 = por %p50, %p51
    %p53 = scmp.ne.s32.totalorder %s44, %s45
    %p54 = scmp.eq.s32.totalorder %s13, 0
    %p55 = por %p53, %p54
    %p56 = scmp.ne.s32.totalorder %s44, %s45
    %p57 = scmp.eq.s32.totalorder %s14, 7
    %p58 = por %p56, %p57
    %p60 = scmp.ne.s32.totalorder %s45, %s59
    %p61 = scmp.eq.s32.totalorder %s14, 0
    %p62 = por %p60, %p61
    %s63 = ssub.s32 %s8, %s15
    %p64 = scmp.eq.s32.totalorder %s63, 0
    %s66 = sadd.s32 %s65, 1
    %s67 = scalar_select %p64, %s65, %s66
    %p70 = pneg %p64
    %p71 = scmp.eq.s32.totalorder %s8, 7
    %p72 = por %p70, %p71
    %p73 = scmp.ne.s32.totalorder %s65, %s68
    %p74 = scmp.eq.s32.totalorder %s8, 0
    %p75 = por %p73, %p74
    %p76 = scmp.ne.s32.totalorder %s65, %s68
    %p77 = scmp.eq.s32.totalorder %s13, 7
    %p78 = por %p76, %p77
    %p79 = scmp.ne.s32.totalorder %s68, %s69
    %p80 = scmp.eq.s32.totalorder %s13, 0
    %p81 = por %p79, %p80
    %p82 = scmp.ne.s32.totalorder %s68, %s69
    %p83 = scmp.eq.s32.totalorder %s14, 7
    %p84 = por %p82, %p83
    %p86 = scmp.ne.s32.totalorder %s69, %s85
    %p87 = scmp.eq.s32.totalorder %s14, 0
    %p88 = por %p86, %p87
    %p89 = scmp.le.s32.totalorder 1, %s8
    %p90 = scmp.lt.s32.totalorder %s8, 9
    %p91 = pnand %p89, %p90
    %p92 = pneg %p91
    // Predicated region
    $region9: #{gnet_forward.9} parent=5 // pred_check
      _
    $region10: #{gnet_forward.9} parent=5 // pred_check_branch
      %94 = sbr.rel (%p91) target = $region12
    $region11: #{gnet_forward.9} parent=5 // pred_region
      %s95 = ssub.s32 %s8, 1
      // Predicated region
      $region13: #{gnet_forward.9} parent=11 // pred_check
        %p96 = pneg %p55
      $region14: #{gnet_forward.9} parent=11 // pred_check_branch
        %98 = sbr.rel (%p96) target = $region16
      $region15: #{gnet_forward.9} parent=11 // pred_region
        _
      $region16: #{gnet_forward.9} parent=11 // pred_fallthru
        _
    $region12: #{gnet_forward.9} parent=5 // pred_fallthru
      _
    %p99 = scmp.lt.s32.totalorder %s8, 8
    // Predicated region
    $region17: #{gnet_forward.9} parent=5 // pred_check
      %p100 = pneg %p99
    $region18: #{gnet_forward.9} parent=5 // pred_check_branch
      %102 = sbr.rel (%p100) target = $region20
    $region19: #{gnet_forward.9} parent=5 // pred_region
      // Predicated region
      $region21: #{gnet_forward.9} parent=19 // pred_check
        %p103 = pneg %p28
      $region22: #{gnet_forward.9} parent=19 // pred_check_branch
        %105 = sbr.rel (%p103) target = $region24
      $region23: #{gnet_forward.9} parent=19 // pred_region
        %s106 = smul.u32 128, %s8
        %p107 = scmp.lt.s32.totalorder %s106, 1023
        %s108 = scalar_select %p107, %s106, 1023
        %s109 = smul.addr %s108, 4
        %s110 = scalar_lea.vmem %s0, %s109
        %s111 = smul.u32 128, %s8
      $region24: #{gnet_forward.9} parent=19 // pred_fallthru
        _
    $region20: #{gnet_forward.9} parent=5 // pred_fallthru
      _
    %p112 = scmp.le.s32.totalorder 1, %s8
    %p113 = scmp.lt.s32.totalorder %s8, 9
    %p114 = pnand %p112, %p113
    %p115 = pneg %p114
    // Predicated region
    $region25: #{gnet_forward.9} parent=5 // pred_check
      _
    $region26: #{gnet_forward.9} parent=5 // pred_check_branch
      %117 = sbr.rel (%p114) target = $region28
    $region27: #{gnet_forward.9} parent=5 // pred_region
      %s118 = ssub.s32 %s8, 1
      %s119 = smul.u32 128, %s13
      %p120 = scmp.lt.s32.totalorder %s119, 1023
      %s121 = scalar_select %p120, %s119, 1023
      %s122 = smul.addr %s121, 4
      %s123 = scalar_lea.vmem %s0, %s122
      %p124 = pneg %p34
      %p125 = pneg %p31
      %p126 = pneg %p55
      %p127 = pneg %p52
      %p128 = pneg %p81
      %p129 = pneg %p78
      %s130 = smul.u32 128, %s13
      %p131 = scmp.lt.s32.totalorder %s130, 1023
      %s132 = scalar_select %p131, %s130, 1023
      %s133 = smul.addr %s132, 8
      %s134 = scalar_lea.vmem %s2, %s133
      %s135 = smul.u32 128, %s13
      %p136 = scmp.lt.s32.totalorder %s135, 1023
      %s137 = scalar_select %p136, %s135, 1023
      %s138 = smul.addr %s137, 4
      %s139 = scalar_lea.vmem %s0, %s138
      %s140 = smul.u32 128, %s13
      %s141 = smul.u32 128, %s13
      %p142 = scmp.lt.s32.totalorder %s141, 1023
      %s143 = scalar_select %p142, %s141, 1023
      %s144 = smul.addr %s143, 8
      %s145 = scalar_lea.vmem %s2, %s144
      %s146 = smul.u32 128, %s13
      %v148 = vld [vmem:[%s139] sm:$0xf]
      %v149 = vld [vmem:[%s139 + $0x4] sm:$0xf]
      %v150 = vld [vmem:[%s139 + $0x8] sm:$0xf]
      %v151 = vld [vmem:[%s139 + $0xc] sm:$0xf]
      %v152 = vld [vmem:[%s139 + $0x10] sm:$0xf]
      %v153 = vld [vmem:[%s139 + $0x14] sm:$0xf]
      %v154 = vld [vmem:[%s139 + $0x18] sm:$0xf]
      %v155 = vld [vmem:[%s139 + $0x1c] sm:$0xf]
      %v156 = vld [vmem:[%s139 + $0x20] sm:$0xf]
      %v157 = vld [vmem:[%s139 + $0x24] sm:$0xf]
      %v158 = vld [vmem:[%s139 + $0x28] sm:$0xf]
      %v159 = vld [vmem:[%s139 + $0x2c] sm:$0xf]
      %v160 = vld [vmem:[%s139 + $0x30] sm:$0xf]
      %v161 = vld [vmem:[%s139 + $0x34] sm:$0xf]
      %v162 = vld [vmem:[%s139 + $0x38] sm:$0xf]
      %v163 = vld [vmem:[%s139 + $0x3c] sm:$0xf]
      %v164 = vld [vmem:[%s139 + $0x40] sm:$0xf]
      %v165 = vld [vmem:[%s139 + $0x44] sm:$0xf]
      %v166 = vld [vmem:[%s139 + $0x48] sm:$0xf]
      %v167 = vld [vmem:[%s139 + $0x4c] sm:$0xf]
      %v168 = vld [vmem:[%s139 + $0x50] sm:$0xf]
      %v169 = vld [vmem:[%s139 + $0x54] sm:$0xf]
      %v170 = vld [vmem:[%s139 + $0x58] sm:$0xf]
      %v171 = vld [vmem:[%s139 + $0x5c] sm:$0xf]
      %v172 = vld [vmem:[%s139 + $0x60] sm:$0xf]
      %v173 = vld [vmem:[%s139 + $0x64] sm:$0xf]
      %v174 = vld [vmem:[%s139 + $0x68] sm:$0xf]
      %v175 = vld [vmem:[%s139 + $0x6c] sm:$0xf]
      %v176 = vld [vmem:[%s139 + $0x70] sm:$0xf]
      %v177 = vld [vmem:[%s139 + $0x74] sm:$0xf]
      %v178 = vld [vmem:[%s139 + $0x78] sm:$0xf]
      %v179 = vld [vmem:[%s139 + $0x7c] sm:$0xf]
      %v180 = vld [vmem:[%s139 + $0x80] sm:$0xf]
      %v181 = vld [vmem:[%s139 + $0x84] sm:$0xf]
      %v182 = vld [vmem:[%s139 + $0x88] sm:$0xf]
      %v183 = vld [vmem:[%s139 + $0x8c] sm:$0xf]
      %v184 = vld [vmem:[%s139 + $0x90] sm:$0xf]
      %v185 = vld [vmem:[%s139 + $0x94] sm:$0xf]
      %v186 = vld [vmem:[%s139 + $0x98] sm:$0xf]
      %v187 = vld [vmem:[%s139 + $0x9c] sm:$0xf]
      %v188 = vld [vmem:[%s139 + $0xa0] sm:$0xf]
      %v189 = vld [vmem:[%s139 + $0xa4] sm:$0xf]
      %v190 = vld [vmem:[%s139 + $0xa8] sm:$0xf]
      %v191 = vld [vmem:[%s139 + $0xac] sm:$0xf]
      %v192 = vld [vmem:[%s139 + $0xb0] sm:$0xf]
      %v193 = vld [vmem:[%s139 + $0xb4] sm:$0xf]
      %v194 = vld [vmem:[%s139 + $0xb8] sm:$0xf]
      %v195 = vld [vmem:[%s139 + $0xbc] sm:$0xf]
      %v196 = vld [vmem:[%s139 + $0xc0] sm:$0xf]
      %v197 = vld [vmem:[%s139 + $0xc4] sm:$0xf]
      %v198 = vld [vmem:[%s139 + $0xc8] sm:$0xf]
      %v199 = vld [vmem:[%s139 + $0xcc] sm:$0xf]
      %v200 = vld [vmem:[%s139 + $0xd0] sm:$0xf]
      %v201 = vld [vmem:[%s139 + $0xd4] sm:$0xf]
      %v202 = vld [vmem:[%s139 + $0xd8] sm:$0xf]
      %v203 = vld [vmem:[%s139 + $0xdc] sm:$0xf]
      %v204 = vld [vmem:[%s139 + $0xe0] sm:$0xf]
      %v205 = vld [vmem:[%s139 + $0xe4] sm:$0xf]
      %v206 = vld [vmem:[%s139 + $0xe8] sm:$0xf]
      %v207 = vld [vmem:[%s139 + $0xec] sm:$0xf]
      %v208 = vld [vmem:[%s139 + $0xf0] sm:$0xf]
      %v209 = vld [vmem:[%s139 + $0xf4] sm:$0xf]
      %v210 = vld [vmem:[%s139 + $0xf8] sm:$0xf]
      %v211 = vld [vmem:[%s139 + $0xfc] sm:$0xf]
      %v212 = vld [vmem:[%s139 + $0x100] sm:$0xf]
      %v213 = vld [vmem:[%s139 + $0x104] sm:$0xf]
      %v214 = vld [vmem:[%s139 + $0x108] sm:$0xf]
      %v215 = vld [vmem:[%s139 + $0x10c] sm:$0xf]
      %v216 = vld [vmem:[%s139 + $0x110] sm:$0xf]
      %v217 = vld [vmem:[%s139 + $0x114] sm:$0xf]
      %v218 = vld [vmem:[%s139 + $0x118] sm:$0xf]
      %v219 = vld [vmem:[%s139 + $0x11c] sm:$0xf]
      %v220 = vld [vmem:[%s139 + $0x120] sm:$0xf]
      %v221 = vld [vmem:[%s139 + $0x124] sm:$0xf]
      %v222 = vld [vmem:[%s139 + $0x128] sm:$0xf]
      %v223 = vld [vmem:[%s139 + $0x12c] sm:$0xf]
      %v224 = vld [vmem:[%s139 + $0x130] sm:$0xf]
      %v225 = vld [vmem:[%s139 + $0x134] sm:$0xf]
      %v226 = vld [vmem:[%s139 + $0x138] sm:$0xf]
      %v227 = vld [vmem:[%s139 + $0x13c] sm:$0xf]
      %v228 = vld [vmem:[%s139 + $0x140] sm:$0xf]
      %v229 = vld [vmem:[%s139 + $0x144] sm:$0xf]
      %v230 = vld [vmem:[%s139 + $0x148] sm:$0xf]
      %v231 = vld [vmem:[%s139 + $0x14c] sm:$0xf]
      %v232 = vld [vmem:[%s139 + $0x150] sm:$0xf]
      %v233 = vld [vmem:[%s139 + $0x154] sm:$0xf]
      %v234 = vld [vmem:[%s139 + $0x158] sm:$0xf]
      %v235 = vld [vmem:[%s139 + $0x15c] sm:$0xf]
      %v236 = vld [vmem:[%s139 + $0x160] sm:$0xf]
      %v237 = vld [vmem:[%s139 + $0x164] sm:$0xf]
      %v238 = vld [vmem:[%s139 + $0x168] sm:$0xf]
      %v239 = vld [vmem:[%s139 + $0x16c] sm:$0xf]
      %v240 = vld [vmem:[%s139 + $0x170] sm:$0xf]
      %v241 = vld [vmem:[%s139 + $0x174] sm:$0xf]
      %v242 = vld [vmem:[%s139 + $0x178] sm:$0xf]
      %v243 = vld [vmem:[%s139 + $0x17c] sm:$0xf]
      %v244 = vld [vmem:[%s139 + $0x180] sm:$0xf]
      %v245 = vld [vmem:[%s139 + $0x184] sm:$0xf]
      %v246 = vld [vmem:[%s139 + $0x188] sm:$0xf]
      %v247 = vld [vmem:[%s139 + $0x18c] sm:$0xf]
      %v248 = vld [vmem:[%s139 + $0x190] sm:$0xf]
      %v249 = vld [vmem:[%s139 + $0x194] sm:$0xf]
      %v250 = vld [vmem:[%s139 + $0x198] sm:$0xf]
      %v251 = vld [vmem:[%s139 + $0x19c] sm:$0xf]
      %v252 = vld [vmem:[%s139 + $0x1a0] sm:$0xf]
      %v253 = vld [vmem:[%s139 + $0x1a4] sm:$0xf]
      %v254 = vld [vmem:[%s139 + $0x1a8] sm:$0xf]
      %v255 = vld [vmem:[%s139 + $0x1ac] sm:$0xf]
      %v256 = vld [vmem:[%s139 + $0x1b0] sm:$0xf]
      %v257 = vld [vmem:[%s139 + $0x1b4] sm:$0xf]
      %v258 = vld [vmem:[%s139 + $0x1b8] sm:$0xf]
      %v259 = vld [vmem:[%s139 + $0x1bc] sm:$0xf]
      %v260 = vld [vmem:[%s139 + $0x1c0] sm:$0xf]
      %v261 = vld [vmem:[%s139 + $0x1c4] sm:$0xf]
      %v262 = vld [vmem:[%s139 + $0x1c8] sm:$0xf]
      %v263 = vld [vmem:[%s139 + $0x1cc] sm:$0xf]
      %v264 = vld [vmem:[%s139 + $0x1d0] sm:$0xf]
      %v265 = vld [vmem:[%s139 + $0x1d4] sm:$0xf]
      %v266 = vld [vmem:[%s139 + $0x1d8] sm:$0xf]
      %v267 = vld [vmem:[%s139 + $0x1dc] sm:$0xf]
      %v268 = vld [vmem:[%s139 + $0x1e0] sm:$0xf]
      %v269 = vld [vmem:[%s139 + $0x1e4] sm:$0xf]
      %v270 = vld [vmem:[%s139 + $0x1e8] sm:$0xf]
      %v271 = vld [vmem:[%s139 + $0x1ec] sm:$0xf]
      %v272 = vld [vmem:[%s139 + $0x1f0] sm:$0xf]
      %v273 = vld [vmem:[%s139 + $0x1f4] sm:$0xf]
      %v274 = vld [vmem:[%s139 + $0x1f8] sm:$0xf]
      %v275 = vld [vmem:[%s139 + $0x1fc] sm:$0xf]
      %v276 = vld [vmem:[%s1] sm:$0xf]
      %v277 = vld [vmem:[%s1 + $0x4] sm:$0xf]
      %v278 = vld [vmem:[%s1 + $0x8] sm:$0xf]
      %v279 = vld [vmem:[%s1 + $0xc] sm:$0xf]
      %v280 = vld [vmem:[%s1 + $0x10] sm:$0xf]
      %v281 = vld [vmem:[%s1 + $0x14] sm:$0xf]
      %v282 = vld [vmem:[%s1 + $0x18] sm:$0xf]
      %v283 = vld [vmem:[%s1 + $0x1c] sm:$0xf]
      %v284 = vld [vmem:[%s1 + $0x20] sm:$0xf]
      %v285 = vld [vmem:[%s1 + $0x24] sm:$0xf]
      %v286 = vld [vmem:[%s1 + $0x28] sm:$0xf]
      %v287 = vld [vmem:[%s1 + $0x2c] sm:$0xf]
      %v288 = vld [vmem:[%s1 + $0x30] sm:$0xf]
      %v289 = vld [vmem:[%s1 + $0x34] sm:$0xf]
      %v290 = vld [vmem:[%s1 + $0x38] sm:$0xf]
      %v291 = vld [vmem:[%s1 + $0x3c] sm:$0xf]
      %v420 = vunpack.c.l.b16 %v148
      %v421 = vunpack.c.l.b16 %v149
      %v422 = vunpack.c.l.b16 %v150
      %v423 = vunpack.c.l.b16 %v151
      %v424 = vunpack.c.l.b16 %v152
      %v425 = vunpack.c.l.b16 %v153
      %v426 = vunpack.c.l.b16 %v154
      %v427 = vunpack.c.l.b16 %v155
      %v428 = vunpack.c.l.b16 %v156
      %v429 = vunpack.c.l.b16 %v157
      %v430 = vunpack.c.l.b16 %v158
      %v431 = vunpack.c.l.b16 %v159
      %v432 = vunpack.c.l.b16 %v160
      %v433 = vunpack.c.l.b16 %v161
      %v434 = vunpack.c.l.b16 %v162
      %v435 = vunpack.c.l.b16 %v163
      %v436 = vunpack.c.l.b16 %v164
      %v437 = vunpack.c.l.b16 %v165
      %v438 = vunpack.c.l.b16 %v166
      %v439 = vunpack.c.l.b16 %v167
      %v440 = vunpack.c.l.b16 %v168
      %v441 = vunpack.c.l.b16 %v169
      %v442 = vunpack.c.l.b16 %v170
      %v443 = vunpack.c.l.b16 %v171
      %v444 = vunpack.c.l.b16 %v172
      %v445 = vunpack.c.l.b16 %v173
      %v446 = vunpack.c.l.b16 %v174
      %v447 = vunpack.c.l.b16 %v175
      %v448 = vunpack.c.l.b16 %v176
      %v449 = vunpack.c.l.b16 %v177
      %v450 = vunpack.c.l.b16 %v178
      %v451 = vunpack.c.l.b16 %v179
      %v452 = vunpack.c.l.b16 %v180
      %v453 = vunpack.c.l.b16 %v181
      %v454 = vunpack.c.l.b16 %v182
      %v455 = vunpack.c.l.b16 %v183
      %v456 = vunpack.c.l.b16 %v184
      %v457 = vunpack.c.l.b16 %v185
      %v458 = vunpack.c.l.b16 %v186
      %v459 = vunpack.c.l.b16 %v187
      %v460 = vunpack.c.l.b16 %v188
      %v461 = vunpack.c.l.b16 %v189
      %v462 = vunpack.c.l.b16 %v190
      %v463 = vunpack.c.l.b16 %v191
      %v464 = vunpack.c.l.b16 %v192
      %v465 = vunpack.c.l.b16 %v193
      %v466 = vunpack.c.l.b16 %v194
      %v467 = vunpack.c.l.b16 %v195
      %v468 = vunpack.c.l.b16 %v196
      %v469 = vunpack.c.l.b16 %v197
      %v470 = vunpack.c.l.b16 %v198
      %v471 = vunpack.c.l.b16 %v199
      %v472 = vunpack.c.l.b16 %v200
      %v473 = vunpack.c.l.b16 %v201
      %v474 = vunpack.c.l.b16 %v202
      %v475 = vunpack.c.l.b16 %v203
      %v476 = vunpack.c.l.b16 %v204
      %v477 = vunpack.c.l.b16 %v205
      %v478 = vunpack.c.l.b16 %v206
      %v479 = vunpack.c.l.b16 %v207
      %v480 = vunpack.c.l.b16 %v208
      %v481 = vunpack.c.l.b16 %v209
      %v482 = vunpack.c.l.b16 %v210
      %v483 = vunpack.c.l.b16 %v211
      %v484 = vunpack.c.l.b16 %v212
      %v485 = vunpack.c.l.b16 %v213
      %v486 = vunpack.c.l.b16 %v214
      %v487 = vunpack.c.l.b16 %v215
      %v488 = vunpack.c.l.b16 %v216
      %v489 = vunpack.c.l.b16 %v217
      %v490 = vunpack.c.l.b16 %v218
      %v491 = vunpack.c.l.b16 %v219
      %v492 = vunpack.c.l.b16 %v220
      %v493 = vunpack.c.l.b16 %v221
      %v494 = vunpack.c.l.b16 %v222
      %v495 = vunpack.c.l.b16 %v223
      %v496 = vunpack.c.l.b16 %v224
      %v497 = vunpack.c.l.b16 %v225
      %v498 = vunpack.c.l.b16 %v226
      %v499 = vunpack.c.l.b16 %v227
      %v500 = vunpack.c.l.b16 %v228
      %v501 = vunpack.c.l.b16 %v229
      %v502 = vunpack.c.l.b16 %v230
      %v503 = vunpack.c.l.b16 %v231
      %v504 = vunpack.c.l.b16 %v232
      %v505 = vunpack.c.l.b16 %v233
      %v506 = vunpack.c.l.b16 %v234
      %v507 = vunpack.c.l.b16 %v235
      %v508 = vunpack.c.l.b16 %v236
      %v509 = vunpack.c.l.b16 %v237
      %v510 = vunpack.c.l.b16 %v238
      %v511 = vunpack.c.l.b16 %v239
      %v512 = vunpack.c.l.b16 %v240
      %v513 = vunpack.c.l.b16 %v241
      %v514 = vunpack.c.l.b16 %v242
      %v515 = vunpack.c.l.b16 %v243
      %v516 = vunpack.c.l.b16 %v244
      %v517 = vunpack.c.l.b16 %v245
      %v518 = vunpack.c.l.b16 %v246
      %v519 = vunpack.c.l.b16 %v247
      %v520 = vunpack.c.l.b16 %v248
      %v521 = vunpack.c.l.b16 %v249
      %v522 = vunpack.c.l.b16 %v250
      %v523 = vunpack.c.l.b16 %v251
      %v524 = vunpack.c.l.b16 %v252
      %v525 = vunpack.c.l.b16 %v253
      %v526 = vunpack.c.l.b16 %v254
      %v527 = vunpack.c.l.b16 %v255
      %v528 = vunpack.c.l.b16 %v256
      %v529 = vunpack.c.l.b16 %v257
      %v530 = vunpack.c.l.b16 %v258
      %v531 = vunpack.c.l.b16 %v259
      %v532 = vunpack.c.l.b16 %v260
      %v533 = vunpack.c.l.b16 %v261
      %v534 = vunpack.c.l.b16 %v262
      %v535 = vunpack.c.l.b16 %v263
      %v536 = vunpack.c.l.b16 %v264
      %v537 = vunpack.c.l.b16 %v265
      %v538 = vunpack.c.l.b16 %v266
      %v539 = vunpack.c.l.b16 %v267
      %v540 = vunpack.c.l.b16 %v268
      %v541 = vunpack.c.l.b16 %v269
      %v542 = vunpack.c.l.b16 %v270
      %v543 = vunpack.c.l.b16 %v271
      %v544 = vunpack.c.l.b16 %v272
      %v545 = vunpack.c.l.b16 %v273
      %v546 = vunpack.c.l.b16 %v274
      %v547 = vunpack.c.l.b16 %v275
      %v548 = vpack.c.b16 %v421, %v420
      %v549 = vpack.c.b16 %v423, %v422
      %v550 = vpack.c.b16 %v425, %v424
      %v551 = vpack.c.b16 %v427, %v426
      %v552 = vpack.c.b16 %v429, %v428
      %v553 = vpack.c.b16 %v431, %v430
      %v554 = vpack.c.b16 %v433, %v432
      %v555 = vpack.c.b16 %v435, %v434
      %v556 = vpack.c.b16 %v437, %v436
      %v557 = vpack.c.b16 %v439, %v438
      %v558 = vpack.c.b16 %v441, %v440
      %v559 = vpack.c.b16 %v443, %v442
      %v560 = vpack.c.b16 %v445, %v444
      %v561 = vpack.c.b16 %v447, %v446
      %v562 = vpack.c.b16 %v449, %v448
      %v563 = vpack.c.b16 %v451, %v450
      %v564 = vpack.c.b16 %v453, %v452
      %v565 = vpack.c.b16 %v455, %v454
      %v566 = vpack.c.b16 %v457, %v456
      %v567 = vpack.c.b16 %v459, %v458
      %v568 = vpack.c.b16 %v461, %v460
      %v569 = vpack.c.b16 %v463, %v462
      %v570 = vpack.c.b16 %v465, %v464
      %v571 = vpack.c.b16 %v467, %v466
      %v572 = vpack.c.b16 %v469, %v468
      %v573 = vpack.c.b16 %v471, %v470
      %v574 = vpack.c.b16 %v473, %v472
      %v575 = vpack.c.b16 %v475, %v474
      %v576 = vpack.c.b16 %v477, %v476
      %v577 = vpack.c.b16 %v479, %v478
      %v578 = vpack.c.b16 %v481, %v480
      %v579 = vpack.c.b16 %v483, %v482
      %v580 = vpack.c.b16 %v485, %v484
      %v581 = vpack.c.b16 %v487, %v486
      %v582 = vpack.c.b16 %v489, %v488
      %v583 = vpack.c.b16 %v491, %v490
      %v584 = vpack.c.b16 %v493, %v492
      %v585 = vpack.c.b16 %v495, %v494
      %v586 = vpack.c.b16 %v497, %v496
      %v587 = vpack.c.b16 %v499, %v498
      %v588 = vpack.c.b16 %v501, %v500
      %v589 = vpack.c.b16 %v503, %v502
      %v590 = vpack.c.b16 %v505, %v504
      %v591 = vpack.c.b16 %v507, %v506
      %v592 = vpack.c.b16 %v509, %v508
      %v593 = vpack.c.b16 %v511, %v510
      %v594 = vpack.c.b16 %v513, %v512
      %v595 = vpack.c.b16 %v515, %v514
      %v596 = vpack.c.b16 %v517, %v516
      %v597 = vpack.c.b16 %v519, %v518
      %v598 = vpack.c.b16 %v521, %v520
      %v599 = vpack.c.b16 %v523, %v522
      %v600 = vpack.c.b16 %v525, %v524
      %v601 = vpack.c.b16 %v527, %v526
      %v602 = vpack.c.b16 %v529, %v528
      %v603 = vpack.c.b16 %v531, %v530
      %v604 = vpack.c.b16 %v533, %v532
      %v605 = vpack.c.b16 %v535, %v534
      %v606 = vpack.c.b16 %v537, %v536
      %v607 = vpack.c.b16 %v539, %v538
      %v608 = vpack.c.b16 %v541, %v540
      %v609 = vpack.c.b16 %v543, %v542
      %v610 = vpack.c.b16 %v545, %v544
      %v611 = vpack.c.b16 %v547, %v546
      %v692 = vunpack.c.l.b16 %v276
      %v693 = vunpack.c.l.b16 %v277
      %v694 = vunpack.c.l.b16 %v278
      %v695 = vunpack.c.l.b16 %v279
      %v696 = vunpack.c.l.b16 %v280
      %v697 = vunpack.c.l.b16 %v281
      %v698 = vunpack.c.l.b16 %v282
      %v699 = vunpack.c.l.b16 %v283
      %v700 = vunpack.c.l.b16 %v284
      %v701 = vunpack.c.l.b16 %v285
      %v702 = vunpack.c.l.b16 %v286
      %v703 = vunpack.c.l.b16 %v287
      %v704 = vunpack.c.l.b16 %v288
      %v705 = vunpack.c.l.b16 %v289
      %v706 = vunpack.c.l.b16 %v290
      %v707 = vunpack.c.l.b16 %v291
      %v708 = vpack.c.b16 %v693, %v692
      %v709 = vpack.c.b16 %v695, %v694
      %v710 = vpack.c.b16 %v697, %v696
      %v711 = vpack.c.b16 %v699, %v698
      %v712 = vpack.c.b16 %v701, %v700
      %v713 = vpack.c.b16 %v703, %v702
      %v714 = vpack.c.b16 %v705, %v704
      %v715 = vpack.c.b16 %v707, %v706
      %724 = vmatprep.subr.bf16.mxu0 0
      %725 = vmatpush1.bf16.msra.mxu0 %v708
      %726 = vmatprep.subr.bf16.mxu0 0
      %727 = vmatpush1.bf16.msra.mxu0 %v709
      %728 = vmatprep.subr.bf16.mxu0 0
      %729 = vmatpush1.bf16.msra.mxu0 %v710
      %730 = vmatprep.subr.bf16.mxu0 0
      %731 = vmatpush1.bf16.msra.mxu0 %v711
      %732 = vmatprep.subr.bf16.mxu0 0
      %733 = vmatpush1.bf16.msra.mxu0 %v712
      %734 = vmatprep.subr.bf16.mxu0 0
      %735 = vmatpush1.bf16.msra.mxu0 %v713
      %736 = vmatprep.subr.bf16.mxu0 0
      %737 = vmatpush1.bf16.msra.mxu0 %v714
      %738 = vmatprep.subr.bf16.mxu0 0
      %739 = vmatpush1.bf16.msra.mxu0 %v715
      %740 = vmatprep.subr.bf16.mxu0 0
      %741 = vmatpush1.bf16.msra.mxu0 0
      %742 = vmatprep.subr.bf16.mxu0 0
      %743 = vmatpush1.bf16.msra.mxu0 0
      %744 = vmatprep.subr.bf16.mxu0 0
      %745 = vmatpush1.bf16.msra.mxu0 0
      %746 = vmatprep.subr.bf16.mxu0 0
      %747 = vmatpush1.bf16.msra.mxu0 0
      %748 = vmatprep.subr.bf16.mxu0 0
      %749 = vmatpush1.bf16.msra.mxu0 0
      %750 = vmatprep.subr.bf16.mxu0 0
      %751 = vmatpush1.bf16.msra.mxu0 0
      %752 = vmatprep.subr.bf16.mxu0 0
      %753 = vmatpush1.bf16.msra.mxu0 0
      %754 = vmatprep.subr.bf16.mxu0 0
      %755 = vmatpush1.bf16.msra.mxu0 0
      %756 = vmatprep.mubr.bf16.mxu0 0
      %757 = vmatmul.mubr.bf16.gmra.mrb[0].mxu0 %v548
      %v758 = vpop.f32.mrb[0].mxu0
      %v759 = vadd.f32 0.0, %v758
      %v760 = vpop.f32.mrb[0].mxu0
      %v761 = vpop.f32.mrb[0].mxu0
      %v762 = vadd.f32 0.0, %v761
      %v763 = vpop.f32.mrb[0].mxu0
      %764 = vmatprep.mubr.bf16.mxu0 0
      %765 = vmatmul.mubr.bf16.gmra.mrb[0].mxu0 %v549
      %v766 = vpop.f32.mrb[0].mxu0
      %v767 = vadd.f32 0.0, %v766
      %v768 = vpop.f32.mrb[0].mxu0
      %v769 = vpop.f32.mrb[0].mxu0
      %v770 = vadd.f32 0.0, %v769
      %v771 = vpop.f32.mrb[0].mxu0
      %772 = vmatprep.mubr.bf16.mxu0 0
      %773 = vmatmul.mubr.bf16.gmra.mrb[0].mxu0 %v550
      %v774 = vpop.f32.mrb[0].mxu0
      %v775 = vadd.f32 0.0, %v774
      %v776 = vpop.f32.mrb[0].mxu0
      %v777 = vpop.f32.mrb[0].mxu0
      %v778 = vadd.f32 0.0, %v777
      %v779 = vpop.f32.mrb[0].mxu0
      %780 = vmatprep.mubr.bf16.mxu0 0
      %781 = vmatmul.mubr.bf16.gmra.mrb[0].mxu0 %v551
      %v782 = vpop.f32.mrb[0].mxu0
      %v783 = vadd.f32 0.0, %v782
      %v784 = vpop.f32.mrb[0].mxu0
      %v785 = vpop.f32.mrb[0].mxu0
      %v786 = vadd.f32 0.0, %v785
      %v787 = vpop.f32.mrb[0].mxu0
      %788 = vmatprep.mubr.bf16.mxu0 0
      %789 = vmatmul.mubr.bf16.gmra.mrb[0].mxu0 %v552
      %v790 = vpop.f32.mrb[0].mxu0
      %v791 = vadd.f32 0.0, %v790
      %v792 = vpop.f32.mrb[0].mxu0
      %v793 = vpop.f32.mrb[0].mxu0
      %v794 = vadd.f32 0.0, %v793
      %v795 = vpop.f32.mrb[0].mxu0
      %796 = vmatprep.mubr.bf16.mxu0 0
      %797 = vmatmul.mubr.bf16.gmra.mrb[0].mxu0 %v553
      %v798 = vpop.f32.mrb[0].mxu0
      %v799 = vadd.f32 0.0, %v798
      %v800 = vpop.f32.mrb[0].mxu0
      %v801 = vpop.f32.mrb[0].mxu0
      %v802 = vadd.f32 0.0, %v801
      %v803 = vpop.f32.mrb[0].mxu0
      %804 = vmatprep.mubr.bf16.mxu0 0
      %805 = vmatmul.mubr.bf16.gmra.mrb[0].mxu0 %v554
      %v806 = vpop.f32.mrb[0].mxu0
      %v807 = vadd.f32 0.0, %v806
      %v808 = vpop.f32.mrb[0].mxu0
      %v809 = vpop.f32.mrb[0].mxu0
      %v810 = vadd.f32 0.0, %v809
      %v811 = vpop.f32.mrb[0].mxu0
      %812 = vmatprep.mubr.bf16.mxu0 0
      %813 = vmatmul.mubr.bf16.gmra.mrb[0].mxu0 %v555
      %v814 = vpop.f32.mrb[0].mxu0
      %v815 = vadd.f32 0.0, %v814
      %v816 = vpop.f32.mrb[0].mxu0
      %v817 = vpop.f32.mrb[0].mxu0
      %v818 = vadd.f32 0.0, %v817
      %v819 = vpop.f32.mrb[0].mxu0
      %820 = vmatprep.mubr.bf16.mxu0 0
      %821 = vmatmul.mubr.bf16.gmra.mrb[0].mxu0 %v556
      %v822 = vpop.f32.mrb[0].mxu0
      %v823 = vadd.f32 0.0, %v822
      %v824 = vpop.f32.mrb[0].mxu0
      %v825 = vpop.f32.mrb[0].mxu0
      %v826 = vadd.f32 0.0, %v825
      %v827 = vpop.f32.mrb[0].mxu0
      %828 = vmatprep.mubr.bf16.mxu0 0
      %829 = vmatmul.mubr.bf16.gmra.mrb[0].mxu0 %v557
      %v830 = vpop.f32.mrb[0].mxu0
      %v831 = vadd.f32 0.0, %v830
      %v832 = vpop.f32.mrb[0].mxu0
      %v833 = vpop.f32.mrb[0].mxu0
      %v834 = vadd.f32 0.0, %v833
      %v835 = vpop.f32.mrb[0].mxu0
      %836 = vmatprep.mubr.bf16.mxu0 0
      %837 = vmatmul.mubr.bf16.gmra.mrb[0].mxu0 %v558
      %v838 = vpop.f32.mrb[0].mxu0
      %v839 = vadd.f32 0.0, %v838
      %v840 = vpop.f32.mrb[0].mxu0
      %v841 = vpop.f32.mrb[0].mxu0
      %v842 = vadd.f32 0.0, %v841
      %v843 = vpop.f32.mrb[0].mxu0
      %844 = vmatprep.mubr.bf16.mxu0 0
      %845 = vmatmul.mubr.bf16.gmra.mrb[0].mxu0 %v559
      %v846 = vpop.f32.mrb[0].mxu0
      %v847 = vadd.f32 0.0, %v846
      %v848 = vpop.f32.mrb[0].mxu0
      %v849 = vpop.f32.mrb[0].mxu0
      %v850 = vadd.f32 0.0, %v849
      %v851 = vpop.f32.mrb[0].mxu0
      %852 = vmatprep.mubr.bf16.mxu0 0
      %853 = vmatmul.mubr.bf16.gmra.mrb[0].mxu0 %v560
      %v854 = vpop.f32.mrb[0].mxu0
      %v855 = vadd.f32 0.0, %v854
      %v856 = vpop.f32.mrb[0].mxu0
      %v857 = vpop.f32.mrb[0].mxu0
      %v858 = vadd.f32 0.0, %v857
      %v859 = vpop.f32.mrb[0].mxu0
      %860 = vmatprep.mubr.bf16.mxu0 0
      %861 = vmatmul.mubr.bf16.gmra.mrb[0].mxu0 %v561
      %v862 = vpop.f32.mrb[0].mxu0
      %v863 = vadd.f32 0.0, %v862
      %v864 = vpop.f32.mrb[0].mxu0
      %v865 = vpop.f32.mrb[0].mxu0
      %v866 = vadd.f32 0.0, %v865
      %v867 = vpop.f32.mrb[0].mxu0
      %868 = vmatprep.mubr.bf16.mxu0 0
      %869 = vmatmul.mubr.bf16.gmra.mrb[0].mxu0 %v562
      %v870 = vpop.f32.mrb[0].mxu0
      %v871 = vadd.f32 0.0, %v870
      %v872 = vpop.f32.mrb[0].mxu0
      %v873 = vpop.f32.mrb[0].mxu0
      %v874 = vadd.f32 0.0, %v873
      %v875 = vpop.f32.mrb[0].mxu0
      %876 = vmatprep.mubr.bf16.mxu0 0
      %877 = vmatmul.mubr.bf16.gmra.mrb[0].mxu0 %v563
      %v878 = vpop.f32.mrb[0].mxu0
      %v879 = vadd.f32 0.0, %v878
      %v880 = vpop.f32.mrb[0].mxu0
      %v881 = vpop.f32.mrb[0].mxu0
      %v882 = vadd.f32 0.0, %v881
      %v883 = vpop.f32.mrb[0].mxu0
      %884 = vmatprep.mubr.bf16.mxu0 0
      %885 = vmatmul.mubr.bf16.gmra.mrb[0].mxu0 %v564
      %v886 = vpop.f32.mrb[0].mxu0
      %v887 = vadd.f32 0.0, %v886
      %v888 = vpop.f32.mrb[0].mxu0
      %v889 = vpop.f32.mrb[0].mxu0
      %v890 = vadd.f32 0.0, %v889
      %v891 = vpop.f32.mrb[0].mxu0
      %892 = vmatprep.mubr.bf16.mxu0 0
      %893 = vmatmul.mubr.bf16.gmra.mrb[0].mxu0 %v565
      %v894 = vpop.f32.mrb[0].mxu0
      %v895 = vadd.f32 0.0, %v894
      %v896 = vpop.f32.mrb[0].mxu0
      %v897 = vpop.f32.mrb[0].mxu0
      %v898 = vadd.f32 0.0, %v897
      %v899 = vpop.f32.mrb[0].mxu0
      %900 = vmatprep.mubr.bf16.mxu0 0
      %901 = vmatmul.mubr.bf16.gmra.mrb[0].mxu0 %v566
      %v902 = vpop.f32.mrb[0].mxu0
      %v903 = vadd.f32 0.0, %v902
      %v904 = vpop.f32.mrb[0].mxu0
      %v905 = vpop.f32.mrb[0].mxu0
      %v906 = vadd.f32 0.0, %v905
      %v907 = vpop.f32.mrb[0].mxu0
      %908 = vmatprep.mubr.bf16.mxu0 0
      %909 = vmatmul.mubr.bf16.gmra.mrb[0].mxu0 %v567
      %v910 = vpop.f32.mrb[0].mxu0
      %v911 = vadd.f32 0.0, %v910
      %v912 = vpop.f32.mrb[0].mxu0
      %v913 = vpop.f32.mrb[0].mxu0
      %v914 = vadd.f32 0.0, %v913
      %v915 = vpop.f32.mrb[0].mxu0
      %916 = vmatprep.mubr.bf16.mxu0 0
      %917 = vmatmul.mubr.bf16.gmra.mrb[0].mxu0 %v568
      %v918 = vpop.f32.mrb[0].mxu0
      %v919 = vadd.f32 0.0, %v918
      %v920 = vpop.f32.mrb[0].mxu0
      %v921 = vpop.f32.mrb[0].mxu0
      %v922 = vadd.f32 0.0, %v921
      %v923 = vpop.f32.mrb[0].mxu0
      %924 = vmatprep.mubr.bf16.mxu0 0
      %925 = vmatmul.mubr.bf16.gmra.mrb[0].mxu0 %v569
      %v926 = vpop.f32.mrb[0].mxu0
      %v927 = vadd.f32 0.0, %v926
      %v928 = vpop.f32.mrb[0].mxu0
      %v929 = vpop.f32.mrb[0].mxu0
      %v930 = vadd.f32 0.0, %v929
      %v931 = vpop.f32.mrb[0].mxu0
      %932 = vmatprep.mubr.bf16.mxu0 0
      %933 = vmatmul.mubr.bf16.gmra.mrb[0].mxu0 %v570
      %v934 = vpop.f32.mrb[0].mxu0
      %v935 = vadd.f32 0.0, %v934
      %v936 = vpop.f32.mrb[0].mxu0
      %v937 = vpop.f32.mrb[0].mxu0
      %v938 = vadd.f32 0.0, %v937
      %v939 = vpop.f32.mrb[0].mxu0
      %940 = vmatprep.mubr.bf16.mxu0 0
      %941 = vmatmul.mubr.bf16.gmra.mrb[0].mxu0 %v571
      %v942 = vpop.f32.mrb[0].mxu0
      %v943 = vadd.f32 0.0, %v942
      %v944 = vpop.f32.mrb[0].mxu0
      %v945 = vpop.f32.mrb[0].mxu0
      %v946 = vadd.f32 0.0, %v945
      %v947 = vpop.f32.mrb[0].mxu0
      %948 = vmatprep.mubr.bf16.mxu0 0
      %949 = vmatmul.mubr.bf16.gmra.mrb[0].mxu0 %v572
      %v950 = vpop.f32.mrb[0].mxu0
      %v951 = vadd.f32 0.0, %v950
      %v952 = vpop.f32.mrb[0].mxu0
      %v953 = vpop.f32.mrb[0].mxu0
      %v954 = vadd.f32 0.0, %v953
      %v955 = vpop.f32.mrb[0].mxu0
      %956 = vmatprep.mubr.bf16.mxu0 0
      %957 = vmatmul.mubr.bf16.gmra.mrb[0].mxu0 %v573
      %v958 = vpop.f32.mrb[0].mxu0
      %v959 = vadd.f32 0.0, %v958
      %v960 = vpop.f32.mrb[0].mxu0
      %v961 = vpop.f32.mrb[0].mxu0
      %v962 = vadd.f32 0.0, %v961
      %v963 = vpop.f32.mrb[0].mxu0
      %964 = vmatprep.mubr.bf16.mxu0 0
      %965 = vmatmul.mubr.bf16.gmra.mrb[0].mxu0 %v574
      %v966 = vpop.f32.mrb[0].mxu0
      %v967 = vadd.f32 0.0, %v966
      %v968 = vpop.f32.mrb[0].mxu0
      %v969 = vpop.f32.mrb[0].mxu0
      %v970 = vadd.f32 0.0, %v969
      %v971 = vpop.f32.mrb[0].mxu0
      %972 = vmatprep.mubr.bf16.mxu0 0
      %973 = vmatmul.mubr.bf16.gmra.mrb[0].mxu0 %v575
      %v974 = vpop.f32.mrb[0].mxu0
      %v975 = vadd.f32 0.0, %v974
      %v976 = vpop.f32.mrb[0].mxu0
      %v977 = vpop.f32.mrb[0].mxu0
      %v978 = vadd.f32 0.0, %v977
      %v979 = vpop.f32.mrb[0].mxu0
      %980 = vmatprep.mubr.bf16.mxu0 0
      %981 = vmatmul.mubr.bf16.gmra.mrb[0].mxu0 %v576
      %v982 = vpop.f32.mrb[0].mxu0
      %v983 = vadd.f32 0.0, %v982
      %v984 = vpop.f32.mrb[0].mxu0
      %v985 = vpop.f32.mrb[0].mxu0
      %v986 = vadd.f32 0.0, %v985
      %v987 = vpop.f32.mrb[0].mxu0
      %988 = vmatprep.mubr.bf16.mxu0 0
      %989 = vmatmul.mubr.bf16.gmra.mrb[0].mxu0 %v577
      %v990 = vpop.f32.mrb[0].mxu0
      %v991 = vadd.f32 0.0, %v990
      %v992 = vpop.f32.mrb[0].mxu0
      %v993 = vpop.f32.mrb[0].mxu0
      %v994 = vadd.f32 0.0, %v993
      %v995 = vpop.f32.mrb[0].mxu0
      %996 = vmatprep.mubr.bf16.mxu0 0
      %997 = vmatmul.mubr.bf16.gmra.mrb[0].mxu0 %v578
      %v998 = vpop.f32.mrb[0].mxu0
      %v999 = vadd.f32 0.0, %v998
      %v1000 = vpop.f32.mrb[0].mxu0
      %v1001 = vpop.f32.mrb[0].mxu0
      %v1002 = vadd.f32 0.0, %v1001
      %v1003 = vpop.f32.mrb[0].mxu0
      %1004 = vmatprep.mubr.bf16.mxu0 0
      %1005 = vmatmul.mubr.bf16.gmra.mrb[0].mxu0 %v579
      %v1006 = vpop.f32.mrb[0].mxu0
      %v1007 = vadd.f32 0.0, %v1006
      %v1008 = vpop.f32.mrb[0].mxu0
      %v1009 = vpop.f32.mrb[0].mxu0
      %v1010 = vadd.f32 0.0, %v1009
      %v1011 = vpop.f32.mrb[0].mxu0
      %1012 = vmatprep.mubr.bf16.mxu0 0
      %1013 = vmatmul.mubr.bf16.gmra.mrb[0].mxu0 %v580
      %v1014 = vpop.f32.mrb[0].mxu0
      %v1015 = vadd.f32 0.0, %v1014
      %v1016 = vpop.f32.mrb[0].mxu0
      %v1017 = vpop.f32.mrb[0].mxu0
      %v1018 = vadd.f32 0.0, %v1017
      %v1019 = vpop.f32.mrb[0].mxu0
      %1020 = vmatprep.mubr.bf16.mxu0 0
      %1021 = vmatmul.mubr.bf16.gmra.mrb[0].mxu0 %v581
      %v1022 = vpop.f32.mrb[0].mxu0
      %v1023 = vadd.f32 0.0, %v1022
      %v1024 = vpop.f32.mrb[0].mxu0
      %v1025 = vpop.f32.mrb[0].mxu0
      %v1026 = vadd.f32 0.0, %v1025
      %v1027 = vpop.f32.mrb[0].mxu0
      %1028 = vmatprep.mubr.bf16.mxu0 0
      %1029 = vmatmul.mubr.bf16.gmra.mrb[0].mxu0 %v582
      %v1030 = vpop.f32.mrb[0].mxu0
      %v1031 = vadd.f32 0.0, %v1030
      %v1032 = vpop.f32.mrb[0].mxu0
      %v1033 = vpop.f32.mrb[0].mxu0
      %v1034 = vadd.f32 0.0, %v1033
      %v1035 = vpop.f32.mrb[0].mxu0
      %1036 = vmatprep.mubr.bf16.mxu0 0
      %1037 = vmatmul.mubr.bf16.gmra.mrb[0].mxu0 %v583
      %v1038 = vpop.f32.mrb[0].mxu0
      %v1039 = vadd.f32 0.0, %v1038
      %v1040 = vpop.f32.mrb[0].mxu0
      %v1041 = vpop.f32.mrb[0].mxu0
      %v1042 = vadd.f32 0.0, %v1041
      %v1043 = vpop.f32.mrb[0].mxu0
      %1044 = vmatprep.mubr.bf16.mxu0 0
      %1045 = vmatmul.mubr.bf16.gmra.mrb[0].mxu0 %v584
      %v1046 = vpop.f32.mrb[0].mxu0
      %v1047 = vadd.f32 0.0, %v1046
      %v1048 = vpop.f32.mrb[0].mxu0
      %v1049 = vpop.f32.mrb[0].mxu0
      %v1050 = vadd.f32 0.0, %v1049
      %v1051 = vpop.f32.mrb[0].mxu0
      %1052 = vmatprep.mubr.bf16.mxu0 0
      %1053 = vmatmul.mubr.bf16.gmra.mrb[0].mxu0 %v585
      %v1054 = vpop.f32.mrb[0].mxu0
      %v1055 = vadd.f32 0.0, %v1054
      %v1056 = vpop.f32.mrb[0].mxu0
      %v1057 = vpop.f32.mrb[0].mxu0
      %v1058 = vadd.f32 0.0, %v1057
      %v1059 = vpop.f32.mrb[0].mxu0
      %1060 = vmatprep.mubr.bf16.mxu0 0
      %1061 = vmatmul.mubr.bf16.gmra.mrb[0].mxu0 %v586
      %v1062 = vpop.f32.mrb[0].mxu0
      %v1063 = vadd.f32 0.0, %v1062
      %v1064 = vpop.f32.mrb[0].mxu0
      %v1065 = vpop.f32.mrb[0].mxu0
      %v1066 = vadd.f32 0.0, %v1065
      %v1067 = vpop.f32.mrb[0].mxu0
      %1068 = vmatprep.mubr.bf16.mxu0 0
      %1069 = vmatmul.mubr.bf16.gmra.mrb[0].mxu0 %v587
      %v1070 = vpop.f32.mrb[0].mxu0
      %v1071 = vadd.f32 0.0, %v1070
      %v1072 = vpop.f32.mrb[0].mxu0
      %v1073 = vpop.f32.mrb[0].mxu0
      %v1074 = vadd.f32 0.0, %v1073
      %v1075 = vpop.f32.mrb[0].mxu0
      %1076 = vmatprep.mubr.bf16.mxu0 0
      %1077 = vmatmul.mubr.bf16.gmra.mrb[0].mxu0 %v588
      %v1078 = vpop.f32.mrb[0].mxu0
      %v1079 = vadd.f32 0.0, %v1078
      %v1080 = vpop.f32.mrb[0].mxu0
      %v1081 = vpop.f32.mrb[0].mxu0
      %v1082 = vadd.f32 0.0, %v1081
      %v1083 = vpop.f32.mrb[0].mxu0
      %1084 = vmatprep.mubr.bf16.mxu0 0
      %1085 = vmatmul.mubr.bf16.gmra.mrb[0].mxu0 %v589
      %v1086 = vpop.f32.mrb[0].mxu0
      %v1087 = vadd.f32 0.0, %v1086
      %v1088 = vpop.f32.mrb[0].mxu0
      %v1089 = vpop.f32.mrb[0].mxu0
      %v1090 = vadd.f32 0.0, %v1089
      %v1091 = vpop.f32.mrb[0].mxu0
      %1092 = vmatprep.mubr.bf16.mxu0 0
      %1093 = vmatmul.mubr.bf16.gmra.mrb[0].mxu0 %v590
      %v1094 = vpop.f32.mrb[0].mxu0
      %v1095 = vadd.f32 0.0, %v1094
      %v1096 = vpop.f32.mrb[0].mxu0
      %v1097 = vpop.f32.mrb[0].mxu0
      %v1098 = vadd.f32 0.0, %v1097
      %v1099 = vpop.f32.mrb[0].mxu0
      %1100 = vmatprep.mubr.bf16.mxu0 0
      %1101 = vmatmul.mubr.bf16.gmra.mrb[0].mxu0 %v591
      %v1102 = vpop.f32.mrb[0].mxu0
      %v1103 = vadd.f32 0.0, %v1102
      %v1104 = vpop.f32.mrb[0].mxu0
      %v1105 = vpop.f32.mrb[0].mxu0
      %v1106 = vadd.f32 0.0, %v1105
      %v1107 = vpop.f32.mrb[0].mxu0
      %1108 = vmatprep.mubr.bf16.mxu0 0
      %1109 = vmatmul.mubr.bf16.gmra.mrb[0].mxu0 %v592
      %v1110 = vpop.f32.mrb[0].mxu0
      %v1111 = vadd.f32 0.0, %v1110
      %v1112 = vpop.f32.mrb[0].mxu0
      %v1113 = vpop.f32.mrb[0].mxu0
      %v1114 = vadd.f32 0.0, %v1113
      %v1115 = vpop.f32.mrb[0].mxu0
      %1116 = vmatprep.mubr.bf16.mxu0 0
      %1117 = vmatmul.mubr.bf16.gmra.mrb[0].mxu0 %v593
      %v1118 = vpop.f32.mrb[0].mxu0
      %v1119 = vadd.f32 0.0, %v1118
      %v1120 = vpop.f32.mrb[0].mxu0
      %v1121 = vpop.f32.mrb[0].mxu0
      %v1122 = vadd.f32 0.0, %v1121
      %v1123 = vpop.f32.mrb[0].mxu0
      %1124 = vmatprep.mubr.bf16.mxu0 0
      %1125 = vmatmul.mubr.bf16.gmra.mrb[0].mxu0 %v594
      %v1126 = vpop.f32.mrb[0].mxu0
      %v1127 = vadd.f32 0.0, %v1126
      %v1128 = vpop.f32.mrb[0].mxu0
      %v1129 = vpop.f32.mrb[0].mxu0
      %v1130 = vadd.f32 0.0, %v1129
      %v1131 = vpop.f32.mrb[0].mxu0
      %1132 = vmatprep.mubr.bf16.mxu0 0
      %1133 = vmatmul.mubr.bf16.gmra.mrb[0].mxu0 %v595
      %v1134 = vpop.f32.mrb[0].mxu0
      %v1135 = vadd.f32 0.0, %v1134
      %v1136 = vpop.f32.mrb[0].mxu0
      %v1137 = vpop.f32.mrb[0].mxu0
      %v1138 = vadd.f32 0.0, %v1137
      %v1139 = vpop.f32.mrb[0].mxu0
      %1140 = vmatprep.mubr.bf16.mxu0 0
      %1141 = vmatmul.mubr.bf16.gmra.mrb[0].mxu0 %v596
      %v1142 = vpop.f32.mrb[0].mxu0
      %v1143 = vadd.f32 0.0, %v1142
      %v1144 = vpop.f32.mrb[0].mxu0
      %v1145 = vpop.f32.mrb[0].mxu0
      %v1146 = vadd.f32 0.0, %v1145
      %v1147 = vpop.f32.mrb[0].mxu0
      %1148 = vmatprep.mubr.bf16.mxu0 0
      %1149 = vmatmul.mubr.bf16.gmra.mrb[0].mxu0 %v597
      %v1150 = vpop.f32.mrb[0].mxu0
      %v1151 = vadd.f32 0.0, %v1150
      %v1152 = vpop.f32.mrb[0].mxu0
      %v1153 = vpop.f32.mrb[0].mxu0
      %v1154 = vadd.f32 0.0, %v1153
      %v1155 = vpop.f32.mrb[0].mxu0
      %1156 = vmatprep.mubr.bf16.mxu0 0
      %1157 = vmatmul.mubr.bf16.gmra.mrb[0].mxu0 %v598
      %v1158 = vpop.f32.mrb[0].mxu0
      %v1159 = vadd.f32 0.0, %v1158
      %v1160 = vpop.f32.mrb[0].mxu0
      %v1161 = vpop.f32.mrb[0].mxu0
      %v1162 = vadd.f32 0.0, %v1161
      %v1163 = vpop.f32.mrb[0].mxu0
      %1164 = vmatprep.mubr.bf16.mxu0 0
      %1165 = vmatmul.mubr.bf16.gmra.mrb[0].mxu0 %v599
      %v1166 = vpop.f32.mrb[0].mxu0
      %v1167 = vadd.f32 0.0, %v1166
      %v1168 = vpop.f32.mrb[0].mxu0
      %v1169 = vpop.f32.mrb[0].mxu0
      %v1170 = vadd.f32 0.0, %v1169
      %v1171 = vpop.f32.mrb[0].mxu0
      %1172 = vmatprep.mubr.bf16.mxu0 0
      %1173 = vmatmul.mubr.bf16.gmra.mrb[0].mxu0 %v600
      %v1174 = vpop.f32.mrb[0].mxu0
      %v1175 = vadd.f32 0.0, %v1174
      %v1176 = vpop.f32.mrb[0].mxu0
      %v1177 = vpop.f32.mrb[0].mxu0
      %v1178 = vadd.f32 0.0, %v1177
      %v1179 = vpop.f32.mrb[0].mxu0
      %1180 = vmatprep.mubr.bf16.mxu0 0
      %1181 = vmatmul.mubr.bf16.gmra.mrb[0].mxu0 %v601
      %v1182 = vpop.f32.mrb[0].mxu0
      %v1183 = vadd.f32 0.0, %v1182
      %v1184 = vpop.f32.mrb[0].mxu0
      %v1185 = vpop.f32.mrb[0].mxu0
      %v1186 = vadd.f32 0.0, %v1185
      %v1187 = vpop.f32.mrb[0].mxu0
      %1188 = vmatprep.mubr.bf16.mxu0 0
      %1189 = vmatmul.mubr.bf16.gmra.mrb[0].mxu0 %v602
      %v1190 = vpop.f32.mrb[0].mxu0
      %v1191 = vadd.f32 0.0, %v1190
      %v1192 = vpop.f32.mrb[0].mxu0
      %v1193 = vpop.f32.mrb[0].mxu0
      %v1194 = vadd.f32 0.0, %v1193
      %v1195 = vpop.f32.mrb[0].mxu0
      %1196 = vmatprep.mubr.bf16.mxu0 0
      %1197 = vmatmul.mubr.bf16.gmra.mrb[0].mxu0 %v603
      %v1198 = vpop.f32.mrb[0].mxu0
      %v1199 = vadd.f32 0.0, %v1198
      %v1200 = vpop.f32.mrb[0].mxu0
      %v1201 = vpop.f32.mrb[0].mxu0
      %v1202 = vadd.f32 0.0, %v1201
      %v1203 = vpop.f32.mrb[0].mxu0
      %1204 = vmatprep.mubr.bf16.mxu0 0
      %1205 = vmatmul.mubr.bf16.gmra.mrb[0].mxu0 %v604
      %v1206 = vpop.f32.mrb[0].mxu0
      %v1207 = vadd.f32 0.0, %v1206
      %v1208 = vpop.f32.mrb[0].mxu0
      %v1209 = vpop.f32.mrb[0].mxu0
      %v1210 = vadd.f32 0.0, %v1209
      %v1211 = vpop.f32.mrb[0].mxu0
      %1212 = vmatprep.mubr.bf16.mxu0 0
      %1213 = vmatmul.mubr.bf16.gmra.mrb[0].mxu0 %v605
      %v1214 = vpop.f32.mrb[0].mxu0
      %v1215 = vadd.f32 0.0, %v1214
      %v1216 = vpop.f32.mrb[0].mxu0
      %v1217 = vpop.f32.mrb[0].mxu0
      %v1218 = vadd.f32 0.0, %v1217
      %v1219 = vpop.f32.mrb[0].mxu0
      %1220 = vmatprep.mubr.bf16.mxu0 0
      %1221 = vmatmul.mubr.bf16.gmra.mrb[0].mxu0 %v606
      %v1222 = vpop.f32.mrb[0].mxu0
      %v1223 = vadd.f32 0.0, %v1222
      %v1224 = vpop.f32.mrb[0].mxu0
      %v1225 = vpop.f32.mrb[0].mxu0
      %v1226 = vadd.f32 0.0, %v1225
      %v1227 = vpop.f32.mrb[0].mxu0
      %1228 = vmatprep.mubr.bf16.mxu0 0
      %1229 = vmatmul.mubr.bf16.gmra.mrb[0].mxu0 %v607
      %v1230 = vpop.f32.mrb[0].mxu0
      %v1231 = vadd.f32 0.0, %v1230
      %v1232 = vpop.f32.mrb[0].mxu0
      %v1233 = vpop.f32.mrb[0].mxu0
      %v1234 = vadd.f32 0.0, %v1233
      %v1235 = vpop.f32.mrb[0].mxu0
      %1236 = vmatprep.mubr.bf16.mxu0 0
      %1237 = vmatmul.mubr.bf16.gmra.mrb[0].mxu0 %v608
      %v1238 = vpop.f32.mrb[0].mxu0
      %v1239 = vadd.f32 0.0, %v1238
      %v1240 = vpop.f32.mrb[0].mxu0
      %v1241 = vpop.f32.mrb[0].mxu0
      %v1242 = vadd.f32 0.0, %v1241
      %v1243 = vpop.f32.mrb[0].mxu0
      %1244 = vmatprep.mubr.bf16.mxu0 0
      %1245 = vmatmul.mubr.bf16.gmra.mrb[0].mxu0 %v609
      %v1246 = vpop.f32.mrb[0].mxu0
      %v1247 = vadd.f32 0.0, %v1246
      %v1248 = vpop.f32.mrb[0].mxu0
      %v1249 = vpop.f32.mrb[0].mxu0
      %v1250 = vadd.f32 0.0, %v1249
      %v1251 = vpop.f32.mrb[0].mxu0
      %1252 = vmatprep.mubr.bf16.mxu0 0
      %1253 = vmatmul.mubr.bf16.gmra.mrb[0].mxu0 %v610
      %v1254 = vpop.f32.mrb[0].mxu0
      %v1255 = vadd.f32 0.0, %v1254
      %v1256 = vpop.f32.mrb[0].mxu0
      %v1257 = vpop.f32.mrb[0].mxu0
      %v1258 = vadd.f32 0.0, %v1257
      %v1259 = vpop.f32.mrb[0].mxu0
      %1260 = vmatprep.mubr.bf16.mxu0 0
      %1261 = vmatmul.mubr.bf16.gmra.mrb[0].mxu0 %v611
      %v1262 = vpop.f32.mrb[0].mxu0
      %v1263 = vadd.f32 0.0, %v1262
      %v1264 = vpop.f32.mrb[0].mxu0
      %v1265 = vpop.f32.mrb[0].mxu0
      %v1266 = vadd.f32 0.0, %v1265
      %v1267 = vpop.f32.mrb[0].mxu0
      %1268 = vdwg.mxu0
      %v1269 = vtanh.pop %v759
      %v1270 = vtanh.pop %v762
      %v1271 = vtanh.pop %v767
      %v1272 = vtanh.pop %v770
      %v1273 = vtanh.pop %v775
      %v1274 = vtanh.pop %v778
      %v1275 = vtanh.pop %v783
      %v1276 = vtanh.pop %v786
      %v1277 = vtanh.pop %v791
      %v1278 = vtanh.pop %v794
      %v1279 = vtanh.pop %v799
      %v1280 = vtanh.pop %v802
      %v1281 = vtanh.pop %v807
      %v1282 = vtanh.pop %v810
      %v1283 = vtanh.pop %v815
      %v1284 = vtanh.pop %v818
      %v1285 = vtanh.pop %v823
      %v1286 = vtanh.pop %v826
      %v1287 = vtanh.pop %v831
      %v1288 = vtanh.pop %v834
      %v1289 = vtanh.pop %v839
      %v1290 = vtanh.pop %v842
      %v1291 = vtanh.pop %v847
      %v1292 = vtanh.pop %v850
      %v1293 = vtanh.pop %v855
      %v1294 = vtanh.pop %v858
      %v1295 = vtanh.pop %v863
      %v1296 = vtanh.pop %v866
      %v1297 = vtanh.pop %v871
      %v1298 = vtanh.pop %v874
      %v1299 = vtanh.pop %v879
      %v1300 = vtanh.pop %v882
      %v1301 = vtanh.pop %v887
      %v1302 = vtanh.pop %v890
      %v1303 = vtanh.pop %v895
      %v1304 = vtanh.pop %v898
      %v1305 = vtanh.pop %v903
      %v1306 = vtanh.pop %v906
      %v1307 = vtanh.pop %v911
      %v1308 = vtanh.pop %v914
      %v1309 = vtanh.pop %v919
      %v1310 = vtanh.pop %v922
      %v1311 = vtanh.pop %v927
      %v1312 = vtanh.pop %v930
      %v1313 = vtanh.pop %v935
      %v1314 = vtanh.pop %v938
      %v1315 = vtanh.pop %v943
      %v1316 = vtanh.pop %v946
      %v1317 = vtanh.pop %v951
      %v1318 = vtanh.pop %v954
      %v1319 = vtanh.pop %v959
      %v1320 = vtanh.pop %v962
      %v1321 = vtanh.pop %v967
      %v1322 = vtanh.pop %v970
      %v1323 = vtanh.pop %v975
      %v1324 = vtanh.pop %v978
      %v1325 = vtanh.pop %v983
      %v1326 = vtanh.pop %v986
      %v1327 = vtanh.pop %v991
      %v1328 = vtanh.pop %v994
      %v1329 = vtanh.pop %v999
      %v1330 = vtanh.pop %v1002
      %v1331 = vtanh.pop %v1007
      %v1332 = vtanh.pop %v1010
      %v1333 = vtanh.pop %v1015
      %v1334 = vtanh.pop %v1018
      %v1335 = vtanh.pop %v1023
      %v1336 = vtanh.pop %v1026
      %v1337 = vtanh.pop %v1031
      %v1338 = vtanh.pop %v1034
      %v1339 = vtanh.pop %v1039
      %v1340 = vtanh.pop %v1042
      %v1341 = vtanh.pop %v1047
      %v1342 = vtanh.pop %v1050
      %v1343 = vtanh.pop %v1055
      %v1344 = vtanh.pop %v1058
      %v1345 = vtanh.pop %v1063
      %v1346 = vtanh.pop %v1066
      %v1347 = vtanh.pop %v1071
      %v1348 = vtanh.pop %v1074
      %v1349 = vtanh.pop %v1079
      %v1350 = vtanh.pop %v1082
      %v1351 = vtanh.pop %v1087
      %v1352 = vtanh.pop %v1090
      %v1353 = vtanh.pop %v1095
      %v1354 = vtanh.pop %v1098
      %v1355 = vtanh.pop %v1103
      %v1356 = vtanh.pop %v1106
      %v1357 = vtanh.pop %v1111
      %v1358 = vtanh.pop %v1114
      %v1359 = vtanh.pop %v1119
      %v1360 = vtanh.pop %v1122
      %v1361 = vtanh.pop %v1127
      %v1362 = vtanh.pop %v1130
      %v1363 = vtanh.pop %v1135
      %v1364 = vtanh.pop %v1138
      %v1365 = vtanh.pop %v1143
      %v1366 = vtanh.pop %v1146
      %v1367 = vtanh.pop %v1151
      %v1368 = vtanh.pop %v1154
      %v1369 = vtanh.pop %v1159
      %v1370 = vtanh.pop %v1162
      %v1371 = vtanh.pop %v1167
      %v1372 = vtanh.pop %v1170
      %v1373 = vtanh.pop %v1175
      %v1374 = vtanh.pop %v1178
      %v1375 = vtanh.pop %v1183
      %v1376 = vtanh.pop %v1186
      %v1377 = vtanh.pop %v1191
      %v1378 = vtanh.pop %v1194
      %v1379 = vtanh.pop %v1199
      %v1380 = vtanh.pop %v1202
      %v1381 = vtanh.pop %v1207
      %v1382 = vtanh.pop %v1210
      %v1383 = vtanh.pop %v1215
      %v1384 = vtanh.pop %v1218
      %v1385 = vtanh.pop %v1223
      %v1386 = vtanh.pop %v1226
      %v1387 = vtanh.pop %v1231
      %v1388 = vtanh.pop %v1234
      %v1389 = vtanh.pop %v1239
      %v1390 = vtanh.pop %v1242
      %v1391 = vtanh.pop %v1247
      %v1392 = vtanh.pop %v1250
      %v1393 = vtanh.pop %v1255
      %v1394 = vtanh.pop %v1258
      %v1395 = vtanh.pop %v1263
      %v1396 = vtanh.pop %v1266
      %vm1397 = vcmask 23552
      %1398 = vst.msk [vmem:[%s145] sm:$0xff] %vm1397, %v1269
      %1399 = vst.msk [vmem:[%s145 + $0x8] sm:$0xff] %vm1397, %v1270
      %1400 = vst.msk [vmem:[%s145 + $0x10] sm:$0xff] %vm1397, %v1271
      %1401 = vst.msk [vmem:[%s145 + $0x18] sm:$0xff] %vm1397, %v1272
      %1402 = vst.msk [vmem:[%s145 + $0x20] sm:$0xff] %vm1397, %v1273
      %1403 = vst.msk [vmem:[%s145 + $0x28] sm:$0xff] %vm1397, %v1274
      %1404 = vst.msk [vmem:[%s145 + $0x30] sm:$0xff] %vm1397, %v1275
      %1405 = vst.msk [vmem:[%s145 + $0x38] sm:$0xff] %vm1397, %v1276
      %1406 = vst.msk [vmem:[%s145 + $0x40] sm:$0xff] %vm1397, %v1277
      %1407 = vst.msk [vmem:[%s145 + $0x48] sm:$0xff] %vm1397, %v1278
      %1408 = vst.msk [vmem:[%s145 + $0x50] sm:$0xff] %vm1397, %v1279
      %1409 = vst.msk [vmem:[%s145 + $0x58] sm:$0xff] %vm1397, %v1280
      %1410 = vst.msk [vmem:[%s145 + $0x60] sm:$0xff] %vm1397, %v1281
      %1411 = vst.msk [vmem:[%s145 + $0x68] sm:$0xff] %vm1397, %v1282
      %1412 = vst.msk [vmem:[%s145 + $0x70] sm:$0xff] %vm1397, %v1283
      %1413 = vst.msk [vmem:[%s145 + $0x78] sm:$0xff] %vm1397, %v1284
      %1414 = vst.msk [vmem:[%s145 + $0x80] sm:$0xff] %vm1397, %v1285
      %1415 = vst.msk [vmem:[%s145 + $0x88] sm:$0xff] %vm1397, %v1286
      %1416 = vst.msk [vmem:[%s145 + $0x90] sm:$0xff] %vm1397, %v1287
      %1417 = vst.msk [vmem:[%s145 + $0x98] sm:$0xff] %vm1397, %v1288
      %1418 = vst.msk [vmem:[%s145 + $0xa0] sm:$0xff] %vm1397, %v1289
      %1419 = vst.msk [vmem:[%s145 + $0xa8] sm:$0xff] %vm1397, %v1290
      %1420 = vst.msk [vmem:[%s145 + $0xb0] sm:$0xff] %vm1397, %v1291
      %1421 = vst.msk [vmem:[%s145 + $0xb8] sm:$0xff] %vm1397, %v1292
      %1422 = vst.msk [vmem:[%s145 + $0xc0] sm:$0xff] %vm1397, %v1293
      %1423 = vst.msk [vmem:[%s145 + $0xc8] sm:$0xff] %vm1397, %v1294
      %1424 = vst.msk [vmem:[%s145 + $0xd0] sm:$0xff] %vm1397, %v1295
      %1425 = vst.msk [vmem:[%s145 + $0xd8] sm:$0xff] %vm1397, %v1296
      %1426 = vst.msk [vmem:[%s145 + $0xe0] sm:$0xff] %vm1397, %v1297
      %1427 = vst.msk [vmem:[%s145 + $0xe8] sm:$0xff] %vm1397, %v1298
      %1428 = vst.msk [vmem:[%s145 + $0xf0] sm:$0xff] %vm1397, %v1299
      %1429 = vst.msk [vmem:[%s145 + $0xf8] sm:$0xff] %vm1397, %v1300
      %1430 = vst.msk [vmem:[%s145 + $0x100] sm:$0xff] %vm1397, %v1301
      %1431 = vst.msk [vmem:[%s145 + $0x108] sm:$0xff] %vm1397, %v1302
      %1432 = vst.msk [vmem:[%s145 + $0x110] sm:$0xff] %vm1397, %v1303
      %1433 = vst.msk [vmem:[%s145 + $0x118] sm:$0xff] %vm1397, %v1304
      %1434 = vst.msk [vmem:[%s145 + $0x120] sm:$0xff] %vm1397, %v1305
      %1435 = vst.msk [vmem:[%s145 + $0x128] sm:$0xff] %vm1397, %v1306
      %1436 = vst.msk [vmem:[%s145 + $0x130] sm:$0xff] %vm1397, %v1307
      %1437 = vst.msk [vmem:[%s145 + $0x138] sm:$0xff] %vm1397, %v1308
      %1438 = vst.msk [vmem:[%s145 + $0x140] sm:$0xff] %vm1397, %v1309
      %1439 = vst.msk [vmem:[%s145 + $0x148] sm:$0xff] %vm1397, %v1310
      %1440 = vst.msk [vmem:[%s145 + $0x150] sm:$0xff] %vm1397, %v1311
      %1441 = vst.msk [vmem:[%s145 + $0x158] sm:$0xff] %vm1397, %v1312
      %1442 = vst.msk [vmem:[%s145 + $0x160] sm:$0xff] %vm1397, %v1313
      %1443 = vst.msk [vmem:[%s145 + $0x168] sm:$0xff] %vm1397, %v1314
      %1444 = vst.msk [vmem:[%s145 + $0x170] sm:$0xff] %vm1397, %v1315
      %1445 = vst.msk [vmem:[%s145 + $0x178] sm:$0xff] %vm1397, %v1316
      %1446 = vst.msk [vmem:[%s145 + $0x180] sm:$0xff] %vm1397, %v1317
      %1447 = vst.msk [vmem:[%s145 + $0x188] sm:$0xff] %vm1397, %v1318
      %1448 = vst.msk [vmem:[%s145 + $0x190] sm:$0xff] %vm1397, %v1319
      %1449 = vst.msk [vmem:[%s145 + $0x198] sm:$0xff] %vm1397, %v1320
      %1450 = vst.msk [vmem:[%s145 + $0x1a0] sm:$0xff] %vm1397, %v1321
      %1451 = vst.msk [vmem:[%s145 + $0x1a8] sm:$0xff] %vm1397, %v1322
      %1452 = vst.msk [vmem:[%s145 + $0x1b0] sm:$0xff] %vm1397, %v1323
      %1453 = vst.msk [vmem:[%s145 + $0x1b8] sm:$0xff] %vm1397, %v1324
      %1454 = vst.msk [vmem:[%s145 + $0x1c0] sm:$0xff] %vm1397, %v1325
      %1455 = vst.msk [vmem:[%s145 + $0x1c8] sm:$0xff] %vm1397, %v1326
      %1456 = vst.msk [vmem:[%s145 + $0x1d0] sm:$0xff] %vm1397, %v1327
      %1457 = vst.msk [vmem:[%s145 + $0x1d8] sm:$0xff] %vm1397, %v1328
      %1458 = vst.msk [vmem:[%s145 + $0x1e0] sm:$0xff] %vm1397, %v1329
      %1459 = vst.msk [vmem:[%s145 + $0x1e8] sm:$0xff] %vm1397, %v1330
      %1460 = vst.msk [vmem:[%s145 + $0x1f0] sm:$0xff] %vm1397, %v1331
      %1461 = vst.msk [vmem:[%s145 + $0x1f8] sm:$0xff] %vm1397, %v1332
      %1462 = vst.msk [vmem:[%s145 + $0x200] sm:$0xff] %vm1397, %v1333
      %1463 = vst.msk [vmem:[%s145 + $0x208] sm:$0xff] %vm1397, %v1334
      %1464 = vst.msk [vmem:[%s145 + $0x210] sm:$0xff] %vm1397, %v1335
      %1465 = vst.msk [vmem:[%s145 + $0x218] sm:$0xff] %vm1397, %v1336
      %1466 = vst.msk [vmem:[%s145 + $0x220] sm:$0xff] %vm1397, %v1337
      %1467 = vst.msk [vmem:[%s145 + $0x228] sm:$0xff] %vm1397, %v1338
      %1468 = vst.msk [vmem:[%s145 + $0x230] sm:$0xff] %vm1397, %v1339
      %1469 = vst.msk [vmem:[%s145 + $0x238] sm:$0xff] %vm1397, %v1340
      %1470 = vst.msk [vmem:[%s145 + $0x240] sm:$0xff] %vm1397, %v1341
      %1471 = vst.msk [vmem:[%s145 + $0x248] sm:$0xff] %vm1397, %v1342
      %1472 = vst.msk [vmem:[%s145 + $0x250] sm:$0xff] %vm1397, %v1343
      %1473 = vst.msk [vmem:[%s145 + $0x258] sm:$0xff] %vm1397, %v1344
      %1474 = vst.msk [vmem:[%s145 + $0x260] sm:$0xff] %vm1397, %v1345
      %1475 = vst.msk [vmem:[%s145 + $0x268] sm:$0xff] %vm1397, %v1346
      %1476 = vst.msk [vmem:[%s145 + $0x270] sm:$0xff] %vm1397, %v1347
      %1477 = vst.msk [vmem:[%s145 + $0x278] sm:$0xff] %vm1397, %v1348
      %1478 = vst.msk [vmem:[%s145 + $0x280] sm:$0xff] %vm1397, %v1349
      %1479 = vst.msk [vmem:[%s145 + $0x288] sm:$0xff] %vm1397, %v1350
      %1480 = vst.msk [vmem:[%s145 + $0x290] sm:$0xff] %vm1397, %v1351
      %1481 = vst.msk [vmem:[%s145 + $0x298] sm:$0xff] %vm1397, %v1352
      %1482 = vst.msk [vmem:[%s145 + $0x2a0] sm:$0xff] %vm1397, %v1353
      %1483 = vst.msk [vmem:[%s145 + $0x2a8] sm:$0xff] %vm1397, %v1354
      %1484 = vst.msk [vmem:[%s145 + $0x2b0] sm:$0xff] %vm1397, %v1355
      %1485 = vst.msk [vmem:[%s145 + $0x2b8] sm:$0xff] %vm1397, %v1356
      %1486 = vst.msk [vmem:[%s145 + $0x2c0] sm:$0xff] %vm1397, %v1357
      %1487 = vst.msk [vmem:[%s145 + $0x2c8] sm:$0xff] %vm1397, %v1358
      %1488 = vst.msk [vmem:[%s145 + $0x2d0] sm:$0xff] %vm1397, %v1359
      %1489 = vst.msk [vmem:[%s145 + $0x2d8] sm:$0xff] %vm1397, %v1360
      %1490 = vst.msk [vmem:[%s145 + $0x2e0] sm:$0xff] %vm1397, %v1361
      %1491 = vst.msk [vmem:[%s145 + $0x2e8] sm:$0xff] %vm1397, %v1362
      %1492 = vst.msk [vmem:[%s145 + $0x2f0] sm:$0xff] %vm1397, %v1363
      %1493 = vst.msk [vmem:[%s145 + $0x2f8] sm:$0xff] %vm1397, %v1364
      %1494 = vst.msk [vmem:[%s145 + $0x300] sm:$0xff] %vm1397, %v1365
      %1495 = vst.msk [vmem:[%s145 + $0x308] sm:$0xff] %vm1397, %v1366
      %1496 = vst.msk [vmem:[%s145 + $0x310] sm:$0xff] %vm1397, %v1367
      %1497 = vst.msk [vmem:[%s145 + $0x318] sm:$0xff] %vm1397, %v1368
      %1498 = vst.msk [vmem:[%s145 + $0x320] sm:$0xff] %vm1397, %v1369
      %1499 = vst.msk [vmem:[%s145 + $0x328] sm:$0xff] %vm1397, %v1370
      %1500 = vst.msk [vmem:[%s145 + $0x330] sm:$0xff] %vm1397, %v1371
      %1501 = vst.msk [vmem:[%s145 + $0x338] sm:$0xff] %vm1397, %v1372
      %1502 = vst.msk [vmem:[%s145 + $0x340] sm:$0xff] %vm1397, %v1373
      %1503 = vst.msk [vmem:[%s145 + $0x348] sm:$0xff] %vm1397, %v1374
      %1504 = vst.msk [vmem:[%s145 + $0x350] sm:$0xff] %vm1397, %v1375
      %1505 = vst.msk [vmem:[%s145 + $0x358] sm:$0xff] %vm1397, %v1376
      %1506 = vst.msk [vmem:[%s145 + $0x360] sm:$0xff] %vm1397, %v1377
      %1507 = vst.msk [vmem:[%s145 + $0x368] sm:$0xff] %vm1397, %v1378
      %1508 = vst.msk [vmem:[%s145 + $0x370] sm:$0xff] %vm1397, %v1379
      %1509 = vst.msk [vmem:[%s145 + $0x378] sm:$0xff] %vm1397, %v1380
      %1510 = vst.msk [vmem:[%s145 + $0x380] sm:$0xff] %vm1397, %v1381
      %1511 = vst.msk [vmem:[%s145 + $0x388] sm:$0xff] %vm1397, %v1382
      %1512 = vst.msk [vmem:[%s145 + $0x390] sm:$0xff] %vm1397, %v1383
      %1513 = vst.msk [vmem:[%s145 + $0x398] sm:$0xff] %vm1397, %v1384
      %1514 = vst.msk [vmem:[%s145 + $0x3a0] sm:$0xff] %vm1397, %v1385
      %1515 = vst.msk [vmem:[%s145 + $0x3a8] sm:$0xff] %vm1397, %v1386
      %1516 = vst.msk [vmem:[%s145 + $0x3b0] sm:$0xff] %vm1397, %v1387
      %1517 = vst.msk [vmem:[%s145 + $0x3b8] sm:$0xff] %vm1397, %v1388
      %1518 = vst.msk [vmem:[%s145 + $0x3c0] sm:$0xff] %vm1397, %v1389
      %1519 = vst.msk [vmem:[%s145 + $0x3c8] sm:$0xff] %vm1397, %v1390
      %1520 = vst.msk [vmem:[%s145 + $0x3d0] sm:$0xff] %vm1397, %v1391
      %1521 = vst.msk [vmem:[%s145 + $0x3d8] sm:$0xff] %vm1397, %v1392
      %1522 = vst.msk [vmem:[%s145 + $0x3e0] sm:$0xff] %vm1397, %v1393
      %1523 = vst.msk [vmem:[%s145 + $0x3e8] sm:$0xff] %vm1397, %v1394
      %1524 = vst.msk [vmem:[%s145 + $0x3f0] sm:$0xff] %vm1397, %v1395
      %1525 = vst.msk [vmem:[%s145 + $0x3f8] sm:$0xff] %vm1397, %v1396
      %s1526 = smul.u32 128, %s13
      %p1527 = scmp.lt.s32.totalorder %s1526, 1023
      %s1528 = scalar_select %p1527, %s1526, 1023
      %s1529 = smul.addr %s1528, 8
      %s1530 = scalar_lea.vmem %s2, %s1529
      // Predicated region
      $region29: #{gnet_forward.9} parent=27 // pred_check
        %p1531 = pneg %p78
      $region30: #{gnet_forward.9} parent=27 // pred_check_branch
        %1533 = sbr.rel (%p1531) target = $region32
      $region31: #{gnet_forward.9} parent=27 // pred_region
        %s1534 = smul.u32 128, %s13
      $region32: #{gnet_forward.9} parent=27 // pred_fallthru
        _
    $region28: #{gnet_forward.9} parent=5 // pred_fallthru
      _
    %p1535 = scmp.le.s32.totalorder 2, %s8
    // Predicated region
    $region33: #{gnet_forward.9} parent=5 // pred_check
      %p1536 = pneg %p1535
    $region34: #{gnet_forward.9} parent=5 // pred_check_branch
      %1538 = sbr.rel (%p1536) target = $region36
    $region35: #{gnet_forward.9} parent=5 // pred_region
      %s1539 = ssub.s32 %s8, 2
      // Predicated region
      $region37: #{gnet_forward.9} parent=35 // pred_check
        %p1540 = pneg %p84
      $region38: #{gnet_forward.9} parent=35 // pred_check_branch
        %1542 = sbr.rel (%p1540) target = $region40
      $region39: #{gnet_forward.9} parent=35 // pred_region
        %s1543 = smul.u32 128, %s14
        %p1544 = scmp.lt.s32.totalorder %s1543, 1023
        %s1545 = scalar_select %p1544, %s1543, 1023
        %s1546 = smul.addr %s1545, 8
        %s1547 = scalar_lea.vmem %s2, %s1546
      $region40: #{gnet_forward.9} parent=35 // pred_fallthru
        _
    $region36: #{gnet_forward.9} parent=5 // pred_fallthru
      _
  $region6: #{gnet_forward.9} parent=0 // loop_footer
    %s12 = sadd.s32 1, %s8
  $region7: #{gnet_forward.9} parent=0 // loop_footer_branch
    %7 = sbr.rel target = $region3
  $region8: #{gnet_forward.9} parent=0 // loop_exit
    _

</llo_original>
